<compile_context>
chip_gen: v7x
topology: tpu7x:2x2x1
jax: 0.10.0
libtpu: 0.0.40
codegen_flags: <defaults>
</compile_context>

<pallas_src>
import functools

import jax
import jax.numpy as jnp
import numpy as np
from jax import lax
from jax.experimental import pallas as pl
from jax.experimental.pallas import tpu as pltpu


# ------------------------------- fused kernel ------------------------------ #

def _net_kernel(pat_ref, w1_ref, b1_ref, w2_ref, b2_ref,
                fc1w_ref, fc1b_ref, fc2w_ref, fc2b_ref, fc3w_ref, fc3b_ref,
                out_ref, *, batch):
    B = batch
    f32 = jnp.float32
    n = B * 12 * 16                 # rows per pool phase (pw padded 12 -> 16)

    # ---- conv1: one MXU matmul over phase-ordered im2col patches ------------
    # pat rows ordered (phase, b, ph, pw); cols = 5x5 tap index padded 25->32.
    out1 = jnp.dot(pat_ref[...], w1_ref[...],
                   preferred_element_type=f32)            # (4n, 8)

    # ---- pool-1: max over the 4 phase row-blocks, then bias + ReLU ----------
    m = jnp.maximum(jnp.maximum(out1[0 * n:1 * n], out1[1 * n:2 * n]),
                    jnp.maximum(out1[2 * n:3 * n], out1[3 * n:4 * n]))  # (n, 8)
    a1 = jnp.maximum(m + b1_ref[...], 0.0)                # (B*192, 8)
    a1r = a1.reshape(B, 12, 16, 8)                        # (b, h, w_pad, c1)

    # ---- conv2: 25 accumulating MXU matmuls (one per 5x5 tap) ---------------
    acc2 = jnp.zeros((B * 64, 16), f32)
    for kh in range(5):
        for kw in range(5):
            win = a1r[:, kh:kh + 8, kw:kw + 8, :].reshape(B * 64, 8)
            acc2 = acc2 + jnp.dot(win, w2_ref[kh * 5 + kw],
                                  preferred_element_type=f32)
    c2 = acc2.reshape(B, 8, 8, 16)                        # (b, oh, ow, c2)

    # ---- ReLU + pool-2 + fc1 (flatten folded into 16 weight blocks) ---------
    h1 = jnp.zeros((B, 128), f32)
    for ph in range(4):
        for pw in range(4):
            v = jnp.maximum(
                jnp.maximum(c2[:, 2 * ph, 2 * pw, :], c2[:, 2 * ph, 2 * pw + 1, :]),
                jnp.maximum(c2[:, 2 * ph + 1, 2 * pw, :], c2[:, 2 * ph + 1, 2 * pw + 1, :]))
            v = jnp.maximum(v + b2_ref[...], 0.0)         # (B, 16) pooled act
            h1 = h1 + jnp.dot(v, fc1w_ref[ph * 4 + pw],
                              preferred_element_type=f32)  # (B,16)@(16,128)
    h1 = jnp.maximum(h1 + fc1b_ref[...], 0.0)             # fc1 + ReLU

    # ---- fc2 + ReLU, fc3 -----------------------------------------------------
    h2 = jnp.maximum(jnp.dot(h1, fc2w_ref[...], preferred_element_type=f32)
                     + fc2b_ref[...], 0.0)
    out = jnp.dot(h2, fc3w_ref[...], preferred_element_type=f32) + fc3b_ref[...]
    out_ref[...] = out.astype(out_ref.dtype)              # (B,128) lane-dense


# ----------------------------- parameter prep ------------------------------ #

def init_params(key):
    ks = jax.random.split(key, 10)

    def init(k, shape, fan_in):
        return jax.random.normal(k, shape, jnp.float32) / jnp.sqrt(float(fan_in))

    return {
        "conv1_w": init(ks[0], (6, 1, 5, 5), 1 * 5 * 5),
        "conv1_b": init(ks[1], (6,), 1 * 5 * 5),
        "conv2_w": init(ks[2], (16, 6, 5, 5), 6 * 5 * 5),
        "conv2_b": init(ks[3], (16,), 6 * 5 * 5),
        "fc1_w":   init(ks[4], (120, 256), 256),
        "fc1_b":   init(ks[5], (120,), 256),
        "fc2_w":   init(ks[6], (84, 120), 120),
        "fc2_b":   init(ks[7], (84,), 120),
        "fc3_w":   init(ks[8], (10, 84), 84),
        "fc3_b":   init(ks[9], (10,), 84),
    }


def prepare_params(p):
    """One-time repack: transpose / permute / minimally zero-pad all weights."""
    f32 = jnp.float32
    # conv1: (6,1,5,5) -> (tap=kh*5+kw, cout) padded to (32, 8)
    w1 = jnp.transpose(p["conv1_w"], (2, 3, 1, 0)).reshape(25, 6)
    w1 = jnp.zeros((32, 8), f32).at[:25, :6].set(w1)
    b1 = jnp.zeros((1, 8), f32).at[0, :6].set(p["conv1_b"])
    # conv2: (16,6,5,5) -> (tap, ci, cout) padded to (25, 8, 16)
    w2 = jnp.transpose(p["conv2_w"], (2, 3, 1, 0)).reshape(25, 6, 16)
    w2 = jnp.zeros((25, 8, 16), f32).at[:, :6, :].set(w2)
    b2 = jnp.zeros((1, 16), f32).at[0, :].set(p["conv2_b"])
    # fc1: (120,256) with input index c*16 + h*4 + w -> 16 blocks [h*4+w] of (ci,out)
    fc1 = jnp.transpose(p["fc1_w"].reshape(120, 16, 4, 4), (2, 3, 1, 0)).reshape(16, 16, 120)
    fc1w = jnp.zeros((16, 16, 128), f32).at[:, :, :120].set(fc1)
    fc1b = jnp.zeros((1, 128), f32).at[0, :120].set(p["fc1_b"])
    # fc2 / fc3: pre-transpose to (K,N) and pad to 128x128
    fc2w = jnp.zeros((128, 128), f32).at[:120, :84].set(jnp.transpose(p["fc2_w"]))
    fc2b = jnp.zeros((1, 128), f32).at[0, :84].set(p["fc2_b"])
    fc3w = jnp.zeros((128, 128), f32).at[:84, :10].set(jnp.transpose(p["fc3_w"]))
    fc3b = jnp.zeros((1, 128), f32).at[0, :10].set(p["fc3_b"])
    return dict(w1=w1, b1=b1, w2=w2, b2=b2, fc1w=fc1w, fc1b=fc1b,
                fc2w=fc2w, fc2b=fc2b, fc3w=fc3w, fc3b=fc3b)


# ------------------------------ forward pass ------------------------------- #

@jax.jit
def net_forward(prepped, x_nchw):
    B = x_nchw.shape[0]
    x = x_nchw[:, 0, :, :]                                   # (B,28,28), Cin=1

    # Pool-phase-ordered im2col for conv1 (pure layout gather, zero FLOPs).
    # Row order = (dh, dw, b, ph, pw); col = 5x5 tap (padded 25->32); pw is
    # padded 12->16 so every in-kernel reshape is a whole-vreg regroup.
    taps = [x[:, kh:kh + 24, kw:kw + 24] for kh in range(5) for kw in range(5)]
    pat = jnp.stack(taps, axis=-1)                           # (B,24,24,25)
    pat = pat.reshape(B, 12, 2, 12, 2, 25)                   # (b,ph,dh,pw,dw,k)
    pat = pat.transpose(2, 4, 0, 1, 3, 5)                    # (dh,dw,b,ph,pw,k)
    pat = jnp.pad(pat, ((0, 0), (0, 0), (0, 0), (0, 0), (0, 4), (0, 7)))
    pat = pat.reshape(4 * B * 12 * 16, 32)                   # (1536, 32)

    out = pl.pallas_call(
        functools.partial(_net_kernel, batch=B),
        out_shape=jax.ShapeDtypeStruct((B, 128), jnp.float32),
        in_specs=[pl.BlockSpec(memory_space=pltpu.MemorySpace.VMEM)] * 11,
        out_specs=pl.BlockSpec(memory_space=pltpu.MemorySpace.VMEM),
    )(pat, prepped["w1"], prepped["b1"], prepped["w2"], prepped["b2"],
      prepped["fc1w"], prepped["fc1b"], prepped["fc2w"], prepped["fc2b"],
      prepped["fc3w"], prepped["fc3b"])
    return out[:, :10]                                       # strip lane padding


# --------------------------- plain-JAX reference --------------------------- #

def reference_forward(params, x):
    def conv(z, w, b):
        y = lax.conv_general_dilated(z, w, (1, 1), "VALID",
                                     dimension_numbers=("NCHW", "OIHW", "NCHW"))
        return jax.nn.relu(y + b[None, :, None, None])

    def pool(z):
        return lax.reduce_window(z, -jnp.inf, lax.max,
                                 (1, 1, 2, 2), (1, 1, 2, 2), "VALID")

    y = pool(conv(x, params["conv1_w"], params["conv1_b"]))
    y = pool(conv(y, params["conv2_w"], params["conv2_b"]))
    y = y.reshape(y.shape[0], -1)
    y = jax.nn.relu(y @ params["fc1_w"].T + params["fc1_b"])
    y = jax.nn.relu(y @ params["fc2_w"].T + params["fc2_b"])
    return y @ params["fc3_w"].T + params["fc3_b"]


if __name__ == "__main__":
    key = jax.random.PRNGKey(0)
    pkey, xkey = jax.random.split(key)
    params = init_params(pkey)
    prepped = prepare_params(params)

    # Module math requires 28x28 single-channel input (16*4*4 flatten); batch=2.
    x = jax.random.normal(xkey, (2, 1, 28, 28), jnp.float32)

    out = net_forward(prepped, x)
    out = jax.block_until_ready(out)
    assert out.shape == (2, 10)

    ref = reference_forward(params, x)
    np.testing.assert_allclose(np.asarray(out), np.asarray(ref), rtol=1e-4, atol=1e-4)

    print("KERNEL_OK")
</pallas_src>

<mosaic_0001>
module attributes {stable_mosaic.version = 11 : i64} {
  func.func @_net_kernel(%arg0: memref<1536x32xf32, #tpu.memory_space<vmem>>, %arg1: memref<32x8xf32, #tpu.memory_space<vmem>>, %arg2: memref<1x8xf32, #tpu.memory_space<vmem>>, %arg3: memref<25x8x16xf32, #tpu.memory_space<vmem>>, %arg4: memref<1x16xf32, #tpu.memory_space<vmem>>, %arg5: memref<16x16x128xf32, #tpu.memory_space<vmem>>, %arg6: memref<1x128xf32, #tpu.memory_space<vmem>>, %arg7: memref<128x128xf32, #tpu.memory_space<vmem>>, %arg8: memref<1x128xf32, #tpu.memory_space<vmem>>, %arg9: memref<128x128xf32, #tpu.memory_space<vmem>>, %arg10: memref<1x128xf32, #tpu.memory_space<vmem>>, %arg11: memref<2x128xf32, #tpu.memory_space<vmem>>) attributes {dimension_semantics = [], scalar_prefetch = 0 : i64, scratch_operands = 0 : i64, tpu.core_type = #tpu.core_type<tc>} {
    %c0 = arith.constant 0 : index
    %c0_0 = arith.constant 0 : index
    %0 = vector.load %arg0[%c0, %c0_0] : memref<1536x32xf32, #tpu.memory_space<vmem>>, vector<1536x32xf32>
    %c0_1 = arith.constant 0 : index
    %c0_2 = arith.constant 0 : index
    %1 = vector.load %arg1[%c0_1, %c0_2] : memref<32x8xf32, #tpu.memory_space<vmem>>, vector<32x8xf32>
    %cst = arith.constant dense<0.000000e+00> : vector<1536x8xf32>
    %2 = tpu.matmul %0, %1, %cst {dimension_numbers = #tpu.dot_dimension_numbers<[1], [0], [0], [1], [0, 0, 1, 1], [], []>} : vector<1536x32xf32>, vector<32x8xf32>, vector<1536x8xf32> -> vector<1536x8xf32>
    %3 = vector.extract_strided_slice %2 {offsets = [0, 0], sizes = [384, 8], strides = [1, 1]} : vector<1536x8xf32> to vector<384x8xf32>
    %4 = vector.extract_strided_slice %2 {offsets = [384, 0], sizes = [384, 8], strides = [1, 1]} : vector<1536x8xf32> to vector<384x8xf32>
    %5 = arith.maximumf %3, %4 : vector<384x8xf32>
    %6 = vector.extract_strided_slice %2 {offsets = [768, 0], sizes = [384, 8], strides = [1, 1]} : vector<1536x8xf32> to vector<384x8xf32>
    %7 = vector.extract_strided_slice %2 {offsets = [1152, 0], sizes = [384, 8], strides = [1, 1]} : vector<1536x8xf32> to vector<384x8xf32>
    %8 = arith.maximumf %6, %7 : vector<384x8xf32>
    %9 = arith.maximumf %5, %8 : vector<384x8xf32>
    %c0_3 = arith.constant 0 : index
    %c0_4 = arith.constant 0 : index
    %10 = vector.load %arg2[%c0_3, %c0_4] : memref<1x8xf32, #tpu.memory_space<vmem>>, vector<1x8xf32>
    %11 = vector.broadcast %10 : vector<1x8xf32> to vector<384x8xf32>
    %12 = arith.addf %9, %11 : vector<384x8xf32>
    %cst_5 = arith.constant 0.000000e+00 : f32
    %13 = vector.broadcast %cst_5 : f32 to vector<384x8xf32>
    %14 = arith.maximumf %12, %13 : vector<384x8xf32>
    %15 = vector.shape_cast %14 : vector<384x8xf32> to vector<2x12x16x8xf32>
    %cst_6 = arith.constant 0.000000e+00 : f32
    %16 = vector.broadcast %cst_6 : f32 to vector<128x16xf32>
    %17 = vector.extract_strided_slice %15 {offsets = [0, 0, 0, 0], sizes = [2, 8, 8, 8], strides = [1, 1, 1, 1]} : vector<2x12x16x8xf32> to vector<2x8x8x8xf32>
    %18 = vector.shape_cast %17 : vector<2x8x8x8xf32> to vector<128x8xf32>
    %c0_7 = arith.constant 0 : index
    %c0_8 = arith.constant 0 : index
    %c0_9 = arith.constant 0 : index
    %19 = vector.load %arg3[%c0_7, %c0_8, %c0_9] : memref<25x8x16xf32, #tpu.memory_space<vmem>>, vector<1x8x16xf32>
    %20 = vector.shape_cast %19 : vector<1x8x16xf32> to vector<8x16xf32>
    %cst_10 = arith.constant dense<0.000000e+00> : vector<128x16xf32>
    %21 = tpu.matmul %18, %20, %cst_10 {dimension_numbers = #tpu.dot_dimension_numbers<[1], [0], [0], [1], [0, 0, 1, 1], [], []>} : vector<128x8xf32>, vector<8x16xf32>, vector<128x16xf32> -> vector<128x16xf32>
    %22 = arith.addf %16, %21 : vector<128x16xf32>
    %23 = vector.extract_strided_slice %15 {offsets = [0, 0, 1, 0], sizes = [2, 8, 8, 8], strides = [1, 1, 1, 1]} : vector<2x12x16x8xf32> to vector<2x8x8x8xf32>
    %24 = vector.shape_cast %23 : vector<2x8x8x8xf32> to vector<128x8xf32>
    %c1 = arith.constant 1 : index
    %c0_11 = arith.constant 0 : index
    %c0_12 = arith.constant 0 : index
    %25 = vector.load %arg3[%c1, %c0_11, %c0_12] : memref<25x8x16xf32, #tpu.memory_space<vmem>>, vector<1x8x16xf32>
    %26 = vector.shape_cast %25 : vector<1x8x16xf32> to vector<8x16xf32>
    %cst_13 = arith.constant dense<0.000000e+00> : vector<128x16xf32>
    %27 = tpu.matmul %24, %26, %cst_13 {dimension_numbers = #tpu.dot_dimension_numbers<[1], [0], [0], [1], [0, 0, 1, 1], [], []>} : vector<128x8xf32>, vector<8x16xf32>, vector<128x16xf32> -> vector<128x16xf32>
    %28 = arith.addf %22, %27 : vector<128x16xf32>
    %29 = vector.extract_strided_slice %15 {offsets = [0, 0, 2, 0], sizes = [2, 8, 8, 8], strides = [1, 1, 1, 1]} : vector<2x12x16x8xf32> to vector<2x8x8x8xf32>
    %30 = vector.shape_cast %29 : vector<2x8x8x8xf32> to vector<128x8xf32>
    %c2 = arith.constant 2 : index
    %c0_14 = arith.constant 0 : index
    %c0_15 = arith.constant 0 : index
    %31 = vector.load %arg3[%c2, %c0_14, %c0_15] : memref<25x8x16xf32, #tpu.memory_space<vmem>>, vector<1x8x16xf32>
    %32 = vector.shape_cast %31 : vector<1x8x16xf32> to vector<8x16xf32>
    %cst_16 = arith.constant dense<0.000000e+00> : vector<128x16xf32>
    %33 = tpu.matmul %30, %32, %cst_16 {dimension_numbers = #tpu.dot_dimension_numbers<[1], [0], [0], [1], [0, 0, 1, 1], [], []>} : vector<128x8xf32>, vector<8x16xf32>, vector<128x16xf32> -> vector<128x16xf32>
    %34 = arith.addf %28, %33 : vector<128x16xf32>
    %35 = vector.extract_strided_slice %15 {offsets = [0, 0, 3, 0], sizes = [2, 8, 8, 8], strides = [1, 1, 1, 1]} : vector<2x12x16x8xf32> to vector<2x8x8x8xf32>
    %36 = vector.shape_cast %35 : vector<2x8x8x8xf32> to vector<128x8xf32>
    %c3 = arith.constant 3 : index
    %c0_17 = arith.constant 0 : index
    %c0_18 = arith.constant 0 : index
    %37 = vector.load %arg3[%c3, %c0_17, %c0_18] : memref<25x8x16xf32, #tpu.memory_space<vmem>>, vector<1x8x16xf32>
    %38 = vector.shape_cast %37 : vector<1x8x16xf32> to vector<8x16xf32>
    %cst_19 = arith.constant dense<0.000000e+00> : vector<128x16xf32>
    %39 = tpu.matmul %36, %38, %cst_19 {dimension_numbers = #tpu.dot_dimension_numbers<[1], [0], [0], [1], [0, 0, 1, 1], [], []>} : vector<128x8xf32>, vector<8x16xf32>, vector<128x16xf32> -> vector<128x16xf32>
    %40 = arith.addf %34, %39 : vector<128x16xf32>
    %41 = vector.extract_strided_slice %15 {offsets = [0, 0, 4, 0], sizes = [2, 8, 8, 8], strides = [1, 1, 1, 1]} : vector<2x12x16x8xf32> to vector<2x8x8x8xf32>
    %42 = vector.shape_cast %41 : vector<2x8x8x8xf32> to vector<128x8xf32>
    %c4 = arith.constant 4 : index
    %c0_20 = arith.constant 0 : index
    %c0_21 = arith.constant 0 : index
    %43 = vector.load %arg3[%c4, %c0_20, %c0_21] : memref<25x8x16xf32, #tpu.memory_space<vmem>>, vector<1x8x16xf32>
    %44 = vector.shape_cast %43 : vector<1x8x16xf32> to vector<8x16xf32>
    %cst_22 = arith.constant dense<0.000000e+00> : vector<128x16xf32>
    %45 = tpu.matmul %42, %44, %cst_22 {dimension_numbers = #tpu.dot_dimension_numbers<[1], [0], [0], [1], [0, 0, 1, 1], [], []>} : vector<128x8xf32>, vector<8x16xf32>, vector<128x16xf32> -> vector<128x16xf32>
    %46 = arith.addf %40, %45 : vector<128x16xf32>
    %47 = vector.extract_strided_slice %15 {offsets = [0, 1, 0, 0], sizes = [2, 8, 8, 8], strides = [1, 1, 1, 1]} : vector<2x12x16x8xf32> to vector<2x8x8x8xf32>
    %48 = vector.shape_cast %47 : vector<2x8x8x8xf32> to vector<128x8xf32>
    %c5 = arith.constant 5 : index
    %c0_23 = arith.constant 0 : index
    %c0_24 = arith.constant 0 : index
    %49 = vector.load %arg3[%c5, %c0_23, %c0_24] : memref<25x8x16xf32, #tpu.memory_space<vmem>>, vector<1x8x16xf32>
    %50 = vector.shape_cast %49 : vector<1x8x16xf32> to vector<8x16xf32>
    %cst_25 = arith.constant dense<0.000000e+00> : vector<128x16xf32>
    %51 = tpu.matmul %48, %50, %cst_25 {dimension_numbers = #tpu.dot_dimension_numbers<[1], [0], [0], [1], [0, 0, 1, 1], [], []>} : vector<128x8xf32>, vector<8x16xf32>, vector<128x16xf32> -> vector<128x16xf32>
    %52 = arith.addf %46, %51 : vector<128x16xf32>
    %53 = vector.extract_strided_slice %15 {offsets = [0, 1, 1, 0], sizes = [2, 8, 8, 8], strides = [1, 1, 1, 1]} : vector<2x12x16x8xf32> to vector<2x8x8x8xf32>
    %54 = vector.shape_cast %53 : vector<2x8x8x8xf32> to vector<128x8xf32>
    %c6 = arith.constant 6 : index
    %c0_26 = arith.constant 0 : index
    %c0_27 = arith.constant 0 : index
    %55 = vector.load %arg3[%c6, %c0_26, %c0_27] : memref<25x8x16xf32, #tpu.memory_space<vmem>>, vector<1x8x16xf32>
    %56 = vector.shape_cast %55 : vector<1x8x16xf32> to vector<8x16xf32>
    %cst_28 = arith.constant dense<0.000000e+00> : vector<128x16xf32>
    %57 = tpu.matmul %54, %56, %cst_28 {dimension_numbers = #tpu.dot_dimension_numbers<[1], [0], [0], [1], [0, 0, 1, 1], [], []>} : vector<128x8xf32>, vector<8x16xf32>, vector<128x16xf32> -> vector<128x16xf32>
    %58 = arith.addf %52, %57 : vector<128x16xf32>
    %59 = vector.extract_strided_slice %15 {offsets = [0, 1, 2, 0], sizes = [2, 8, 8, 8], strides = [1, 1, 1, 1]} : vector<2x12x16x8xf32> to vector<2x8x8x8xf32>
    %60 = vector.shape_cast %59 : vector<2x8x8x8xf32> to vector<128x8xf32>
    %c7 = arith.constant 7 : index
    %c0_29 = arith.constant 0 : index
    %c0_30 = arith.constant 0 : index
    %61 = vector.load %arg3[%c7, %c0_29, %c0_30] : memref<25x8x16xf32, #tpu.memory_space<vmem>>, vector<1x8x16xf32>
    %62 = vector.shape_cast %61 : vector<1x8x16xf32> to vector<8x16xf32>
    %cst_31 = arith.constant dense<0.000000e+00> : vector<128x16xf32>
    %63 = tpu.matmul %60, %62, %cst_31 {dimension_numbers = #tpu.dot_dimension_numbers<[1], [0], [0], [1], [0, 0, 1, 1], [], []>} : vector<128x8xf32>, vector<8x16xf32>, vector<128x16xf32> -> vector<128x16xf32>
    %64 = arith.addf %58, %63 : vector<128x16xf32>
    %65 = vector.extract_strided_slice %15 {offsets = [0, 1, 3, 0], sizes = [2, 8, 8, 8], strides = [1, 1, 1, 1]} : vector<2x12x16x8xf32> to vector<2x8x8x8xf32>
    %66 = vector.shape_cast %65 : vector<2x8x8x8xf32> to vector<128x8xf32>
    %c8 = arith.constant 8 : index
    %c0_32 = arith.constant 0 : index
    %c0_33 = arith.constant 0 : index
    %67 = vector.load %arg3[%c8, %c0_32, %c0_33] : memref<25x8x16xf32, #tpu.memory_space<vmem>>, vector<1x8x16xf32>
    %68 = vector.shape_cast %67 : vector<1x8x16xf32> to vector<8x16xf32>
    %cst_34 = arith.constant dense<0.000000e+00> : vector<128x16xf32>
    %69 = tpu.matmul %66, %68, %cst_34 {dimension_numbers = #tpu.dot_dimension_numbers<[1], [0], [0], [1], [0, 0, 1, 1], [], []>} : vector<128x8xf32>, vector<8x16xf32>, vector<128x16xf32> -> vector<128x16xf32>
    %70 = arith.addf %64, %69 : vector<128x16xf32>
    %71 = vector.extract_strided_slice %15 {offsets = [0, 1, 4, 0], sizes = [2, 8, 8, 8], strides = [1, 1, 1, 1]} : vector<2x12x16x8xf32> to vector<2x8x8x8xf32>
    %72 = vector.shape_cast %71 : vector<2x8x8x8xf32> to vector<128x8xf32>
    %c9 = arith.constant 9 : index
    %c0_35 = arith.constant 0 : index
    %c0_36 = arith.constant 0 : index
    %73 = vector.load %arg3[%c9, %c0_35, %c0_36] : memref<25x8x16xf32, #tpu.memory_space<vmem>>, vector<1x8x16xf32>
    %74 = vector.shape_cast %73 : vector<1x8x16xf32> to vector<8x16xf32>
    %cst_37 = arith.constant dense<0.000000e+00> : vector<128x16xf32>
    %75 = tpu.matmul %72, %74, %cst_37 {dimension_numbers = #tpu.dot_dimension_numbers<[1], [0], [0], [1], [0, 0, 1, 1], [], []>} : vector<128x8xf32>, vector<8x16xf32>, vector<128x16xf32> -> vector<128x16xf32>
    %76 = arith.addf %70, %75 : vector<128x16xf32>
    %77 = vector.extract_strided_slice %15 {offsets = [0, 2, 0, 0], sizes = [2, 8, 8, 8], strides = [1, 1, 1, 1]} : vector<2x12x16x8xf32> to vector<2x8x8x8xf32>
    %78 = vector.shape_cast %77 : vector<2x8x8x8xf32> to vector<128x8xf32>
    %c10 = arith.constant 10 : index
    %c0_38 = arith.constant 0 : index
    %c0_39 = arith.constant 0 : index
    %79 = vector.load %arg3[%c10, %c0_38, %c0_39] : memref<25x8x16xf32, #tpu.memory_space<vmem>>, vector<1x8x16xf32>
    %80 = vector.shape_cast %79 : vector<1x8x16xf32> to vector<8x16xf32>
    %cst_40 = arith.constant dense<0.000000e+00> : vector<128x16xf32>
    %81 = tpu.matmul %78, %80, %cst_40 {dimension_numbers = #tpu.dot_dimension_numbers<[1], [0], [0], [1], [0, 0, 1, 1], [], []>} : vector<128x8xf32>, vector<8x16xf32>, vector<128x16xf32> -> vector<128x16xf32>
    %82 = arith.addf %76, %81 : vector<128x16xf32>
    %83 = vector.extract_strided_slice %15 {offsets = [0, 2, 1, 0], sizes = [2, 8, 8, 8], strides = [1, 1, 1, 1]} : vector<2x12x16x8xf32> to vector<2x8x8x8xf32>
    %84 = vector.shape_cast %83 : vector<2x8x8x8xf32> to vector<128x8xf32>
    %c11 = arith.constant 11 : index
    %c0_41 = arith.constant 0 : index
    %c0_42 = arith.constant 0 : index
    %85 = vector.load %arg3[%c11, %c0_41, %c0_42] : memref<25x8x16xf32, #tpu.memory_space<vmem>>, vector<1x8x16xf32>
    %86 = vector.shape_cast %85 : vector<1x8x16xf32> to vector<8x16xf32>
    %cst_43 = arith.constant dense<0.000000e+00> : vector<128x16xf32>
    %87 = tpu.matmul %84, %86, %cst_43 {dimension_numbers = #tpu.dot_dimension_numbers<[1], [0], [0], [1], [0, 0, 1, 1], [], []>} : vector<128x8xf32>, vector<8x16xf32>, vector<128x16xf32> -> vector<128x16xf32>
    %88 = arith.addf %82, %87 : vector<128x16xf32>
    %89 = vector.extract_strided_slice %15 {offsets = [0, 2, 2, 0], sizes = [2, 8, 8, 8], strides = [1, 1, 1, 1]} : vector<2x12x16x8xf32> to vector<2x8x8x8xf32>
    %90 = vector.shape_cast %89 : vector<2x8x8x8xf32> to vector<128x8xf32>
    %c12 = arith.constant 12 : index
    %c0_44 = arith.constant 0 : index
    %c0_45 = arith.constant 0 : index
    %91 = vector.load %arg3[%c12, %c0_44, %c0_45] : memref<25x8x16xf32, #tpu.memory_space<vmem>>, vector<1x8x16xf32>
    %92 = vector.shape_cast %91 : vector<1x8x16xf32> to vector<8x16xf32>
    %cst_46 = arith.constant dense<0.000000e+00> : vector<128x16xf32>
    %93 = tpu.matmul %90, %92, %cst_46 {dimension_numbers = #tpu.dot_dimension_numbers<[1], [0], [0], [1], [0, 0, 1, 1], [], []>} : vector<128x8xf32>, vector<8x16xf32>, vector<128x16xf32> -> vector<128x16xf32>
    %94 = arith.addf %88, %93 : vector<128x16xf32>
    %95 = vector.extract_strided_slice %15 {offsets = [0, 2, 3, 0], sizes = [2, 8, 8, 8], strides = [1, 1, 1, 1]} : vector<2x12x16x8xf32> to vector<2x8x8x8xf32>
    %96 = vector.shape_cast %95 : vector<2x8x8x8xf32> to vector<128x8xf32>
    %c13 = arith.constant 13 : index
    %c0_47 = arith.constant 0 : index
    %c0_48 = arith.constant 0 : index
    %97 = vector.load %arg3[%c13, %c0_47, %c0_48] : memref<25x8x16xf32, #tpu.memory_space<vmem>>, vector<1x8x16xf32>
    %98 = vector.shape_cast %97 : vector<1x8x16xf32> to vector<8x16xf32>
    %cst_49 = arith.constant dense<0.000000e+00> : vector<128x16xf32>
    %99 = tpu.matmul %96, %98, %cst_49 {dimension_numbers = #tpu.dot_dimension_numbers<[1], [0], [0], [1], [0, 0, 1, 1], [], []>} : vector<128x8xf32>, vector<8x16xf32>, vector<128x16xf32> -> vector<128x16xf32>
    %100 = arith.addf %94, %99 : vector<128x16xf32>
    %101 = vector.extract_strided_slice %15 {offsets = [0, 2, 4, 0], sizes = [2, 8, 8, 8], strides = [1, 1, 1, 1]} : vector<2x12x16x8xf32> to vector<2x8x8x8xf32>
    %102 = vector.shape_cast %101 : vector<2x8x8x8xf32> to vector<128x8xf32>
    %c14 = arith.constant 14 : index
    %c0_50 = arith.constant 0 : index
    %c0_51 = arith.constant 0 : index
    %103 = vector.load %arg3[%c14, %c0_50, %c0_51] : memref<25x8x16xf32, #tpu.memory_space<vmem>>, vector<1x8x16xf32>
    %104 = vector.shape_cast %103 : vector<1x8x16xf32> to vector<8x16xf32>
    %cst_52 = arith.constant dense<0.000000e+00> : vector<128x16xf32>
    %105 = tpu.matmul %102, %104, %cst_52 {dimension_numbers = #tpu.dot_dimension_numbers<[1], [0], [0], [1], [0, 0, 1, 1], [], []>} : vector<128x8xf32>, vector<8x16xf32>, vector<128x16xf32> -> vector<128x16xf32>
    %106 = arith.addf %100, %105 : vector<128x16xf32>
    %107 = vector.extract_strided_slice %15 {offsets = [0, 3, 0, 0], sizes = [2, 8, 8, 8], strides = [1, 1, 1, 1]} : vector<2x12x16x8xf32> to vector<2x8x8x8xf32>
    %108 = vector.shape_cast %107 : vector<2x8x8x8xf32> to vector<128x8xf32>
    %c15 = arith.constant 15 : index
    %c0_53 = arith.constant 0 : index
    %c0_54 = arith.constant 0 : index
    %109 = vector.load %arg3[%c15, %c0_53, %c0_54] : memref<25x8x16xf32, #tpu.memory_space<vmem>>, vector<1x8x16xf32>
    %110 = vector.shape_cast %109 : vector<1x8x16xf32> to vector<8x16xf32>
    %cst_55 = arith.constant dense<0.000000e+00> : vector<128x16xf32>
    %111 = tpu.matmul %108, %110, %cst_55 {dimension_numbers = #tpu.dot_dimension_numbers<[1], [0], [0], [1], [0, 0, 1, 1], [], []>} : vector<128x8xf32>, vector<8x16xf32>, vector<128x16xf32> -> vector<128x16xf32>
    %112 = arith.addf %106, %111 : vector<128x16xf32>
    %113 = vector.extract_strided_slice %15 {offsets = [0, 3, 1, 0], sizes = [2, 8, 8, 8], strides = [1, 1, 1, 1]} : vector<2x12x16x8xf32> to vector<2x8x8x8xf32>
    %114 = vector.shape_cast %113 : vector<2x8x8x8xf32> to vector<128x8xf32>
    %c16 = arith.constant 16 : index
    %c0_56 = arith.constant 0 : index
    %c0_57 = arith.constant 0 : index
    %115 = vector.load %arg3[%c16, %c0_56, %c0_57] : memref<25x8x16xf32, #tpu.memory_space<vmem>>, vector<1x8x16xf32>
    %116 = vector.shape_cast %115 : vector<1x8x16xf32> to vector<8x16xf32>
    %cst_58 = arith.constant dense<0.000000e+00> : vector<128x16xf32>
    %117 = tpu.matmul %114, %116, %cst_58 {dimension_numbers = #tpu.dot_dimension_numbers<[1], [0], [0], [1], [0, 0, 1, 1], [], []>} : vector<128x8xf32>, vector<8x16xf32>, vector<128x16xf32> -> vector<128x16xf32>
    %118 = arith.addf %112, %117 : vector<128x16xf32>
    %119 = vector.extract_strided_slice %15 {offsets = [0, 3, 2, 0], sizes = [2, 8, 8, 8], strides = [1, 1, 1, 1]} : vector<2x12x16x8xf32> to vector<2x8x8x8xf32>
    %120 = vector.shape_cast %119 : vector<2x8x8x8xf32> to vector<128x8xf32>
    %c17 = arith.constant 17 : index
    %c0_59 = arith.constant 0 : index
    %c0_60 = arith.constant 0 : index
    %121 = vector.load %arg3[%c17, %c0_59, %c0_60] : memref<25x8x16xf32, #tpu.memory_space<vmem>>, vector<1x8x16xf32>
    %122 = vector.shape_cast %121 : vector<1x8x16xf32> to vector<8x16xf32>
    %cst_61 = arith.constant dense<0.000000e+00> : vector<128x16xf32>
    %123 = tpu.matmul %120, %122, %cst_61 {dimension_numbers = #tpu.dot_dimension_numbers<[1], [0], [0], [1], [0, 0, 1, 1], [], []>} : vector<128x8xf32>, vector<8x16xf32>, vector<128x16xf32> -> vector<128x16xf32>
    %124 = arith.addf %118, %123 : vector<128x16xf32>
    %125 = vector.extract_strided_slice %15 {offsets = [0, 3, 3, 0], sizes = [2, 8, 8, 8], strides = [1, 1, 1, 1]} : vector<2x12x16x8xf32> to vector<2x8x8x8xf32>
    %126 = vector.shape_cast %125 : vector<2x8x8x8xf32> to vector<128x8xf32>
    %c18 = arith.constant 18 : index
    %c0_62 = arith.constant 0 : index
    %c0_63 = arith.constant 0 : index
    %127 = vector.load %arg3[%c18, %c0_62, %c0_63] : memref<25x8x16xf32, #tpu.memory_space<vmem>>, vector<1x8x16xf32>
    %128 = vector.shape_cast %127 : vector<1x8x16xf32> to vector<8x16xf32>
    %cst_64 = arith.constant dense<0.000000e+00> : vector<128x16xf32>
    %129 = tpu.matmul %126, %128, %cst_64 {dimension_numbers = #tpu.dot_dimension_numbers<[1], [0], [0], [1], [0, 0, 1, 1], [], []>} : vector<128x8xf32>, vector<8x16xf32>, vector<128x16xf32> -> vector<128x16xf32>
    %130 = arith.addf %124, %129 : vector<128x16xf32>
    %131 = vector.extract_strided_slice %15 {offsets = [0, 3, 4, 0], sizes = [2, 8, 8, 8], strides = [1, 1, 1, 1]} : vector<2x12x16x8xf32> to vector<2x8x8x8xf32>
    %132 = vector.shape_cast %131 : vector<2x8x8x8xf32> to vector<128x8xf32>
    %c19 = arith.constant 19 : index
    %c0_65 = arith.constant 0 : index
    %c0_66 = arith.constant 0 : index
    %133 = vector.load %arg3[%c19, %c0_65, %c0_66] : memref<25x8x16xf32, #tpu.memory_space<vmem>>, vector<1x8x16xf32>
    %134 = vector.shape_cast %133 : vector<1x8x16xf32> to vector<8x16xf32>
    %cst_67 = arith.constant dense<0.000000e+00> : vector<128x16xf32>
    %135 = tpu.matmul %132, %134, %cst_67 {dimension_numbers = #tpu.dot_dimension_numbers<[1], [0], [0], [1], [0, 0, 1, 1], [], []>} : vector<128x8xf32>, vector<8x16xf32>, vector<128x16xf32> -> vector<128x16xf32>
    %136 = arith.addf %130, %135 : vector<128x16xf32>
    %137 = vector.extract_strided_slice %15 {offsets = [0, 4, 0, 0], sizes = [2, 8, 8, 8], strides = [1, 1, 1, 1]} : vector<2x12x16x8xf32> to vector<2x8x8x8xf32>
    %138 = vector.shape_cast %137 : vector<2x8x8x8xf32> to vector<128x8xf32>
    %c20 = arith.constant 20 : index
    %c0_68 = arith.constant 0 : index
    %c0_69 = arith.constant 0 : index
    %139 = vector.load %arg3[%c20, %c0_68, %c0_69] : memref<25x8x16xf32, #tpu.memory_space<vmem>>, vector<1x8x16xf32>
    %140 = vector.shape_cast %139 : vector<1x8x16xf32> to vector<8x16xf32>
    %cst_70 = arith.constant dense<0.000000e+00> : vector<128x16xf32>
    %141 = tpu.matmul %138, %140, %cst_70 {dimension_numbers = #tpu.dot_dimension_numbers<[1], [0], [0], [1], [0, 0, 1, 1], [], []>} : vector<128x8xf32>, vector<8x16xf32>, vector<128x16xf32> -> vector<128x16xf32>
    %142 = arith.addf %136, %141 : vector<128x16xf32>
    %143 = vector.extract_strided_slice %15 {offsets = [0, 4, 1, 0], sizes = [2, 8, 8, 8], strides = [1, 1, 1, 1]} : vector<2x12x16x8xf32> to vector<2x8x8x8xf32>
    %144 = vector.shape_cast %143 : vector<2x8x8x8xf32> to vector<128x8xf32>
    %c21 = arith.constant 21 : index
    %c0_71 = arith.constant 0 : index
    %c0_72 = arith.constant 0 : index
    %145 = vector.load %arg3[%c21, %c0_71, %c0_72] : memref<25x8x16xf32, #tpu.memory_space<vmem>>, vector<1x8x16xf32>
    %146 = vector.shape_cast %145 : vector<1x8x16xf32> to vector<8x16xf32>
    %cst_73 = arith.constant dense<0.000000e+00> : vector<128x16xf32>
    %147 = tpu.matmul %144, %146, %cst_73 {dimension_numbers = #tpu.dot_dimension_numbers<[1], [0], [0], [1], [0, 0, 1, 1], [], []>} : vector<128x8xf32>, vector<8x16xf32>, vector<128x16xf32> -> vector<128x16xf32>
    %148 = arith.addf %142, %147 : vector<128x16xf32>
    %149 = vector.extract_strided_slice %15 {offsets = [0, 4, 2, 0], sizes = [2, 8, 8, 8], strides = [1, 1, 1, 1]} : vector<2x12x16x8xf32> to vector<2x8x8x8xf32>
    %150 = vector.shape_cast %149 : vector<2x8x8x8xf32> to vector<128x8xf32>
    %c22 = arith.constant 22 : index
    %c0_74 = arith.constant 0 : index
    %c0_75 = arith.constant 0 : index
    %151 = vector.load %arg3[%c22, %c0_74, %c0_75] : memref<25x8x16xf32, #tpu.memory_space<vmem>>, vector<1x8x16xf32>
    %152 = vector.shape_cast %151 : vector<1x8x16xf32> to vector<8x16xf32>
    %cst_76 = arith.constant dense<0.000000e+00> : vector<128x16xf32>
    %153 = tpu.matmul %150, %152, %cst_76 {dimension_numbers = #tpu.dot_dimension_numbers<[1], [0], [0], [1], [0, 0, 1, 1], [], []>} : vector<128x8xf32>, vector<8x16xf32>, vector<128x16xf32> -> vector<128x16xf32>
    %154 = arith.addf %148, %153 : vector<128x16xf32>
    %155 = vector.extract_strided_slice %15 {offsets = [0, 4, 3, 0], sizes = [2, 8, 8, 8], strides = [1, 1, 1, 1]} : vector<2x12x16x8xf32> to vector<2x8x8x8xf32>
    %156 = vector.shape_cast %155 : vector<2x8x8x8xf32> to vector<128x8xf32>
    %c23 = arith.constant 23 : index
    %c0_77 = arith.constant 0 : index
    %c0_78 = arith.constant 0 : index
    %157 = vector.load %arg3[%c23, %c0_77, %c0_78] : memref<25x8x16xf32, #tpu.memory_space<vmem>>, vector<1x8x16xf32>
    %158 = vector.shape_cast %157 : vector<1x8x16xf32> to vector<8x16xf32>
    %cst_79 = arith.constant dense<0.000000e+00> : vector<128x16xf32>
    %159 = tpu.matmul %156, %158, %cst_79 {dimension_numbers = #tpu.dot_dimension_numbers<[1], [0], [0], [1], [0, 0, 1, 1], [], []>} : vector<128x8xf32>, vector<8x16xf32>, vector<128x16xf32> -> vector<128x16xf32>
    %160 = arith.addf %154, %159 : vector<128x16xf32>
    %161 = vector.extract_strided_slice %15 {offsets = [0, 4, 4, 0], sizes = [2, 8, 8, 8], strides = [1, 1, 1, 1]} : vector<2x12x16x8xf32> to vector<2x8x8x8xf32>
    %162 = vector.shape_cast %161 : vector<2x8x8x8xf32> to vector<128x8xf32>
    %c24 = arith.constant 24 : index
    %c0_80 = arith.constant 0 : index
    %c0_81 = arith.constant 0 : index
    %163 = vector.load %arg3[%c24, %c0_80, %c0_81] : memref<25x8x16xf32, #tpu.memory_space<vmem>>, vector<1x8x16xf32>
    %164 = vector.shape_cast %163 : vector<1x8x16xf32> to vector<8x16xf32>
    %cst_82 = arith.constant dense<0.000000e+00> : vector<128x16xf32>
    %165 = tpu.matmul %162, %164, %cst_82 {dimension_numbers = #tpu.dot_dimension_numbers<[1], [0], [0], [1], [0, 0, 1, 1], [], []>} : vector<128x8xf32>, vector<8x16xf32>, vector<128x16xf32> -> vector<128x16xf32>
    %166 = arith.addf %160, %165 : vector<128x16xf32>
    %167 = vector.shape_cast %166 : vector<128x16xf32> to vector<2x8x8x16xf32>
    %cst_83 = arith.constant 0.000000e+00 : f32
    %168 = vector.broadcast %cst_83 : f32 to vector<2x128xf32>
    %169 = vector.extract_strided_slice %167 {offsets = [0, 0, 0, 0], sizes = [2, 1, 1, 16], strides = [1, 1, 1, 1]} : vector<2x8x8x16xf32> to vector<2x1x1x16xf32>
    %170 = vector.shape_cast %169 : vector<2x1x1x16xf32> to vector<2x16xf32>
    %171 = vector.extract_strided_slice %167 {offsets = [0, 0, 1, 0], sizes = [2, 1, 1, 16], strides = [1, 1, 1, 1]} : vector<2x8x8x16xf32> to vector<2x1x1x16xf32>
    %172 = vector.shape_cast %171 : vector<2x1x1x16xf32> to vector<2x16xf32>
    %173 = arith.maximumf %170, %172 : vector<2x16xf32>
    %174 = vector.extract_strided_slice %167 {offsets = [0, 1, 0, 0], sizes = [2, 1, 1, 16], strides = [1, 1, 1, 1]} : vector<2x8x8x16xf32> to vector<2x1x1x16xf32>
    %175 = vector.shape_cast %174 : vector<2x1x1x16xf32> to vector<2x16xf32>
    %176 = vector.extract_strided_slice %167 {offsets = [0, 1, 1, 0], sizes = [2, 1, 1, 16], strides = [1, 1, 1, 1]} : vector<2x8x8x16xf32> to vector<2x1x1x16xf32>
    %177 = vector.shape_cast %176 : vector<2x1x1x16xf32> to vector<2x16xf32>
    %178 = arith.maximumf %175, %177 : vector<2x16xf32>
    %179 = arith.maximumf %173, %178 : vector<2x16xf32>
    %c0_84 = arith.constant 0 : index
    %c0_85 = arith.constant 0 : index
    %180 = vector.load %arg4[%c0_84, %c0_85] : memref<1x16xf32, #tpu.memory_space<vmem>>, vector<1x16xf32>
    %181 = vector.broadcast %180 : vector<1x16xf32> to vector<2x16xf32>
    %182 = arith.addf %179, %181 : vector<2x16xf32>
    %cst_86 = arith.constant 0.000000e+00 : f32
    %183 = vector.broadcast %cst_86 : f32 to vector<2x16xf32>
    %184 = arith.maximumf %182, %183 : vector<2x16xf32>
    %c0_87 = arith.constant 0 : index
    %c0_88 = arith.constant 0 : index
    %c0_89 = arith.constant 0 : index
    %185 = vector.load %arg5[%c0_87, %c0_88, %c0_89] : memref<16x16x128xf32, #tpu.memory_space<vmem>>, vector<1x16x128xf32>
    %186 = vector.shape_cast %185 : vector<1x16x128xf32> to vector<16x128xf32>
    %cst_90 = arith.constant dense<0.000000e+00> : vector<2x128xf32>
    %187 = tpu.matmul %184, %186, %cst_90 {dimension_numbers = #tpu.dot_dimension_numbers<[1], [0], [0], [1], [0, 0, 1, 1], [], []>} : vector<2x16xf32>, vector<16x128xf32>, vector<2x128xf32> -> vector<2x128xf32>
    %188 = arith.addf %168, %187 : vector<2x128xf32>
    %189 = vector.extract_strided_slice %167 {offsets = [0, 0, 2, 0], sizes = [2, 1, 1, 16], strides = [1, 1, 1, 1]} : vector<2x8x8x16xf32> to vector<2x1x1x16xf32>
    %190 = vector.shape_cast %189 : vector<2x1x1x16xf32> to vector<2x16xf32>
    %191 = vector.extract_strided_slice %167 {offsets = [0, 0, 3, 0], sizes = [2, 1, 1, 16], strides = [1, 1, 1, 1]} : vector<2x8x8x16xf32> to vector<2x1x1x16xf32>
    %192 = vector.shape_cast %191 : vector<2x1x1x16xf32> to vector<2x16xf32>
    %193 = arith.maximumf %190, %192 : vector<2x16xf32>
    %194 = vector.extract_strided_slice %167 {offsets = [0, 1, 2, 0], sizes = [2, 1, 1, 16], strides = [1, 1, 1, 1]} : vector<2x8x8x16xf32> to vector<2x1x1x16xf32>
    %195 = vector.shape_cast %194 : vector<2x1x1x16xf32> to vector<2x16xf32>
    %196 = vector.extract_strided_slice %167 {offsets = [0, 1, 3, 0], sizes = [2, 1, 1, 16], strides = [1, 1, 1, 1]} : vector<2x8x8x16xf32> to vector<2x1x1x16xf32>
    %197 = vector.shape_cast %196 : vector<2x1x1x16xf32> to vector<2x16xf32>
    %198 = arith.maximumf %195, %197 : vector<2x16xf32>
    %199 = arith.maximumf %193, %198 : vector<2x16xf32>
    %c0_91 = arith.constant 0 : index
    %c0_92 = arith.constant 0 : index
    %200 = vector.load %arg4[%c0_91, %c0_92] : memref<1x16xf32, #tpu.memory_space<vmem>>, vector<1x16xf32>
    %201 = vector.broadcast %200 : vector<1x16xf32> to vector<2x16xf32>
    %202 = arith.addf %199, %201 : vector<2x16xf32>
    %cst_93 = arith.constant 0.000000e+00 : f32
    %203 = vector.broadcast %cst_93 : f32 to vector<2x16xf32>
    %204 = arith.maximumf %202, %203 : vector<2x16xf32>
    %c1_94 = arith.constant 1 : index
    %c0_95 = arith.constant 0 : index
    %c0_96 = arith.constant 0 : index
    %205 = vector.load %arg5[%c1_94, %c0_95, %c0_96] : memref<16x16x128xf32, #tpu.memory_space<vmem>>, vector<1x16x128xf32>
    %206 = vector.shape_cast %205 : vector<1x16x128xf32> to vector<16x128xf32>
    %cst_97 = arith.constant dense<0.000000e+00> : vector<2x128xf32>
    %207 = tpu.matmul %204, %206, %cst_97 {dimension_numbers = #tpu.dot_dimension_numbers<[1], [0], [0], [1], [0, 0, 1, 1], [], []>} : vector<2x16xf32>, vector<16x128xf32>, vector<2x128xf32> -> vector<2x128xf32>
    %208 = arith.addf %188, %207 : vector<2x128xf32>
    %209 = vector.extract_strided_slice %167 {offsets = [0, 0, 4, 0], sizes = [2, 1, 1, 16], strides = [1, 1, 1, 1]} : vector<2x8x8x16xf32> to vector<2x1x1x16xf32>
    %210 = vector.shape_cast %209 : vector<2x1x1x16xf32> to vector<2x16xf32>
    %211 = vector.extract_strided_slice %167 {offsets = [0, 0, 5, 0], sizes = [2, 1, 1, 16], strides = [1, 1, 1, 1]} : vector<2x8x8x16xf32> to vector<2x1x1x16xf32>
    %212 = vector.shape_cast %211 : vector<2x1x1x16xf32> to vector<2x16xf32>
    %213 = arith.maximumf %210, %212 : vector<2x16xf32>
    %214 = vector.extract_strided_slice %167 {offsets = [0, 1, 4, 0], sizes = [2, 1, 1, 16], strides = [1, 1, 1, 1]} : vector<2x8x8x16xf32> to vector<2x1x1x16xf32>
    %215 = vector.shape_cast %214 : vector<2x1x1x16xf32> to vector<2x16xf32>
    %216 = vector.extract_strided_slice %167 {offsets = [0, 1, 5, 0], sizes = [2, 1, 1, 16], strides = [1, 1, 1, 1]} : vector<2x8x8x16xf32> to vector<2x1x1x16xf32>
    %217 = vector.shape_cast %216 : vector<2x1x1x16xf32> to vector<2x16xf32>
    %218 = arith.maximumf %215, %217 : vector<2x16xf32>
    %219 = arith.maximumf %213, %218 : vector<2x16xf32>
    %c0_98 = arith.constant 0 : index
    %c0_99 = arith.constant 0 : index
    %220 = vector.load %arg4[%c0_98, %c0_99] : memref<1x16xf32, #tpu.memory_space<vmem>>, vector<1x16xf32>
    %221 = vector.broadcast %220 : vector<1x16xf32> to vector<2x16xf32>
    %222 = arith.addf %219, %221 : vector<2x16xf32>
    %cst_100 = arith.constant 0.000000e+00 : f32
    %223 = vector.broadcast %cst_100 : f32 to vector<2x16xf32>
    %224 = arith.maximumf %222, %223 : vector<2x16xf32>
    %c2_101 = arith.constant 2 : index
    %c0_102 = arith.constant 0 : index
    %c0_103 = arith.constant 0 : index
    %225 = vector.load %arg5[%c2_101, %c0_102, %c0_103] : memref<16x16x128xf32, #tpu.memory_space<vmem>>, vector<1x16x128xf32>
    %226 = vector.shape_cast %225 : vector<1x16x128xf32> to vector<16x128xf32>
    %cst_104 = arith.constant dense<0.000000e+00> : vector<2x128xf32>
    %227 = tpu.matmul %224, %226, %cst_104 {dimension_numbers = #tpu.dot_dimension_numbers<[1], [0], [0], [1], [0, 0, 1, 1], [], []>} : vector<2x16xf32>, vector<16x128xf32>, vector<2x128xf32> -> vector<2x128xf32>
    %228 = arith.addf %208, %227 : vector<2x128xf32>
    %229 = vector.extract_strided_slice %167 {offsets = [0, 0, 6, 0], sizes = [2, 1, 1, 16], strides = [1, 1, 1, 1]} : vector<2x8x8x16xf32> to vector<2x1x1x16xf32>
    %230 = vector.shape_cast %229 : vector<2x1x1x16xf32> to vector<2x16xf32>
    %231 = vector.extract_strided_slice %167 {offsets = [0, 0, 7, 0], sizes = [2, 1, 1, 16], strides = [1, 1, 1, 1]} : vector<2x8x8x16xf32> to vector<2x1x1x16xf32>
    %232 = vector.shape_cast %231 : vector<2x1x1x16xf32> to vector<2x16xf32>
    %233 = arith.maximumf %230, %232 : vector<2x16xf32>
    %234 = vector.extract_strided_slice %167 {offsets = [0, 1, 6, 0], sizes = [2, 1, 1, 16], strides = [1, 1, 1, 1]} : vector<2x8x8x16xf32> to vector<2x1x1x16xf32>
    %235 = vector.shape_cast %234 : vector<2x1x1x16xf32> to vector<2x16xf32>
    %236 = vector.extract_strided_slice %167 {offsets = [0, 1, 7, 0], sizes = [2, 1, 1, 16], strides = [1, 1, 1, 1]} : vector<2x8x8x16xf32> to vector<2x1x1x16xf32>
    %237 = vector.shape_cast %236 : vector<2x1x1x16xf32> to vector<2x16xf32>
    %238 = arith.maximumf %235, %237 : vector<2x16xf32>
    %239 = arith.maximumf %233, %238 : vector<2x16xf32>
    %c0_105 = arith.constant 0 : index
    %c0_106 = arith.constant 0 : index
    %240 = vector.load %arg4[%c0_105, %c0_106] : memref<1x16xf32, #tpu.memory_space<vmem>>, vector<1x16xf32>
    %241 = vector.broadcast %240 : vector<1x16xf32> to vector<2x16xf32>
    %242 = arith.addf %239, %241 : vector<2x16xf32>
    %cst_107 = arith.constant 0.000000e+00 : f32
    %243 = vector.broadcast %cst_107 : f32 to vector<2x16xf32>
    %244 = arith.maximumf %242, %243 : vector<2x16xf32>
    %c3_108 = arith.constant 3 : index
    %c0_109 = arith.constant 0 : index
    %c0_110 = arith.constant 0 : index
    %245 = vector.load %arg5[%c3_108, %c0_109, %c0_110] : memref<16x16x128xf32, #tpu.memory_space<vmem>>, vector<1x16x128xf32>
    %246 = vector.shape_cast %245 : vector<1x16x128xf32> to vector<16x128xf32>
    %cst_111 = arith.constant dense<0.000000e+00> : vector<2x128xf32>
    %247 = tpu.matmul %244, %246, %cst_111 {dimension_numbers = #tpu.dot_dimension_numbers<[1], [0], [0], [1], [0, 0, 1, 1], [], []>} : vector<2x16xf32>, vector<16x128xf32>, vector<2x128xf32> -> vector<2x128xf32>
    %248 = arith.addf %228, %247 : vector<2x128xf32>
    %249 = vector.extract_strided_slice %167 {offsets = [0, 2, 0, 0], sizes = [2, 1, 1, 16], strides = [1, 1, 1, 1]} : vector<2x8x8x16xf32> to vector<2x1x1x16xf32>
    %250 = vector.shape_cast %249 : vector<2x1x1x16xf32> to vector<2x16xf32>
    %251 = vector.extract_strided_slice %167 {offsets = [0, 2, 1, 0], sizes = [2, 1, 1, 16], strides = [1, 1, 1, 1]} : vector<2x8x8x16xf32> to vector<2x1x1x16xf32>
    %252 = vector.shape_cast %251 : vector<2x1x1x16xf32> to vector<2x16xf32>
    %253 = arith.maximumf %250, %252 : vector<2x16xf32>
    %254 = vector.extract_strided_slice %167 {offsets = [0, 3, 0, 0], sizes = [2, 1, 1, 16], strides = [1, 1, 1, 1]} : vector<2x8x8x16xf32> to vector<2x1x1x16xf32>
    %255 = vector.shape_cast %254 : vector<2x1x1x16xf32> to vector<2x16xf32>
    %256 = vector.extract_strided_slice %167 {offsets = [0, 3, 1, 0], sizes = [2, 1, 1, 16], strides = [1, 1, 1, 1]} : vector<2x8x8x16xf32> to vector<2x1x1x16xf32>
    %257 = vector.shape_cast %256 : vector<2x1x1x16xf32> to vector<2x16xf32>
    %258 = arith.maximumf %255, %257 : vector<2x16xf32>
    %259 = arith.maximumf %253, %258 : vector<2x16xf32>
    %c0_112 = arith.constant 0 : index
    %c0_113 = arith.constant 0 : index
    %260 = vector.load %arg4[%c0_112, %c0_113] : memref<1x16xf32, #tpu.memory_space<vmem>>, vector<1x16xf32>
    %261 = vector.broadcast %260 : vector<1x16xf32> to vector<2x16xf32>
    %262 = arith.addf %259, %261 : vector<2x16xf32>
    %cst_114 = arith.constant 0.000000e+00 : f32
    %263 = vector.broadcast %cst_114 : f32 to vector<2x16xf32>
    %264 = arith.maximumf %262, %263 : vector<2x16xf32>
    %c4_115 = arith.constant 4 : index
    %c0_116 = arith.constant 0 : index
    %c0_117 = arith.constant 0 : index
    %265 = vector.load %arg5[%c4_115, %c0_116, %c0_117] : memref<16x16x128xf32, #tpu.memory_space<vmem>>, vector<1x16x128xf32>
    %266 = vector.shape_cast %265 : vector<1x16x128xf32> to vector<16x128xf32>
    %cst_118 = arith.constant dense<0.000000e+00> : vector<2x128xf32>
    %267 = tpu.matmul %264, %266, %cst_118 {dimension_numbers = #tpu.dot_dimension_numbers<[1], [0], [0], [1], [0, 0, 1, 1], [], []>} : vector<2x16xf32>, vector<16x128xf32>, vector<2x128xf32> -> vector<2x128xf32>
    %268 = arith.addf %248, %267 : vector<2x128xf32>
    %269 = vector.extract_strided_slice %167 {offsets = [0, 2, 2, 0], sizes = [2, 1, 1, 16], strides = [1, 1, 1, 1]} : vector<2x8x8x16xf32> to vector<2x1x1x16xf32>
    %270 = vector.shape_cast %269 : vector<2x1x1x16xf32> to vector<2x16xf32>
    %271 = vector.extract_strided_slice %167 {offsets = [0, 2, 3, 0], sizes = [2, 1, 1, 16], strides = [1, 1, 1, 1]} : vector<2x8x8x16xf32> to vector<2x1x1x16xf32>
    %272 = vector.shape_cast %271 : vector<2x1x1x16xf32> to vector<2x16xf32>
    %273 = arith.maximumf %270, %272 : vector<2x16xf32>
    %274 = vector.extract_strided_slice %167 {offsets = [0, 3, 2, 0], sizes = [2, 1, 1, 16], strides = [1, 1, 1, 1]} : vector<2x8x8x16xf32> to vector<2x1x1x16xf32>
    %275 = vector.shape_cast %274 : vector<2x1x1x16xf32> to vector<2x16xf32>
    %276 = vector.extract_strided_slice %167 {offsets = [0, 3, 3, 0], sizes = [2, 1, 1, 16], strides = [1, 1, 1, 1]} : vector<2x8x8x16xf32> to vector<2x1x1x16xf32>
    %277 = vector.shape_cast %276 : vector<2x1x1x16xf32> to vector<2x16xf32>
    %278 = arith.maximumf %275, %277 : vector<2x16xf32>
    %279 = arith.maximumf %273, %278 : vector<2x16xf32>
    %c0_119 = arith.constant 0 : index
    %c0_120 = arith.constant 0 : index
    %280 = vector.load %arg4[%c0_119, %c0_120] : memref<1x16xf32, #tpu.memory_space<vmem>>, vector<1x16xf32>
    %281 = vector.broadcast %280 : vector<1x16xf32> to vector<2x16xf32>
    %282 = arith.addf %279, %281 : vector<2x16xf32>
    %cst_121 = arith.constant 0.000000e+00 : f32
    %283 = vector.broadcast %cst_121 : f32 to vector<2x16xf32>
    %284 = arith.maximumf %282, %283 : vector<2x16xf32>
    %c5_122 = arith.constant 5 : index
    %c0_123 = arith.constant 0 : index
    %c0_124 = arith.constant 0 : index
    %285 = vector.load %arg5[%c5_122, %c0_123, %c0_124] : memref<16x16x128xf32, #tpu.memory_space<vmem>>, vector<1x16x128xf32>
    %286 = vector.shape_cast %285 : vector<1x16x128xf32> to vector<16x128xf32>
    %cst_125 = arith.constant dense<0.000000e+00> : vector<2x128xf32>
    %287 = tpu.matmul %284, %286, %cst_125 {dimension_numbers = #tpu.dot_dimension_numbers<[1], [0], [0], [1], [0, 0, 1, 1], [], []>} : vector<2x16xf32>, vector<16x128xf32>, vector<2x128xf32> -> vector<2x128xf32>
    %288 = arith.addf %268, %287 : vector<2x128xf32>
    %289 = vector.extract_strided_slice %167 {offsets = [0, 2, 4, 0], sizes = [2, 1, 1, 16], strides = [1, 1, 1, 1]} : vector<2x8x8x16xf32> to vector<2x1x1x16xf32>
    %290 = vector.shape_cast %289 : vector<2x1x1x16xf32> to vector<2x16xf32>
    %291 = vector.extract_strided_slice %167 {offsets = [0, 2, 5, 0], sizes = [2, 1, 1, 16], strides = [1, 1, 1, 1]} : vector<2x8x8x16xf32> to vector<2x1x1x16xf32>
    %292 = vector.shape_cast %291 : vector<2x1x1x16xf32> to vector<2x16xf32>
    %293 = arith.maximumf %290, %292 : vector<2x16xf32>
    %294 = vector.extract_strided_slice %167 {offsets = [0, 3, 4, 0], sizes = [2, 1, 1, 16], strides = [1, 1, 1, 1]} : vector<2x8x8x16xf32> to vector<2x1x1x16xf32>
    %295 = vector.shape_cast %294 : vector<2x1x1x16xf32> to vector<2x16xf32>
    %296 = vector.extract_strided_slice %167 {offsets = [0, 3, 5, 0], sizes = [2, 1, 1, 16], strides = [1, 1, 1, 1]} : vector<2x8x8x16xf32> to vector<2x1x1x16xf32>
    %297 = vector.shape_cast %296 : vector<2x1x1x16xf32> to vector<2x16xf32>
    %298 = arith.maximumf %295, %297 : vector<2x16xf32>
    %299 = arith.maximumf %293, %298 : vector<2x16xf32>
    %c0_126 = arith.constant 0 : index
    %c0_127 = arith.constant 0 : index
    %300 = vector.load %arg4[%c0_126, %c0_127] : memref<1x16xf32, #tpu.memory_space<vmem>>, vector<1x16xf32>
    %301 = vector.broadcast %300 : vector<1x16xf32> to vector<2x16xf32>
    %302 = arith.addf %299, %301 : vector<2x16xf32>
    %cst_128 = arith.constant 0.000000e+00 : f32
    %303 = vector.broadcast %cst_128 : f32 to vector<2x16xf32>
    %304 = arith.maximumf %302, %303 : vector<2x16xf32>
    %c6_129 = arith.constant 6 : index
    %c0_130 = arith.constant 0 : index
    %c0_131 = arith.constant 0 : index
    %305 = vector.load %arg5[%c6_129, %c0_130, %c0_131] : memref<16x16x128xf32, #tpu.memory_space<vmem>>, vector<1x16x128xf32>
    %306 = vector.shape_cast %305 : vector<1x16x128xf32> to vector<16x128xf32>
    %cst_132 = arith.constant dense<0.000000e+00> : vector<2x128xf32>
    %307 = tpu.matmul %304, %306, %cst_132 {dimension_numbers = #tpu.dot_dimension_numbers<[1], [0], [0], [1], [0, 0, 1, 1], [], []>} : vector<2x16xf32>, vector<16x128xf32>, vector<2x128xf32> -> vector<2x128xf32>
    %308 = arith.addf %288, %307 : vector<2x128xf32>
    %309 = vector.extract_strided_slice %167 {offsets = [0, 2, 6, 0], sizes = [2, 1, 1, 16], strides = [1, 1, 1, 1]} : vector<2x8x8x16xf32> to vector<2x1x1x16xf32>
    %310 = vector.shape_cast %309 : vector<2x1x1x16xf32> to vector<2x16xf32>
    %311 = vector.extract_strided_slice %167 {offsets = [0, 2, 7, 0], sizes = [2, 1, 1, 16], strides = [1, 1, 1, 1]} : vector<2x8x8x16xf32> to vector<2x1x1x16xf32>
    %312 = vector.shape_cast %311 : vector<2x1x1x16xf32> to vector<2x16xf32>
    %313 = arith.maximumf %310, %312 : vector<2x16xf32>
    %314 = vector.extract_strided_slice %167 {offsets = [0, 3, 6, 0], sizes = [2, 1, 1, 16], strides = [1, 1, 1, 1]} : vector<2x8x8x16xf32> to vector<2x1x1x16xf32>
    %315 = vector.shape_cast %314 : vector<2x1x1x16xf32> to vector<2x16xf32>
    %316 = vector.extract_strided_slice %167 {offsets = [0, 3, 7, 0], sizes = [2, 1, 1, 16], strides = [1, 1, 1, 1]} : vector<2x8x8x16xf32> to vector<2x1x1x16xf32>
    %317 = vector.shape_cast %316 : vector<2x1x1x16xf32> to vector<2x16xf32>
    %318 = arith.maximumf %315, %317 : vector<2x16xf32>
    %319 = arith.maximumf %313, %318 : vector<2x16xf32>
    %c0_133 = arith.constant 0 : index
    %c0_134 = arith.constant 0 : index
    %320 = vector.load %arg4[%c0_133, %c0_134] : memref<1x16xf32, #tpu.memory_space<vmem>>, vector<1x16xf32>
    %321 = vector.broadcast %320 : vector<1x16xf32> to vector<2x16xf32>
    %322 = arith.addf %319, %321 : vector<2x16xf32>
    %cst_135 = arith.constant 0.000000e+00 : f32
    %323 = vector.broadcast %cst_135 : f32 to vector<2x16xf32>
    %324 = arith.maximumf %322, %323 : vector<2x16xf32>
    %c7_136 = arith.constant 7 : index
    %c0_137 = arith.constant 0 : index
    %c0_138 = arith.constant 0 : index
    %325 = vector.load %arg5[%c7_136, %c0_137, %c0_138] : memref<16x16x128xf32, #tpu.memory_space<vmem>>, vector<1x16x128xf32>
    %326 = vector.shape_cast %325 : vector<1x16x128xf32> to vector<16x128xf32>
    %cst_139 = arith.constant dense<0.000000e+00> : vector<2x128xf32>
    %327 = tpu.matmul %324, %326, %cst_139 {dimension_numbers = #tpu.dot_dimension_numbers<[1], [0], [0], [1], [0, 0, 1, 1], [], []>} : vector<2x16xf32>, vector<16x128xf32>, vector<2x128xf32> -> vector<2x128xf32>
    %328 = arith.addf %308, %327 : vector<2x128xf32>
    %329 = vector.extract_strided_slice %167 {offsets = [0, 4, 0, 0], sizes = [2, 1, 1, 16], strides = [1, 1, 1, 1]} : vector<2x8x8x16xf32> to vector<2x1x1x16xf32>
    %330 = vector.shape_cast %329 : vector<2x1x1x16xf32> to vector<2x16xf32>
    %331 = vector.extract_strided_slice %167 {offsets = [0, 4, 1, 0], sizes = [2, 1, 1, 16], strides = [1, 1, 1, 1]} : vector<2x8x8x16xf32> to vector<2x1x1x16xf32>
    %332 = vector.shape_cast %331 : vector<2x1x1x16xf32> to vector<2x16xf32>
    %333 = arith.maximumf %330, %332 : vector<2x16xf32>
    %334 = vector.extract_strided_slice %167 {offsets = [0, 5, 0, 0], sizes = [2, 1, 1, 16], strides = [1, 1, 1, 1]} : vector<2x8x8x16xf32> to vector<2x1x1x16xf32>
    %335 = vector.shape_cast %334 : vector<2x1x1x16xf32> to vector<2x16xf32>
    %336 = vector.extract_strided_slice %167 {offsets = [0, 5, 1, 0], sizes = [2, 1, 1, 16], strides = [1, 1, 1, 1]} : vector<2x8x8x16xf32> to vector<2x1x1x16xf32>
    %337 = vector.shape_cast %336 : vector<2x1x1x16xf32> to vector<2x16xf32>
    %338 = arith.maximumf %335, %337 : vector<2x16xf32>
    %339 = arith.maximumf %333, %338 : vector<2x16xf32>
    %c0_140 = arith.constant 0 : index
    %c0_141 = arith.constant 0 : index
    %340 = vector.load %arg4[%c0_140, %c0_141] : memref<1x16xf32, #tpu.memory_space<vmem>>, vector<1x16xf32>
    %341 = vector.broadcast %340 : vector<1x16xf32> to vector<2x16xf32>
    %342 = arith.addf %339, %341 : vector<2x16xf32>
    %cst_142 = arith.constant 0.000000e+00 : f32
    %343 = vector.broadcast %cst_142 : f32 to vector<2x16xf32>
    %344 = arith.maximumf %342, %343 : vector<2x16xf32>
    %c8_143 = arith.constant 8 : index
    %c0_144 = arith.constant 0 : index
    %c0_145 = arith.constant 0 : index
    %345 = vector.load %arg5[%c8_143, %c0_144, %c0_145] : memref<16x16x128xf32, #tpu.memory_space<vmem>>, vector<1x16x128xf32>
    %346 = vector.shape_cast %345 : vector<1x16x128xf32> to vector<16x128xf32>
    %cst_146 = arith.constant dense<0.000000e+00> : vector<2x128xf32>
    %347 = tpu.matmul %344, %346, %cst_146 {dimension_numbers = #tpu.dot_dimension_numbers<[1], [0], [0], [1], [0, 0, 1, 1], [], []>} : vector<2x16xf32>, vector<16x128xf32>, vector<2x128xf32> -> vector<2x128xf32>
    %348 = arith.addf %328, %347 : vector<2x128xf32>
    %349 = vector.extract_strided_slice %167 {offsets = [0, 4, 2, 0], sizes = [2, 1, 1, 16], strides = [1, 1, 1, 1]} : vector<2x8x8x16xf32> to vector<2x1x1x16xf32>
    %350 = vector.shape_cast %349 : vector<2x1x1x16xf32> to vector<2x16xf32>
    %351 = vector.extract_strided_slice %167 {offsets = [0, 4, 3, 0], sizes = [2, 1, 1, 16], strides = [1, 1, 1, 1]} : vector<2x8x8x16xf32> to vector<2x1x1x16xf32>
    %352 = vector.shape_cast %351 : vector<2x1x1x16xf32> to vector<2x16xf32>
    %353 = arith.maximumf %350, %352 : vector<2x16xf32>
    %354 = vector.extract_strided_slice %167 {offsets = [0, 5, 2, 0], sizes = [2, 1, 1, 16], strides = [1, 1, 1, 1]} : vector<2x8x8x16xf32> to vector<2x1x1x16xf32>
    %355 = vector.shape_cast %354 : vector<2x1x1x16xf32> to vector<2x16xf32>
    %356 = vector.extract_strided_slice %167 {offsets = [0, 5, 3, 0], sizes = [2, 1, 1, 16], strides = [1, 1, 1, 1]} : vector<2x8x8x16xf32> to vector<2x1x1x16xf32>
    %357 = vector.shape_cast %356 : vector<2x1x1x16xf32> to vector<2x16xf32>
    %358 = arith.maximumf %355, %357 : vector<2x16xf32>
    %359 = arith.maximumf %353, %358 : vector<2x16xf32>
    %c0_147 = arith.constant 0 : index
    %c0_148 = arith.constant 0 : index
    %360 = vector.load %arg4[%c0_147, %c0_148] : memref<1x16xf32, #tpu.memory_space<vmem>>, vector<1x16xf32>
    %361 = vector.broadcast %360 : vector<1x16xf32> to vector<2x16xf32>
    %362 = arith.addf %359, %361 : vector<2x16xf32>
    %cst_149 = arith.constant 0.000000e+00 : f32
    %363 = vector.broadcast %cst_149 : f32 to vector<2x16xf32>
    %364 = arith.maximumf %362, %363 : vector<2x16xf32>
    %c9_150 = arith.constant 9 : index
    %c0_151 = arith.constant 0 : index
    %c0_152 = arith.constant 0 : index
    %365 = vector.load %arg5[%c9_150, %c0_151, %c0_152] : memref<16x16x128xf32, #tpu.memory_space<vmem>>, vector<1x16x128xf32>
    %366 = vector.shape_cast %365 : vector<1x16x128xf32> to vector<16x128xf32>
    %cst_153 = arith.constant dense<0.000000e+00> : vector<2x128xf32>
    %367 = tpu.matmul %364, %366, %cst_153 {dimension_numbers = #tpu.dot_dimension_numbers<[1], [0], [0], [1], [0, 0, 1, 1], [], []>} : vector<2x16xf32>, vector<16x128xf32>, vector<2x128xf32> -> vector<2x128xf32>
    %368 = arith.addf %348, %367 : vector<2x128xf32>
    %369 = vector.extract_strided_slice %167 {offsets = [0, 4, 4, 0], sizes = [2, 1, 1, 16], strides = [1, 1, 1, 1]} : vector<2x8x8x16xf32> to vector<2x1x1x16xf32>
    %370 = vector.shape_cast %369 : vector<2x1x1x16xf32> to vector<2x16xf32>
    %371 = vector.extract_strided_slice %167 {offsets = [0, 4, 5, 0], sizes = [2, 1, 1, 16], strides = [1, 1, 1, 1]} : vector<2x8x8x16xf32> to vector<2x1x1x16xf32>
    %372 = vector.shape_cast %371 : vector<2x1x1x16xf32> to vector<2x16xf32>
    %373 = arith.maximumf %370, %372 : vector<2x16xf32>
    %374 = vector.extract_strided_slice %167 {offsets = [0, 5, 4, 0], sizes = [2, 1, 1, 16], strides = [1, 1, 1, 1]} : vector<2x8x8x16xf32> to vector<2x1x1x16xf32>
    %375 = vector.shape_cast %374 : vector<2x1x1x16xf32> to vector<2x16xf32>
    %376 = vector.extract_strided_slice %167 {offsets = [0, 5, 5, 0], sizes = [2, 1, 1, 16], strides = [1, 1, 1, 1]} : vector<2x8x8x16xf32> to vector<2x1x1x16xf32>
    %377 = vector.shape_cast %376 : vector<2x1x1x16xf32> to vector<2x16xf32>
    %378 = arith.maximumf %375, %377 : vector<2x16xf32>
    %379 = arith.maximumf %373, %378 : vector<2x16xf32>
    %c0_154 = arith.constant 0 : index
    %c0_155 = arith.constant 0 : index
    %380 = vector.load %arg4[%c0_154, %c0_155] : memref<1x16xf32, #tpu.memory_space<vmem>>, vector<1x16xf32>
    %381 = vector.broadcast %380 : vector<1x16xf32> to vector<2x16xf32>
    %382 = arith.addf %379, %381 : vector<2x16xf32>
    %cst_156 = arith.constant 0.000000e+00 : f32
    %383 = vector.broadcast %cst_156 : f32 to vector<2x16xf32>
    %384 = arith.maximumf %382, %383 : vector<2x16xf32>
    %c10_157 = arith.constant 10 : index
    %c0_158 = arith.constant 0 : index
    %c0_159 = arith.constant 0 : index
    %385 = vector.load %arg5[%c10_157, %c0_158, %c0_159] : memref<16x16x128xf32, #tpu.memory_space<vmem>>, vector<1x16x128xf32>
    %386 = vector.shape_cast %385 : vector<1x16x128xf32> to vector<16x128xf32>
    %cst_160 = arith.constant dense<0.000000e+00> : vector<2x128xf32>
    %387 = tpu.matmul %384, %386, %cst_160 {dimension_numbers = #tpu.dot_dimension_numbers<[1], [0], [0], [1], [0, 0, 1, 1], [], []>} : vector<2x16xf32>, vector<16x128xf32>, vector<2x128xf32> -> vector<2x128xf32>
    %388 = arith.addf %368, %387 : vector<2x128xf32>
    %389 = vector.extract_strided_slice %167 {offsets = [0, 4, 6, 0], sizes = [2, 1, 1, 16], strides = [1, 1, 1, 1]} : vector<2x8x8x16xf32> to vector<2x1x1x16xf32>
    %390 = vector.shape_cast %389 : vector<2x1x1x16xf32> to vector<2x16xf32>
    %391 = vector.extract_strided_slice %167 {offsets = [0, 4, 7, 0], sizes = [2, 1, 1, 16], strides = [1, 1, 1, 1]} : vector<2x8x8x16xf32> to vector<2x1x1x16xf32>
    %392 = vector.shape_cast %391 : vector<2x1x1x16xf32> to vector<2x16xf32>
    %393 = arith.maximumf %390, %392 : vector<2x16xf32>
    %394 = vector.extract_strided_slice %167 {offsets = [0, 5, 6, 0], sizes = [2, 1, 1, 16], strides = [1, 1, 1, 1]} : vector<2x8x8x16xf32> to vector<2x1x1x16xf32>
    %395 = vector.shape_cast %394 : vector<2x1x1x16xf32> to vector<2x16xf32>
    %396 = vector.extract_strided_slice %167 {offsets = [0, 5, 7, 0], sizes = [2, 1, 1, 16], strides = [1, 1, 1, 1]} : vector<2x8x8x16xf32> to vector<2x1x1x16xf32>
    %397 = vector.shape_cast %396 : vector<2x1x1x16xf32> to vector<2x16xf32>
    %398 = arith.maximumf %395, %397 : vector<2x16xf32>
    %399 = arith.maximumf %393, %398 : vector<2x16xf32>
    %c0_161 = arith.constant 0 : index
    %c0_162 = arith.constant 0 : index
    %400 = vector.load %arg4[%c0_161, %c0_162] : memref<1x16xf32, #tpu.memory_space<vmem>>, vector<1x16xf32>
    %401 = vector.broadcast %400 : vector<1x16xf32> to vector<2x16xf32>
    %402 = arith.addf %399, %401 : vector<2x16xf32>
    %cst_163 = arith.constant 0.000000e+00 : f32
    %403 = vector.broadcast %cst_163 : f32 to vector<2x16xf32>
    %404 = arith.maximumf %402, %403 : vector<2x16xf32>
    %c11_164 = arith.constant 11 : index
    %c0_165 = arith.constant 0 : index
    %c0_166 = arith.constant 0 : index
    %405 = vector.load %arg5[%c11_164, %c0_165, %c0_166] : memref<16x16x128xf32, #tpu.memory_space<vmem>>, vector<1x16x128xf32>
    %406 = vector.shape_cast %405 : vector<1x16x128xf32> to vector<16x128xf32>
    %cst_167 = arith.constant dense<0.000000e+00> : vector<2x128xf32>
    %407 = tpu.matmul %404, %406, %cst_167 {dimension_numbers = #tpu.dot_dimension_numbers<[1], [0], [0], [1], [0, 0, 1, 1], [], []>} : vector<2x16xf32>, vector<16x128xf32>, vector<2x128xf32> -> vector<2x128xf32>
    %408 = arith.addf %388, %407 : vector<2x128xf32>
    %409 = vector.extract_strided_slice %167 {offsets = [0, 6, 0, 0], sizes = [2, 1, 1, 16], strides = [1, 1, 1, 1]} : vector<2x8x8x16xf32> to vector<2x1x1x16xf32>
    %410 = vector.shape_cast %409 : vector<2x1x1x16xf32> to vector<2x16xf32>
    %411 = vector.extract_strided_slice %167 {offsets = [0, 6, 1, 0], sizes = [2, 1, 1, 16], strides = [1, 1, 1, 1]} : vector<2x8x8x16xf32> to vector<2x1x1x16xf32>
    %412 = vector.shape_cast %411 : vector<2x1x1x16xf32> to vector<2x16xf32>
    %413 = arith.maximumf %410, %412 : vector<2x16xf32>
    %414 = vector.extract_strided_slice %167 {offsets = [0, 7, 0, 0], sizes = [2, 1, 1, 16], strides = [1, 1, 1, 1]} : vector<2x8x8x16xf32> to vector<2x1x1x16xf32>
    %415 = vector.shape_cast %414 : vector<2x1x1x16xf32> to vector<2x16xf32>
    %416 = vector.extract_strided_slice %167 {offsets = [0, 7, 1, 0], sizes = [2, 1, 1, 16], strides = [1, 1, 1, 1]} : vector<2x8x8x16xf32> to vector<2x1x1x16xf32>
    %417 = vector.shape_cast %416 : vector<2x1x1x16xf32> to vector<2x16xf32>
    %418 = arith.maximumf %415, %417 : vector<2x16xf32>
    %419 = arith.maximumf %413, %418 : vector<2x16xf32>
    %c0_168 = arith.constant 0 : index
    %c0_169 = arith.constant 0 : index
    %420 = vector.load %arg4[%c0_168, %c0_169] : memref<1x16xf32, #tpu.memory_space<vmem>>, vector<1x16xf32>
    %421 = vector.broadcast %420 : vector<1x16xf32> to vector<2x16xf32>
    %422 = arith.addf %419, %421 : vector<2x16xf32>
    %cst_170 = arith.constant 0.000000e+00 : f32
    %423 = vector.broadcast %cst_170 : f32 to vector<2x16xf32>
    %424 = arith.maximumf %422, %423 : vector<2x16xf32>
    %c12_171 = arith.constant 12 : index
    %c0_172 = arith.constant 0 : index
    %c0_173 = arith.constant 0 : index
    %425 = vector.load %arg5[%c12_171, %c0_172, %c0_173] : memref<16x16x128xf32, #tpu.memory_space<vmem>>, vector<1x16x128xf32>
    %426 = vector.shape_cast %425 : vector<1x16x128xf32> to vector<16x128xf32>
    %cst_174 = arith.constant dense<0.000000e+00> : vector<2x128xf32>
    %427 = tpu.matmul %424, %426, %cst_174 {dimension_numbers = #tpu.dot_dimension_numbers<[1], [0], [0], [1], [0, 0, 1, 1], [], []>} : vector<2x16xf32>, vector<16x128xf32>, vector<2x128xf32> -> vector<2x128xf32>
    %428 = arith.addf %408, %427 : vector<2x128xf32>
    %429 = vector.extract_strided_slice %167 {offsets = [0, 6, 2, 0], sizes = [2, 1, 1, 16], strides = [1, 1, 1, 1]} : vector<2x8x8x16xf32> to vector<2x1x1x16xf32>
    %430 = vector.shape_cast %429 : vector<2x1x1x16xf32> to vector<2x16xf32>
    %431 = vector.extract_strided_slice %167 {offsets = [0, 6, 3, 0], sizes = [2, 1, 1, 16], strides = [1, 1, 1, 1]} : vector<2x8x8x16xf32> to vector<2x1x1x16xf32>
    %432 = vector.shape_cast %431 : vector<2x1x1x16xf32> to vector<2x16xf32>
    %433 = arith.maximumf %430, %432 : vector<2x16xf32>
    %434 = vector.extract_strided_slice %167 {offsets = [0, 7, 2, 0], sizes = [2, 1, 1, 16], strides = [1, 1, 1, 1]} : vector<2x8x8x16xf32> to vector<2x1x1x16xf32>
    %435 = vector.shape_cast %434 : vector<2x1x1x16xf32> to vector<2x16xf32>
    %436 = vector.extract_strided_slice %167 {offsets = [0, 7, 3, 0], sizes = [2, 1, 1, 16], strides = [1, 1, 1, 1]} : vector<2x8x8x16xf32> to vector<2x1x1x16xf32>
    %437 = vector.shape_cast %436 : vector<2x1x1x16xf32> to vector<2x16xf32>
    %438 = arith.maximumf %435, %437 : vector<2x16xf32>
    %439 = arith.maximumf %433, %438 : vector<2x16xf32>
    %c0_175 = arith.constant 0 : index
    %c0_176 = arith.constant 0 : index
    %440 = vector.load %arg4[%c0_175, %c0_176] : memref<1x16xf32, #tpu.memory_space<vmem>>, vector<1x16xf32>
    %441 = vector.broadcast %440 : vector<1x16xf32> to vector<2x16xf32>
    %442 = arith.addf %439, %441 : vector<2x16xf32>
    %cst_177 = arith.constant 0.000000e+00 : f32
    %443 = vector.broadcast %cst_177 : f32 to vector<2x16xf32>
    %444 = arith.maximumf %442, %443 : vector<2x16xf32>
    %c13_178 = arith.constant 13 : index
    %c0_179 = arith.constant 0 : index
    %c0_180 = arith.constant 0 : index
    %445 = vector.load %arg5[%c13_178, %c0_179, %c0_180] : memref<16x16x128xf32, #tpu.memory_space<vmem>>, vector<1x16x128xf32>
    %446 = vector.shape_cast %445 : vector<1x16x128xf32> to vector<16x128xf32>
    %cst_181 = arith.constant dense<0.000000e+00> : vector<2x128xf32>
    %447 = tpu.matmul %444, %446, %cst_181 {dimension_numbers = #tpu.dot_dimension_numbers<[1], [0], [0], [1], [0, 0, 1, 1], [], []>} : vector<2x16xf32>, vector<16x128xf32>, vector<2x128xf32> -> vector<2x128xf32>
    %448 = arith.addf %428, %447 : vector<2x128xf32>
    %449 = vector.extract_strided_slice %167 {offsets = [0, 6, 4, 0], sizes = [2, 1, 1, 16], strides = [1, 1, 1, 1]} : vector<2x8x8x16xf32> to vector<2x1x1x16xf32>
    %450 = vector.shape_cast %449 : vector<2x1x1x16xf32> to vector<2x16xf32>
    %451 = vector.extract_strided_slice %167 {offsets = [0, 6, 5, 0], sizes = [2, 1, 1, 16], strides = [1, 1, 1, 1]} : vector<2x8x8x16xf32> to vector<2x1x1x16xf32>
    %452 = vector.shape_cast %451 : vector<2x1x1x16xf32> to vector<2x16xf32>
    %453 = arith.maximumf %450, %452 : vector<2x16xf32>
    %454 = vector.extract_strided_slice %167 {offsets = [0, 7, 4, 0], sizes = [2, 1, 1, 16], strides = [1, 1, 1, 1]} : vector<2x8x8x16xf32> to vector<2x1x1x16xf32>
    %455 = vector.shape_cast %454 : vector<2x1x1x16xf32> to vector<2x16xf32>
    %456 = vector.extract_strided_slice %167 {offsets = [0, 7, 5, 0], sizes = [2, 1, 1, 16], strides = [1, 1, 1, 1]} : vector<2x8x8x16xf32> to vector<2x1x1x16xf32>
    %457 = vector.shape_cast %456 : vector<2x1x1x16xf32> to vector<2x16xf32>
    %458 = arith.maximumf %455, %457 : vector<2x16xf32>
    %459 = arith.maximumf %453, %458 : vector<2x16xf32>
    %c0_182 = arith.constant 0 : index
    %c0_183 = arith.constant 0 : index
    %460 = vector.load %arg4[%c0_182, %c0_183] : memref<1x16xf32, #tpu.memory_space<vmem>>, vector<1x16xf32>
    %461 = vector.broadcast %460 : vector<1x16xf32> to vector<2x16xf32>
    %462 = arith.addf %459, %461 : vector<2x16xf32>
    %cst_184 = arith.constant 0.000000e+00 : f32
    %463 = vector.broadcast %cst_184 : f32 to vector<2x16xf32>
    %464 = arith.maximumf %462, %463 : vector<2x16xf32>
    %c14_185 = arith.constant 14 : index
    %c0_186 = arith.constant 0 : index
    %c0_187 = arith.constant 0 : index
    %465 = vector.load %arg5[%c14_185, %c0_186, %c0_187] : memref<16x16x128xf32, #tpu.memory_space<vmem>>, vector<1x16x128xf32>
    %466 = vector.shape_cast %465 : vector<1x16x128xf32> to vector<16x128xf32>
    %cst_188 = arith.constant dense<0.000000e+00> : vector<2x128xf32>
    %467 = tpu.matmul %464, %466, %cst_188 {dimension_numbers = #tpu.dot_dimension_numbers<[1], [0], [0], [1], [0, 0, 1, 1], [], []>} : vector<2x16xf32>, vector<16x128xf32>, vector<2x128xf32> -> vector<2x128xf32>
    %468 = arith.addf %448, %467 : vector<2x128xf32>
    %469 = vector.extract_strided_slice %167 {offsets = [0, 6, 6, 0], sizes = [2, 1, 1, 16], strides = [1, 1, 1, 1]} : vector<2x8x8x16xf32> to vector<2x1x1x16xf32>
    %470 = vector.shape_cast %469 : vector<2x1x1x16xf32> to vector<2x16xf32>
    %471 = vector.extract_strided_slice %167 {offsets = [0, 6, 7, 0], sizes = [2, 1, 1, 16], strides = [1, 1, 1, 1]} : vector<2x8x8x16xf32> to vector<2x1x1x16xf32>
    %472 = vector.shape_cast %471 : vector<2x1x1x16xf32> to vector<2x16xf32>
    %473 = arith.maximumf %470, %472 : vector<2x16xf32>
    %474 = vector.extract_strided_slice %167 {offsets = [0, 7, 6, 0], sizes = [2, 1, 1, 16], strides = [1, 1, 1, 1]} : vector<2x8x8x16xf32> to vector<2x1x1x16xf32>
    %475 = vector.shape_cast %474 : vector<2x1x1x16xf32> to vector<2x16xf32>
    %476 = vector.extract_strided_slice %167 {offsets = [0, 7, 7, 0], sizes = [2, 1, 1, 16], strides = [1, 1, 1, 1]} : vector<2x8x8x16xf32> to vector<2x1x1x16xf32>
    %477 = vector.shape_cast %476 : vector<2x1x1x16xf32> to vector<2x16xf32>
    %478 = arith.maximumf %475, %477 : vector<2x16xf32>
    %479 = arith.maximumf %473, %478 : vector<2x16xf32>
    %c0_189 = arith.constant 0 : index
    %c0_190 = arith.constant 0 : index
    %480 = vector.load %arg4[%c0_189, %c0_190] : memref<1x16xf32, #tpu.memory_space<vmem>>, vector<1x16xf32>
    %481 = vector.broadcast %480 : vector<1x16xf32> to vector<2x16xf32>
    %482 = arith.addf %479, %481 : vector<2x16xf32>
    %cst_191 = arith.constant 0.000000e+00 : f32
    %483 = vector.broadcast %cst_191 : f32 to vector<2x16xf32>
    %484 = arith.maximumf %482, %483 : vector<2x16xf32>
    %c15_192 = arith.constant 15 : index
    %c0_193 = arith.constant 0 : index
    %c0_194 = arith.constant 0 : index
    %485 = vector.load %arg5[%c15_192, %c0_193, %c0_194] : memref<16x16x128xf32, #tpu.memory_space<vmem>>, vector<1x16x128xf32>
    %486 = vector.shape_cast %485 : vector<1x16x128xf32> to vector<16x128xf32>
    %cst_195 = arith.constant dense<0.000000e+00> : vector<2x128xf32>
    %487 = tpu.matmul %484, %486, %cst_195 {dimension_numbers = #tpu.dot_dimension_numbers<[1], [0], [0], [1], [0, 0, 1, 1], [], []>} : vector<2x16xf32>, vector<16x128xf32>, vector<2x128xf32> -> vector<2x128xf32>
    %488 = arith.addf %468, %487 : vector<2x128xf32>
    %c0_196 = arith.constant 0 : index
    %c0_197 = arith.constant 0 : index
    %489 = vector.load %arg6[%c0_196, %c0_197] : memref<1x128xf32, #tpu.memory_space<vmem>>, vector<1x128xf32>
    %490 = vector.broadcast %489 : vector<1x128xf32> to vector<2x128xf32>
    %491 = arith.addf %488, %490 : vector<2x128xf32>
    %cst_198 = arith.constant 0.000000e+00 : f32
    %492 = vector.broadcast %cst_198 : f32 to vector<2x128xf32>
    %493 = arith.maximumf %491, %492 : vector<2x128xf32>
    %c0_199 = arith.constant 0 : index
    %c0_200 = arith.constant 0 : index
    %494 = vector.load %arg7[%c0_199, %c0_200] : memref<128x128xf32, #tpu.memory_space<vmem>>, vector<128x128xf32>
    %cst_201 = arith.constant dense<0.000000e+00> : vector<2x128xf32>
    %495 = tpu.matmul %493, %494, %cst_201 {dimension_numbers = #tpu.dot_dimension_numbers<[1], [0], [0], [1], [0, 0, 1, 1], [], []>} : vector<2x128xf32>, vector<128x128xf32>, vector<2x128xf32> -> vector<2x128xf32>
    %c0_202 = arith.constant 0 : index
    %c0_203 = arith.constant 0 : index
    %496 = vector.load %arg8[%c0_202, %c0_203] : memref<1x128xf32, #tpu.memory_space<vmem>>, vector<1x128xf32>
    %497 = vector.broadcast %496 : vector<1x128xf32> to vector<2x128xf32>
    %498 = arith.addf %495, %497 : vector<2x128xf32>
    %cst_204 = arith.constant 0.000000e+00 : f32
    %499 = vector.broadcast %cst_204 : f32 to vector<2x128xf32>
    %500 = arith.maximumf %498, %499 : vector<2x128xf32>
    %c0_205 = arith.constant 0 : index
    %c0_206 = arith.constant 0 : index
    %501 = vector.load %arg9[%c0_205, %c0_206] : memref<128x128xf32, #tpu.memory_space<vmem>>, vector<128x128xf32>
    %cst_207 = arith.constant dense<0.000000e+00> : vector<2x128xf32>
    %502 = tpu.matmul %500, %501, %cst_207 {dimension_numbers = #tpu.dot_dimension_numbers<[1], [0], [0], [1], [0, 0, 1, 1], [], []>} : vector<2x128xf32>, vector<128x128xf32>, vector<2x128xf32> -> vector<2x128xf32>
    %c0_208 = arith.constant 0 : index
    %c0_209 = arith.constant 0 : index
    %503 = vector.load %arg10[%c0_208, %c0_209] : memref<1x128xf32, #tpu.memory_space<vmem>>, vector<1x128xf32>
    %504 = vector.broadcast %503 : vector<1x128xf32> to vector<2x128xf32>
    %505 = arith.addf %502, %504 : vector<2x128xf32>
    %c0_210 = arith.constant 0 : index
    %c0_211 = arith.constant 0 : index
    %506 = vector.load %arg11[%c0_210, %c0_211] : memref<2x128xf32, #tpu.memory_space<vmem>>, vector<2x128xf32>
    tpu.vector_store %arg11[%c0_210, %c0_211], %505 {strides = array<i32>} : memref<2x128xf32, #tpu.memory_space<vmem>>, vector<2x128xf32>,
    return
  }
}

</mosaic_0001>

<llo_original>
// kernel: net_forward.1
$region0: #{net_forward.1}
  #allocation0 [shape = 'u32[]', space=smem, size = 0x4, offset = 0x4, fixed_abs, tag = 'smem constant byte address 0x4 - core index']
  #allocation1 [shape = 'u32[144,128]{1,0:T(1,128)}', space=vmem, size = 0x12000, scoped, tag = 'internal scratch']
  %s0 = inlined_call_operand.vmem [shape: f32[1536,32], index: 0, kind: input, shape index: {}]
  %s1 = inlined_call_operand.vmem [shape: f32[32,8], index: 1, kind: input, shape index: {}]
  %s2 = inlined_call_operand.vmem [shape: f32[1,8], index: 2, kind: input, shape index: {}]
  %s3 = inlined_call_operand.vmem [shape: f32[25,8,16], index: 3, kind: input, shape index: {}]
  %s4 = inlined_call_operand.vmem [shape: f32[1,16], index: 4, kind: input, shape index: {}]
  %s5 = inlined_call_operand.vmem [shape: f32[16,16,128], index: 5, kind: input, shape index: {}]
  %s6 = inlined_call_operand.vmem [shape: f32[1,128], index: 6, kind: input, shape index: {}]
  %s7 = inlined_call_operand.vmem [shape: f32[128,128], index: 7, kind: input, shape index: {}]
  %s8 = inlined_call_operand.vmem [shape: f32[1,128], index: 8, kind: input, shape index: {}]
  %s9 = inlined_call_operand.vmem [shape: f32[128,128], index: 9, kind: input, shape index: {}]
  %s10 = inlined_call_operand.vmem [shape: f32[1,128], index: 10, kind: input, shape index: {}]
  %s11 = inlined_call_operand.hbm [shape: f32[2,128], index: 11, kind: output, shape index: {}]
  %s12 = sld [smem:[#allocation0]]
  $region54: #{net_forward.1} parent=0
    _
  %s14 = ssub.s32 1, %s12
  %s15 = scalar_select 0, %s14, %s12
  $region1: #{net_forward.1} parent=0
    #allocation2 [shape = 'u8[1024]{0}', space=vmem, size = 0x400, scoped, tag = 'output window, operand 0, single buffered']
    #allocation3 [shape = 's32[1]{0}', space=sflag, size = 0x4, scoped, tag = 'scoped memory for net_forward.1']
    %16 = vsyncpa [#allocation3], 0
    // Predicated region
    $region2: #{net_forward.1} parent=1 // pred_check
      _
    $region3: #{net_forward.1} parent=1 // pred_check_branch
      %18 = sbr.rel (0) target = $region5
    $region4: #{net_forward.1} parent=1 // pred_region
      _
    $region5: #{net_forward.1} parent=1 // pred_fallthru
      _
    // Predicated region
    $region6: #{net_forward.1} parent=1 // pred_check
      _
    $region7: #{net_forward.1} parent=1 // pred_check_branch
      %20 = sbr.rel (0) target = $region9
    $region8: #{net_forward.1} parent=1 // pred_region
      _
    $region9: #{net_forward.1} parent=1 // pred_fallthru
      _
    // Predicated region
    $region10: #{net_forward.1} parent=1 // pred_check
      _
    $region11: #{net_forward.1} parent=1 // pred_check_branch
      %22 = sbr.rel (0) target = $region13
    $region12: #{net_forward.1} parent=1 // pred_region
      _
    $region13: #{net_forward.1} parent=1 // pred_fallthru
      _
    // Predicated region
    $region14: #{net_forward.1} parent=1 // pred_check
      _
    $region15: #{net_forward.1} parent=1 // pred_check_branch
      %24 = sbr.rel (0) target = $region17
    $region16: #{net_forward.1} parent=1 // pred_region
      _
    $region17: #{net_forward.1} parent=1 // pred_fallthru
      _
    // Predicated region
    $region18: #{net_forward.1} parent=1 // pred_check
      _
    $region19: #{net_forward.1} parent=1 // pred_check_branch
      %26 = sbr.rel (0) target = $region21
    $region20: #{net_forward.1} parent=1 // pred_region
      _
    $region21: #{net_forward.1} parent=1 // pred_fallthru
      _
    // Predicated region
    $region22: #{net_forward.1} parent=1 // pred_check
      _
    $region23: #{net_forward.1} parent=1 // pred_check_branch
      %28 = sbr.rel (0) target = $region25
    $region24: #{net_forward.1} parent=1 // pred_region
      _
    $region25: #{net_forward.1} parent=1 // pred_fallthru
      _
    // Predicated region
    $region26: #{net_forward.1} parent=1 // pred_check
      _
    $region27: #{net_forward.1} parent=1 // pred_check_branch
      %30 = sbr.rel (0) target = $region29
    $region28: #{net_forward.1} parent=1 // pred_region
      _
    $region29: #{net_forward.1} parent=1 // pred_fallthru
      _
    // Predicated region
    $region30: #{net_forward.1} parent=1 // pred_check
      _
    $region31: #{net_forward.1} parent=1 // pred_check_branch
      %32 = sbr.rel (0) target = $region33
    $region32: #{net_forward.1} parent=1 // pred_region
      _
    $region33: #{net_forward.1} parent=1 // pred_fallthru
      _
    // Predicated region
    $region34: #{net_forward.1} parent=1 // pred_check
      _
    $region35: #{net_forward.1} parent=1 // pred_check_branch
      %34 = sbr.rel (0) target = $region37
    $region36: #{net_forward.1} parent=1 // pred_region
      _
    $region37: #{net_forward.1} parent=1 // pred_fallthru
      _
    // Predicated region
    $region38: #{net_forward.1} parent=1 // pred_check
      _
    $region39: #{net_forward.1} parent=1 // pred_check_branch
      %36 = sbr.rel (0) target = $region41
    $region40: #{net_forward.1} parent=1 // pred_region
      _
    $region41: #{net_forward.1} parent=1 // pred_fallthru
      _
    // Predicated region
    $region42: #{net_forward.1} parent=1 // pred_check
      _
    $region43: #{net_forward.1} parent=1 // pred_check_branch
      %38 = sbr.rel (0) target = $region45
    $region44: #{net_forward.1} parent=1 // pred_region
      _
    $region45: #{net_forward.1} parent=1 // pred_fallthru
      _
    %v39 = vld [vmem:[%s0] sm:$0xff]
    %v40 = vld [vmem:[%s0 + $0x8] sm:$0xff]
    %v41 = vld [vmem:[%s0 + $0x10] sm:$0xff]
    %v42 = vld [vmem:[%s0 + $0x18] sm:$0xff]
    %v43 = vld [vmem:[%s0 + $0x20] sm:$0xff]
    %v44 = vld [vmem:[%s0 + $0x28] sm:$0xff]
    %v45 = vld [vmem:[%s0 + $0x30] sm:$0xff]
    %v46 = vld [vmem:[%s0 + $0x38] sm:$0xff]
    %v47 = vld [vmem:[%s0 + $0x40] sm:$0xff]
    %v48 = vld [vmem:[%s0 + $0x48] sm:$0xff]
    %v49 = vld [vmem:[%s0 + $0x50] sm:$0xff]
    %v50 = vld [vmem:[%s0 + $0x58] sm:$0xff]
    %v51 = vld [vmem:[%s0 + $0x60] sm:$0xff]
    %v52 = vld [vmem:[%s0 + $0x68] sm:$0xff]
    %v53 = vld [vmem:[%s0 + $0x70] sm:$0xff]
    %v54 = vld [vmem:[%s0 + $0x78] sm:$0xff]
    %v55 = vld [vmem:[%s0 + $0x80] sm:$0xff]
    %v56 = vld [vmem:[%s0 + $0x88] sm:$0xff]
    %v57 = vld [vmem:[%s0 + $0x90] sm:$0xff]
    %v58 = vld [vmem:[%s0 + $0x98] sm:$0xff]
    %v59 = vld [vmem:[%s0 + $0xa0] sm:$0xff]
    %v60 = vld [vmem:[%s0 + $0xa8] sm:$0xff]
    %v61 = vld [vmem:[%s0 + $0xb0] sm:$0xff]
    %v62 = vld [vmem:[%s0 + $0xb8] sm:$0xff]
    %v63 = vld [vmem:[%s0 + $0xc0] sm:$0xff]
    %v64 = vld [vmem:[%s0 + $0xc8] sm:$0xff]
    %v65 = vld [vmem:[%s0 + $0xd0] sm:$0xff]
    %v66 = vld [vmem:[%s0 + $0xd8] sm:$0xff]
    %v67 = vld [vmem:[%s0 + $0xe0] sm:$0xff]
    %v68 = vld [vmem:[%s0 + $0xe8] sm:$0xff]
    %v69 = vld [vmem:[%s0 + $0xf0] sm:$0xff]
    %v70 = vld [vmem:[%s0 + $0xf8] sm:$0xff]
    %v71 = vld [vmem:[%s0 + $0x100] sm:$0xff]
    %v72 = vld [vmem:[%s0 + $0x108] sm:$0xff]
    %v73 = vld [vmem:[%s0 + $0x110] sm:$0xff]
    %v74 = vld [vmem:[%s0 + $0x118] sm:$0xff]
    %v75 = vld [vmem:[%s0 + $0x120] sm:$0xff]
    %v76 = vld [vmem:[%s0 + $0x128] sm:$0xff]
    %v77 = vld [vmem:[%s0 + $0x130] sm:$0xff]
    %v78 = vld [vmem:[%s0 + $0x138] sm:$0xff]
    %v79 = vld [vmem:[%s0 + $0x140] sm:$0xff]
    %v80 = vld [vmem:[%s0 + $0x148] sm:$0xff]
    %v81 = vld [vmem:[%s0 + $0x150] sm:$0xff]
    %v82 = vld [vmem:[%s0 + $0x158] sm:$0xff]
    %v83 = vld [vmem:[%s0 + $0x160] sm:$0xff]
    %v84 = vld [vmem:[%s0 + $0x168] sm:$0xff]
    %v85 = vld [vmem:[%s0 + $0x170] sm:$0xff]
    %v86 = vld [vmem:[%s0 + $0x178] sm:$0xff]
    %v87 = vld [vmem:[%s0 + $0x180] sm:$0xff]
    %v88 = vld [vmem:[%s0 + $0x188] sm:$0xff]
    %v89 = vld [vmem:[%s0 + $0x190] sm:$0xff]
    %v90 = vld [vmem:[%s0 + $0x198] sm:$0xff]
    %v91 = vld [vmem:[%s0 + $0x1a0] sm:$0xff]
    %v92 = vld [vmem:[%s0 + $0x1a8] sm:$0xff]
    %v93 = vld [vmem:[%s0 + $0x1b0] sm:$0xff]
    %v94 = vld [vmem:[%s0 + $0x1b8] sm:$0xff]
    %v95 = vld [vmem:[%s0 + $0x1c0] sm:$0xff]
    %v96 = vld [vmem:[%s0 + $0x1c8] sm:$0xff]
    %v97 = vld [vmem:[%s0 + $0x1d0] sm:$0xff]
    %v98 = vld [vmem:[%s0 + $0x1d8] sm:$0xff]
    %v99 = vld [vmem:[%s0 + $0x1e0] sm:$0xff]
    %v100 = vld [vmem:[%s0 + $0x1e8] sm:$0xff]
    %v101 = vld [vmem:[%s0 + $0x1f0] sm:$0xff]
    %v102 = vld [vmem:[%s0 + $0x1f8] sm:$0xff]
    %v103 = vld [vmem:[%s0 + $0x200] sm:$0xff]
    %v104 = vld [vmem:[%s0 + $0x208] sm:$0xff]
    %v105 = vld [vmem:[%s0 + $0x210] sm:$0xff]
    %v106 = vld [vmem:[%s0 + $0x218] sm:$0xff]
    %v107 = vld [vmem:[%s0 + $0x220] sm:$0xff]
    %v108 = vld [vmem:[%s0 + $0x228] sm:$0xff]
    %v109 = vld [vmem:[%s0 + $0x230] sm:$0xff]
    %v110 = vld [vmem:[%s0 + $0x238] sm:$0xff]
    %v111 = vld [vmem:[%s0 + $0x240] sm:$0xff]
    %v112 = vld [vmem:[%s0 + $0x248] sm:$0xff]
    %v113 = vld [vmem:[%s0 + $0x250] sm:$0xff]
    %v114 = vld [vmem:[%s0 + $0x258] sm:$0xff]
    %v115 = vld [vmem:[%s0 + $0x260] sm:$0xff]
    %v116 = vld [vmem:[%s0 + $0x268] sm:$0xff]
    %v117 = vld [vmem:[%s0 + $0x270] sm:$0xff]
    %v118 = vld [vmem:[%s0 + $0x278] sm:$0xff]
    %v119 = vld [vmem:[%s0 + $0x280] sm:$0xff]
    %v120 = vld [vmem:[%s0 + $0x288] sm:$0xff]
    %v121 = vld [vmem:[%s0 + $0x290] sm:$0xff]
    %v122 = vld [vmem:[%s0 + $0x298] sm:$0xff]
    %v123 = vld [vmem:[%s0 + $0x2a0] sm:$0xff]
    %v124 = vld [vmem:[%s0 + $0x2a8] sm:$0xff]
    %v125 = vld [vmem:[%s0 + $0x2b0] sm:$0xff]
    %v126 = vld [vmem:[%s0 + $0x2b8] sm:$0xff]
    %v127 = vld [vmem:[%s0 + $0x2c0] sm:$0xff]
    %v128 = vld [vmem:[%s0 + $0x2c8] sm:$0xff]
    %v129 = vld [vmem:[%s0 + $0x2d0] sm:$0xff]
    %v130 = vld [vmem:[%s0 + $0x2d8] sm:$0xff]
    %v131 = vld [vmem:[%s0 + $0x2e0] sm:$0xff]
    %v132 = vld [vmem:[%s0 + $0x2e8] sm:$0xff]
    %v133 = vld [vmem:[%s0 + $0x2f0] sm:$0xff]
    %v134 = vld [vmem:[%s0 + $0x2f8] sm:$0xff]
    %v135 = vld [vmem:[%s0 + $0x300] sm:$0xff]
    %v136 = vld [vmem:[%s0 + $0x308] sm:$0xff]
    %v137 = vld [vmem:[%s0 + $0x310] sm:$0xff]
    %v138 = vld [vmem:[%s0 + $0x318] sm:$0xff]
    %v139 = vld [vmem:[%s0 + $0x320] sm:$0xff]
    %v140 = vld [vmem:[%s0 + $0x328] sm:$0xff]
    %v141 = vld [vmem:[%s0 + $0x330] sm:$0xff]
    %v142 = vld [vmem:[%s0 + $0x338] sm:$0xff]
    %v143 = vld [vmem:[%s0 + $0x340] sm:$0xff]
    %v144 = vld [vmem:[%s0 + $0x348] sm:$0xff]
    %v145 = vld [vmem:[%s0 + $0x350] sm:$0xff]
    %v146 = vld [vmem:[%s0 + $0x358] sm:$0xff]
    %v147 = vld [vmem:[%s0 + $0x360] sm:$0xff]
    %v148 = vld [vmem:[%s0 + $0x368] sm:$0xff]
    %v149 = vld [vmem:[%s0 + $0x370] sm:$0xff]
    %v150 = vld [vmem:[%s0 + $0x378] sm:$0xff]
    %v151 = vld [vmem:[%s0 + $0x380] sm:$0xff]
    %v152 = vld [vmem:[%s0 + $0x388] sm:$0xff]
    %v153 = vld [vmem:[%s0 + $0x390] sm:$0xff]
    %v154 = vld [vmem:[%s0 + $0x398] sm:$0xff]
    %v155 = vld [vmem:[%s0 + $0x3a0] sm:$0xff]
    %v156 = vld [vmem:[%s0 + $0x3a8] sm:$0xff]
    %v157 = vld [vmem:[%s0 + $0x3b0] sm:$0xff]
    %v158 = vld [vmem:[%s0 + $0x3b8] sm:$0xff]
    %v159 = vld [vmem:[%s0 + $0x3c0] sm:$0xff]
    %v160 = vld [vmem:[%s0 + $0x3c8] sm:$0xff]
    %v161 = vld [vmem:[%s0 + $0x3d0] sm:$0xff]
    %v162 = vld [vmem:[%s0 + $0x3d8] sm:$0xff]
    %v163 = vld [vmem:[%s0 + $0x3e0] sm:$0xff]
    %v164 = vld [vmem:[%s0 + $0x3e8] sm:$0xff]
    %v165 = vld [vmem:[%s0 + $0x3f0] sm:$0xff]
    %v166 = vld [vmem:[%s0 + $0x3f8] sm:$0xff]
    %v167 = vld [vmem:[%s0 + $0x400] sm:$0xff]
    %v168 = vld [vmem:[%s0 + $0x408] sm:$0xff]
    %v169 = vld [vmem:[%s0 + $0x410] sm:$0xff]
    %v170 = vld [vmem:[%s0 + $0x418] sm:$0xff]
    %v171 = vld [vmem:[%s0 + $0x420] sm:$0xff]
    %v172 = vld [vmem:[%s0 + $0x428] sm:$0xff]
    %v173 = vld [vmem:[%s0 + $0x430] sm:$0xff]
    %v174 = vld [vmem:[%s0 + $0x438] sm:$0xff]
    %v175 = vld [vmem:[%s0 + $0x440] sm:$0xff]
    %v176 = vld [vmem:[%s0 + $0x448] sm:$0xff]
    %v177 = vld [vmem:[%s0 + $0x450] sm:$0xff]
    %v178 = vld [vmem:[%s0 + $0x458] sm:$0xff]
    %v179 = vld [vmem:[%s0 + $0x460] sm:$0xff]
    %v180 = vld [vmem:[%s0 + $0x468] sm:$0xff]
    %v181 = vld [vmem:[%s0 + $0x470] sm:$0xff]
    %v182 = vld [vmem:[%s0 + $0x478] sm:$0xff]
    %v183 = vld [vmem:[%s0 + $0x480] sm:$0xff]
    %v184 = vld [vmem:[%s0 + $0x488] sm:$0xff]
    %v185 = vld [vmem:[%s0 + $0x490] sm:$0xff]
    %v186 = vld [vmem:[%s0 + $0x498] sm:$0xff]
    %v187 = vld [vmem:[%s0 + $0x4a0] sm:$0xff]
    %v188 = vld [vmem:[%s0 + $0x4a8] sm:$0xff]
    %v189 = vld [vmem:[%s0 + $0x4b0] sm:$0xff]
    %v190 = vld [vmem:[%s0 + $0x4b8] sm:$0xff]
    %v191 = vld [vmem:[%s0 + $0x4c0] sm:$0xff]
    %v192 = vld [vmem:[%s0 + $0x4c8] sm:$0xff]
    %v193 = vld [vmem:[%s0 + $0x4d0] sm:$0xff]
    %v194 = vld [vmem:[%s0 + $0x4d8] sm:$0xff]
    %v195 = vld [vmem:[%s0 + $0x4e0] sm:$0xff]
    %v196 = vld [vmem:[%s0 + $0x4e8] sm:$0xff]
    %v197 = vld [vmem:[%s0 + $0x4f0] sm:$0xff]
    %v198 = vld [vmem:[%s0 + $0x4f8] sm:$0xff]
    %v199 = vld [vmem:[%s0 + $0x500] sm:$0xff]
    %v200 = vld [vmem:[%s0 + $0x508] sm:$0xff]
    %v201 = vld [vmem:[%s0 + $0x510] sm:$0xff]
    %v202 = vld [vmem:[%s0 + $0x518] sm:$0xff]
    %v203 = vld [vmem:[%s0 + $0x520] sm:$0xff]
    %v204 = vld [vmem:[%s0 + $0x528] sm:$0xff]
    %v205 = vld [vmem:[%s0 + $0x530] sm:$0xff]
    %v206 = vld [vmem:[%s0 + $0x538] sm:$0xff]
    %v207 = vld [vmem:[%s0 + $0x540] sm:$0xff]
    %v208 = vld [vmem:[%s0 + $0x548] sm:$0xff]
    %v209 = vld [vmem:[%s0 + $0x550] sm:$0xff]
    %v210 = vld [vmem:[%s0 + $0x558] sm:$0xff]
    %v211 = vld [vmem:[%s0 + $0x560] sm:$0xff]
    %v212 = vld [vmem:[%s0 + $0x568] sm:$0xff]
    %v213 = vld [vmem:[%s0 + $0x570] sm:$0xff]
    %v214 = vld [vmem:[%s0 + $0x578] sm:$0xff]
    %v215 = vld [vmem:[%s0 + $0x580] sm:$0xff]
    %v216 = vld [vmem:[%s0 + $0x588] sm:$0xff]
    %v217 = vld [vmem:[%s0 + $0x590] sm:$0xff]
    %v218 = vld [vmem:[%s0 + $0x598] sm:$0xff]
    %v219 = vld [vmem:[%s0 + $0x5a0] sm:$0xff]
    %v220 = vld [vmem:[%s0 + $0x5a8] sm:$0xff]
    %v221 = vld [vmem:[%s0 + $0x5b0] sm:$0xff]
    %v222 = vld [vmem:[%s0 + $0x5b8] sm:$0xff]
    %v223 = vld [vmem:[%s0 + $0x5c0] sm:$0xff]
    %v224 = vld [vmem:[%s0 + $0x5c8] sm:$0xff]
    %v225 = vld [vmem:[%s0 + $0x5d0] sm:$0xff]
    %v226 = vld [vmem:[%s0 + $0x5d8] sm:$0xff]
    %v227 = vld [vmem:[%s0 + $0x5e0] sm:$0xff]
    %v228 = vld [vmem:[%s0 + $0x5e8] sm:$0xff]
    %v229 = vld [vmem:[%s0 + $0x5f0] sm:$0xff]
    %v230 = vld [vmem:[%s0 + $0x5f8] sm:$0xff]
    %v231 = vld [vmem:[%s1] sm:$0xff]
    %v232 = vld [vmem:[%s1 + $0x8] sm:$0xff]
    %v233 = vld [vmem:[%s1 + $0x10] sm:$0xff]
    %v234 = vld [vmem:[%s1 + $0x18] sm:$0xff]
    %vm235 = vcmask 261120
    %v237 = vsel %vm235, %v39, 0
    %v240 = vsel %vm235, %v40, 0
    %v243 = vsel %vm235, %v41, 0
    %v246 = vsel %vm235, %v42, 0
    %v249 = vsel %vm235, %v43, 0
    %v252 = vsel %vm235, %v44, 0
    %v255 = vsel %vm235, %v45, 0
    %v258 = vsel %vm235, %v46, 0
    %v261 = vsel %vm235, %v47, 0
    %v264 = vsel %vm235, %v48, 0
    %v267 = vsel %vm235, %v49, 0
    %v270 = vsel %vm235, %v50, 0
    %v273 = vsel %vm235, %v51, 0
    %v276 = vsel %vm235, %v52, 0
    %v279 = vsel %vm235, %v53, 0
    %v282 = vsel %vm235, %v54, 0
    %v285 = vsel %vm235, %v55, 0
    %v288 = vsel %vm235, %v56, 0
    %v291 = vsel %vm235, %v57, 0
    %v294 = vsel %vm235, %v58, 0
    %v297 = vsel %vm235, %v59, 0
    %v300 = vsel %vm235, %v60, 0
    %v303 = vsel %vm235, %v61, 0
    %v306 = vsel %vm235, %v62, 0
    %v309 = vsel %vm235, %v63, 0
    %v312 = vsel %vm235, %v64, 0
    %v315 = vsel %vm235, %v65, 0
    %v318 = vsel %vm235, %v66, 0
    %v321 = vsel %vm235, %v67, 0
    %v324 = vsel %vm235, %v68, 0
    %v327 = vsel %vm235, %v69, 0
    %v330 = vsel %vm235, %v70, 0
    %v333 = vsel %vm235, %v71, 0
    %v336 = vsel %vm235, %v72, 0
    %v339 = vsel %vm235, %v73, 0
    %v342 = vsel %vm235, %v74, 0
    %v345 = vsel %vm235, %v75, 0
    %v348 = vsel %vm235, %v76, 0
    %v351 = vsel %vm235, %v77, 0
    %v354 = vsel %vm235, %v78, 0
    %v357 = vsel %vm235, %v79, 0
    %v360 = vsel %vm235, %v80, 0
    %v363 = vsel %vm235, %v81, 0
    %v366 = vsel %vm235, %v82, 0
    %v369 = vsel %vm235, %v83, 0
    %v372 = vsel %vm235, %v84, 0
    %v375 = vsel %vm235, %v85, 0
    %v378 = vsel %vm235, %v86, 0
    %v381 = vsel %vm235, %v87, 0
    %v384 = vsel %vm235, %v88, 0
    %v387 = vsel %vm235, %v89, 0
    %v390 = vsel %vm235, %v90, 0
    %v393 = vsel %vm235, %v91, 0
    %v396 = vsel %vm235, %v92, 0
    %v399 = vsel %vm235, %v93, 0
    %v402 = vsel %vm235, %v94, 0
    %v405 = vsel %vm235, %v95, 0
    %v408 = vsel %vm235, %v96, 0
    %v411 = vsel %vm235, %v97, 0
    %v414 = vsel %vm235, %v98, 0
    %v417 = vsel %vm235, %v99, 0
    %v420 = vsel %vm235, %v100, 0
    %v423 = vsel %vm235, %v101, 0
    %v426 = vsel %vm235, %v102, 0
    %v429 = vsel %vm235, %v103, 0
    %v432 = vsel %vm235, %v104, 0
    %v435 = vsel %vm235, %v105, 0
    %v438 = vsel %vm235, %v106, 0
    %v441 = vsel %vm235, %v107, 0
    %v444 = vsel %vm235, %v108, 0
    %v447 = vsel %vm235, %v109, 0
    %v450 = vsel %vm235, %v110, 0
    %v453 = vsel %vm235, %v111, 0
    %v456 = vsel %vm235, %v112, 0
    %v459 = vsel %vm235, %v113, 0
    %v462 = vsel %vm235, %v114, 0
    %v465 = vsel %vm235, %v115, 0
    %v468 = vsel %vm235, %v116, 0
    %v471 = vsel %vm235, %v117, 0
    %v474 = vsel %vm235, %v118, 0
    %v477 = vsel %vm235, %v119, 0
    %v480 = vsel %vm235, %v120, 0
    %v483 = vsel %vm235, %v121, 0
    %v486 = vsel %vm235, %v122, 0
    %v489 = vsel %vm235, %v123, 0
    %v492 = vsel %vm235, %v124, 0
    %v495 = vsel %vm235, %v125, 0
    %v498 = vsel %vm235, %v126, 0
    %v501 = vsel %vm235, %v127, 0
    %v504 = vsel %vm235, %v128, 0
    %v507 = vsel %vm235, %v129, 0
    %v510 = vsel %vm235, %v130, 0
    %v513 = vsel %vm235, %v131, 0
    %v516 = vsel %vm235, %v132, 0
    %v519 = vsel %vm235, %v133, 0
    %v522 = vsel %vm235, %v134, 0
    %v525 = vsel %vm235, %v135, 0
    %v528 = vsel %vm235, %v136, 0
    %v531 = vsel %vm235, %v137, 0
    %v534 = vsel %vm235, %v138, 0
    %v537 = vsel %vm235, %v139, 0
    %v540 = vsel %vm235, %v140, 0
    %v543 = vsel %vm235, %v141, 0
    %v546 = vsel %vm235, %v142, 0
    %v549 = vsel %vm235, %v143, 0
    %v552 = vsel %vm235, %v144, 0
    %v555 = vsel %vm235, %v145, 0
    %v558 = vsel %vm235, %v146, 0
    %v561 = vsel %vm235, %v147, 0
    %v564 = vsel %vm235, %v148, 0
    %v567 = vsel %vm235, %v149, 0
    %v570 = vsel %vm235, %v150, 0
    %v573 = vsel %vm235, %v151, 0
    %v576 = vsel %vm235, %v152, 0
    %v579 = vsel %vm235, %v153, 0
    %v582 = vsel %vm235, %v154, 0
    %v585 = vsel %vm235, %v155, 0
    %v588 = vsel %vm235, %v156, 0
    %v591 = vsel %vm235, %v157, 0
    %v594 = vsel %vm235, %v158, 0
    %v597 = vsel %vm235, %v159, 0
    %v600 = vsel %vm235, %v160, 0
    %v603 = vsel %vm235, %v161, 0
    %v606 = vsel %vm235, %v162, 0
    %v609 = vsel %vm235, %v163, 0
    %v612 = vsel %vm235, %v164, 0
    %v615 = vsel %vm235, %v165, 0
    %v618 = vsel %vm235, %v166, 0
    %v621 = vsel %vm235, %v167, 0
    %v624 = vsel %vm235, %v168, 0
    %v627 = vsel %vm235, %v169, 0
    %v630 = vsel %vm235, %v170, 0
    %v633 = vsel %vm235, %v171, 0
    %v636 = vsel %vm235, %v172, 0
    %v639 = vsel %vm235, %v173, 0
    %v642 = vsel %vm235, %v174, 0
    %v645 = vsel %vm235, %v175, 0
    %v648 = vsel %vm235, %v176, 0
    %v651 = vsel %vm235, %v177, 0
    %v654 = vsel %vm235, %v178, 0
    %v657 = vsel %vm235, %v179, 0
    %v660 = vsel %vm235, %v180, 0
    %v663 = vsel %vm235, %v181, 0
    %v666 = vsel %vm235, %v182, 0
    %v669 = vsel %vm235, %v183, 0
    %v672 = vsel %vm235, %v184, 0
    %v675 = vsel %vm235, %v185, 0
    %v678 = vsel %vm235, %v186, 0
    %v681 = vsel %vm235, %v187, 0
    %v684 = vsel %vm235, %v188, 0
    %v687 = vsel %vm235, %v189, 0
    %v690 = vsel %vm235, %v190, 0
    %v693 = vsel %vm235, %v191, 0
    %v696 = vsel %vm235, %v192, 0
    %v699 = vsel %vm235, %v193, 0
    %v702 = vsel %vm235, %v194, 0
    %v705 = vsel %vm235, %v195, 0
    %v708 = vsel %vm235, %v196, 0
    %v711 = vsel %vm235, %v197, 0
    %v714 = vsel %vm235, %v198, 0
    %v717 = vsel %vm235, %v199, 0
    %v720 = vsel %vm235, %v200, 0
    %v723 = vsel %vm235, %v201, 0
    %v726 = vsel %vm235, %v202, 0
    %v729 = vsel %vm235, %v203, 0
    %v732 = vsel %vm235, %v204, 0
    %v735 = vsel %vm235, %v205, 0
    %v738 = vsel %vm235, %v206, 0
    %v741 = vsel %vm235, %v207, 0
    %v744 = vsel %vm235, %v208, 0
    %v747 = vsel %vm235, %v209, 0
    %v750 = vsel %vm235, %v210, 0
    %v753 = vsel %vm235, %v211, 0
    %v756 = vsel %vm235, %v212, 0
    %v759 = vsel %vm235, %v213, 0
    %v762 = vsel %vm235, %v214, 0
    %v765 = vsel %vm235, %v215, 0
    %v768 = vsel %vm235, %v216, 0
    %v771 = vsel %vm235, %v217, 0
    %v774 = vsel %vm235, %v218, 0
    %v777 = vsel %vm235, %v219, 0
    %v780 = vsel %vm235, %v220, 0
    %v783 = vsel %vm235, %v221, 0
    %v786 = vsel %vm235, %v222, 0
    %v789 = vsel %vm235, %v223, 0
    %v792 = vsel %vm235, %v224, 0
    %v795 = vsel %vm235, %v225, 0
    %v798 = vsel %vm235, %v226, 0
    %v801 = vsel %vm235, %v227, 0
    %v804 = vsel %vm235, %v228, 0
    %v807 = vsel %vm235, %v229, 0
    %v810 = vsel %vm235, %v230, 0
    %812 = vmatprep.subr.mxu0 0.0
    %813 = vmatpush1.msra.mxu0 %v231
    %814 = vmatprep.subr.mxu0 0.0
    %815 = vmatpush1.msra.mxu0 %v232
    %816 = vmatprep.subr.mxu0 0.0
    %817 = vmatpush1.msra.mxu0 %v233
    %818 = vmatprep.subr.mxu0 0.0
    %819 = vmatpush1.msra.mxu0 %v234
    %820 = vmatprep.subr.mxu0 0.0
    %821 = vmatpush1.msra.mxu0 0.0
    %822 = vmatprep.subr.mxu0 0.0
    %823 = vmatpush1.msra.mxu0 0.0
    %824 = vmatprep.subr.mxu0 0.0
    %825 = vmatpush1.msra.mxu0 0.0
    %826 = vmatprep.subr.mxu0 0.0
    %827 = vmatpush1.msra.mxu0 0.0
    %828 = vmatprep.subr.mxu0 0.0
    %829 = vmatpush1.msra.mxu0 0.0
    %830 = vmatprep.subr.mxu0 0.0
    %831 = vmatpush1.msra.mxu0 0.0
    %832 = vmatprep.subr.mxu0 0.0
    %833 = vmatpush1.msra.mxu0 0.0
    %834 = vmatprep.subr.mxu0 0.0
    %835 = vmatpush1.msra.mxu0 0.0
    %836 = vmatprep.subr.mxu0 0.0
    %837 = vmatpush1.msra.mxu0 0.0
    %838 = vmatprep.subr.mxu0 0.0
    %839 = vmatpush1.msra.mxu0 0.0
    %840 = vmatprep.subr.mxu0 0.0
    %841 = vmatpush1.msra.mxu0 0.0
    %842 = vmatprep.subr.mxu0 0.0
    %843 = vmatpush1.msra.mxu0 0.0
    %844 = vmatprep.subr.mxu0 0.0
    %845 = vmatpush1.msra.mxu0 0.0
    %846 = vmatprep.subr.mxu0 0.0
    %847 = vmatpush1.msra.mxu0 0.0
    %848 = vmatprep.subr.mxu0 0.0
    %849 = vmatpush1.msra.mxu0 0.0
    %850 = vmatprep.subr.mxu0 0.0
    %851 = vmatpush1.msra.mxu0 0.0
    %852 = vmatprep.subr.mxu0 0.0
    %853 = vmatpush1.msra.mxu0 0.0
    %854 = vmatprep.subr.mxu0 0.0
    %855 = vmatpush1.msra.mxu0 0.0
    %856 = vmatprep.subr.mxu0 0.0
    %857 = vmatpush1.msra.mxu0 0.0
    %858 = vmatprep.subr.mxu0 0.0
    %859 = vmatpush1.msra.mxu0 0.0
    %860 = vmatprep.subr.mxu0 0.0
    %861 = vmatpush1.msra.mxu0 0.0
    %862 = vmatprep.subr.mxu0 0.0
    %863 = vmatpush1.msra.mxu0 0.0
    %864 = vmatprep.subr.mxu0 0.0
    %865 = vmatpush1.msra.mxu0 0.0
    %866 = vmatprep.subr.mxu0 0.0
    %867 = vmatpush1.msra.mxu0 0.0
    %868 = vmatprep.subr.mxu0 0.0
    %869 = vmatpush1.msra.mxu0 0.0
    %870 = vmatprep.subr.mxu0 0.0
    %871 = vmatpush1.msra.mxu0 0.0
    %872 = vmatprep.subr.mxu0 0.0
    %873 = vmatpush1.msra.mxu0 0.0
    %874 = vmatprep.subr.mxu0 0.0
    %875 = vmatpush1.msra.mxu0 0.0
    %876 = vmatprep.mubr.f32.mxu0 0.0
    %877 = vmatmul.mubr.f32.gmra.mrb[0].mxu0 %v237
    %v878 = vpop.f32.mrb[0].mxu0
    %v879 = vadd.f32 0.0, %v878
    %v880 = vpop.f32.mrb[0].mxu0
    %881 = vmatprep.mubr.f32.mxu0 0.0
    %882 = vmatmul.mubr.f32.gmra.mrb[0].mxu0 %v240
    %v883 = vpop.f32.mrb[0].mxu0
    %v884 = vadd.f32 0.0, %v883
    %v885 = vpop.f32.mrb[0].mxu0
    %886 = vmatprep.mubr.f32.mxu0 0.0
    %887 = vmatmul.mubr.f32.gmra.mrb[0].mxu0 %v243
    %v888 = vpop.f32.mrb[0].mxu0
    %v889 = vadd.f32 0.0, %v888
    %v890 = vpop.f32.mrb[0].mxu0
    %891 = vmatprep.mubr.f32.mxu0 0.0
    %892 = vmatmul.mubr.f32.gmra.mrb[0].mxu0 %v246
    %v893 = vpop.f32.mrb[0].mxu0
    %v894 = vadd.f32 0.0, %v893
    %v895 = vpop.f32.mrb[0].mxu0
    %896 = vmatprep.mubr.f32.mxu0 0.0
    %897 = vmatmul.mubr.f32.gmra.mrb[0].mxu0 %v249
    %v898 = vpop.f32.mrb[0].mxu0
    %v899 = vadd.f32 0.0, %v898
    %v900 = vpop.f32.mrb[0].mxu0
    %901 = vmatprep.mubr.f32.mxu0 0.0
    %902 = vmatmul.mubr.f32.gmra.mrb[0].mxu0 %v252
    %v903 = vpop.f32.mrb[0].mxu0
    %v904 = vadd.f32 0.0, %v903
    %v905 = vpop.f32.mrb[0].mxu0
    %906 = vmatprep.mubr.f32.mxu0 0.0
    %907 = vmatmul.mubr.f32.gmra.mrb[0].mxu0 %v255
    %v908 = vpop.f32.mrb[0].mxu0
    %v909 = vadd.f32 0.0, %v908
    %v910 = vpop.f32.mrb[0].mxu0
    %911 = vmatprep.mubr.f32.mxu0 0.0
    %912 = vmatmul.mubr.f32.gmra.mrb[0].mxu0 %v258
    %v913 = vpop.f32.mrb[0].mxu0
    %v914 = vadd.f32 0.0, %v913
    %v915 = vpop.f32.mrb[0].mxu0
    %916 = vmatprep.mubr.f32.mxu0 0.0
    %917 = vmatmul.mubr.f32.gmra.mrb[0].mxu0 %v261
    %v918 = vpop.f32.mrb[0].mxu0
    %v919 = vadd.f32 0.0, %v918
    %v920 = vpop.f32.mrb[0].mxu0
    %921 = vmatprep.mubr.f32.mxu0 0.0
    %922 = vmatmul.mubr.f32.gmra.mrb[0].mxu0 %v264
    %v923 = vpop.f32.mrb[0].mxu0
    %v924 = vadd.f32 0.0, %v923
    %v925 = vpop.f32.mrb[0].mxu0
    %926 = vmatprep.mubr.f32.mxu0 0.0
    %927 = vmatmul.mubr.f32.gmra.mrb[0].mxu0 %v267
    %v928 = vpop.f32.mrb[0].mxu0
    %v929 = vadd.f32 0.0, %v928
    %v930 = vpop.f32.mrb[0].mxu0
    %931 = vmatprep.mubr.f32.mxu0 0.0
    %932 = vmatmul.mubr.f32.gmra.mrb[0].mxu0 %v270
    %v933 = vpop.f32.mrb[0].mxu0
    %v934 = vadd.f32 0.0, %v933
    %v935 = vpop.f32.mrb[0].mxu0
    %936 = vmatprep.mubr.f32.mxu0 0.0
    %937 = vmatmul.mubr.f32.gmra.mrb[0].mxu0 %v273
    %v938 = vpop.f32.mrb[0].mxu0
    %v939 = vadd.f32 0.0, %v938
    %v940 = vpop.f32.mrb[0].mxu0
    %941 = vmatprep.mubr.f32.mxu0 0.0
    %942 = vmatmul.mubr.f32.gmra.mrb[0].mxu0 %v276
    %v943 = vpop.f32.mrb[0].mxu0
    %v944 = vadd.f32 0.0, %v943
    %v945 = vpop.f32.mrb[0].mxu0
    %946 = vmatprep.mubr.f32.mxu0 0.0
    %947 = vmatmul.mubr.f32.gmra.mrb[0].mxu0 %v279
    %v948 = vpop.f32.mrb[0].mxu0
    %v949 = vadd.f32 0.0, %v948
    %v950 = vpop.f32.mrb[0].mxu0
    %951 = vmatprep.mubr.f32.mxu0 0.0
    %952 = vmatmul.mubr.f32.gmra.mrb[0].mxu0 %v282
    %v953 = vpop.f32.mrb[0].mxu0
    %v954 = vadd.f32 0.0, %v953
    %v955 = vpop.f32.mrb[0].mxu0
    %956 = vmatprep.mubr.f32.mxu0 0.0
    %957 = vmatmul.mubr.f32.gmra.mrb[0].mxu0 %v285
    %v958 = vpop.f32.mrb[0].mxu0
    %v959 = vadd.f32 0.0, %v958
    %v960 = vpop.f32.mrb[0].mxu0
    %961 = vmatprep.mubr.f32.mxu0 0.0
    %962 = vmatmul.mubr.f32.gmra.mrb[0].mxu0 %v288
    %v963 = vpop.f32.mrb[0].mxu0
    %v964 = vadd.f32 0.0, %v963
    %v965 = vpop.f32.mrb[0].mxu0
    %966 = vmatprep.mubr.f32.mxu0 0.0
    %967 = vmatmul.mubr.f32.gmra.mrb[0].mxu0 %v291
    %v968 = vpop.f32.mrb[0].mxu0
    %v969 = vadd.f32 0.0, %v968
    %v970 = vpop.f32.mrb[0].mxu0
    %971 = vmatprep.mubr.f32.mxu0 0.0
    %972 = vmatmul.mubr.f32.gmra.mrb[0].mxu0 %v294
    %v973 = vpop.f32.mrb[0].mxu0
    %v974 = vadd.f32 0.0, %v973
    %v975 = vpop.f32.mrb[0].mxu0
    %976 = vmatprep.mubr.f32.mxu0 0.0
    %977 = vmatmul.mubr.f32.gmra.mrb[0].mxu0 %v297
    %v978 = vpop.f32.mrb[0].mxu0
    %v979 = vadd.f32 0.0, %v978
    %v980 = vpop.f32.mrb[0].mxu0
    %981 = vmatprep.mubr.f32.mxu0 0.0
    %982 = vmatmul.mubr.f32.gmra.mrb[0].mxu0 %v300
    %v983 = vpop.f32.mrb[0].mxu0
    %v984 = vadd.f32 0.0, %v983
    %v985 = vpop.f32.mrb[0].mxu0
    %986 = vmatprep.mubr.f32.mxu0 0.0
    %987 = vmatmul.mubr.f32.gmra.mrb[0].mxu0 %v303
    %v988 = vpop.f32.mrb[0].mxu0
    %v989 = vadd.f32 0.0, %v988
    %v990 = vpop.f32.mrb[0].mxu0
    %991 = vmatprep.mubr.f32.mxu0 0.0
    %992 = vmatmul.mubr.f32.gmra.mrb[0].mxu0 %v306
    %v993 = vpop.f32.mrb[0].mxu0
    %v994 = vadd.f32 0.0, %v993
    %v995 = vpop.f32.mrb[0].mxu0
    %996 = vmatprep.mubr.f32.mxu0 0.0
    %997 = vmatmul.mubr.f32.gmra.mrb[0].mxu0 %v309
    %v998 = vpop.f32.mrb[0].mxu0
    %v999 = vadd.f32 0.0, %v998
    %v1000 = vpop.f32.mrb[0].mxu0
    %1001 = vmatprep.mubr.f32.mxu0 0.0
    %1002 = vmatmul.mubr.f32.gmra.mrb[0].mxu0 %v312
    %v1003 = vpop.f32.mrb[0].mxu0
    %v1004 = vadd.f32 0.0, %v1003
    %v1005 = vpop.f32.mrb[0].mxu0
    %1006 = vmatprep.mubr.f32.mxu0 0.0
    %1007 = vmatmul.mubr.f32.gmra.mrb[0].mxu0 %v315
    %v1008 = vpop.f32.mrb[0].mxu0
    %v1009 = vadd.f32 0.0, %v1008
    %v1010 = vpop.f32.mrb[0].mxu0
    %1011 = vmatprep.mubr.f32.mxu0 0.0
    %1012 = vmatmul.mubr.f32.gmra.mrb[0].mxu0 %v318
    %v1013 = vpop.f32.mrb[0].mxu0
    %v1014 = vadd.f32 0.0, %v1013
    %v1015 = vpop.f32.mrb[0].mxu0
    %1016 = vmatprep.mubr.f32.mxu0 0.0
    %1017 = vmatmul.mubr.f32.gmra.mrb[0].mxu0 %v321
    %v1018 = vpop.f32.mrb[0].mxu0
    %v1019 = vadd.f32 0.0, %v1018
    %v1020 = vpop.f32.mrb[0].mxu0
    %1021 = vmatprep.mubr.f32.mxu0 0.0
    %1022 = vmatmul.mubr.f32.gmra.mrb[0].mxu0 %v324
    %v1023 = vpop.f32.mrb[0].mxu0
    %v1024 = vadd.f32 0.0, %v1023
    %v1025 = vpop.f32.mrb[0].mxu0
    %1026 = vmatprep.mubr.f32.mxu0 0.0
    %1027 = vmatmul.mubr.f32.gmra.mrb[0].mxu0 %v327
    %v1028 = vpop.f32.mrb[0].mxu0
    %v1029 = vadd.f32 0.0, %v1028
    %v1030 = vpop.f32.mrb[0].mxu0
    %1031 = vmatprep.mubr.f32.mxu0 0.0
    %1032 = vmatmul.mubr.f32.gmra.mrb[0].mxu0 %v330
    %v1033 = vpop.f32.mrb[0].mxu0
    %v1034 = vadd.f32 0.0, %v1033
    %v1035 = vpop.f32.mrb[0].mxu0
    %1036 = vmatprep.mubr.f32.mxu0 0.0
    %1037 = vmatmul.mubr.f32.gmra.mrb[0].mxu0 %v333
    %v1038 = vpop.f32.mrb[0].mxu0
    %v1039 = vadd.f32 0.0, %v1038
    %v1040 = vpop.f32.mrb[0].mxu0
    %1041 = vmatprep.mubr.f32.mxu0 0.0
    %1042 = vmatmul.mubr.f32.gmra.mrb[0].mxu0 %v336
    %v1043 = vpop.f32.mrb[0].mxu0
    %v1044 = vadd.f32 0.0, %v1043
    %v1045 = vpop.f32.mrb[0].mxu0
    %1046 = vmatprep.mubr.f32.mxu0 0.0
    %1047 = vmatmul.mubr.f32.gmra.mrb[0].mxu0 %v339
    %v1048 = vpop.f32.mrb[0].mxu0
    %v1049 = vadd.f32 0.0, %v1048
    %v1050 = vpop.f32.mrb[0].mxu0
    %1051 = vmatprep.mubr.f32.mxu0 0.0
    %1052 = vmatmul.mubr.f32.gmra.mrb[0].mxu0 %v342
    %v1053 = vpop.f32.mrb[0].mxu0
    %v1054 = vadd.f32 0.0, %v1053
    %v1055 = vpop.f32.mrb[0].mxu0
    %1056 = vmatprep.mubr.f32.mxu0 0.0
    %1057 = vmatmul.mubr.f32.gmra.mrb[0].mxu0 %v345
    %v1058 = vpop.f32.mrb[0].mxu0
    %v1059 = vadd.f32 0.0, %v1058
    %v1060 = vpop.f32.mrb[0].mxu0
    %1061 = vmatprep.mubr.f32.mxu0 0.0
    %1062 = vmatmul.mubr.f32.gmra.mrb[0].mxu0 %v348
    %v1063 = vpop.f32.mrb[0].mxu0
    %v1064 = vadd.f32 0.0, %v1063
    %v1065 = vpop.f32.mrb[0].mxu0
    %1066 = vmatprep.mubr.f32.mxu0 0.0
    %1067 = vmatmul.mubr.f32.gmra.mrb[0].mxu0 %v351
    %v1068 = vpop.f32.mrb[0].mxu0
    %v1069 = vadd.f32 0.0, %v1068
    %v1070 = vpop.f32.mrb[0].mxu0
    %1071 = vmatprep.mubr.f32.mxu0 0.0
    %1072 = vmatmul.mubr.f32.gmra.mrb[0].mxu0 %v354
    %v1073 = vpop.f32.mrb[0].mxu0
    %v1074 = vadd.f32 0.0, %v1073
    %v1075 = vpop.f32.mrb[0].mxu0
    %1076 = vmatprep.mubr.f32.mxu0 0.0
    %1077 = vmatmul.mubr.f32.gmra.mrb[0].mxu0 %v357
    %v1078 = vpop.f32.mrb[0].mxu0
    %v1079 = vadd.f32 0.0, %v1078
    %v1080 = vpop.f32.mrb[0].mxu0
    %1081 = vmatprep.mubr.f32.mxu0 0.0
    %1082 = vmatmul.mubr.f32.gmra.mrb[0].mxu0 %v360
    %v1083 = vpop.f32.mrb[0].mxu0
    %v1084 = vadd.f32 0.0, %v1083
    %v1085 = vpop.f32.mrb[0].mxu0
    %1086 = vmatprep.mubr.f32.mxu0 0.0
    %1087 = vmatmul.mubr.f32.gmra.mrb[0].mxu0 %v363
    %v1088 = vpop.f32.mrb[0].mxu0
    %v1089 = vadd.f32 0.0, %v1088
    %v1090 = vpop.f32.mrb[0].mxu0
    %1091 = vmatprep.mubr.f32.mxu0 0.0
    %1092 = vmatmul.mubr.f32.gmra.mrb[0].mxu0 %v366
    %v1093 = vpop.f32.mrb[0].mxu0
    %v1094 = vadd.f32 0.0, %v1093
    %v1095 = vpop.f32.mrb[0].mxu0
    %1096 = vmatprep.mubr.f32.mxu0 0.0
    %1097 = vmatmul.mubr.f32.gmra.mrb[0].mxu0 %v369
    %v1098 = vpop.f32.mrb[0].mxu0
    %v1099 = vadd.f32 0.0, %v1098
    %v1100 = vpop.f32.mrb[0].mxu0
    %1101 = vmatprep.mubr.f32.mxu0 0.0
    %1102 = vmatmul.mubr.f32.gmra.mrb[0].mxu0 %v372
    %v1103 = vpop.f32.mrb[0].mxu0
    %v1104 = vadd.f32 0.0, %v1103
    %v1105 = vpop.f32.mrb[0].mxu0
    %1106 = vmatprep.mubr.f32.mxu0 0.0
    %1107 = vmatmul.mubr.f32.gmra.mrb[0].mxu0 %v375
    %v1108 = vpop.f32.mrb[0].mxu0
    %v1109 = vadd.f32 0.0, %v1108
    %v1110 = vpop.f32.mrb[0].mxu0
    %1111 = vmatprep.mubr.f32.mxu0 0.0
    %1112 = vmatmul.mubr.f32.gmra.mrb[0].mxu0 %v378
    %v1113 = vpop.f32.mrb[0].mxu0
    %v1114 = vadd.f32 0.0, %v1113
    %v1115 = vpop.f32.mrb[0].mxu0
    %1116 = vmatprep.mubr.f32.mxu0 0.0
    %1117 = vmatmul.mubr.f32.gmra.mrb[0].mxu0 %v381
    %v1118 = vpop.f32.mrb[0].mxu0
    %v1119 = vadd.f32 0.0, %v1118
    %v1120 = vpop.f32.mrb[0].mxu0
    %1121 = vmatprep.mubr.f32.mxu0 0.0
    %1122 = vmatmul.mubr.f32.gmra.mrb[0].mxu0 %v384
    %v1123 = vpop.f32.mrb[0].mxu0
    %v1124 = vadd.f32 0.0, %v1123
    %v1125 = vpop.f32.mrb[0].mxu0
    %1126 = vmatprep.mubr.f32.mxu0 0.0
    %1127 = vmatmul.mubr.f32.gmra.mrb[0].mxu0 %v387
    %v1128 = vpop.f32.mrb[0].mxu0
    %v1129 = vadd.f32 0.0, %v1128
    %v1130 = vpop.f32.mrb[0].mxu0
    %1131 = vmatprep.mubr.f32.mxu0 0.0
    %1132 = vmatmul.mubr.f32.gmra.mrb[0].mxu0 %v390
    %v1133 = vpop.f32.mrb[0].mxu0
    %v1134 = vadd.f32 0.0, %v1133
    %v1135 = vpop.f32.mrb[0].mxu0
    %1136 = vmatprep.mubr.f32.mxu0 0.0
    %1137 = vmatmul.mubr.f32.gmra.mrb[0].mxu0 %v393
    %v1138 = vpop.f32.mrb[0].mxu0
    %v1139 = vadd.f32 0.0, %v1138
    %v1140 = vpop.f32.mrb[0].mxu0
    %1141 = vmatprep.mubr.f32.mxu0 0.0
    %1142 = vmatmul.mubr.f32.gmra.mrb[0].mxu0 %v396
    %v1143 = vpop.f32.mrb[0].mxu0
    %v1144 = vadd.f32 0.0, %v1143
    %v1145 = vpop.f32.mrb[0].mxu0
    %1146 = vmatprep.mubr.f32.mxu0 0.0
    %1147 = vmatmul.mubr.f32.gmra.mrb[0].mxu0 %v399
    %v1148 = vpop.f32.mrb[0].mxu0
    %v1149 = vadd.f32 0.0, %v1148
    %v1150 = vpop.f32.mrb[0].mxu0
    %1151 = vmatprep.mubr.f32.mxu0 0.0
    %1152 = vmatmul.mubr.f32.gmra.mrb[0].mxu0 %v402
    %v1153 = vpop.f32.mrb[0].mxu0
    %v1154 = vadd.f32 0.0, %v1153
    %v1155 = vpop.f32.mrb[0].mxu0
    %1156 = vmatprep.mubr.f32.mxu0 0.0
    %1157 = vmatmul.mubr.f32.gmra.mrb[0].mxu0 %v405
    %v1158 = vpop.f32.mrb[0].mxu0
    %v1159 = vadd.f32 0.0, %v1158
    %v1160 = vpop.f32.mrb[0].mxu0
    %1161 = vmatprep.mubr.f32.mxu0 0.0
    %1162 = vmatmul.mubr.f32.gmra.mrb[0].mxu0 %v408
    %v1163 = vpop.f32.mrb[0].mxu0
    %v1164 = vadd.f32 0.0, %v1163
    %v1165 = vpop.f32.mrb[0].mxu0
    %1166 = vmatprep.mubr.f32.mxu0 0.0
    %1167 = vmatmul.mubr.f32.gmra.mrb[0].mxu0 %v411
    %v1168 = vpop.f32.mrb[0].mxu0
    %v1169 = vadd.f32 0.0, %v1168
    %v1170 = vpop.f32.mrb[0].mxu0
    %1171 = vmatprep.mubr.f32.mxu0 0.0
    %1172 = vmatmul.mubr.f32.gmra.mrb[0].mxu0 %v414
    %v1173 = vpop.f32.mrb[0].mxu0
    %v1174 = vadd.f32 0.0, %v1173
    %v1175 = vpop.f32.mrb[0].mxu0
    %1176 = vmatprep.mubr.f32.mxu0 0.0
    %1177 = vmatmul.mubr.f32.gmra.mrb[0].mxu0 %v417
    %v1178 = vpop.f32.mrb[0].mxu0
    %v1179 = vadd.f32 0.0, %v1178
    %v1180 = vpop.f32.mrb[0].mxu0
    %1181 = vmatprep.mubr.f32.mxu0 0.0
    %1182 = vmatmul.mubr.f32.gmra.mrb[0].mxu0 %v420
    %v1183 = vpop.f32.mrb[0].mxu0
    %v1184 = vadd.f32 0.0, %v1183
    %v1185 = vpop.f32.mrb[0].mxu0
    %1186 = vmatprep.mubr.f32.mxu0 0.0
    %1187 = vmatmul.mubr.f32.gmra.mrb[0].mxu0 %v423
    %v1188 = vpop.f32.mrb[0].mxu0
    %v1189 = vadd.f32 0.0, %v1188
    %v1190 = vpop.f32.mrb[0].mxu0
    %1191 = vmatprep.mubr.f32.mxu0 0.0
    %1192 = vmatmul.mubr.f32.gmra.mrb[0].mxu0 %v426
    %v1193 = vpop.f32.mrb[0].mxu0
    %v1194 = vadd.f32 0.0, %v1193
    %v1195 = vpop.f32.mrb[0].mxu0
    %1196 = vmatprep.mubr.f32.mxu0 0.0
    %1197 = vmatmul.mubr.f32.gmra.mrb[0].mxu0 %v429
    %v1198 = vpop.f32.mrb[0].mxu0
    %v1199 = vadd.f32 0.0, %v1198
    %v1200 = vpop.f32.mrb[0].mxu0
    %1201 = vmatprep.mubr.f32.mxu0 0.0
    %1202 = vmatmul.mubr.f32.gmra.mrb[0].mxu0 %v432
    %v1203 = vpop.f32.mrb[0].mxu0
    %v1204 = vadd.f32 0.0, %v1203
    %v1205 = vpop.f32.mrb[0].mxu0
    %1206 = vmatprep.mubr.f32.mxu0 0.0
    %1207 = vmatmul.mubr.f32.gmra.mrb[0].mxu0 %v435
    %v1208 = vpop.f32.mrb[0].mxu0
    %v1209 = vadd.f32 0.0, %v1208
    %v1210 = vpop.f32.mrb[0].mxu0
    %1211 = vmatprep.mubr.f32.mxu0 0.0
    %1212 = vmatmul.mubr.f32.gmra.mrb[0].mxu0 %v438
    %v1213 = vpop.f32.mrb[0].mxu0
    %v1214 = vadd.f32 0.0, %v1213
    %v1215 = vpop.f32.mrb[0].mxu0
    %1216 = vmatprep.mubr.f32.mxu0 0.0
    %1217 = vmatmul.mubr.f32.gmra.mrb[0].mxu0 %v441
    %v1218 = vpop.f32.mrb[0].mxu0
    %v1219 = vadd.f32 0.0, %v1218
    %v1220 = vpop.f32.mrb[0].mxu0
    %1221 = vmatprep.mubr.f32.mxu0 0.0
    %1222 = vmatmul.mubr.f32.gmra.mrb[0].mxu0 %v444
    %v1223 = vpop.f32.mrb[0].mxu0
    %v1224 = vadd.f32 0.0, %v1223
    %v1225 = vpop.f32.mrb[0].mxu0
    %1226 = vmatprep.mubr.f32.mxu0 0.0
    %1227 = vmatmul.mubr.f32.gmra.mrb[0].mxu0 %v447
    %v1228 = vpop.f32.mrb[0].mxu0
    %v1229 = vadd.f32 0.0, %v1228
    %v1230 = vpop.f32.mrb[0].mxu0
    %1231 = vmatprep.mubr.f32.mxu0 0.0
    %1232 = vmatmul.mubr.f32.gmra.mrb[0].mxu0 %v450
    %v1233 = vpop.f32.mrb[0].mxu0
    %v1234 = vadd.f32 0.0, %v1233
    %v1235 = vpop.f32.mrb[0].mxu0
    %1236 = vmatprep.mubr.f32.mxu0 0.0
    %1237 = vmatmul.mubr.f32.gmra.mrb[0].mxu0 %v453
    %v1238 = vpop.f32.mrb[0].mxu0
    %v1239 = vadd.f32 0.0, %v1238
    %v1240 = vpop.f32.mrb[0].mxu0
    %1241 = vmatprep.mubr.f32.mxu0 0.0
    %1242 = vmatmul.mubr.f32.gmra.mrb[0].mxu0 %v456
    %v1243 = vpop.f32.mrb[0].mxu0
    %v1244 = vadd.f32 0.0, %v1243
    %v1245 = vpop.f32.mrb[0].mxu0
    %1246 = vmatprep.mubr.f32.mxu0 0.0
    %1247 = vmatmul.mubr.f32.gmra.mrb[0].mxu0 %v459
    %v1248 = vpop.f32.mrb[0].mxu0
    %v1249 = vadd.f32 0.0, %v1248
    %v1250 = vpop.f32.mrb[0].mxu0
    %1251 = vmatprep.mubr.f32.mxu0 0.0
    %1252 = vmatmul.mubr.f32.gmra.mrb[0].mxu0 %v462
    %v1253 = vpop.f32.mrb[0].mxu0
    %v1254 = vadd.f32 0.0, %v1253
    %v1255 = vpop.f32.mrb[0].mxu0
    %1256 = vmatprep.mubr.f32.mxu0 0.0
    %1257 = vmatmul.mubr.f32.gmra.mrb[0].mxu0 %v465
    %v1258 = vpop.f32.mrb[0].mxu0
    %v1259 = vadd.f32 0.0, %v1258
    %v1260 = vpop.f32.mrb[0].mxu0
    %1261 = vmatprep.mubr.f32.mxu0 0.0
    %1262 = vmatmul.mubr.f32.gmra.mrb[0].mxu0 %v468
    %v1263 = vpop.f32.mrb[0].mxu0
    %v1264 = vadd.f32 0.0, %v1263
    %v1265 = vpop.f32.mrb[0].mxu0
    %1266 = vmatprep.mubr.f32.mxu0 0.0
    %1267 = vmatmul.mubr.f32.gmra.mrb[0].mxu0 %v471
    %v1268 = vpop.f32.mrb[0].mxu0
    %v1269 = vadd.f32 0.0, %v1268
    %v1270 = vpop.f32.mrb[0].mxu0
    %1271 = vmatprep.mubr.f32.mxu0 0.0
    %1272 = vmatmul.mubr.f32.gmra.mrb[0].mxu0 %v474
    %v1273 = vpop.f32.mrb[0].mxu0
    %v1274 = vadd.f32 0.0, %v1273
    %v1275 = vpop.f32.mrb[0].mxu0
    %1276 = vmatprep.mubr.f32.mxu0 0.0
    %1277 = vmatmul.mubr.f32.gmra.mrb[0].mxu0 %v477
    %v1278 = vpop.f32.mrb[0].mxu0
    %v1279 = vadd.f32 0.0, %v1278
    %v1280 = vpop.f32.mrb[0].mxu0
    %1281 = vmatprep.mubr.f32.mxu0 0.0
    %1282 = vmatmul.mubr.f32.gmra.mrb[0].mxu0 %v480
    %v1283 = vpop.f32.mrb[0].mxu0
    %v1284 = vadd.f32 0.0, %v1283
    %v1285 = vpop.f32.mrb[0].mxu0
    %1286 = vmatprep.mubr.f32.mxu0 0.0
    %1287 = vmatmul.mubr.f32.gmra.mrb[0].mxu0 %v483
    %v1288 = vpop.f32.mrb[0].mxu0
    %v1289 = vadd.f32 0.0, %v1288
    %v1290 = vpop.f32.mrb[0].mxu0
    %1291 = vmatprep.mubr.f32.mxu0 0.0
    %1292 = vmatmul.mubr.f32.gmra.mrb[0].mxu0 %v486
    %v1293 = vpop.f32.mrb[0].mxu0
    %v1294 = vadd.f32 0.0, %v1293
    %v1295 = vpop.f32.mrb[0].mxu0
    %1296 = vmatprep.mubr.f32.mxu0 0.0
    %1297 = vmatmul.mubr.f32.gmra.mrb[0].mxu0 %v489
    %v1298 = vpop.f32.mrb[0].mxu0
    %v1299 = vadd.f32 0.0, %v1298
    %v1300 = vpop.f32.mrb[0].mxu0
    %1301 = vmatprep.mubr.f32.mxu0 0.0
    %1302 = vmatmul.mubr.f32.gmra.mrb[0].mxu0 %v492
    %v1303 = vpop.f32.mrb[0].mxu0
    %v1304 = vadd.f32 0.0, %v1303
    %v1305 = vpop.f32.mrb[0].mxu0
    %1306 = vmatprep.mubr.f32.mxu0 0.0
    %1307 = vmatmul.mubr.f32.gmra.mrb[0].mxu0 %v495
    %v1308 = vpop.f32.mrb[0].mxu0
    %v1309 = vadd.f32 0.0, %v1308
    %v1310 = vpop.f32.mrb[0].mxu0
    %1311 = vmatprep.mubr.f32.mxu0 0.0
    %1312 = vmatmul.mubr.f32.gmra.mrb[0].mxu0 %v498
    %v1313 = vpop.f32.mrb[0].mxu0
    %v1314 = vadd.f32 0.0, %v1313
    %v1315 = vpop.f32.mrb[0].mxu0
    %1316 = vmatprep.mubr.f32.mxu0 0.0
    %1317 = vmatmul.mubr.f32.gmra.mrb[0].mxu0 %v501
    %v1318 = vpop.f32.mrb[0].mxu0
    %v1319 = vadd.f32 0.0, %v1318
    %v1320 = vpop.f32.mrb[0].mxu0
    %1321 = vmatprep.mubr.f32.mxu0 0.0
    %1322 = vmatmul.mubr.f32.gmra.mrb[0].mxu0 %v504
    %v1323 = vpop.f32.mrb[0].mxu0
    %v1324 = vadd.f32 0.0, %v1323
    %v1325 = vpop.f32.mrb[0].mxu0
    %1326 = vmatprep.mubr.f32.mxu0 0.0
    %1327 = vmatmul.mubr.f32.gmra.mrb[0].mxu0 %v507
    %v1328 = vpop.f32.mrb[0].mxu0
    %v1329 = vadd.f32 0.0, %v1328
    %v1330 = vpop.f32.mrb[0].mxu0
    %1331 = vmatprep.mubr.f32.mxu0 0.0
    %1332 = vmatmul.mubr.f32.gmra.mrb[0].mxu0 %v510
    %v1333 = vpop.f32.mrb[0].mxu0
    %v1334 = vadd.f32 0.0, %v1333
    %v1335 = vpop.f32.mrb[0].mxu0
    %1336 = vmatprep.mubr.f32.mxu0 0.0
    %1337 = vmatmul.mubr.f32.gmra.mrb[0].mxu0 %v513
    %v1338 = vpop.f32.mrb[0].mxu0
    %v1339 = vadd.f32 0.0, %v1338
    %v1340 = vpop.f32.mrb[0].mxu0
    %1341 = vmatprep.mubr.f32.mxu0 0.0
    %1342 = vmatmul.mubr.f32.gmra.mrb[0].mxu0 %v516
    %v1343 = vpop.f32.mrb[0].mxu0
    %v1344 = vadd.f32 0.0, %v1343
    %v1345 = vpop.f32.mrb[0].mxu0
    %1346 = vmatprep.mubr.f32.mxu0 0.0
    %1347 = vmatmul.mubr.f32.gmra.mrb[0].mxu0 %v519
    %v1348 = vpop.f32.mrb[0].mxu0
    %v1349 = vadd.f32 0.0, %v1348
    %v1350 = vpop.f32.mrb[0].mxu0
    %1351 = vmatprep.mubr.f32.mxu0 0.0
    %1352 = vmatmul.mubr.f32.gmra.mrb[0].mxu0 %v522
    %v1353 = vpop.f32.mrb[0].mxu0
    %v1354 = vadd.f32 0.0, %v1353
    %v1355 = vpop.f32.mrb[0].mxu0
    %1356 = vmatprep.mubr.f32.mxu0 0.0
    %1357 = vmatmul.mubr.f32.gmra.mrb[0].mxu0 %v525
    %v1358 = vpop.f32.mrb[0].mxu0
    %v1359 = vadd.f32 0.0, %v1358
    %v1360 = vpop.f32.mrb[0].mxu0
    %1361 = vmatprep.mubr.f32.mxu0 0.0
    %1362 = vmatmul.mubr.f32.gmra.mrb[0].mxu0 %v528
    %v1363 = vpop.f32.mrb[0].mxu0
    %v1364 = vadd.f32 0.0, %v1363
    %v1365 = vpop.f32.mrb[0].mxu0
    %1366 = vmatprep.mubr.f32.mxu0 0.0
    %1367 = vmatmul.mubr.f32.gmra.mrb[0].mxu0 %v531
    %v1368 = vpop.f32.mrb[0].mxu0
    %v1369 = vadd.f32 0.0, %v1368
    %v1370 = vpop.f32.mrb[0].mxu0
    %1371 = vmatprep.mubr.f32.mxu0 0.0
    %1372 = vmatmul.mubr.f32.gmra.mrb[0].mxu0 %v534
    %v1373 = vpop.f32.mrb[0].mxu0
    %v1374 = vadd.f32 0.0, %v1373
    %v1375 = vpop.f32.mrb[0].mxu0
    %1376 = vmatprep.mubr.f32.mxu0 0.0
    %1377 = vmatmul.mubr.f32.gmra.mrb[0].mxu0 %v537
    %v1378 = vpop.f32.mrb[0].mxu0
    %v1379 = vadd.f32 0.0, %v1378
    %v1380 = vpop.f32.mrb[0].mxu0
    %1381 = vmatprep.mubr.f32.mxu0 0.0
    %1382 = vmatmul.mubr.f32.gmra.mrb[0].mxu0 %v540
    %v1383 = vpop.f32.mrb[0].mxu0
    %v1384 = vadd.f32 0.0, %v1383
    %v1385 = vpop.f32.mrb[0].mxu0
    %1386 = vmatprep.mubr.f32.mxu0 0.0
    %1387 = vmatmul.mubr.f32.gmra.mrb[0].mxu0 %v543
    %v1388 = vpop.f32.mrb[0].mxu0
    %v1389 = vadd.f32 0.0, %v1388
    %v1390 = vpop.f32.mrb[0].mxu0
    %1391 = vmatprep.mubr.f32.mxu0 0.0
    %1392 = vmatmul.mubr.f32.gmra.mrb[0].mxu0 %v546
    %v1393 = vpop.f32.mrb[0].mxu0
    %v1394 = vadd.f32 0.0, %v1393
    %v1395 = vpop.f32.mrb[0].mxu0
    %1396 = vmatprep.mubr.f32.mxu0 0.0
    %1397 = vmatmul.mubr.f32.gmra.mrb[0].mxu0 %v549
    %v1398 = vpop.f32.mrb[0].mxu0
    %v1399 = vadd.f32 0.0, %v1398
    %v1400 = vpop.f32.mrb[0].mxu0
    %1401 = vmatprep.mubr.f32.mxu0 0.0
    %1402 = vmatmul.mubr.f32.gmra.mrb[0].mxu0 %v552
    %v1403 = vpop.f32.mrb[0].mxu0
    %v1404 = vadd.f32 0.0, %v1403
    %v1405 = vpop.f32.mrb[0].mxu0
    %1406 = vmatprep.mubr.f32.mxu0 0.0
    %1407 = vmatmul.mubr.f32.gmra.mrb[0].mxu0 %v555
    %v1408 = vpop.f32.mrb[0].mxu0
    %v1409 = vadd.f32 0.0, %v1408
    %v1410 = vpop.f32.mrb[0].mxu0
    %1411 = vmatprep.mubr.f32.mxu0 0.0
    %1412 = vmatmul.mubr.f32.gmra.mrb[0].mxu0 %v558
    %v1413 = vpop.f32.mrb[0].mxu0
    %v1414 = vadd.f32 0.0, %v1413
    %v1415 = vpop.f32.mrb[0].mxu0
    %1416 = vmatprep.mubr.f32.mxu0 0.0
    %1417 = vmatmul.mubr.f32.gmra.mrb[0].mxu0 %v561
    %v1418 = vpop.f32.mrb[0].mxu0
    %v1419 = vadd.f32 0.0, %v1418
    %v1420 = vpop.f32.mrb[0].mxu0
    %1421 = vmatprep.mubr.f32.mxu0 0.0
    %1422 = vmatmul.mubr.f32.gmra.mrb[0].mxu0 %v564
    %v1423 = vpop.f32.mrb[0].mxu0
    %v1424 = vadd.f32 0.0, %v1423
    %v1425 = vpop.f32.mrb[0].mxu0
    %1426 = vmatprep.mubr.f32.mxu0 0.0
    %1427 = vmatmul.mubr.f32.gmra.mrb[0].mxu0 %v567
    %v1428 = vpop.f32.mrb[0].mxu0
    %v1429 = vadd.f32 0.0, %v1428
    %v1430 = vpop.f32.mrb[0].mxu0
    %1431 = vmatprep.mubr.f32.mxu0 0.0
    %1432 = vmatmul.mubr.f32.gmra.mrb[0].mxu0 %v570
    %v1433 = vpop.f32.mrb[0].mxu0
    %v1434 = vadd.f32 0.0, %v1433
    %v1435 = vpop.f32.mrb[0].mxu0
    %1436 = vmatprep.mubr.f32.mxu0 0.0
    %1437 = vmatmul.mubr.f32.gmra.mrb[0].mxu0 %v573
    %v1438 = vpop.f32.mrb[0].mxu0
    %v1439 = vadd.f32 0.0, %v1438
    %v1440 = vpop.f32.mrb[0].mxu0
    %1441 = vmatprep.mubr.f32.mxu0 0.0
    %1442 = vmatmul.mubr.f32.gmra.mrb[0].mxu0 %v576
    %v1443 = vpop.f32.mrb[0].mxu0
    %v1444 = vadd.f32 0.0, %v1443
    %v1445 = vpop.f32.mrb[0].mxu0
    %1446 = vmatprep.mubr.f32.mxu0 0.0
    %1447 = vmatmul.mubr.f32.gmra.mrb[0].mxu0 %v579
    %v1448 = vpop.f32.mrb[0].mxu0
    %v1449 = vadd.f32 0.0, %v1448
    %v1450 = vpop.f32.mrb[0].mxu0
    %1451 = vmatprep.mubr.f32.mxu0 0.0
    %1452 = vmatmul.mubr.f32.gmra.mrb[0].mxu0 %v582
    %v1453 = vpop.f32.mrb[0].mxu0
    %v1454 = vadd.f32 0.0, %v1453
    %v1455 = vpop.f32.mrb[0].mxu0
    %1456 = vmatprep.mubr.f32.mxu0 0.0
    %1457 = vmatmul.mubr.f32.gmra.mrb[0].mxu0 %v585
    %v1458 = vpop.f32.mrb[0].mxu0
    %v1459 = vadd.f32 0.0, %v1458
    %v1460 = vpop.f32.mrb[0].mxu0
    %1461 = vmatprep.mubr.f32.mxu0 0.0
    %1462 = vmatmul.mubr.f32.gmra.mrb[0].mxu0 %v588
    %v1463 = vpop.f32.mrb[0].mxu0
    %v1464 = vadd.f32 0.0, %v1463
    %v1465 = vpop.f32.mrb[0].mxu0
    %1466 = vmatprep.mubr.f32.mxu0 0.0
    %1467 = vmatmul.mubr.f32.gmra.mrb[0].mxu0 %v591
    %v1468 = vpop.f32.mrb[0].mxu0
    %v1469 = vadd.f32 0.0, %v1468
    %v1470 = vpop.f32.mrb[0].mxu0
    %1471 = vmatprep.mubr.f32.mxu0 0.0
    %1472 = vmatmul.mubr.f32.gmra.mrb[0].mxu0 %v594
    %v1473 = vpop.f32.mrb[0].mxu0
    %v1474 = vadd.f32 0.0, %v1473
    %v1475 = vpop.f32.mrb[0].mxu0
    %1476 = vmatprep.mubr.f32.mxu0 0.0
    %1477 = vmatmul.mubr.f32.gmra.mrb[0].mxu0 %v597
    %v1478 = vpop.f32.mrb[0].mxu0
    %v1479 = vadd.f32 0.0, %v1478
    %v1480 = vpop.f32.mrb[0].mxu0
    %1481 = vmatprep.mubr.f32.mxu0 0.0
    %1482 = vmatmul.mubr.f32.gmra.mrb[0].mxu0 %v600
    %v1483 = vpop.f32.mrb[0].mxu0
    %v1484 = vadd.f32 0.0, %v1483
    %v1485 = vpop.f32.mrb[0].mxu0
    %1486 = vmatprep.mubr.f32.mxu0 0.0
    %1487 = vmatmul.mubr.f32.gmra.mrb[0].mxu0 %v603
    %v1488 = vpop.f32.mrb[0].mxu0
    %v1489 = vadd.f32 0.0, %v1488
    %v1490 = vpop.f32.mrb[0].mxu0
    %1491 = vmatprep.mubr.f32.mxu0 0.0
    %1492 = vmatmul.mubr.f32.gmra.mrb[0].mxu0 %v606
    %v1493 = vpop.f32.mrb[0].mxu0
    %v1494 = vadd.f32 0.0, %v1493
    %v1495 = vpop.f32.mrb[0].mxu0
    %1496 = vmatprep.mubr.f32.mxu0 0.0
    %1497 = vmatmul.mubr.f32.gmra.mrb[0].mxu0 %v609
    %v1498 = vpop.f32.mrb[0].mxu0
    %v1499 = vadd.f32 0.0, %v1498
    %v1500 = vpop.f32.mrb[0].mxu0
    %1501 = vmatprep.mubr.f32.mxu0 0.0
    %1502 = vmatmul.mubr.f32.gmra.mrb[0].mxu0 %v612
    %v1503 = vpop.f32.mrb[0].mxu0
    %v1504 = vadd.f32 0.0, %v1503
    %v1505 = vpop.f32.mrb[0].mxu0
    %1506 = vmatprep.mubr.f32.mxu0 0.0
    %1507 = vmatmul.mubr.f32.gmra.mrb[0].mxu0 %v615
    %v1508 = vpop.f32.mrb[0].mxu0
    %v1509 = vadd.f32 0.0, %v1508
    %v1510 = vpop.f32.mrb[0].mxu0
    %1511 = vmatprep.mubr.f32.mxu0 0.0
    %1512 = vmatmul.mubr.f32.gmra.mrb[0].mxu0 %v618
    %v1513 = vpop.f32.mrb[0].mxu0
    %v1514 = vadd.f32 0.0, %v1513
    %v1515 = vpop.f32.mrb[0].mxu0
    %1516 = vmatprep.mubr.f32.mxu0 0.0
    %1517 = vmatmul.mubr.f32.gmra.mrb[0].mxu0 %v621
    %v1518 = vpop.f32.mrb[0].mxu0
    %v1519 = vadd.f32 0.0, %v1518
    %v1520 = vpop.f32.mrb[0].mxu0
    %1521 = vmatprep.mubr.f32.mxu0 0.0
    %1522 = vmatmul.mubr.f32.gmra.mrb[0].mxu0 %v624
    %v1523 = vpop.f32.mrb[0].mxu0
    %v1524 = vadd.f32 0.0, %v1523
    %v1525 = vpop.f32.mrb[0].mxu0
    %1526 = vmatprep.mubr.f32.mxu0 0.0
    %1527 = vmatmul.mubr.f32.gmra.mrb[0].mxu0 %v627
    %v1528 = vpop.f32.mrb[0].mxu0
    %v1529 = vadd.f32 0.0, %v1528
    %v1530 = vpop.f32.mrb[0].mxu0
    %1531 = vmatprep.mubr.f32.mxu0 0.0
    %1532 = vmatmul.mubr.f32.gmra.mrb[0].mxu0 %v630
    %v1533 = vpop.f32.mrb[0].mxu0
    %v1534 = vadd.f32 0.0, %v1533
    %v1535 = vpop.f32.mrb[0].mxu0
    %1536 = vmatprep.mubr.f32.mxu0 0.0
    %1537 = vmatmul.mubr.f32.gmra.mrb[0].mxu0 %v633
    %v1538 = vpop.f32.mrb[0].mxu0
    %v1539 = vadd.f32 0.0, %v1538
    %v1540 = vpop.f32.mrb[0].mxu0
    %1541 = vmatprep.mubr.f32.mxu0 0.0
    %1542 = vmatmul.mubr.f32.gmra.mrb[0].mxu0 %v636
    %v1543 = vpop.f32.mrb[0].mxu0
    %v1544 = vadd.f32 0.0, %v1543
    %v1545 = vpop.f32.mrb[0].mxu0
    %1546 = vmatprep.mubr.f32.mxu0 0.0
    %1547 = vmatmul.mubr.f32.gmra.mrb[0].mxu0 %v639
    %v1548 = vpop.f32.mrb[0].mxu0
    %v1549 = vadd.f32 0.0, %v1548
    %v1550 = vpop.f32.mrb[0].mxu0
    %1551 = vmatprep.mubr.f32.mxu0 0.0
    %1552 = vmatmul.mubr.f32.gmra.mrb[0].mxu0 %v642
    %v1553 = vpop.f32.mrb[0].mxu0
    %v1554 = vadd.f32 0.0, %v1553
    %v1555 = vpop.f32.mrb[0].mxu0
    %1556 = vmatprep.mubr.f32.mxu0 0.0
    %1557 = vmatmul.mubr.f32.gmra.mrb[0].mxu0 %v645
    %v1558 = vpop.f32.mrb[0].mxu0
    %v1559 = vadd.f32 0.0, %v1558
    %v1560 = vpop.f32.mrb[0].mxu0
    %1561 = vmatprep.mubr.f32.mxu0 0.0
    %1562 = vmatmul.mubr.f32.gmra.mrb[0].mxu0 %v648
    %v1563 = vpop.f32.mrb[0].mxu0
    %v1564 = vadd.f32 0.0, %v1563
    %v1565 = vpop.f32.mrb[0].mxu0
    %1566 = vmatprep.mubr.f32.mxu0 0.0
    %1567 = vmatmul.mubr.f32.gmra.mrb[0].mxu0 %v651
    %v1568 = vpop.f32.mrb[0].mxu0
    %v1569 = vadd.f32 0.0, %v1568
    %v1570 = vpop.f32.mrb[0].mxu0
    %1571 = vmatprep.mubr.f32.mxu0 0.0
    %1572 = vmatmul.mubr.f32.gmra.mrb[0].mxu0 %v654
    %v1573 = vpop.f32.mrb[0].mxu0
    %v1574 = vadd.f32 0.0, %v1573
    %v1575 = vpop.f32.mrb[0].mxu0
    %1576 = vmatprep.mubr.f32.mxu0 0.0
    %1577 = vmatmul.mubr.f32.gmra.mrb[0].mxu0 %v657
    %v1578 = vpop.f32.mrb[0].mxu0
    %v1579 = vadd.f32 0.0, %v1578
    %v1580 = vpop.f32.mrb[0].mxu0
    %1581 = vmatprep.mubr.f32.mxu0 0.0
    %1582 = vmatmul.mubr.f32.gmra.mrb[0].mxu0 %v660
    %v1583 = vpop.f32.mrb[0].mxu0
    %v1584 = vadd.f32 0.0, %v1583
    %v1585 = vpop.f32.mrb[0].mxu0
    %1586 = vmatprep.mubr.f32.mxu0 0.0
    %1587 = vmatmul.mubr.f32.gmra.mrb[0].mxu0 %v663
    %v1588 = vpop.f32.mrb[0].mxu0
    %v1589 = vadd.f32 0.0, %v1588
    %v1590 = vpop.f32.mrb[0].mxu0
    %1591 = vmatprep.mubr.f32.mxu0 0.0
    %1592 = vmatmul.mubr.f32.gmra.mrb[0].mxu0 %v666
    %v1593 = vpop.f32.mrb[0].mxu0
    %v1594 = vadd.f32 0.0, %v1593
    %v1595 = vpop.f32.mrb[0].mxu0
    %1596 = vmatprep.mubr.f32.mxu0 0.0
    %1597 = vmatmul.mubr.f32.gmra.mrb[0].mxu0 %v669
    %v1598 = vpop.f32.mrb[0].mxu0
    %v1599 = vadd.f32 0.0, %v1598
    %v1600 = vpop.f32.mrb[0].mxu0
    %1601 = vmatprep.mubr.f32.mxu0 0.0
    %1602 = vmatmul.mubr.f32.gmra.mrb[0].mxu0 %v672
    %v1603 = vpop.f32.mrb[0].mxu0
    %v1604 = vadd.f32 0.0, %v1603
    %v1605 = vpop.f32.mrb[0].mxu0
    %1606 = vmatprep.mubr.f32.mxu0 0.0
    %1607 = vmatmul.mubr.f32.gmra.mrb[0].mxu0 %v675
    %v1608 = vpop.f32.mrb[0].mxu0
    %v1609 = vadd.f32 0.0, %v1608
    %v1610 = vpop.f32.mrb[0].mxu0
    %1611 = vmatprep.mubr.f32.mxu0 0.0
    %1612 = vmatmul.mubr.f32.gmra.mrb[0].mxu0 %v678
    %v1613 = vpop.f32.mrb[0].mxu0
    %v1614 = vadd.f32 0.0, %v1613
    %v1615 = vpop.f32.mrb[0].mxu0
    %1616 = vmatprep.mubr.f32.mxu0 0.0
    %1617 = vmatmul.mubr.f32.gmra.mrb[0].mxu0 %v681
    %v1618 = vpop.f32.mrb[0].mxu0
    %v1619 = vadd.f32 0.0, %v1618
    %v1620 = vpop.f32.mrb[0].mxu0
    %1621 = vmatprep.mubr.f32.mxu0 0.0
    %1622 = vmatmul.mubr.f32.gmra.mrb[0].mxu0 %v684
    %v1623 = vpop.f32.mrb[0].mxu0
    %v1624 = vadd.f32 0.0, %v1623
    %v1625 = vpop.f32.mrb[0].mxu0
    %1626 = vmatprep.mubr.f32.mxu0 0.0
    %1627 = vmatmul.mubr.f32.gmra.mrb[0].mxu0 %v687
    %v1628 = vpop.f32.mrb[0].mxu0
    %v1629 = vadd.f32 0.0, %v1628
    %v1630 = vpop.f32.mrb[0].mxu0
    %1631 = vmatprep.mubr.f32.mxu0 0.0
    %1632 = vmatmul.mubr.f32.gmra.mrb[0].mxu0 %v690
    %v1633 = vpop.f32.mrb[0].mxu0
    %v1634 = vadd.f32 0.0, %v1633
    %v1635 = vpop.f32.mrb[0].mxu0
    %1636 = vmatprep.mubr.f32.mxu0 0.0
    %1637 = vmatmul.mubr.f32.gmra.mrb[0].mxu0 %v693
    %v1638 = vpop.f32.mrb[0].mxu0
    %v1639 = vadd.f32 0.0, %v1638
    %v1640 = vpop.f32.mrb[0].mxu0
    %1641 = vmatprep.mubr.f32.mxu0 0.0
    %1642 = vmatmul.mubr.f32.gmra.mrb[0].mxu0 %v696
    %v1643 = vpop.f32.mrb[0].mxu0
    %v1644 = vadd.f32 0.0, %v1643
    %v1645 = vpop.f32.mrb[0].mxu0
    %1646 = vmatprep.mubr.f32.mxu0 0.0
    %1647 = vmatmul.mubr.f32.gmra.mrb[0].mxu0 %v699
    %v1648 = vpop.f32.mrb[0].mxu0
    %v1649 = vadd.f32 0.0, %v1648
    %v1650 = vpop.f32.mrb[0].mxu0
    %1651 = vmatprep.mubr.f32.mxu0 0.0
    %1652 = vmatmul.mubr.f32.gmra.mrb[0].mxu0 %v702
    %v1653 = vpop.f32.mrb[0].mxu0
    %v1654 = vadd.f32 0.0, %v1653
    %v1655 = vpop.f32.mrb[0].mxu0
    %1656 = vmatprep.mubr.f32.mxu0 0.0
    %1657 = vmatmul.mubr.f32.gmra.mrb[0].mxu0 %v705
    %v1658 = vpop.f32.mrb[0].mxu0
    %v1659 = vadd.f32 0.0, %v1658
    %v1660 = vpop.f32.mrb[0].mxu0
    %1661 = vmatprep.mubr.f32.mxu0 0.0
    %1662 = vmatmul.mubr.f32.gmra.mrb[0].mxu0 %v708
    %v1663 = vpop.f32.mrb[0].mxu0
    %v1664 = vadd.f32 0.0, %v1663
    %v1665 = vpop.f32.mrb[0].mxu0
    %1666 = vmatprep.mubr.f32.mxu0 0.0
    %1667 = vmatmul.mubr.f32.gmra.mrb[0].mxu0 %v711
    %v1668 = vpop.f32.mrb[0].mxu0
    %v1669 = vadd.f32 0.0, %v1668
    %v1670 = vpop.f32.mrb[0].mxu0
    %1671 = vmatprep.mubr.f32.mxu0 0.0
    %1672 = vmatmul.mubr.f32.gmra.mrb[0].mxu0 %v714
    %v1673 = vpop.f32.mrb[0].mxu0
    %v1674 = vadd.f32 0.0, %v1673
    %v1675 = vpop.f32.mrb[0].mxu0
    %1676 = vmatprep.mubr.f32.mxu0 0.0
    %1677 = vmatmul.mubr.f32.gmra.mrb[0].mxu0 %v717
    %v1678 = vpop.f32.mrb[0].mxu0
    %v1679 = vadd.f32 0.0, %v1678
    %v1680 = vpop.f32.mrb[0].mxu0
    %1681 = vmatprep.mubr.f32.mxu0 0.0
    %1682 = vmatmul.mubr.f32.gmra.mrb[0].mxu0 %v720
    %v1683 = vpop.f32.mrb[0].mxu0
    %v1684 = vadd.f32 0.0, %v1683
    %v1685 = vpop.f32.mrb[0].mxu0
    %1686 = vmatprep.mubr.f32.mxu0 0.0
    %1687 = vmatmul.mubr.f32.gmra.mrb[0].mxu0 %v723
    %v1688 = vpop.f32.mrb[0].mxu0
    %v1689 = vadd.f32 0.0, %v1688
    %v1690 = vpop.f32.mrb[0].mxu0
    %1691 = vmatprep.mubr.f32.mxu0 0.0
    %1692 = vmatmul.mubr.f32.gmra.mrb[0].mxu0 %v726
    %v1693 = vpop.f32.mrb[0].mxu0
    %v1694 = vadd.f32 0.0, %v1693
    %v1695 = vpop.f32.mrb[0].mxu0
    %1696 = vmatprep.mubr.f32.mxu0 0.0
    %1697 = vmatmul.mubr.f32.gmra.mrb[0].mxu0 %v729
    %v1698 = vpop.f32.mrb[0].mxu0
    %v1699 = vadd.f32 0.0, %v1698
    %v1700 = vpop.f32.mrb[0].mxu0
    %1701 = vmatprep.mubr.f32.mxu0 0.0
    %1702 = vmatmul.mubr.f32.gmra.mrb[0].mxu0 %v732
    %v1703 = vpop.f32.mrb[0].mxu0
    %v1704 = vadd.f32 0.0, %v1703
    %v1705 = vpop.f32.mrb[0].mxu0
    %1706 = vmatprep.mubr.f32.mxu0 0.0
    %1707 = vmatmul.mubr.f32.gmra.mrb[0].mxu0 %v735
    %v1708 = vpop.f32.mrb[0].mxu0
    %v1709 = vadd.f32 0.0, %v1708
    %v1710 = vpop.f32.mrb[0].mxu0
    %1711 = vmatprep.mubr.f32.mxu0 0.0
    %1712 = vmatmul.mubr.f32.gmra.mrb[0].mxu0 %v738
    %v1713 = vpop.f32.mrb[0].mxu0
    %v1714 = vadd.f32 0.0, %v1713
    %v1715 = vpop.f32.mrb[0].mxu0
    %1716 = vmatprep.mubr.f32.mxu0 0.0
    %1717 = vmatmul.mubr.f32.gmra.mrb[0].mxu0 %v741
    %v1718 = vpop.f32.mrb[0].mxu0
    %v1719 = vadd.f32 0.0, %v1718
    %v1720 = vpop.f32.mrb[0].mxu0
    %1721 = vmatprep.mubr.f32.mxu0 0.0
    %1722 = vmatmul.mubr.f32.gmra.mrb[0].mxu0 %v744
    %v1723 = vpop.f32.mrb[0].mxu0
    %v1724 = vadd.f32 0.0, %v1723
    %v1725 = vpop.f32.mrb[0].mxu0
    %1726 = vmatprep.mubr.f32.mxu0 0.0
    %1727 = vmatmul.mubr.f32.gmra.mrb[0].mxu0 %v747
    %v1728 = vpop.f32.mrb[0].mxu0
    %v1729 = vadd.f32 0.0, %v1728
    %v1730 = vpop.f32.mrb[0].mxu0
    %1731 = vmatprep.mubr.f32.mxu0 0.0
    %1732 = vmatmul.mubr.f32.gmra.mrb[0].mxu0 %v750
    %v1733 = vpop.f32.mrb[0].mxu0
    %v1734 = vadd.f32 0.0, %v1733
    %v1735 = vpop.f32.mrb[0].mxu0
    %1736 = vmatprep.mubr.f32.mxu0 0.0
    %1737 = vmatmul.mubr.f32.gmra.mrb[0].mxu0 %v753
    %v1738 = vpop.f32.mrb[0].mxu0
    %v1739 = vadd.f32 0.0, %v1738
    %v1740 = vpop.f32.mrb[0].mxu0
    %1741 = vmatprep.mubr.f32.mxu0 0.0
    %1742 = vmatmul.mubr.f32.gmra.mrb[0].mxu0 %v756
    %v1743 = vpop.f32.mrb[0].mxu0
    %v1744 = vadd.f32 0.0, %v1743
    %v1745 = vpop.f32.mrb[0].mxu0
    %1746 = vmatprep.mubr.f32.mxu0 0.0
    %1747 = vmatmul.mubr.f32.gmra.mrb[0].mxu0 %v759
    %v1748 = vpop.f32.mrb[0].mxu0
    %v1749 = vadd.f32 0.0, %v1748
    %v1750 = vpop.f32.mrb[0].mxu0
    %1751 = vmatprep.mubr.f32.mxu0 0.0
    %1752 = vmatmul.mubr.f32.gmra.mrb[0].mxu0 %v762
    %v1753 = vpop.f32.mrb[0].mxu0
    %v1754 = vadd.f32 0.0, %v1753
    %v1755 = vpop.f32.mrb[0].mxu0
    %1756 = vmatprep.mubr.f32.mxu0 0.0
    %1757 = vmatmul.mubr.f32.gmra.mrb[0].mxu0 %v765
    %v1758 = vpop.f32.mrb[0].mxu0
    %v1759 = vadd.f32 0.0, %v1758
    %v1760 = vpop.f32.mrb[0].mxu0
    %1761 = vmatprep.mubr.f32.mxu0 0.0
    %1762 = vmatmul.mubr.f32.gmra.mrb[0].mxu0 %v768
    %v1763 = vpop.f32.mrb[0].mxu0
    %v1764 = vadd.f32 0.0, %v1763
    %v1765 = vpop.f32.mrb[0].mxu0
    %1766 = vmatprep.mubr.f32.mxu0 0.0
    %1767 = vmatmul.mubr.f32.gmra.mrb[0].mxu0 %v771
    %v1768 = vpop.f32.mrb[0].mxu0
    %v1769 = vadd.f32 0.0, %v1768
    %v1770 = vpop.f32.mrb[0].mxu0
    %1771 = vmatprep.mubr.f32.mxu0 0.0
    %1772 = vmatmul.mubr.f32.gmra.mrb[0].mxu0 %v774
    %v1773 = vpop.f32.mrb[0].mxu0
    %v1774 = vadd.f32 0.0, %v1773
    %v1775 = vpop.f32.mrb[0].mxu0
    %1776 = vmatprep.mubr.f32.mxu0 0.0
    %1777 = vmatmul.mubr.f32.gmra.mrb[0].mxu0 %v777
    %v1778 = vpop.f32.mrb[0].mxu0
    %v1779 = vadd.f32 0.0, %v1778
    %v1780 = vpop.f32.mrb[0].mxu0
    %1781 = vmatprep.mubr.f32.mxu0 0.0
    %1782 = vmatmul.mubr.f32.gmra.mrb[0].mxu0 %v780
    %v1783 = vpop.f32.mrb[0].mxu0
    %v1784 = vadd.f32 0.0, %v1783
    %v1785 = vpop.f32.mrb[0].mxu0
    %1786 = vmatprep.mubr.f32.mxu0 0.0
    %1787 = vmatmul.mubr.f32.gmra.mrb[0].mxu0 %v783
    %v1788 = vpop.f32.mrb[0].mxu0
    %v1789 = vadd.f32 0.0, %v1788
    %v1790 = vpop.f32.mrb[0].mxu0
    %1791 = vmatprep.mubr.f32.mxu0 0.0
    %1792 = vmatmul.mubr.f32.gmra.mrb[0].mxu0 %v786
    %v1793 = vpop.f32.mrb[0].mxu0
    %v1794 = vadd.f32 0.0, %v1793
    %v1795 = vpop.f32.mrb[0].mxu0
    %1796 = vmatprep.mubr.f32.mxu0 0.0
    %1797 = vmatmul.mubr.f32.gmra.mrb[0].mxu0 %v789
    %v1798 = vpop.f32.mrb[0].mxu0
    %v1799 = vadd.f32 0.0, %v1798
    %v1800 = vpop.f32.mrb[0].mxu0
    %1801 = vmatprep.mubr.f32.mxu0 0.0
    %1802 = vmatmul.mubr.f32.gmra.mrb[0].mxu0 %v792
    %v1803 = vpop.f32.mrb[0].mxu0
    %v1804 = vadd.f32 0.0, %v1803
    %v1805 = vpop.f32.mrb[0].mxu0
    %1806 = vmatprep.mubr.f32.mxu0 0.0
    %1807 = vmatmul.mubr.f32.gmra.mrb[0].mxu0 %v795
    %v1808 = vpop.f32.mrb[0].mxu0
    %v1809 = vadd.f32 0.0, %v1808
    %v1810 = vpop.f32.mrb[0].mxu0
    %1811 = vmatprep.mubr.f32.mxu0 0.0
    %1812 = vmatmul.mubr.f32.gmra.mrb[0].mxu0 %v798
    %v1813 = vpop.f32.mrb[0].mxu0
    %v1814 = vadd.f32 0.0, %v1813
    %v1815 = vpop.f32.mrb[0].mxu0
    %1816 = vmatprep.mubr.f32.mxu0 0.0
    %1817 = vmatmul.mubr.f32.gmra.mrb[0].mxu0 %v801
    %v1818 = vpop.f32.mrb[0].mxu0
    %v1819 = vadd.f32 0.0, %v1818
    %v1820 = vpop.f32.mrb[0].mxu0
    %1821 = vmatprep.mubr.f32.mxu0 0.0
    %1822 = vmatmul.mubr.f32.gmra.mrb[0].mxu0 %v804
    %v1823 = vpop.f32.mrb[0].mxu0
    %v1824 = vadd.f32 0.0, %v1823
    %v1825 = vpop.f32.mrb[0].mxu0
    %1826 = vmatprep.mubr.f32.mxu0 0.0
    %1827 = vmatmul.mubr.f32.gmra.mrb[0].mxu0 %v807
    %v1828 = vpop.f32.mrb[0].mxu0
    %v1829 = vadd.f32 0.0, %v1828
    %v1830 = vpop.f32.mrb[0].mxu0
    %1831 = vmatprep.mubr.f32.mxu0 0.0
    %1832 = vmatmul.mubr.f32.gmra.mrb[0].mxu0 %v810
    %v1833 = vpop.f32.mrb[0].mxu0
    %v1834 = vadd.f32 0.0, %v1833
    %v1835 = vpop.f32.mrb[0].mxu0
    %1836 = vdwg.mxu0
    %v1837 = vmax.f32 %v879, %v1119
    %v1838 = vmax.f32 %v884, %v1124
    %v1839 = vmax.f32 %v889, %v1129
    %v1840 = vmax.f32 %v894, %v1134
    %v1841 = vmax.f32 %v899, %v1139
    %v1842 = vmax.f32 %v904, %v1144
    %v1843 = vmax.f32 %v909, %v1149
    %v1844 = vmax.f32 %v914, %v1154
    %v1845 = vmax.f32 %v919, %v1159
    %v1846 = vmax.f32 %v924, %v1164
    %v1847 = vmax.f32 %v929, %v1169
    %v1848 = vmax.f32 %v934, %v1174
    %v1849 = vmax.f32 %v939, %v1179
    %v1850 = vmax.f32 %v944, %v1184
    %v1851 = vmax.f32 %v949, %v1189
    %v1852 = vmax.f32 %v954, %v1194
    %v1853 = vmax.f32 %v959, %v1199
    %v1854 = vmax.f32 %v964, %v1204
    %v1855 = vmax.f32 %v969, %v1209
    %v1856 = vmax.f32 %v974, %v1214
    %v1857 = vmax.f32 %v979, %v1219
    %v1858 = vmax.f32 %v984, %v1224
    %v1859 = vmax.f32 %v989, %v1229
    %v1860 = vmax.f32 %v994, %v1234
    %v1861 = vmax.f32 %v999, %v1239
    %v1862 = vmax.f32 %v1004, %v1244
    %v1863 = vmax.f32 %v1009, %v1249
    %v1864 = vmax.f32 %v1014, %v1254
    %v1865 = vmax.f32 %v1019, %v1259
    %v1866 = vmax.f32 %v1024, %v1264
    %v1867 = vmax.f32 %v1029, %v1269
    %v1868 = vmax.f32 %v1034, %v1274
    %v1869 = vmax.f32 %v1039, %v1279
    %v1870 = vmax.f32 %v1044, %v1284
    %v1871 = vmax.f32 %v1049, %v1289
    %v1872 = vmax.f32 %v1054, %v1294
    %v1873 = vmax.f32 %v1059, %v1299
    %v1874 = vmax.f32 %v1064, %v1304
    %v1875 = vmax.f32 %v1069, %v1309
    %v1876 = vmax.f32 %v1074, %v1314
    %v1877 = vmax.f32 %v1079, %v1319
    %v1878 = vmax.f32 %v1084, %v1324
    %v1879 = vmax.f32 %v1089, %v1329
    %v1880 = vmax.f32 %v1094, %v1334
    %v1881 = vmax.f32 %v1099, %v1339
    %v1882 = vmax.f32 %v1104, %v1344
    %v1883 = vmax.f32 %v1109, %v1349
    %v1884 = vmax.f32 %v1114, %v1354
    %v1885 = vmax.f32 %v1359, %v1599
    %v1886 = vmax.f32 %v1364, %v1604
    %v1887 = vmax.f32 %v1369, %v1609
    %v1888 = vmax.f32 %v1374, %v1614
    %v1889 = vmax.f32 %v1379, %v1619
    %v1890 = vmax.f32 %v1384, %v1624
    %v1891 = vmax.f32 %v1389, %v1629
    %v1892 = vmax.f32 %v1394, %v1634
    %v1893 = vmax.f32 %v1399, %v1639
    %v1894 = vmax.f32 %v1404, %v1644
    %v1895 = vmax.f32 %v1409, %v1649
    %v1896 = vmax.f32 %v1414, %v1654
    %v1897 = vmax.f32 %v1419, %v1659
    %v1898 = vmax.f32 %v1424, %v1664
    %v1899 = vmax.f32 %v1429, %v1669
    %v1900 = vmax.f32 %v1434, %v1674
    %v1901 = vmax.f32 %v1439, %v1679
    %v1902 = vmax.f32 %v1444, %v1684
    %v1903 = vmax.f32 %v1449, %v1689
    %v1904 = vmax.f32 %v1454, %v1694
    %v1905 = vmax.f32 %v1459, %v1699
    %v1906 = vmax.f32 %v1464, %v1704
    %v1907 = vmax.f32 %v1469, %v1709
    %v1908 = vmax.f32 %v1474, %v1714
    %v1909 = vmax.f32 %v1479, %v1719
    %v1910 = vmax.f32 %v1484, %v1724
    %v1911 = vmax.f32 %v1489, %v1729
    %v1912 = vmax.f32 %v1494, %v1734
    %v1913 = vmax.f32 %v1499, %v1739
    %v1914 = vmax.f32 %v1504, %v1744
    %v1915 = vmax.f32 %v1509, %v1749
    %v1916 = vmax.f32 %v1514, %v1754
    %v1917 = vmax.f32 %v1519, %v1759
    %v1918 = vmax.f32 %v1524, %v1764
    %v1919 = vmax.f32 %v1529, %v1769
    %v1920 = vmax.f32 %v1534, %v1774
    %v1921 = vmax.f32 %v1539, %v1779
    %v1922 = vmax.f32 %v1544, %v1784
    %v1923 = vmax.f32 %v1549, %v1789
    %v1924 = vmax.f32 %v1554, %v1794
    %v1925 = vmax.f32 %v1559, %v1799
    %v1926 = vmax.f32 %v1564, %v1804
    %v1927 = vmax.f32 %v1569, %v1809
    %v1928 = vmax.f32 %v1574, %v1814
    %v1929 = vmax.f32 %v1579, %v1819
    %v1930 = vmax.f32 %v1584, %v1824
    %v1931 = vmax.f32 %v1589, %v1829
    %v1932 = vmax.f32 %v1594, %v1834
    %v1933 = vmax.f32 %v1837, %v1885
    %v1934 = vmax.f32 %v1838, %v1886
    %v1935 = vmax.f32 %v1839, %v1887
    %v1936 = vmax.f32 %v1840, %v1888
    %v1937 = vmax.f32 %v1841, %v1889
    %v1938 = vmax.f32 %v1842, %v1890
    %v1939 = vmax.f32 %v1843, %v1891
    %v1940 = vmax.f32 %v1844, %v1892
    %v1941 = vmax.f32 %v1845, %v1893
    %v1942 = vmax.f32 %v1846, %v1894
    %v1943 = vmax.f32 %v1847, %v1895
    %v1944 = vmax.f32 %v1848, %v1896
    %v1945 = vmax.f32 %v1849, %v1897
    %v1946 = vmax.f32 %v1850, %v1898
    %v1947 = vmax.f32 %v1851, %v1899
    %v1948 = vmax.f32 %v1852, %v1900
    %v1949 = vmax.f32 %v1853, %v1901
    %v1950 = vmax.f32 %v1854, %v1902
    %v1951 = vmax.f32 %v1855, %v1903
    %v1952 = vmax.f32 %v1856, %v1904
    %v1953 = vmax.f32 %v1857, %v1905
    %v1954 = vmax.f32 %v1858, %v1906
    %v1955 = vmax.f32 %v1859, %v1907
    %v1956 = vmax.f32 %v1860, %v1908
    %v1957 = vmax.f32 %v1861, %v1909
    %v1958 = vmax.f32 %v1862, %v1910
    %v1959 = vmax.f32 %v1863, %v1911
    %v1960 = vmax.f32 %v1864, %v1912
    %v1961 = vmax.f32 %v1865, %v1913
    %v1962 = vmax.f32 %v1866, %v1914
    %v1963 = vmax.f32 %v1867, %v1915
    %v1964 = vmax.f32 %v1868, %v1916
    %v1965 = vmax.f32 %v1869, %v1917
    %v1966 = vmax.f32 %v1870, %v1918
    %v1967 = vmax.f32 %v1871, %v1919
    %v1968 = vmax.f32 %v1872, %v1920
    %v1969 = vmax.f32 %v1873, %v1921
    %v1970 = vmax.f32 %v1874, %v1922
    %v1971 = vmax.f32 %v1875, %v1923
    %v1972 = vmax.f32 %v1876, %v1924
    %v1973 = vmax.f32 %v1877, %v1925
    %v1974 = vmax.f32 %v1878, %v1926
    %v1975 = vmax.f32 %v1879, %v1927
    %v1976 = vmax.f32 %v1880, %v1928
    %v1977 = vmax.f32 %v1881, %v1929
    %v1978 = vmax.f32 %v1882, %v1930
    %v1979 = vmax.f32 %v1883, %v1931
    %v1980 = vmax.f32 %v1884, %v1932
    %v1981 = vld [vmem:[%s2] sm:$0x1]
    %v1983 = vlaneseq
    %v1984 = vshrl.u32 %v1983, 7
    %v1985 = vsub.s32 0, %v1984
    %v1986 = vrot.slane %v1981, %v1985
    %v1988 = vadd.f32 %v1933, %v1986
    %v1989 = vadd.f32 %v1934, %v1986
    %v1990 = vadd.f32 %v1935, %v1986
    %v1991 = vadd.f32 %v1936, %v1986
    %v1992 = vadd.f32 %v1937, %v1986
    %v1993 = vadd.f32 %v1938, %v1986
    %v1994 = vadd.f32 %v1939, %v1986
    %v1995 = vadd.f32 %v1940, %v1986
    %v1996 = vadd.f32 %v1941, %v1986
    %v1997 = vadd.f32 %v1942, %v1986
    %v1998 = vadd.f32 %v1943, %v1986
    %v1999 = vadd.f32 %v1944, %v1986
    %v2000 = vadd.f32 %v1945, %v1986
    %v2001 = vadd.f32 %v1946, %v1986
    %v2002 = vadd.f32 %v1947, %v1986
    %v2003 = vadd.f32 %v1948, %v1986
    %v2004 = vadd.f32 %v1949, %v1986
    %v2005 = vadd.f32 %v1950, %v1986
    %v2006 = vadd.f32 %v1951, %v1986
    %v2007 = vadd.f32 %v1952, %v1986
    %v2008 = vadd.f32 %v1953, %v1986
    %v2009 = vadd.f32 %v1954, %v1986
    %v2010 = vadd.f32 %v1955, %v1986
    %v2011 = vadd.f32 %v1956, %v1986
    %v2012 = vadd.f32 %v1957, %v1986
    %v2013 = vadd.f32 %v1958, %v1986
    %v2014 = vadd.f32 %v1959, %v1986
    %v2015 = vadd.f32 %v1960, %v1986
    %v2016 = vadd.f32 %v1961, %v1986
    %v2017 = vadd.f32 %v1962, %v1986
    %v2018 = vadd.f32 %v1963, %v1986
    %v2019 = vadd.f32 %v1964, %v1986
    %v2020 = vadd.f32 %v1965, %v1986
    %v2021 = vadd.f32 %v1966, %v1986
    %v2022 = vadd.f32 %v1967, %v1986
    %v2023 = vadd.f32 %v1968, %v1986
    %v2024 = vadd.f32 %v1969, %v1986
    %v2025 = vadd.f32 %v1970, %v1986
    %v2026 = vadd.f32 %v1971, %v1986
    %v2027 = vadd.f32 %v1972, %v1986
    %v2028 = vadd.f32 %v1973, %v1986
    %v2029 = vadd.f32 %v1974, %v1986
    %v2030 = vadd.f32 %v1975, %v1986
    %v2031 = vadd.f32 %v1976, %v1986
    %v2032 = vadd.f32 %v1977, %v1986
    %v2033 = vadd.f32 %v1978, %v1986
    %v2034 = vadd.f32 %v1979, %v1986
    %v2035 = vadd.f32 %v1980, %v1986
    %v2036 = vmax.f32 %v1988, 0.0
    %v2037 = vmax.f32 %v1989, 0.0
    %v2038 = vmax.f32 %v1990, 0.0
    %v2039 = vmax.f32 %v1991, 0.0
    %v2040 = vmax.f32 %v1992, 0.0
    %v2041 = vmax.f32 %v1993, 0.0
    %v2042 = vmax.f32 %v1994, 0.0
    %v2043 = vmax.f32 %v1995, 0.0
    %v2044 = vmax.f32 %v1996, 0.0
    %v2045 = vmax.f32 %v1997, 0.0
    %v2046 = vmax.f32 %v1998, 0.0
    %v2047 = vmax.f32 %v1999, 0.0
    %v2048 = vmax.f32 %v2000, 0.0
    %v2049 = vmax.f32 %v2001, 0.0
    %v2050 = vmax.f32 %v2002, 0.0
    %v2051 = vmax.f32 %v2003, 0.0
    %v2052 = vmax.f32 %v2004, 0.0
    %v2053 = vmax.f32 %v2005, 0.0
    %v2054 = vmax.f32 %v2006, 0.0
    %v2055 = vmax.f32 %v2007, 0.0
    %v2056 = vmax.f32 %v2008, 0.0
    %v2057 = vmax.f32 %v2009, 0.0
    %v2058 = vmax.f32 %v2010, 0.0
    %v2059 = vmax.f32 %v2011, 0.0
    %v2060 = vmax.f32 %v2012, 0.0
    %v2061 = vmax.f32 %v2013, 0.0
    %v2062 = vmax.f32 %v2014, 0.0
    %v2063 = vmax.f32 %v2015, 0.0
    %v2064 = vmax.f32 %v2016, 0.0
    %v2065 = vmax.f32 %v2017, 0.0
    %v2066 = vmax.f32 %v2018, 0.0
    %v2067 = vmax.f32 %v2019, 0.0
    %v2068 = vmax.f32 %v2020, 0.0
    %v2069 = vmax.f32 %v2021, 0.0
    %v2070 = vmax.f32 %v2022, 0.0
    %v2071 = vmax.f32 %v2023, 0.0
    %v2072 = vmax.f32 %v2024, 0.0
    %v2073 = vmax.f32 %v2025, 0.0
    %v2074 = vmax.f32 %v2026, 0.0
    %v2075 = vmax.f32 %v2027, 0.0
    %v2076 = vmax.f32 %v2028, 0.0
    %v2077 = vmax.f32 %v2029, 0.0
    %v2078 = vmax.f32 %v2030, 0.0
    %v2079 = vmax.f32 %v2031, 0.0
    %v2080 = vmax.f32 %v2032, 0.0
    %v2081 = vmax.f32 %v2033, 0.0
    %v2082 = vmax.f32 %v2034, 0.0
    %v2083 = vmax.f32 %v2035, 0.0
    %v2084 = vld [vmem:[%s3] sm:$0xff]
    %vm2117 = vcmask 1046528
    %v2118 = vrot.slane %v2036, 1
    %v2119 = vrot.slane %v2037, 1
    %v2120 = vsel %vm2117, %v2118, %v2119
    %v2121 = vrot.slane %v2038, 1
    %v2122 = vrot.slane %v2039, 1
    %v2123 = vsel %vm2117, %v2121, %v2122
    %v2124 = vrot.slane %v2040, 1
    %v2125 = vrot.slane %v2041, 1
    %v2126 = vsel %vm2117, %v2124, %v2125
    %v2127 = vrot.slane %v2042, 1
    %v2128 = vrot.slane %v2043, 1
    %v2129 = vsel %vm2117, %v2127, %v2128
    %v2130 = vrot.slane %v2044, 1
    %v2131 = vrot.slane %v2045, 1
    %v2132 = vsel %vm2117, %v2130, %v2131
    %v2133 = vrot.slane %v2046, 1
    %v2134 = vrot.slane %v2047, 1
    %v2135 = vsel %vm2117, %v2133, %v2134
    %v2136 = vrot.slane %v2048, 1
    %v2137 = vrot.slane %v2049, 1
    %v2138 = vsel %vm2117, %v2136, %v2137
    %v2139 = vrot.slane %v2050, 1
    %v2140 = vrot.slane %v2051, 1
    %v2141 = vsel %vm2117, %v2139, %v2140
    %v2142 = vrot.slane %v2060, 1
    %v2143 = vrot.slane %v2061, 1
    %v2144 = vsel %vm2117, %v2142, %v2143
    %v2145 = vrot.slane %v2062, 1
    %v2146 = vrot.slane %v2063, 1
    %v2147 = vsel %vm2117, %v2145, %v2146
    %v2148 = vrot.slane %v2064, 1
    %v2149 = vrot.slane %v2065, 1
    %v2150 = vsel %vm2117, %v2148, %v2149
    %v2151 = vrot.slane %v2066, 1
    %v2152 = vrot.slane %v2067, 1
    %v2153 = vsel %vm2117, %v2151, %v2152
    %v2154 = vrot.slane %v2068, 1
    %v2155 = vrot.slane %v2069, 1
    %v2156 = vsel %vm2117, %v2154, %v2155
    %v2157 = vrot.slane %v2070, 1
    %v2158 = vrot.slane %v2071, 1
    %v2159 = vsel %vm2117, %v2157, %v2158
    %v2160 = vrot.slane %v2072, 1
    %v2161 = vrot.slane %v2073, 1
    %v2162 = vsel %vm2117, %v2160, %v2161
    %v2163 = vrot.slane %v2074, 1
    %v2164 = vrot.slane %v2075, 1
    %v2165 = vsel %vm2117, %v2163, %v2164
    %s2166 = scalar_lea.vmem %s3, 8
    %v2167 = vld [vmem:[%s2166] sm:$0xff]
    %vm2168 = vcmask 64512
    %v2169 = vsel %vm2168, %v2120, 0
    %v2171 = vsel %vm2168, %v2123, 0
    %v2173 = vsel %vm2168, %v2126, 0
    %v2175 = vsel %vm2168, %v2129, 0
    %v2177 = vsel %vm2168, %v2132, 0
    %v2179 = vsel %vm2168, %v2135, 0
    %v2181 = vsel %vm2168, %v2138, 0
    %v2183 = vsel %vm2168, %v2141, 0
    %v2185 = vsel %vm2168, %v2144, 0
    %v2187 = vsel %vm2168, %v2147, 0
    %v2189 = vsel %vm2168, %v2150, 0
    %v2191 = vsel %vm2168, %v2153, 0
    %v2193 = vsel %vm2168, %v2156, 0
    %v2195 = vsel %vm2168, %v2159, 0
    %v2197 = vsel %vm2168, %v2162, 0
    %v2199 = vsel %vm2168, %v2165, 0
    %2201 = vmatprep.subr.mxu0 0.0
    %2202 = vmatpush1.msra.mxu0 %v2167
    %2203 = vmatprep.subr.mxu0 0.0
    %2204 = vmatpush1.msra.mxu0 0.0
    %2205 = vmatprep.subr.mxu0 0.0
    %2206 = vmatpush1.msra.mxu0 0.0
    %2207 = vmatprep.subr.mxu0 0.0
    %2208 = vmatpush1.msra.mxu0 0.0
    %2209 = vmatprep.subr.mxu0 0.0
    %2210 = vmatpush1.msra.mxu0 0.0
    %2211 = vmatprep.subr.mxu0 0.0
    %2212 = vmatpush1.msra.mxu0 0.0
    %2213 = vmatprep.subr.mxu0 0.0
    %2214 = vmatpush1.msra.mxu0 0.0
    %2215 = vmatprep.subr.mxu0 0.0
    %2216 = vmatpush1.msra.mxu0 0.0
    %2217 = vmatprep.subr.mxu0 0.0
    %2218 = vmatpush1.msra.mxu0 0.0
    %2219 = vmatprep.subr.mxu0 0.0
    %2220 = vmatpush1.msra.mxu0 0.0
    %2221 = vmatprep.subr.mxu0 0.0
    %2222 = vmatpush1.msra.mxu0 0.0
    %2223 = vmatprep.subr.mxu0 0.0
    %2224 = vmatpush1.msra.mxu0 0.0
    %2225 = vmatprep.subr.mxu0 0.0
    %2226 = vmatpush1.msra.mxu0 0.0
    %2227 = vmatprep.subr.mxu0 0.0
    %2228 = vmatpush1.msra.mxu0 0.0
    %2229 = vmatprep.subr.mxu0 0.0
    %2230 = vmatpush1.msra.mxu0 0.0
    %2231 = vmatprep.subr.mxu0 0.0
    %2232 = vmatpush1.msra.mxu0 0.0
    %2233 = vmatprep.subr.mxu0 0.0
    %2234 = vmatpush1.msra.mxu0 0.0
    %2235 = vmatprep.subr.mxu0 0.0
    %2236 = vmatpush1.msra.mxu0 0.0
    %2237 = vmatprep.subr.mxu0 0.0
    %2238 = vmatpush1.msra.mxu0 0.0
    %2239 = vmatprep.subr.mxu0 0.0
    %2240 = vmatpush1.msra.mxu0 0.0
    %2241 = vmatprep.subr.mxu0 0.0
    %2242 = vmatpush1.msra.mxu0 0.0
    %2243 = vmatprep.subr.mxu0 0.0
    %2244 = vmatpush1.msra.mxu0 0.0
    %2245 = vmatprep.subr.mxu0 0.0
    %2246 = vmatpush1.msra.mxu0 0.0
    %2247 = vmatprep.subr.mxu0 0.0
    %2248 = vmatpush1.msra.mxu0 0.0
    %2249 = vmatprep.subr.mxu0 0.0
    %2250 = vmatpush1.msra.mxu0 0.0
    %2251 = vmatprep.subr.mxu0 0.0
    %2252 = vmatpush1.msra.mxu0 0.0
    %2253 = vmatprep.subr.mxu0 0.0
    %2254 = vmatpush1.msra.mxu0 0.0
    %2255 = vmatprep.subr.mxu0 0.0
    %2256 = vmatpush1.msra.mxu0 0.0
    %2257 = vmatprep.subr.mxu0 0.0
    %2258 = vmatpush1.msra.mxu0 0.0
    %2259 = vmatprep.subr.mxu0 0.0
    %2260 = vmatpush1.msra.mxu0 0.0
    %2261 = vmatprep.subr.mxu0 0.0
    %2262 = vmatpush1.msra.mxu0 0.0
    %2263 = vmatprep.subr.mxu0 0.0
    %2264 = vmatpush1.msra.mxu0 0.0
    %2265 = vmatprep.mubr.f32.mxu0 0.0
    %2266 = vmatmul.mubr.f32.gmra.mrb[0].mxu0 %v2169
    %v2267 = vpop.f32.mrb[0].mxu0
    %v2268 = vadd.f32 0.0, %v2267
    %v2269 = vpop.f32.mrb[0].mxu0
    %2270 = vmatprep.mubr.f32.mxu0 0.0
    %2271 = vmatmul.mubr.f32.gmra.mrb[0].mxu0 %v2171
    %v2272 = vpop.f32.mrb[0].mxu0
    %v2273 = vadd.f32 0.0, %v2272
    %v2274 = vpop.f32.mrb[0].mxu0
    %2275 = vmatprep.mubr.f32.mxu0 0.0
    %2276 = vmatmul.mubr.f32.gmra.mrb[0].mxu0 %v2173
    %v2277 = vpop.f32.mrb[0].mxu0
    %v2278 = vadd.f32 0.0, %v2277
    %v2279 = vpop.f32.mrb[0].mxu0
    %2280 = vmatprep.mubr.f32.mxu0 0.0
    %2281 = vmatmul.mubr.f32.gmra.mrb[0].mxu0 %v2175
    %v2282 = vpop.f32.mrb[0].mxu0
    %v2283 = vadd.f32 0.0, %v2282
    %v2284 = vpop.f32.mrb[0].mxu0
    %2285 = vmatprep.mubr.f32.mxu0 0.0
    %2286 = vmatmul.mubr.f32.gmra.mrb[0].mxu0 %v2177
    %v2287 = vpop.f32.mrb[0].mxu0
    %v2288 = vadd.f32 0.0, %v2287
    %v2289 = vpop.f32.mrb[0].mxu0
    %2290 = vmatprep.mubr.f32.mxu0 0.0
    %2291 = vmatmul.mubr.f32.gmra.mrb[0].mxu0 %v2179
    %v2292 = vpop.f32.mrb[0].mxu0
    %v2293 = vadd.f32 0.0, %v2292
    %v2294 = vpop.f32.mrb[0].mxu0
    %2295 = vmatprep.mubr.f32.mxu0 0.0
    %2296 = vmatmul.mubr.f32.gmra.mrb[0].mxu0 %v2181
    %v2297 = vpop.f32.mrb[0].mxu0
    %v2298 = vadd.f32 0.0, %v2297
    %v2299 = vpop.f32.mrb[0].mxu0
    %2300 = vmatprep.mubr.f32.mxu0 0.0
    %2301 = vmatmul.mubr.f32.gmra.mrb[0].mxu0 %v2183
    %v2302 = vpop.f32.mrb[0].mxu0
    %v2303 = vadd.f32 0.0, %v2302
    %v2304 = vpop.f32.mrb[0].mxu0
    %2305 = vmatprep.mubr.f32.mxu0 0.0
    %2306 = vmatmul.mubr.f32.gmra.mrb[0].mxu0 %v2185
    %v2307 = vpop.f32.mrb[0].mxu0
    %v2308 = vadd.f32 0.0, %v2307
    %v2309 = vpop.f32.mrb[0].mxu0
    %2310 = vmatprep.mubr.f32.mxu0 0.0
    %2311 = vmatmul.mubr.f32.gmra.mrb[0].mxu0 %v2187
    %v2312 = vpop.f32.mrb[0].mxu0
    %v2313 = vadd.f32 0.0, %v2312
    %v2314 = vpop.f32.mrb[0].mxu0
    %2315 = vmatprep.mubr.f32.mxu0 0.0
    %2316 = vmatmul.mubr.f32.gmra.mrb[0].mxu0 %v2189
    %v2317 = vpop.f32.mrb[0].mxu0
    %v2318 = vadd.f32 0.0, %v2317
    %v2319 = vpop.f32.mrb[0].mxu0
    %2320 = vmatprep.mubr.f32.mxu0 0.0
    %2321 = vmatmul.mubr.f32.gmra.mrb[0].mxu0 %v2191
    %v2322 = vpop.f32.mrb[0].mxu0
    %v2323 = vadd.f32 0.0, %v2322
    %v2324 = vpop.f32.mrb[0].mxu0
    %2325 = vmatprep.mubr.f32.mxu0 0.0
    %2326 = vmatmul.mubr.f32.gmra.mrb[0].mxu0 %v2193
    %v2327 = vpop.f32.mrb[0].mxu0
    %v2328 = vadd.f32 0.0, %v2327
    %v2329 = vpop.f32.mrb[0].mxu0
    %2330 = vmatprep.mubr.f32.mxu0 0.0
    %2331 = vmatmul.mubr.f32.gmra.mrb[0].mxu0 %v2195
    %v2332 = vpop.f32.mrb[0].mxu0
    %v2333 = vadd.f32 0.0, %v2332
    %v2334 = vpop.f32.mrb[0].mxu0
    %2335 = vmatprep.mubr.f32.mxu0 0.0
    %2336 = vmatmul.mubr.f32.gmra.mrb[0].mxu0 %v2197
    %v2337 = vpop.f32.mrb[0].mxu0
    %v2338 = vadd.f32 0.0, %v2337
    %v2339 = vpop.f32.mrb[0].mxu0
    %2340 = vmatprep.mubr.f32.mxu0 0.0
    %2341 = vmatmul.mubr.f32.gmra.mrb[0].mxu0 %v2199
    %v2342 = vpop.f32.mrb[0].mxu0
    %v2343 = vadd.f32 0.0, %v2342
    %v2344 = vpop.f32.mrb[0].mxu0
    %2345 = vdwg.mxu0
    %v2346 = vsel %vm2168, %v2036, 0
    %v2348 = vsel %vm2168, %v2038, 0
    %v2350 = vsel %vm2168, %v2040, 0
    %v2352 = vsel %vm2168, %v2042, 0
    %v2354 = vsel %vm2168, %v2044, 0
    %v2356 = vsel %vm2168, %v2046, 0
    %v2358 = vsel %vm2168, %v2048, 0
    %v2360 = vsel %vm2168, %v2050, 0
    %v2362 = vsel %vm2168, %v2060, 0
    %v2364 = vsel %vm2168, %v2062, 0
    %v2366 = vsel %vm2168, %v2064, 0
    %v2368 = vsel %vm2168, %v2066, 0
    %v2370 = vsel %vm2168, %v2068, 0
    %v2372 = vsel %vm2168, %v2070, 0
    %v2374 = vsel %vm2168, %v2072, 0
    %v2376 = vsel %vm2168, %v2074, 0
    %2378 = vmatprep.subr.mxu0 0.0
    %2379 = vmatpush1.msra.mxu0 %v2084
    %2380 = vmatprep.subr.mxu0 0.0
    %2381 = vmatpush1.msra.mxu0 0.0
    %2382 = vmatprep.subr.mxu0 0.0
    %2383 = vmatpush1.msra.mxu0 0.0
    %2384 = vmatprep.subr.mxu0 0.0
    %2385 = vmatpush1.msra.mxu0 0.0
    %2386 = vmatprep.subr.mxu0 0.0
    %2387 = vmatpush1.msra.mxu0 0.0
    %2388 = vmatprep.subr.mxu0 0.0
    %2389 = vmatpush1.msra.mxu0 0.0
    %2390 = vmatprep.subr.mxu0 0.0
    %2391 = vmatpush1.msra.mxu0 0.0
    %2392 = vmatprep.subr.mxu0 0.0
    %2393 = vmatpush1.msra.mxu0 0.0
    %2394 = vmatprep.subr.mxu0 0.0
    %2395 = vmatpush1.msra.mxu0 0.0
    %2396 = vmatprep.subr.mxu0 0.0
    %2397 = vmatpush1.msra.mxu0 0.0
    %2398 = vmatprep.subr.mxu0 0.0
    %2399 = vmatpush1.msra.mxu0 0.0
    %2400 = vmatprep.subr.mxu0 0.0
    %2401 = vmatpush1.msra.mxu0 0.0
    %2402 = vmatprep.subr.mxu0 0.0
    %2403 = vmatpush1.msra.mxu0 0.0
    %2404 = vmatprep.subr.mxu0 0.0
    %2405 = vmatpush1.msra.mxu0 0.0
    %2406 = vmatprep.subr.mxu0 0.0
    %2407 = vmatpush1.msra.mxu0 0.0
    %2408 = vmatprep.subr.mxu0 0.0
    %2409 = vmatpush1.msra.mxu0 0.0
    %2410 = vmatprep.subr.mxu0 0.0
    %2411 = vmatpush1.msra.mxu0 0.0
    %2412 = vmatprep.subr.mxu0 0.0
    %2413 = vmatpush1.msra.mxu0 0.0
    %2414 = vmatprep.subr.mxu0 0.0
    %2415 = vmatpush1.msra.mxu0 0.0
    %2416 = vmatprep.subr.mxu0 0.0
    %2417 = vmatpush1.msra.mxu0 0.0
    %2418 = vmatprep.subr.mxu0 0.0
    %2419 = vmatpush1.msra.mxu0 0.0
    %2420 = vmatprep.subr.mxu0 0.0
    %2421 = vmatpush1.msra.mxu0 0.0
    %2422 = vmatprep.subr.mxu0 0.0
    %2423 = vmatpush1.msra.mxu0 0.0
    %2424 = vmatprep.subr.mxu0 0.0
    %2425 = vmatpush1.msra.mxu0 0.0
    %2426 = vmatprep.subr.mxu0 0.0
    %2427 = vmatpush1.msra.mxu0 0.0
    %2428 = vmatprep.subr.mxu0 0.0
    %2429 = vmatpush1.msra.mxu0 0.0
    %2430 = vmatprep.subr.mxu0 0.0
    %2431 = vmatpush1.msra.mxu0 0.0
    %2432 = vmatprep.subr.mxu0 0.0
    %2433 = vmatpush1.msra.mxu0 0.0
    %2434 = vmatprep.subr.mxu0 0.0
    %2435 = vmatpush1.msra.mxu0 0.0
    %2436 = vmatprep.subr.mxu0 0.0
    %2437 = vmatpush1.msra.mxu0 0.0
    %2438 = vmatprep.subr.mxu0 0.0
    %2439 = vmatpush1.msra.mxu0 0.0
    %2440 = vmatprep.subr.mxu0 0.0
    %2441 = vmatpush1.msra.mxu0 0.0
    %2442 = vmatprep.mubr.f32.mxu0 0.0
    %2443 = vmatmul.mubr.f32.gmra.mrb[0].mxu0 %v2346
    %v2444 = vpop.f32.mrb[0].mxu0
    %v2445 = vadd.f32 %v2268, %v2444
    %v2446 = vpop.f32.mrb[0].mxu0
    %2447 = vmatprep.mubr.f32.mxu0 0.0
    %2448 = vmatmul.mubr.f32.gmra.mrb[0].mxu0 %v2348
    %v2449 = vpop.f32.mrb[0].mxu0
    %v2450 = vadd.f32 %v2273, %v2449
    %v2451 = vpop.f32.mrb[0].mxu0
    %2452 = vmatprep.mubr.f32.mxu0 0.0
    %2453 = vmatmul.mubr.f32.gmra.mrb[0].mxu0 %v2350
    %v2454 = vpop.f32.mrb[0].mxu0
    %v2455 = vadd.f32 %v2278, %v2454
    %v2456 = vpop.f32.mrb[0].mxu0
    %2457 = vmatprep.mubr.f32.mxu0 0.0
    %2458 = vmatmul.mubr.f32.gmra.mrb[0].mxu0 %v2352
    %v2459 = vpop.f32.mrb[0].mxu0
    %v2460 = vadd.f32 %v2283, %v2459
    %v2461 = vpop.f32.mrb[0].mxu0
    %2462 = vmatprep.mubr.f32.mxu0 0.0
    %2463 = vmatmul.mubr.f32.gmra.mrb[0].mxu0 %v2354
    %v2464 = vpop.f32.mrb[0].mxu0
    %v2465 = vadd.f32 %v2288, %v2464
    %v2466 = vpop.f32.mrb[0].mxu0
    %2467 = vmatprep.mubr.f32.mxu0 0.0
    %2468 = vmatmul.mubr.f32.gmra.mrb[0].mxu0 %v2356
    %v2469 = vpop.f32.mrb[0].mxu0
    %v2470 = vadd.f32 %v2293, %v2469
    %v2471 = vpop.f32.mrb[0].mxu0
    %2472 = vmatprep.mubr.f32.mxu0 0.0
    %2473 = vmatmul.mubr.f32.gmra.mrb[0].mxu0 %v2358
    %v2474 = vpop.f32.mrb[0].mxu0
    %v2475 = vadd.f32 %v2298, %v2474
    %v2476 = vpop.f32.mrb[0].mxu0
    %2477 = vmatprep.mubr.f32.mxu0 0.0
    %2478 = vmatmul.mubr.f32.gmra.mrb[0].mxu0 %v2360
    %v2479 = vpop.f32.mrb[0].mxu0
    %v2480 = vadd.f32 %v2303, %v2479
    %v2481 = vpop.f32.mrb[0].mxu0
    %2482 = vmatprep.mubr.f32.mxu0 0.0
    %2483 = vmatmul.mubr.f32.gmra.mrb[0].mxu0 %v2362
    %v2484 = vpop.f32.mrb[0].mxu0
    %v2485 = vadd.f32 %v2308, %v2484
    %v2486 = vpop.f32.mrb[0].mxu0
    %2487 = vmatprep.mubr.f32.mxu0 0.0
    %2488 = vmatmul.mubr.f32.gmra.mrb[0].mxu0 %v2364
    %v2489 = vpop.f32.mrb[0].mxu0
    %v2490 = vadd.f32 %v2313, %v2489
    %v2491 = vpop.f32.mrb[0].mxu0
    %2492 = vmatprep.mubr.f32.mxu0 0.0
    %2493 = vmatmul.mubr.f32.gmra.mrb[0].mxu0 %v2366
    %v2494 = vpop.f32.mrb[0].mxu0
    %v2495 = vadd.f32 %v2318, %v2494
    %v2496 = vpop.f32.mrb[0].mxu0
    %2497 = vmatprep.mubr.f32.mxu0 0.0
    %2498 = vmatmul.mubr.f32.gmra.mrb[0].mxu0 %v2368
    %v2499 = vpop.f32.mrb[0].mxu0
    %v2500 = vadd.f32 %v2323, %v2499
    %v2501 = vpop.f32.mrb[0].mxu0
    %2502 = vmatprep.mubr.f32.mxu0 0.0
    %2503 = vmatmul.mubr.f32.gmra.mrb[0].mxu0 %v2370
    %v2504 = vpop.f32.mrb[0].mxu0
    %v2505 = vadd.f32 %v2328, %v2504
    %v2506 = vpop.f32.mrb[0].mxu0
    %2507 = vmatprep.mubr.f32.mxu0 0.0
    %2508 = vmatmul.mubr.f32.gmra.mrb[0].mxu0 %v2372
    %v2509 = vpop.f32.mrb[0].mxu0
    %v2510 = vadd.f32 %v2333, %v2509
    %v2511 = vpop.f32.mrb[0].mxu0
    %2512 = vmatprep.mubr.f32.mxu0 0.0
    %2513 = vmatmul.mubr.f32.gmra.mrb[0].mxu0 %v2374
    %v2514 = vpop.f32.mrb[0].mxu0
    %v2515 = vadd.f32 %v2338, %v2514
    %v2516 = vpop.f32.mrb[0].mxu0
    %2517 = vmatprep.mubr.f32.mxu0 0.0
    %2518 = vmatmul.mubr.f32.gmra.mrb[0].mxu0 %v2376
    %v2519 = vpop.f32.mrb[0].mxu0
    %v2520 = vadd.f32 %v2343, %v2519
    %v2521 = vpop.f32.mrb[0].mxu0
    %2522 = vdwg.mxu0
    %vm2523 = vcmask 1045504
    %v2524 = vrot.slane %v2036, 2
    %v2525 = vrot.slane %v2037, 2
    %v2526 = vsel %vm2523, %v2524, %v2525
    %v2527 = vrot.slane %v2038, 2
    %v2528 = vrot.slane %v2039, 2
    %v2529 = vsel %vm2523, %v2527, %v2528
    %v2530 = vrot.slane %v2040, 2
    %v2531 = vrot.slane %v2041, 2
    %v2532 = vsel %vm2523, %v2530, %v2531
    %v2533 = vrot.slane %v2042, 2
    %v2534 = vrot.slane %v2043, 2
    %v2535 = vsel %vm2523, %v2533, %v2534
    %v2536 = vrot.slane %v2044, 2
    %v2537 = vrot.slane %v2045, 2
    %v2538 = vsel %vm2523, %v2536, %v2537
    %v2539 = vrot.slane %v2046, 2
    %v2540 = vrot.slane %v2047, 2
    %v2541 = vsel %vm2523, %v2539, %v2540
    %v2542 = vrot.slane %v2048, 2
    %v2543 = vrot.slane %v2049, 2
    %v2544 = vsel %vm2523, %v2542, %v2543
    %v2545 = vrot.slane %v2050, 2
    %v2546 = vrot.slane %v2051, 2
    %v2547 = vsel %vm2523, %v2545, %v2546
    %v2548 = vrot.slane %v2060, 2
    %v2549 = vrot.slane %v2061, 2
    %v2550 = vsel %vm2523, %v2548, %v2549
    %v2551 = vrot.slane %v2062, 2
    %v2552 = vrot.slane %v2063, 2
    %v2553 = vsel %vm2523, %v2551, %v2552
    %v2554 = vrot.slane %v2064, 2
    %v2555 = vrot.slane %v2065, 2
    %v2556 = vsel %vm2523, %v2554, %v2555
    %v2557 = vrot.slane %v2066, 2
    %v2558 = vrot.slane %v2067, 2
    %v2559 = vsel %vm2523, %v2557, %v2558
    %v2560 = vrot.slane %v2068, 2
    %v2561 = vrot.slane %v2069, 2
    %v2562 = vsel %vm2523, %v2560, %v2561
    %v2563 = vrot.slane %v2070, 2
    %v2564 = vrot.slane %v2071, 2
    %v2565 = vsel %vm2523, %v2563, %v2564
    %v2566 = vrot.slane %v2072, 2
    %v2567 = vrot.slane %v2073, 2
    %v2568 = vsel %vm2523, %v2566, %v2567
    %v2569 = vrot.slane %v2074, 2
    %v2570 = vrot.slane %v2075, 2
    %v2571 = vsel %vm2523, %v2569, %v2570
    %s2572 = scalar_lea.vmem %s3, 16
    %v2573 = vld [vmem:[%s2572] sm:$0xff]
    %v2574 = vsel %vm2168, %v2526, 0
    %v2576 = vsel %vm2168, %v2529, 0
    %v2578 = vsel %vm2168, %v2532, 0
    %v2580 = vsel %vm2168, %v2535, 0
    %v2582 = vsel %vm2168, %v2538, 0
    %v2584 = vsel %vm2168, %v2541, 0
    %v2586 = vsel %vm2168, %v2544, 0
    %v2588 = vsel %vm2168, %v2547, 0
    %v2590 = vsel %vm2168, %v2550, 0
    %v2592 = vsel %vm2168, %v2553, 0
    %v2594 = vsel %vm2168, %v2556, 0
    %v2596 = vsel %vm2168, %v2559, 0
    %v2598 = vsel %vm2168, %v2562, 0
    %v2600 = vsel %vm2168, %v2565, 0
    %v2602 = vsel %vm2168, %v2568, 0
    %v2604 = vsel %vm2168, %v2571, 0
    %2606 = vmatprep.subr.mxu0 0.0
    %2607 = vmatpush1.msra.mxu0 %v2573
    %2608 = vmatprep.subr.mxu0 0.0
    %2609 = vmatpush1.msra.mxu0 0.0
    %2610 = vmatprep.subr.mxu0 0.0
    %2611 = vmatpush1.msra.mxu0 0.0
    %2612 = vmatprep.subr.mxu0 0.0
    %2613 = vmatpush1.msra.mxu0 0.0
    %2614 = vmatprep.subr.mxu0 0.0
    %2615 = vmatpush1.msra.mxu0 0.0
    %2616 = vmatprep.subr.mxu0 0.0
    %2617 = vmatpush1.msra.mxu0 0.0
    %2618 = vmatprep.subr.mxu0 0.0
    %2619 = vmatpush1.msra.mxu0 0.0
    %2620 = vmatprep.subr.mxu0 0.0
    %2621 = vmatpush1.msra.mxu0 0.0
    %2622 = vmatprep.subr.mxu0 0.0
    %2623 = vmatpush1.msra.mxu0 0.0
    %2624 = vmatprep.subr.mxu0 0.0
    %2625 = vmatpush1.msra.mxu0 0.0
    %2626 = vmatprep.subr.mxu0 0.0
    %2627 = vmatpush1.msra.mxu0 0.0
    %2628 = vmatprep.subr.mxu0 0.0
    %2629 = vmatpush1.msra.mxu0 0.0
    %2630 = vmatprep.subr.mxu0 0.0
    %2631 = vmatpush1.msra.mxu0 0.0
    %2632 = vmatprep.subr.mxu0 0.0
    %2633 = vmatpush1.msra.mxu0 0.0
    %2634 = vmatprep.subr.mxu0 0.0
    %2635 = vmatpush1.msra.mxu0 0.0
    %2636 = vmatprep.subr.mxu0 0.0
    %2637 = vmatpush1.msra.mxu0 0.0
    %2638 = vmatprep.subr.mxu0 0.0
    %2639 = vmatpush1.msra.mxu0 0.0
    %2640 = vmatprep.subr.mxu0 0.0
    %2641 = vmatpush1.msra.mxu0 0.0
    %2642 = vmatprep.subr.mxu0 0.0
    %2643 = vmatpush1.msra.mxu0 0.0
    %2644 = vmatprep.subr.mxu0 0.0
    %2645 = vmatpush1.msra.mxu0 0.0
    %2646 = vmatprep.subr.mxu0 0.0
    %2647 = vmatpush1.msra.mxu0 0.0
    %2648 = vmatprep.subr.mxu0 0.0
    %2649 = vmatpush1.msra.mxu0 0.0
    %2650 = vmatprep.subr.mxu0 0.0
    %2651 = vmatpush1.msra.mxu0 0.0
    %2652 = vmatprep.subr.mxu0 0.0
    %2653 = vmatpush1.msra.mxu0 0.0
    %2654 = vmatprep.subr.mxu0 0.0
    %2655 = vmatpush1.msra.mxu0 0.0
    %2656 = vmatprep.subr.mxu0 0.0
    %2657 = vmatpush1.msra.mxu0 0.0
    %2658 = vmatprep.subr.mxu0 0.0
    %2659 = vmatpush1.msra.mxu0 0.0
    %2660 = vmatprep.subr.mxu0 0.0
    %2661 = vmatpush1.msra.mxu0 0.0
    %2662 = vmatprep.subr.mxu0 0.0
    %2663 = vmatpush1.msra.mxu0 0.0
    %2664 = vmatprep.subr.mxu0 0.0
    %2665 = vmatpush1.msra.mxu0 0.0
    %2666 = vmatprep.subr.mxu0 0.0
    %2667 = vmatpush1.msra.mxu0 0.0
    %2668 = vmatprep.subr.mxu0 0.0
    %2669 = vmatpush1.msra.mxu0 0.0
    %2670 = vmatprep.mubr.f32.mxu0 0.0
    %2671 = vmatmul.mubr.f32.gmra.mrb[0].mxu0 %v2574
    %v2672 = vpop.f32.mrb[0].mxu0
    %v2673 = vadd.f32 0.0, %v2672
    %v2674 = vpop.f32.mrb[0].mxu0
    %2675 = vmatprep.mubr.f32.mxu0 0.0
    %2676 = vmatmul.mubr.f32.gmra.mrb[0].mxu0 %v2576
    %v2677 = vpop.f32.mrb[0].mxu0
    %v2678 = vadd.f32 0.0, %v2677
    %v2679 = vpop.f32.mrb[0].mxu0
    %2680 = vmatprep.mubr.f32.mxu0 0.0
    %2681 = vmatmul.mubr.f32.gmra.mrb[0].mxu0 %v2578
    %v2682 = vpop.f32.mrb[0].mxu0
    %v2683 = vadd.f32 0.0, %v2682
    %v2684 = vpop.f32.mrb[0].mxu0
    %2685 = vmatprep.mubr.f32.mxu0 0.0
    %2686 = vmatmul.mubr.f32.gmra.mrb[0].mxu0 %v2580
    %v2687 = vpop.f32.mrb[0].mxu0
    %v2688 = vadd.f32 0.0, %v2687
    %v2689 = vpop.f32.mrb[0].mxu0
    %2690 = vmatprep.mubr.f32.mxu0 0.0
    %2691 = vmatmul.mubr.f32.gmra.mrb[0].mxu0 %v2582
    %v2692 = vpop.f32.mrb[0].mxu0
    %v2693 = vadd.f32 0.0, %v2692
    %v2694 = vpop.f32.mrb[0].mxu0
    %2695 = vmatprep.mubr.f32.mxu0 0.0
    %2696 = vmatmul.mubr.f32.gmra.mrb[0].mxu0 %v2584
    %v2697 = vpop.f32.mrb[0].mxu0
    %v2698 = vadd.f32 0.0, %v2697
    %v2699 = vpop.f32.mrb[0].mxu0
    %2700 = vmatprep.mubr.f32.mxu0 0.0
    %2701 = vmatmul.mubr.f32.gmra.mrb[0].mxu0 %v2586
    %v2702 = vpop.f32.mrb[0].mxu0
    %v2703 = vadd.f32 0.0, %v2702
    %v2704 = vpop.f32.mrb[0].mxu0
    %2705 = vmatprep.mubr.f32.mxu0 0.0
    %2706 = vmatmul.mubr.f32.gmra.mrb[0].mxu0 %v2588
    %v2707 = vpop.f32.mrb[0].mxu0
    %v2708 = vadd.f32 0.0, %v2707
    %v2709 = vpop.f32.mrb[0].mxu0
    %2710 = vmatprep.mubr.f32.mxu0 0.0
    %2711 = vmatmul.mubr.f32.gmra.mrb[0].mxu0 %v2590
    %v2712 = vpop.f32.mrb[0].mxu0
    %v2713 = vadd.f32 0.0, %v2712
    %v2714 = vpop.f32.mrb[0].mxu0
    %2715 = vmatprep.mubr.f32.mxu0 0.0
    %2716 = vmatmul.mubr.f32.gmra.mrb[0].mxu0 %v2592
    %v2717 = vpop.f32.mrb[0].mxu0
    %v2718 = vadd.f32 0.0, %v2717
    %v2719 = vpop.f32.mrb[0].mxu0
    %2720 = vmatprep.mubr.f32.mxu0 0.0
    %2721 = vmatmul.mubr.f32.gmra.mrb[0].mxu0 %v2594
    %v2722 = vpop.f32.mrb[0].mxu0
    %v2723 = vadd.f32 0.0, %v2722
    %v2724 = vpop.f32.mrb[0].mxu0
    %2725 = vmatprep.mubr.f32.mxu0 0.0
    %2726 = vmatmul.mubr.f32.gmra.mrb[0].mxu0 %v2596
    %v2727 = vpop.f32.mrb[0].mxu0
    %v2728 = vadd.f32 0.0, %v2727
    %v2729 = vpop.f32.mrb[0].mxu0
    %2730 = vmatprep.mubr.f32.mxu0 0.0
    %2731 = vmatmul.mubr.f32.gmra.mrb[0].mxu0 %v2598
    %v2732 = vpop.f32.mrb[0].mxu0
    %v2733 = vadd.f32 0.0, %v2732
    %v2734 = vpop.f32.mrb[0].mxu0
    %2735 = vmatprep.mubr.f32.mxu0 0.0
    %2736 = vmatmul.mubr.f32.gmra.mrb[0].mxu0 %v2600
    %v2737 = vpop.f32.mrb[0].mxu0
    %v2738 = vadd.f32 0.0, %v2737
    %v2739 = vpop.f32.mrb[0].mxu0
    %2740 = vmatprep.mubr.f32.mxu0 0.0
    %2741 = vmatmul.mubr.f32.gmra.mrb[0].mxu0 %v2602
    %v2742 = vpop.f32.mrb[0].mxu0
    %v2743 = vadd.f32 0.0, %v2742
    %v2744 = vpop.f32.mrb[0].mxu0
    %2745 = vmatprep.mubr.f32.mxu0 0.0
    %2746 = vmatmul.mubr.f32.gmra.mrb[0].mxu0 %v2604
    %v2747 = vpop.f32.mrb[0].mxu0
    %v2748 = vadd.f32 0.0, %v2747
    %v2749 = vpop.f32.mrb[0].mxu0
    %2750 = vdwg.mxu0
    %v2751 = vadd.f32 %v2445, %v2673
    %v2752 = vadd.f32 %v2450, %v2678
    %v2753 = vadd.f32 %v2455, %v2683
    %v2754 = vadd.f32 %v2460, %v2688
    %v2755 = vadd.f32 %v2465, %v2693
    %v2756 = vadd.f32 %v2470, %v2698
    %v2757 = vadd.f32 %v2475, %v2703
    %v2758 = vadd.f32 %v2480, %v2708
    %v2759 = vadd.f32 %v2485, %v2713
    %v2760 = vadd.f32 %v2490, %v2718
    %v2761 = vadd.f32 %v2495, %v2723
    %v2762 = vadd.f32 %v2500, %v2728
    %v2763 = vadd.f32 %v2505, %v2733
    %v2764 = vadd.f32 %v2510, %v2738
    %v2765 = vadd.f32 %v2515, %v2743
    %v2766 = vadd.f32 %v2520, %v2748
    %vm2767 = vcmask 1044480
    %v2768 = vrot.slane %v2036, 3
    %v2769 = vrot.slane %v2037, 3
    %v2770 = vsel %vm2767, %v2768, %v2769
    %v2771 = vrot.slane %v2038, 3
    %v2772 = vrot.slane %v2039, 3
    %v2773 = vsel %vm2767, %v2771, %v2772
    %v2774 = vrot.slane %v2040, 3
    %v2775 = vrot.slane %v2041, 3
    %v2776 = vsel %vm2767, %v2774, %v2775
    %v2777 = vrot.slane %v2042, 3
    %v2778 = vrot.slane %v2043, 3
    %v2779 = vsel %vm2767, %v2777, %v2778
    %v2780 = vrot.slane %v2044, 3
    %v2781 = vrot.slane %v2045, 3
    %v2782 = vsel %vm2767, %v2780, %v2781
    %v2783 = vrot.slane %v2046, 3
    %v2784 = vrot.slane %v2047, 3
    %v2785 = vsel %vm2767, %v2783, %v2784
    %v2786 = vrot.slane %v2048, 3
    %v2787 = vrot.slane %v2049, 3
    %v2788 = vsel %vm2767, %v2786, %v2787
    %v2789 = vrot.slane %v2050, 3
    %v2790 = vrot.slane %v2051, 3
    %v2791 = vsel %vm2767, %v2789, %v2790
    %v2792 = vrot.slane %v2060, 3
    %v2793 = vrot.slane %v2061, 3
    %v2794 = vsel %vm2767, %v2792, %v2793
    %v2795 = vrot.slane %v2062, 3
    %v2796 = vrot.slane %v2063, 3
    %v2797 = vsel %vm2767, %v2795, %v2796
    %v2798 = vrot.slane %v2064, 3
    %v2799 = vrot.slane %v2065, 3
    %v2800 = vsel %vm2767, %v2798, %v2799
    %v2801 = vrot.slane %v2066, 3
    %v2802 = vrot.slane %v2067, 3
    %v2803 = vsel %vm2767, %v2801, %v2802
    %v2804 = vrot.slane %v2068, 3
    %v2805 = vrot.slane %v2069, 3
    %v2806 = vsel %vm2767, %v2804, %v2805
    %v2807 = vrot.slane %v2070, 3
    %v2808 = vrot.slane %v2071, 3
    %v2809 = vsel %vm2767, %v2807, %v2808
    %v2810 = vrot.slane %v2072, 3
    %v2811 = vrot.slane %v2073, 3
    %v2812 = vsel %vm2767, %v2810, %v2811
    %v2813 = vrot.slane %v2074, 3
    %v2814 = vrot.slane %v2075, 3
    %v2815 = vsel %vm2767, %v2813, %v2814
    %s2816 = scalar_lea.vmem %s3, 24
    %v2817 = vld [vmem:[%s2816] sm:$0xff]
    %v2818 = vsel %vm2168, %v2770, 0
    %v2820 = vsel %vm2168, %v2773, 0
    %v2822 = vsel %vm2168, %v2776, 0
    %v2824 = vsel %vm2168, %v2779, 0
    %v2826 = vsel %vm2168, %v2782, 0
    %v2828 = vsel %vm2168, %v2785, 0
    %v2830 = vsel %vm2168, %v2788, 0
    %v2832 = vsel %vm2168, %v2791, 0
    %v2834 = vsel %vm2168, %v2794, 0
    %v2836 = vsel %vm2168, %v2797, 0
    %v2838 = vsel %vm2168, %v2800, 0
    %v2840 = vsel %vm2168, %v2803, 0
    %v2842 = vsel %vm2168, %v2806, 0
    %v2844 = vsel %vm2168, %v2809, 0
    %v2846 = vsel %vm2168, %v2812, 0
    %v2848 = vsel %vm2168, %v2815, 0
    %2850 = vmatprep.subr.mxu0 0.0
    %2851 = vmatpush1.msra.mxu0 %v2817
    %2852 = vmatprep.subr.mxu0 0.0
    %2853 = vmatpush1.msra.mxu0 0.0
    %2854 = vmatprep.subr.mxu0 0.0
    %2855 = vmatpush1.msra.mxu0 0.0
    %2856 = vmatprep.subr.mxu0 0.0
    %2857 = vmatpush1.msra.mxu0 0.0
    %2858 = vmatprep.subr.mxu0 0.0
    %2859 = vmatpush1.msra.mxu0 0.0
    %2860 = vmatprep.subr.mxu0 0.0
    %2861 = vmatpush1.msra.mxu0 0.0
    %2862 = vmatprep.subr.mxu0 0.0
    %2863 = vmatpush1.msra.mxu0 0.0
    %2864 = vmatprep.subr.mxu0 0.0
    %2865 = vmatpush1.msra.mxu0 0.0
    %2866 = vmatprep.subr.mxu0 0.0
    %2867 = vmatpush1.msra.mxu0 0.0
    %2868 = vmatprep.subr.mxu0 0.0
    %2869 = vmatpush1.msra.mxu0 0.0
    %2870 = vmatprep.subr.mxu0 0.0
    %2871 = vmatpush1.msra.mxu0 0.0
    %2872 = vmatprep.subr.mxu0 0.0
    %2873 = vmatpush1.msra.mxu0 0.0
    %2874 = vmatprep.subr.mxu0 0.0
    %2875 = vmatpush1.msra.mxu0 0.0
    %2876 = vmatprep.subr.mxu0 0.0
    %2877 = vmatpush1.msra.mxu0 0.0
    %2878 = vmatprep.subr.mxu0 0.0
    %2879 = vmatpush1.msra.mxu0 0.0
    %2880 = vmatprep.subr.mxu0 0.0
    %2881 = vmatpush1.msra.mxu0 0.0
    %2882 = vmatprep.subr.mxu0 0.0
    %2883 = vmatpush1.msra.mxu0 0.0
    %2884 = vmatprep.subr.mxu0 0.0
    %2885 = vmatpush1.msra.mxu0 0.0
    %2886 = vmatprep.subr.mxu0 0.0
    %2887 = vmatpush1.msra.mxu0 0.0
    %2888 = vmatprep.subr.mxu0 0.0
    %2889 = vmatpush1.msra.mxu0 0.0
    %2890 = vmatprep.subr.mxu0 0.0
    %2891 = vmatpush1.msra.mxu0 0.0
    %2892 = vmatprep.subr.mxu0 0.0
    %2893 = vmatpush1.msra.mxu0 0.0
    %2894 = vmatprep.subr.mxu0 0.0
    %2895 = vmatpush1.msra.mxu0 0.0
    %2896 = vmatprep.subr.mxu0 0.0
    %2897 = vmatpush1.msra.mxu0 0.0
    %2898 = vmatprep.subr.mxu0 0.0
    %2899 = vmatpush1.msra.mxu0 0.0
    %2900 = vmatprep.subr.mxu0 0.0
    %2901 = vmatpush1.msra.mxu0 0.0
    %2902 = vmatprep.subr.mxu0 0.0
    %2903 = vmatpush1.msra.mxu0 0.0
    %2904 = vmatprep.subr.mxu0 0.0
    %2905 = vmatpush1.msra.mxu0 0.0
    %2906 = vmatprep.subr.mxu0 0.0
    %2907 = vmatpush1.msra.mxu0 0.0
    %2908 = vmatprep.subr.mxu0 0.0
    %2909 = vmatpush1.msra.mxu0 0.0
    %2910 = vmatprep.subr.mxu0 0.0
    %2911 = vmatpush1.msra.mxu0 0.0
    %2912 = vmatprep.subr.mxu0 0.0
    %2913 = vmatpush1.msra.mxu0 0.0
    %2914 = vmatprep.mubr.f32.mxu0 0.0
    %2915 = vmatmul.mubr.f32.gmra.mrb[0].mxu0 %v2818
    %v2916 = vpop.f32.mrb[0].mxu0
    %v2917 = vadd.f32 0.0, %v2916
    %v2918 = vpop.f32.mrb[0].mxu0
    %2919 = vmatprep.mubr.f32.mxu0 0.0
    %2920 = vmatmul.mubr.f32.gmra.mrb[0].mxu0 %v2820
    %v2921 = vpop.f32.mrb[0].mxu0
    %v2922 = vadd.f32 0.0, %v2921
    %v2923 = vpop.f32.mrb[0].mxu0
    %2924 = vmatprep.mubr.f32.mxu0 0.0
    %2925 = vmatmul.mubr.f32.gmra.mrb[0].mxu0 %v2822
    %v2926 = vpop.f32.mrb[0].mxu0
    %v2927 = vadd.f32 0.0, %v2926
    %v2928 = vpop.f32.mrb[0].mxu0
    %2929 = vmatprep.mubr.f32.mxu0 0.0
    %2930 = vmatmul.mubr.f32.gmra.mrb[0].mxu0 %v2824
    %v2931 = vpop.f32.mrb[0].mxu0
    %v2932 = vadd.f32 0.0, %v2931
    %v2933 = vpop.f32.mrb[0].mxu0
    %2934 = vmatprep.mubr.f32.mxu0 0.0
    %2935 = vmatmul.mubr.f32.gmra.mrb[0].mxu0 %v2826
    %v2936 = vpop.f32.mrb[0].mxu0
    %v2937 = vadd.f32 0.0, %v2936
    %v2938 = vpop.f32.mrb[0].mxu0
    %2939 = vmatprep.mubr.f32.mxu0 0.0
    %2940 = vmatmul.mubr.f32.gmra.mrb[0].mxu0 %v2828
    %v2941 = vpop.f32.mrb[0].mxu0
    %v2942 = vadd.f32 0.0, %v2941
    %v2943 = vpop.f32.mrb[0].mxu0
    %2944 = vmatprep.mubr.f32.mxu0 0.0
    %2945 = vmatmul.mubr.f32.gmra.mrb[0].mxu0 %v2830
    %v2946 = vpop.f32.mrb[0].mxu0
    %v2947 = vadd.f32 0.0, %v2946
    %v2948 = vpop.f32.mrb[0].mxu0
    %2949 = vmatprep.mubr.f32.mxu0 0.0
    %2950 = vmatmul.mubr.f32.gmra.mrb[0].mxu0 %v2832
    %v2951 = vpop.f32.mrb[0].mxu0
    %v2952 = vadd.f32 0.0, %v2951
    %v2953 = vpop.f32.mrb[0].mxu0
    %2954 = vmatprep.mubr.f32.mxu0 0.0
    %2955 = vmatmul.mubr.f32.gmra.mrb[0].mxu0 %v2834
    %v2956 = vpop.f32.mrb[0].mxu0
    %v2957 = vadd.f32 0.0, %v2956
    %v2958 = vpop.f32.mrb[0].mxu0
    %2959 = vmatprep.mubr.f32.mxu0 0.0
    %2960 = vmatmul.mubr.f32.gmra.mrb[0].mxu0 %v2836
    %v2961 = vpop.f32.mrb[0].mxu0
    %v2962 = vadd.f32 0.0, %v2961
    %v2963 = vpop.f32.mrb[0].mxu0
    %2964 = vmatprep.mubr.f32.mxu0 0.0
    %2965 = vmatmul.mubr.f32.gmra.mrb[0].mxu0 %v2838
    %v2966 = vpop.f32.mrb[0].mxu0
    %v2967 = vadd.f32 0.0, %v2966
    %v2968 = vpop.f32.mrb[0].mxu0
    %2969 = vmatprep.mubr.f32.mxu0 0.0
    %2970 = vmatmul.mubr.f32.gmra.mrb[0].mxu0 %v2840
    %v2971 = vpop.f32.mrb[0].mxu0
    %v2972 = vadd.f32 0.0, %v2971
    %v2973 = vpop.f32.mrb[0].mxu0
    %2974 = vmatprep.mubr.f32.mxu0 0.0
    %2975 = vmatmul.mubr.f32.gmra.mrb[0].mxu0 %v2842
    %v2976 = vpop.f32.mrb[0].mxu0
    %v2977 = vadd.f32 0.0, %v2976
    %v2978 = vpop.f32.mrb[0].mxu0
    %2979 = vmatprep.mubr.f32.mxu0 0.0
    %2980 = vmatmul.mubr.f32.gmra.mrb[0].mxu0 %v2844
    %v2981 = vpop.f32.mrb[0].mxu0
    %v2982 = vadd.f32 0.0, %v2981
    %v2983 = vpop.f32.mrb[0].mxu0
    %2984 = vmatprep.mubr.f32.mxu0 0.0
    %2985 = vmatmul.mubr.f32.gmra.mrb[0].mxu0 %v2846
    %v2986 = vpop.f32.mrb[0].mxu0
    %v2987 = vadd.f32 0.0, %v2986
    %v2988 = vpop.f32.mrb[0].mxu0
    %2989 = vmatprep.mubr.f32.mxu0 0.0
    %2990 = vmatmul.mubr.f32.gmra.mrb[0].mxu0 %v2848
    %v2991 = vpop.f32.mrb[0].mxu0
    %v2992 = vadd.f32 0.0, %v2991
    %v2993 = vpop.f32.mrb[0].mxu0
    %2994 = vdwg.mxu0
    %v2995 = vadd.f32 %v2751, %v2917
    %v2996 = vadd.f32 %v2752, %v2922
    %v2997 = vadd.f32 %v2753, %v2927
    %v2998 = vadd.f32 %v2754, %v2932
    %v2999 = vadd.f32 %v2755, %v2937
    %v3000 = vadd.f32 %v2756, %v2942
    %v3001 = vadd.f32 %v2757, %v2947
    %v3002 = vadd.f32 %v2758, %v2952
    %v3003 = vadd.f32 %v2759, %v2957
    %v3004 = vadd.f32 %v2760, %v2962
    %v3005 = vadd.f32 %v2761, %v2967
    %v3006 = vadd.f32 %v2762, %v2972
    %v3007 = vadd.f32 %v2763, %v2977
    %v3008 = vadd.f32 %v2764, %v2982
    %v3009 = vadd.f32 %v2765, %v2987
    %v3010 = vadd.f32 %v2766, %v2992
    %vm3011 = vcmask 1043456
    %v3012 = vrot.slane %v2036, 4
    %v3013 = vrot.slane %v2037, 4
    %v3014 = vsel %vm3011, %v3012, %v3013
    %v3015 = vrot.slane %v2038, 4
    %v3016 = vrot.slane %v2039, 4
    %v3017 = vsel %vm3011, %v3015, %v3016
    %v3018 = vrot.slane %v2040, 4
    %v3019 = vrot.slane %v2041, 4
    %v3020 = vsel %vm3011, %v3018, %v3019
    %v3021 = vrot.slane %v2042, 4
    %v3022 = vrot.slane %v2043, 4
    %v3023 = vsel %vm3011, %v3021, %v3022
    %v3024 = vrot.slane %v2044, 4
    %v3025 = vrot.slane %v2045, 4
    %v3026 = vsel %vm3011, %v3024, %v3025
    %v3027 = vrot.slane %v2046, 4
    %v3028 = vrot.slane %v2047, 4
    %v3029 = vsel %vm3011, %v3027, %v3028
    %v3030 = vrot.slane %v2048, 4
    %v3031 = vrot.slane %v2049, 4
    %v3032 = vsel %vm3011, %v3030, %v3031
    %v3033 = vrot.slane %v2050, 4
    %v3034 = vrot.slane %v2051, 4
    %v3035 = vsel %vm3011, %v3033, %v3034
    %v3036 = vrot.slane %v2060, 4
    %v3037 = vrot.slane %v2061, 4
    %v3038 = vsel %vm3011, %v3036, %v3037
    %v3039 = vrot.slane %v2062, 4
    %v3040 = vrot.slane %v2063, 4
    %v3041 = vsel %vm3011, %v3039, %v3040
    %v3042 = vrot.slane %v2064, 4
    %v3043 = vrot.slane %v2065, 4
    %v3044 = vsel %vm3011, %v3042, %v3043
    %v3045 = vrot.slane %v2066, 4
    %v3046 = vrot.slane %v2067, 4
    %v3047 = vsel %vm3011, %v3045, %v3046
    %v3048 = vrot.slane %v2068, 4
    %v3049 = vrot.slane %v2069, 4
    %v3050 = vsel %vm3011, %v3048, %v3049
    %v3051 = vrot.slane %v2070, 4
    %v3052 = vrot.slane %v2071, 4
    %v3053 = vsel %vm3011, %v3051, %v3052
    %v3054 = vrot.slane %v2072, 4
    %v3055 = vrot.slane %v2073, 4
    %v3056 = vsel %vm3011, %v3054, %v3055
    %v3057 = vrot.slane %v2074, 4
    %v3058 = vrot.slane %v2075, 4
    %v3059 = vsel %vm3011, %v3057, %v3058
    %s3060 = scalar_lea.vmem %s3, 32
    %v3061 = vld [vmem:[%s3060] sm:$0xff]
    %v3062 = vsel %vm2168, %v3014, 0
    %v3064 = vsel %vm2168, %v3017, 0
    %v3066 = vsel %vm2168, %v3020, 0
    %v3068 = vsel %vm2168, %v3023, 0
    %v3070 = vsel %vm2168, %v3026, 0
    %v3072 = vsel %vm2168, %v3029, 0
    %v3074 = vsel %vm2168, %v3032, 0
    %v3076 = vsel %vm2168, %v3035, 0
    %v3078 = vsel %vm2168, %v3038, 0
    %v3080 = vsel %vm2168, %v3041, 0
    %v3082 = vsel %vm2168, %v3044, 0
    %v3084 = vsel %vm2168, %v3047, 0
    %v3086 = vsel %vm2168, %v3050, 0
    %v3088 = vsel %vm2168, %v3053, 0
    %v3090 = vsel %vm2168, %v3056, 0
    %v3092 = vsel %vm2168, %v3059, 0
    %3094 = vmatprep.subr.mxu0 0.0
    %3095 = vmatpush1.msra.mxu0 %v3061
    %3096 = vmatprep.subr.mxu0 0.0
    %3097 = vmatpush1.msra.mxu0 0.0
    %3098 = vmatprep.subr.mxu0 0.0
    %3099 = vmatpush1.msra.mxu0 0.0
    %3100 = vmatprep.subr.mxu0 0.0
    %3101 = vmatpush1.msra.mxu0 0.0
    %3102 = vmatprep.subr.mxu0 0.0
    %3103 = vmatpush1.msra.mxu0 0.0
    %3104 = vmatprep.subr.mxu0 0.0
    %3105 = vmatpush1.msra.mxu0 0.0
    %3106 = vmatprep.subr.mxu0 0.0
    %3107 = vmatpush1.msra.mxu0 0.0
    %3108 = vmatprep.subr.mxu0 0.0
    %3109 = vmatpush1.msra.mxu0 0.0
    %3110 = vmatprep.subr.mxu0 0.0
    %3111 = vmatpush1.msra.mxu0 0.0
    %3112 = vmatprep.subr.mxu0 0.0
    %3113 = vmatpush1.msra.mxu0 0.0
    %3114 = vmatprep.subr.mxu0 0.0
    %3115 = vmatpush1.msra.mxu0 0.0
    %3116 = vmatprep.subr.mxu0 0.0
    %3117 = vmatpush1.msra.mxu0 0.0
    %3118 = vmatprep.subr.mxu0 0.0
    %3119 = vmatpush1.msra.mxu0 0.0
    %3120 = vmatprep.subr.mxu0 0.0
    %3121 = vmatpush1.msra.mxu0 0.0
    %3122 = vmatprep.subr.mxu0 0.0
    %3123 = vmatpush1.msra.mxu0 0.0
    %3124 = vmatprep.subr.mxu0 0.0
    %3125 = vmatpush1.msra.mxu0 0.0
    %3126 = vmatprep.subr.mxu0 0.0
    %3127 = vmatpush1.msra.mxu0 0.0
    %3128 = vmatprep.subr.mxu0 0.0
    %3129 = vmatpush1.msra.mxu0 0.0
    %3130 = vmatprep.subr.mxu0 0.0
    %3131 = vmatpush1.msra.mxu0 0.0
    %3132 = vmatprep.subr.mxu0 0.0
    %3133 = vmatpush1.msra.mxu0 0.0
    %3134 = vmatprep.subr.mxu0 0.0
    %3135 = vmatpush1.msra.mxu0 0.0
    %3136 = vmatprep.subr.mxu0 0.0
    %3137 = vmatpush1.msra.mxu0 0.0
    %3138 = vmatprep.subr.mxu0 0.0
    %3139 = vmatpush1.msra.mxu0 0.0
    %3140 = vmatprep.subr.mxu0 0.0
    %3141 = vmatpush1.msra.mxu0 0.0
    %3142 = vmatprep.subr.mxu0 0.0
    %3143 = vmatpush1.msra.mxu0 0.0
    %3144 = vmatprep.subr.mxu0 0.0
    %3145 = vmatpush1.msra.mxu0 0.0
    %3146 = vmatprep.subr.mxu0 0.0
    %3147 = vmatpush1.msra.mxu0 0.0
    %3148 = vmatprep.subr.mxu0 0.0
    %3149 = vmatpush1.msra.mxu0 0.0
    %3150 = vmatprep.subr.mxu0 0.0
    %3151 = vmatpush1.msra.mxu0 0.0
    %3152 = vmatprep.subr.mxu0 0.0
    %3153 = vmatpush1.msra.mxu0 0.0
    %3154 = vmatprep.subr.mxu0 0.0
    %3155 = vmatpush1.msra.mxu0 0.0
    %3156 = vmatprep.subr.mxu0 0.0
    %3157 = vmatpush1.msra.mxu0 0.0
    %3158 = vmatprep.mubr.f32.mxu0 0.0
    %3159 = vmatmul.mubr.f32.gmra.mrb[0].mxu0 %v3062
    %v3160 = vpop.f32.mrb[0].mxu0
    %v3161 = vadd.f32 0.0, %v3160
    %v3162 = vpop.f32.mrb[0].mxu0
    %3163 = vmatprep.mubr.f32.mxu0 0.0
    %3164 = vmatmul.mubr.f32.gmra.mrb[0].mxu0 %v3064
    %v3165 = vpop.f32.mrb[0].mxu0
    %v3166 = vadd.f32 0.0, %v3165
    %v3167 = vpop.f32.mrb[0].mxu0
    %3168 = vmatprep.mubr.f32.mxu0 0.0
    %3169 = vmatmul.mubr.f32.gmra.mrb[0].mxu0 %v3066
    %v3170 = vpop.f32.mrb[0].mxu0
    %v3171 = vadd.f32 0.0, %v3170
    %v3172 = vpop.f32.mrb[0].mxu0
    %3173 = vmatprep.mubr.f32.mxu0 0.0
    %3174 = vmatmul.mubr.f32.gmra.mrb[0].mxu0 %v3068
    %v3175 = vpop.f32.mrb[0].mxu0
    %v3176 = vadd.f32 0.0, %v3175
    %v3177 = vpop.f32.mrb[0].mxu0
    %3178 = vmatprep.mubr.f32.mxu0 0.0
    %3179 = vmatmul.mubr.f32.gmra.mrb[0].mxu0 %v3070
    %v3180 = vpop.f32.mrb[0].mxu0
    %v3181 = vadd.f32 0.0, %v3180
    %v3182 = vpop.f32.mrb[0].mxu0
    %3183 = vmatprep.mubr.f32.mxu0 0.0
    %3184 = vmatmul.mubr.f32.gmra.mrb[0].mxu0 %v3072
    %v3185 = vpop.f32.mrb[0].mxu0
    %v3186 = vadd.f32 0.0, %v3185
    %v3187 = vpop.f32.mrb[0].mxu0
    %3188 = vmatprep.mubr.f32.mxu0 0.0
    %3189 = vmatmul.mubr.f32.gmra.mrb[0].mxu0 %v3074
    %v3190 = vpop.f32.mrb[0].mxu0
    %v3191 = vadd.f32 0.0, %v3190
    %v3192 = vpop.f32.mrb[0].mxu0
    %3193 = vmatprep.mubr.f32.mxu0 0.0
    %3194 = vmatmul.mubr.f32.gmra.mrb[0].mxu0 %v3076
    %v3195 = vpop.f32.mrb[0].mxu0
    %v3196 = vadd.f32 0.0, %v3195
    %v3197 = vpop.f32.mrb[0].mxu0
    %3198 = vmatprep.mubr.f32.mxu0 0.0
    %3199 = vmatmul.mubr.f32.gmra.mrb[0].mxu0 %v3078
    %v3200 = vpop.f32.mrb[0].mxu0
    %v3201 = vadd.f32 0.0, %v3200
    %v3202 = vpop.f32.mrb[0].mxu0
    %3203 = vmatprep.mubr.f32.mxu0 0.0
    %3204 = vmatmul.mubr.f32.gmra.mrb[0].mxu0 %v3080
    %v3205 = vpop.f32.mrb[0].mxu0
    %v3206 = vadd.f32 0.0, %v3205
    %v3207 = vpop.f32.mrb[0].mxu0
    %3208 = vmatprep.mubr.f32.mxu0 0.0
    %3209 = vmatmul.mubr.f32.gmra.mrb[0].mxu0 %v3082
    %v3210 = vpop.f32.mrb[0].mxu0
    %v3211 = vadd.f32 0.0, %v3210
    %v3212 = vpop.f32.mrb[0].mxu0
    %3213 = vmatprep.mubr.f32.mxu0 0.0
    %3214 = vmatmul.mubr.f32.gmra.mrb[0].mxu0 %v3084
    %v3215 = vpop.f32.mrb[0].mxu0
    %v3216 = vadd.f32 0.0, %v3215
    %v3217 = vpop.f32.mrb[0].mxu0
    %3218 = vmatprep.mubr.f32.mxu0 0.0
    %3219 = vmatmul.mubr.f32.gmra.mrb[0].mxu0 %v3086
    %v3220 = vpop.f32.mrb[0].mxu0
    %v3221 = vadd.f32 0.0, %v3220
    %v3222 = vpop.f32.mrb[0].mxu0
    %3223 = vmatprep.mubr.f32.mxu0 0.0
    %3224 = vmatmul.mubr.f32.gmra.mrb[0].mxu0 %v3088
    %v3225 = vpop.f32.mrb[0].mxu0
    %v3226 = vadd.f32 0.0, %v3225
    %v3227 = vpop.f32.mrb[0].mxu0
    %3228 = vmatprep.mubr.f32.mxu0 0.0
    %3229 = vmatmul.mubr.f32.gmra.mrb[0].mxu0 %v3090
    %v3230 = vpop.f32.mrb[0].mxu0
    %v3231 = vadd.f32 0.0, %v3230
    %v3232 = vpop.f32.mrb[0].mxu0
    %3233 = vmatprep.mubr.f32.mxu0 0.0
    %3234 = vmatmul.mubr.f32.gmra.mrb[0].mxu0 %v3092
    %v3235 = vpop.f32.mrb[0].mxu0
    %v3236 = vadd.f32 0.0, %v3235
    %v3237 = vpop.f32.mrb[0].mxu0
    %3238 = vdwg.mxu0
    %v3239 = vadd.f32 %v2995, %v3161
    %v3240 = vadd.f32 %v2996, %v3166
    %v3241 = vadd.f32 %v2997, %v3171
    %v3242 = vadd.f32 %v2998, %v3176
    %v3243 = vadd.f32 %v2999, %v3181
    %v3244 = vadd.f32 %v3000, %v3186
    %v3245 = vadd.f32 %v3001, %v3191
    %v3246 = vadd.f32 %v3002, %v3196
    %v3247 = vadd.f32 %v3003, %v3201
    %v3248 = vadd.f32 %v3004, %v3206
    %v3249 = vadd.f32 %v3005, %v3211
    %v3250 = vadd.f32 %v3006, %v3216
    %v3251 = vadd.f32 %v3007, %v3221
    %v3252 = vadd.f32 %v3008, %v3226
    %v3253 = vadd.f32 %v3009, %v3231
    %v3254 = vadd.f32 %v3010, %v3236
    %s3255 = scalar_lea.vmem %s3, 40
    %v3256 = vld [vmem:[%s3255] sm:$0xff]
    %v3258 = vsel %vm2168, %v2052, 0
    %v3261 = vsel %vm2168, %v2076, 0
    %3263 = vmatprep.subr.mxu0 0.0
    %3264 = vmatpush1.msra.mxu0 %v3256
    %3265 = vmatprep.subr.mxu0 0.0
    %3266 = vmatpush1.msra.mxu0 0.0
    %3267 = vmatprep.subr.mxu0 0.0
    %3268 = vmatpush1.msra.mxu0 0.0
    %3269 = vmatprep.subr.mxu0 0.0
    %3270 = vmatpush1.msra.mxu0 0.0
    %3271 = vmatprep.subr.mxu0 0.0
    %3272 = vmatpush1.msra.mxu0 0.0
    %3273 = vmatprep.subr.mxu0 0.0
    %3274 = vmatpush1.msra.mxu0 0.0
    %3275 = vmatprep.subr.mxu0 0.0
    %3276 = vmatpush1.msra.mxu0 0.0
    %3277 = vmatprep.subr.mxu0 0.0
    %3278 = vmatpush1.msra.mxu0 0.0
    %3279 = vmatprep.subr.mxu0 0.0
    %3280 = vmatpush1.msra.mxu0 0.0
    %3281 = vmatprep.subr.mxu0 0.0
    %3282 = vmatpush1.msra.mxu0 0.0
    %3283 = vmatprep.subr.mxu0 0.0
    %3284 = vmatpush1.msra.mxu0 0.0
    %3285 = vmatprep.subr.mxu0 0.0
    %3286 = vmatpush1.msra.mxu0 0.0
    %3287 = vmatprep.subr.mxu0 0.0
    %3288 = vmatpush1.msra.mxu0 0.0
    %3289 = vmatprep.subr.mxu0 0.0
    %3290 = vmatpush1.msra.mxu0 0.0
    %3291 = vmatprep.subr.mxu0 0.0
    %3292 = vmatpush1.msra.mxu0 0.0
    %3293 = vmatprep.subr.mxu0 0.0
    %3294 = vmatpush1.msra.mxu0 0.0
    %3295 = vmatprep.subr.mxu0 0.0
    %3296 = vmatpush1.msra.mxu0 0.0
    %3297 = vmatprep.subr.mxu0 0.0
    %3298 = vmatpush1.msra.mxu0 0.0
    %3299 = vmatprep.subr.mxu0 0.0
    %3300 = vmatpush1.msra.mxu0 0.0
    %3301 = vmatprep.subr.mxu0 0.0
    %3302 = vmatpush1.msra.mxu0 0.0
    %3303 = vmatprep.subr.mxu0 0.0
    %3304 = vmatpush1.msra.mxu0 0.0
    %3305 = vmatprep.subr.mxu0 0.0
    %3306 = vmatpush1.msra.mxu0 0.0
    %3307 = vmatprep.subr.mxu0 0.0
    %3308 = vmatpush1.msra.mxu0 0.0
    %3309 = vmatprep.subr.mxu0 0.0
    %3310 = vmatpush1.msra.mxu0 0.0
    %3311 = vmatprep.subr.mxu0 0.0
    %3312 = vmatpush1.msra.mxu0 0.0
    %3313 = vmatprep.subr.mxu0 0.0
    %3314 = vmatpush1.msra.mxu0 0.0
    %3315 = vmatprep.subr.mxu0 0.0
    %3316 = vmatpush1.msra.mxu0 0.0
    %3317 = vmatprep.subr.mxu0 0.0
    %3318 = vmatpush1.msra.mxu0 0.0
    %3319 = vmatprep.subr.mxu0 0.0
    %3320 = vmatpush1.msra.mxu0 0.0
    %3321 = vmatprep.subr.mxu0 0.0
    %3322 = vmatpush1.msra.mxu0 0.0
    %3323 = vmatprep.subr.mxu0 0.0
    %3324 = vmatpush1.msra.mxu0 0.0
    %3325 = vmatprep.subr.mxu0 0.0
    %3326 = vmatpush1.msra.mxu0 0.0
    %3327 = vmatprep.mubr.f32.mxu0 0.0
    %3328 = vmatmul.mubr.f32.gmra.mrb[0].mxu0 %v2348
    %v3329 = vpop.f32.mrb[0].mxu0
    %v3330 = vadd.f32 0.0, %v3329
    %v3331 = vpop.f32.mrb[0].mxu0
    %3332 = vmatprep.mubr.f32.mxu0 0.0
    %3333 = vmatmul.mubr.f32.gmra.mrb[0].mxu0 %v2350
    %v3334 = vpop.f32.mrb[0].mxu0
    %v3335 = vadd.f32 0.0, %v3334
    %v3336 = vpop.f32.mrb[0].mxu0
    %3337 = vmatprep.mubr.f32.mxu0 0.0
    %3338 = vmatmul.mubr.f32.gmra.mrb[0].mxu0 %v2352
    %v3339 = vpop.f32.mrb[0].mxu0
    %v3340 = vadd.f32 0.0, %v3339
    %v3341 = vpop.f32.mrb[0].mxu0
    %3342 = vmatprep.mubr.f32.mxu0 0.0
    %3343 = vmatmul.mubr.f32.gmra.mrb[0].mxu0 %v2354
    %v3344 = vpop.f32.mrb[0].mxu0
    %v3345 = vadd.f32 0.0, %v3344
    %v3346 = vpop.f32.mrb[0].mxu0
    %3347 = vmatprep.mubr.f32.mxu0 0.0
    %3348 = vmatmul.mubr.f32.gmra.mrb[0].mxu0 %v2356
    %v3349 = vpop.f32.mrb[0].mxu0
    %v3350 = vadd.f32 0.0, %v3349
    %v3351 = vpop.f32.mrb[0].mxu0
    %3352 = vmatprep.mubr.f32.mxu0 0.0
    %3353 = vmatmul.mubr.f32.gmra.mrb[0].mxu0 %v2358
    %v3354 = vpop.f32.mrb[0].mxu0
    %v3355 = vadd.f32 0.0, %v3354
    %v3356 = vpop.f32.mrb[0].mxu0
    %3357 = vmatprep.mubr.f32.mxu0 0.0
    %3358 = vmatmul.mubr.f32.gmra.mrb[0].mxu0 %v2360
    %v3359 = vpop.f32.mrb[0].mxu0
    %v3360 = vadd.f32 0.0, %v3359
    %v3361 = vpop.f32.mrb[0].mxu0
    %3362 = vmatprep.mubr.f32.mxu0 0.0
    %3363 = vmatmul.mubr.f32.gmra.mrb[0].mxu0 %v3258
    %v3364 = vpop.f32.mrb[0].mxu0
    %v3365 = vadd.f32 0.0, %v3364
    %v3366 = vpop.f32.mrb[0].mxu0
    %3367 = vmatprep.mubr.f32.mxu0 0.0
    %3368 = vmatmul.mubr.f32.gmra.mrb[0].mxu0 %v2364
    %v3369 = vpop.f32.mrb[0].mxu0
    %v3370 = vadd.f32 0.0, %v3369
    %v3371 = vpop.f32.mrb[0].mxu0
    %3372 = vmatprep.mubr.f32.mxu0 0.0
    %3373 = vmatmul.mubr.f32.gmra.mrb[0].mxu0 %v2366
    %v3374 = vpop.f32.mrb[0].mxu0
    %v3375 = vadd.f32 0.0, %v3374
    %v3376 = vpop.f32.mrb[0].mxu0
    %3377 = vmatprep.mubr.f32.mxu0 0.0
    %3378 = vmatmul.mubr.f32.gmra.mrb[0].mxu0 %v2368
    %v3379 = vpop.f32.mrb[0].mxu0
    %v3380 = vadd.f32 0.0, %v3379
    %v3381 = vpop.f32.mrb[0].mxu0
    %3382 = vmatprep.mubr.f32.mxu0 0.0
    %3383 = vmatmul.mubr.f32.gmra.mrb[0].mxu0 %v2370
    %v3384 = vpop.f32.mrb[0].mxu0
    %v3385 = vadd.f32 0.0, %v3384
    %v3386 = vpop.f32.mrb[0].mxu0
    %3387 = vmatprep.mubr.f32.mxu0 0.0
    %3388 = vmatmul.mubr.f32.gmra.mrb[0].mxu0 %v2372
    %v3389 = vpop.f32.mrb[0].mxu0
    %v3390 = vadd.f32 0.0, %v3389
    %v3391 = vpop.f32.mrb[0].mxu0
    %3392 = vmatprep.mubr.f32.mxu0 0.0
    %3393 = vmatmul.mubr.f32.gmra.mrb[0].mxu0 %v2374
    %v3394 = vpop.f32.mrb[0].mxu0
    %v3395 = vadd.f32 0.0, %v3394
    %v3396 = vpop.f32.mrb[0].mxu0
    %3397 = vmatprep.mubr.f32.mxu0 0.0
    %3398 = vmatmul.mubr.f32.gmra.mrb[0].mxu0 %v2376
    %v3399 = vpop.f32.mrb[0].mxu0
    %v3400 = vadd.f32 0.0, %v3399
    %v3401 = vpop.f32.mrb[0].mxu0
    %3402 = vmatprep.mubr.f32.mxu0 0.0
    %3403 = vmatmul.mubr.f32.gmra.mrb[0].mxu0 %v3261
    %v3404 = vpop.f32.mrb[0].mxu0
    %v3405 = vadd.f32 0.0, %v3404
    %v3406 = vpop.f32.mrb[0].mxu0
    %3407 = vdwg.mxu0
    %v3408 = vadd.f32 %v3239, %v3330
    %v3409 = vadd.f32 %v3240, %v3335
    %v3410 = vadd.f32 %v3241, %v3340
    %v3411 = vadd.f32 %v3242, %v3345
    %v3412 = vadd.f32 %v3243, %v3350
    %v3413 = vadd.f32 %v3244, %v3355
    %v3414 = vadd.f32 %v3245, %v3360
    %v3415 = vadd.f32 %v3246, %v3365
    %v3416 = vadd.f32 %v3247, %v3370
    %v3417 = vadd.f32 %v3248, %v3375
    %v3418 = vadd.f32 %v3249, %v3380
    %v3419 = vadd.f32 %v3250, %v3385
    %v3420 = vadd.f32 %v3251, %v3390
    %v3421 = vadd.f32 %v3252, %v3395
    %v3422 = vadd.f32 %v3253, %v3400
    %v3423 = vadd.f32 %v3254, %v3405
    %v3426 = vrot.slane %v2052, 1
    %v3427 = vrot.slane %v2053, 1
    %v3428 = vsel %vm2117, %v3426, %v3427
    %v3429 = vrot.slane %v2076, 1
    %v3430 = vrot.slane %v2077, 1
    %v3431 = vsel %vm2117, %v3429, %v3430
    %s3432 = scalar_lea.vmem %s3, 48
    %v3433 = vld [vmem:[%s3432] sm:$0xff]
    %v3434 = vsel %vm2168, %v3428, 0
    %v3436 = vsel %vm2168, %v3431, 0
    %3438 = vmatprep.subr.mxu0 0.0
    %3439 = vmatpush1.msra.mxu0 %v3433
    %3440 = vmatprep.subr.mxu0 0.0
    %3441 = vmatpush1.msra.mxu0 0.0
    %3442 = vmatprep.subr.mxu0 0.0
    %3443 = vmatpush1.msra.mxu0 0.0
    %3444 = vmatprep.subr.mxu0 0.0
    %3445 = vmatpush1.msra.mxu0 0.0
    %3446 = vmatprep.subr.mxu0 0.0
    %3447 = vmatpush1.msra.mxu0 0.0
    %3448 = vmatprep.subr.mxu0 0.0
    %3449 = vmatpush1.msra.mxu0 0.0
    %3450 = vmatprep.subr.mxu0 0.0
    %3451 = vmatpush1.msra.mxu0 0.0
    %3452 = vmatprep.subr.mxu0 0.0
    %3453 = vmatpush1.msra.mxu0 0.0
    %3454 = vmatprep.subr.mxu0 0.0
    %3455 = vmatpush1.msra.mxu0 0.0
    %3456 = vmatprep.subr.mxu0 0.0
    %3457 = vmatpush1.msra.mxu0 0.0
    %3458 = vmatprep.subr.mxu0 0.0
    %3459 = vmatpush1.msra.mxu0 0.0
    %3460 = vmatprep.subr.mxu0 0.0
    %3461 = vmatpush1.msra.mxu0 0.0
    %3462 = vmatprep.subr.mxu0 0.0
    %3463 = vmatpush1.msra.mxu0 0.0
    %3464 = vmatprep.subr.mxu0 0.0
    %3465 = vmatpush1.msra.mxu0 0.0
    %3466 = vmatprep.subr.mxu0 0.0
    %3467 = vmatpush1.msra.mxu0 0.0
    %3468 = vmatprep.subr.mxu0 0.0
    %3469 = vmatpush1.msra.mxu0 0.0
    %3470 = vmatprep.subr.mxu0 0.0
    %3471 = vmatpush1.msra.mxu0 0.0
    %3472 = vmatprep.subr.mxu0 0.0
    %3473 = vmatpush1.msra.mxu0 0.0
    %3474 = vmatprep.subr.mxu0 0.0
    %3475 = vmatpush1.msra.mxu0 0.0
    %3476 = vmatprep.subr.mxu0 0.0
    %3477 = vmatpush1.msra.mxu0 0.0
    %3478 = vmatprep.subr.mxu0 0.0
    %3479 = vmatpush1.msra.mxu0 0.0
    %3480 = vmatprep.subr.mxu0 0.0
    %3481 = vmatpush1.msra.mxu0 0.0
    %3482 = vmatprep.subr.mxu0 0.0
    %3483 = vmatpush1.msra.mxu0 0.0
    %3484 = vmatprep.subr.mxu0 0.0
    %3485 = vmatpush1.msra.mxu0 0.0
    %3486 = vmatprep.subr.mxu0 0.0
    %3487 = vmatpush1.msra.mxu0 0.0
    %3488 = vmatprep.subr.mxu0 0.0
    %3489 = vmatpush1.msra.mxu0 0.0
    %3490 = vmatprep.subr.mxu0 0.0
    %3491 = vmatpush1.msra.mxu0 0.0
    %3492 = vmatprep.subr.mxu0 0.0
    %3493 = vmatpush1.msra.mxu0 0.0
    %3494 = vmatprep.subr.mxu0 0.0
    %3495 = vmatpush1.msra.mxu0 0.0
    %3496 = vmatprep.subr.mxu0 0.0
    %3497 = vmatpush1.msra.mxu0 0.0
    %3498 = vmatprep.subr.mxu0 0.0
    %3499 = vmatpush1.msra.mxu0 0.0
    %3500 = vmatprep.subr.mxu0 0.0
    %3501 = vmatpush1.msra.mxu0 0.0
    %3502 = vmatprep.mubr.f32.mxu0 0.0
    %3503 = vmatmul.mubr.f32.gmra.mrb[0].mxu0 %v2171
    %v3504 = vpop.f32.mrb[0].mxu0
    %v3505 = vadd.f32 0.0, %v3504
    %v3506 = vpop.f32.mrb[0].mxu0
    %3507 = vmatprep.mubr.f32.mxu0 0.0
    %3508 = vmatmul.mubr.f32.gmra.mrb[0].mxu0 %v2173
    %v3509 = vpop.f32.mrb[0].mxu0
    %v3510 = vadd.f32 0.0, %v3509
    %v3511 = vpop.f32.mrb[0].mxu0
    %3512 = vmatprep.mubr.f32.mxu0 0.0
    %3513 = vmatmul.mubr.f32.gmra.mrb[0].mxu0 %v2175
    %v3514 = vpop.f32.mrb[0].mxu0
    %v3515 = vadd.f32 0.0, %v3514
    %v3516 = vpop.f32.mrb[0].mxu0
    %3517 = vmatprep.mubr.f32.mxu0 0.0
    %3518 = vmatmul.mubr.f32.gmra.mrb[0].mxu0 %v2177
    %v3519 = vpop.f32.mrb[0].mxu0
    %v3520 = vadd.f32 0.0, %v3519
    %v3521 = vpop.f32.mrb[0].mxu0
    %3522 = vmatprep.mubr.f32.mxu0 0.0
    %3523 = vmatmul.mubr.f32.gmra.mrb[0].mxu0 %v2179
    %v3524 = vpop.f32.mrb[0].mxu0
    %v3525 = vadd.f32 0.0, %v3524
    %v3526 = vpop.f32.mrb[0].mxu0
    %3527 = vmatprep.mubr.f32.mxu0 0.0
    %3528 = vmatmul.mubr.f32.gmra.mrb[0].mxu0 %v2181
    %v3529 = vpop.f32.mrb[0].mxu0
    %v3530 = vadd.f32 0.0, %v3529
    %v3531 = vpop.f32.mrb[0].mxu0
    %3532 = vmatprep.mubr.f32.mxu0 0.0
    %3533 = vmatmul.mubr.f32.gmra.mrb[0].mxu0 %v2183
    %v3534 = vpop.f32.mrb[0].mxu0
    %v3535 = vadd.f32 0.0, %v3534
    %v3536 = vpop.f32.mrb[0].mxu0
    %3537 = vmatprep.mubr.f32.mxu0 0.0
    %3538 = vmatmul.mubr.f32.gmra.mrb[0].mxu0 %v3434
    %v3539 = vpop.f32.mrb[0].mxu0
    %v3540 = vadd.f32 0.0, %v3539
    %v3541 = vpop.f32.mrb[0].mxu0
    %3542 = vmatprep.mubr.f32.mxu0 0.0
    %3543 = vmatmul.mubr.f32.gmra.mrb[0].mxu0 %v2187
    %v3544 = vpop.f32.mrb[0].mxu0
    %v3545 = vadd.f32 0.0, %v3544
    %v3546 = vpop.f32.mrb[0].mxu0
    %3547 = vmatprep.mubr.f32.mxu0 0.0
    %3548 = vmatmul.mubr.f32.gmra.mrb[0].mxu0 %v2189
    %v3549 = vpop.f32.mrb[0].mxu0
    %v3550 = vadd.f32 0.0, %v3549
    %v3551 = vpop.f32.mrb[0].mxu0
    %3552 = vmatprep.mubr.f32.mxu0 0.0
    %3553 = vmatmul.mubr.f32.gmra.mrb[0].mxu0 %v2191
    %v3554 = vpop.f32.mrb[0].mxu0
    %v3555 = vadd.f32 0.0, %v3554
    %v3556 = vpop.f32.mrb[0].mxu0
    %3557 = vmatprep.mubr.f32.mxu0 0.0
    %3558 = vmatmul.mubr.f32.gmra.mrb[0].mxu0 %v2193
    %v3559 = vpop.f32.mrb[0].mxu0
    %v3560 = vadd.f32 0.0, %v3559
    %v3561 = vpop.f32.mrb[0].mxu0
    %3562 = vmatprep.mubr.f32.mxu0 0.0
    %3563 = vmatmul.mubr.f32.gmra.mrb[0].mxu0 %v2195
    %v3564 = vpop.f32.mrb[0].mxu0
    %v3565 = vadd.f32 0.0, %v3564
    %v3566 = vpop.f32.mrb[0].mxu0
    %3567 = vmatprep.mubr.f32.mxu0 0.0
    %3568 = vmatmul.mubr.f32.gmra.mrb[0].mxu0 %v2197
    %v3569 = vpop.f32.mrb[0].mxu0
    %v3570 = vadd.f32 0.0, %v3569
    %v3571 = vpop.f32.mrb[0].mxu0
    %3572 = vmatprep.mubr.f32.mxu0 0.0
    %3573 = vmatmul.mubr.f32.gmra.mrb[0].mxu0 %v2199
    %v3574 = vpop.f32.mrb[0].mxu0
    %v3575 = vadd.f32 0.0, %v3574
    %v3576 = vpop.f32.mrb[0].mxu0
    %3577 = vmatprep.mubr.f32.mxu0 0.0
    %3578 = vmatmul.mubr.f32.gmra.mrb[0].mxu0 %v3436
    %v3579 = vpop.f32.mrb[0].mxu0
    %v3580 = vadd.f32 0.0, %v3579
    %v3581 = vpop.f32.mrb[0].mxu0
    %3582 = vdwg.mxu0
    %v3583 = vadd.f32 %v3408, %v3505
    %v3584 = vadd.f32 %v3409, %v3510
    %v3585 = vadd.f32 %v3410, %v3515
    %v3586 = vadd.f32 %v3411, %v3520
    %v3587 = vadd.f32 %v3412, %v3525
    %v3588 = vadd.f32 %v3413, %v3530
    %v3589 = vadd.f32 %v3414, %v3535
    %v3590 = vadd.f32 %v3415, %v3540
    %v3591 = vadd.f32 %v3416, %v3545
    %v3592 = vadd.f32 %v3417, %v3550
    %v3593 = vadd.f32 %v3418, %v3555
    %v3594 = vadd.f32 %v3419, %v3560
    %v3595 = vadd.f32 %v3420, %v3565
    %v3596 = vadd.f32 %v3421, %v3570
    %v3597 = vadd.f32 %v3422, %v3575
    %v3598 = vadd.f32 %v3423, %v3580
    %v3599 = vrot.slane %v2052, 2
    %v3600 = vrot.slane %v2053, 2
    %v3601 = vsel %vm2523, %v3599, %v3600
    %v3602 = vrot.slane %v2076, 2
    %v3603 = vrot.slane %v2077, 2
    %v3604 = vsel %vm2523, %v3602, %v3603
    %s3605 = scalar_lea.vmem %s3, 56
    %v3606 = vld [vmem:[%s3605] sm:$0xff]
    %v3607 = vsel %vm2168, %v3601, 0
    %v3609 = vsel %vm2168, %v3604, 0
    %3611 = vmatprep.subr.mxu0 0.0
    %3612 = vmatpush1.msra.mxu0 %v3606
    %3613 = vmatprep.subr.mxu0 0.0
    %3614 = vmatpush1.msra.mxu0 0.0
    %3615 = vmatprep.subr.mxu0 0.0
    %3616 = vmatpush1.msra.mxu0 0.0
    %3617 = vmatprep.subr.mxu0 0.0
    %3618 = vmatpush1.msra.mxu0 0.0
    %3619 = vmatprep.subr.mxu0 0.0
    %3620 = vmatpush1.msra.mxu0 0.0
    %3621 = vmatprep.subr.mxu0 0.0
    %3622 = vmatpush1.msra.mxu0 0.0
    %3623 = vmatprep.subr.mxu0 0.0
    %3624 = vmatpush1.msra.mxu0 0.0
    %3625 = vmatprep.subr.mxu0 0.0
    %3626 = vmatpush1.msra.mxu0 0.0
    %3627 = vmatprep.subr.mxu0 0.0
    %3628 = vmatpush1.msra.mxu0 0.0
    %3629 = vmatprep.subr.mxu0 0.0
    %3630 = vmatpush1.msra.mxu0 0.0
    %3631 = vmatprep.subr.mxu0 0.0
    %3632 = vmatpush1.msra.mxu0 0.0
    %3633 = vmatprep.subr.mxu0 0.0
    %3634 = vmatpush1.msra.mxu0 0.0
    %3635 = vmatprep.subr.mxu0 0.0
    %3636 = vmatpush1.msra.mxu0 0.0
    %3637 = vmatprep.subr.mxu0 0.0
    %3638 = vmatpush1.msra.mxu0 0.0
    %3639 = vmatprep.subr.mxu0 0.0
    %3640 = vmatpush1.msra.mxu0 0.0
    %3641 = vmatprep.subr.mxu0 0.0
    %3642 = vmatpush1.msra.mxu0 0.0
    %3643 = vmatprep.subr.mxu0 0.0
    %3644 = vmatpush1.msra.mxu0 0.0
    %3645 = vmatprep.subr.mxu0 0.0
    %3646 = vmatpush1.msra.mxu0 0.0
    %3647 = vmatprep.subr.mxu0 0.0
    %3648 = vmatpush1.msra.mxu0 0.0
    %3649 = vmatprep.subr.mxu0 0.0
    %3650 = vmatpush1.msra.mxu0 0.0
    %3651 = vmatprep.subr.mxu0 0.0
    %3652 = vmatpush1.msra.mxu0 0.0
    %3653 = vmatprep.subr.mxu0 0.0
    %3654 = vmatpush1.msra.mxu0 0.0
    %3655 = vmatprep.subr.mxu0 0.0
    %3656 = vmatpush1.msra.mxu0 0.0
    %3657 = vmatprep.subr.mxu0 0.0
    %3658 = vmatpush1.msra.mxu0 0.0
    %3659 = vmatprep.subr.mxu0 0.0
    %3660 = vmatpush1.msra.mxu0 0.0
    %3661 = vmatprep.subr.mxu0 0.0
    %3662 = vmatpush1.msra.mxu0 0.0
    %3663 = vmatprep.subr.mxu0 0.0
    %3664 = vmatpush1.msra.mxu0 0.0
    %3665 = vmatprep.subr.mxu0 0.0
    %3666 = vmatpush1.msra.mxu0 0.0
    %3667 = vmatprep.subr.mxu0 0.0
    %3668 = vmatpush1.msra.mxu0 0.0
    %3669 = vmatprep.subr.mxu0 0.0
    %3670 = vmatpush1.msra.mxu0 0.0
    %3671 = vmatprep.subr.mxu0 0.0
    %3672 = vmatpush1.msra.mxu0 0.0
    %3673 = vmatprep.subr.mxu0 0.0
    %3674 = vmatpush1.msra.mxu0 0.0
    %3675 = vmatprep.mubr.f32.mxu0 0.0
    %3676 = vmatmul.mubr.f32.gmra.mrb[0].mxu0 %v2576
    %v3677 = vpop.f32.mrb[0].mxu0
    %v3678 = vadd.f32 0.0, %v3677
    %v3679 = vpop.f32.mrb[0].mxu0
    %3680 = vmatprep.mubr.f32.mxu0 0.0
    %3681 = vmatmul.mubr.f32.gmra.mrb[0].mxu0 %v2578
    %v3682 = vpop.f32.mrb[0].mxu0
    %v3683 = vadd.f32 0.0, %v3682
    %v3684 = vpop.f32.mrb[0].mxu0
    %3685 = vmatprep.mubr.f32.mxu0 0.0
    %3686 = vmatmul.mubr.f32.gmra.mrb[0].mxu0 %v2580
    %v3687 = vpop.f32.mrb[0].mxu0
    %v3688 = vadd.f32 0.0, %v3687
    %v3689 = vpop.f32.mrb[0].mxu0
    %3690 = vmatprep.mubr.f32.mxu0 0.0
    %3691 = vmatmul.mubr.f32.gmra.mrb[0].mxu0 %v2582
    %v3692 = vpop.f32.mrb[0].mxu0
    %v3693 = vadd.f32 0.0, %v3692
    %v3694 = vpop.f32.mrb[0].mxu0
    %3695 = vmatprep.mubr.f32.mxu0 0.0
    %3696 = vmatmul.mubr.f32.gmra.mrb[0].mxu0 %v2584
    %v3697 = vpop.f32.mrb[0].mxu0
    %v3698 = vadd.f32 0.0, %v3697
    %v3699 = vpop.f32.mrb[0].mxu0
    %3700 = vmatprep.mubr.f32.mxu0 0.0
    %3701 = vmatmul.mubr.f32.gmra.mrb[0].mxu0 %v2586
    %v3702 = vpop.f32.mrb[0].mxu0
    %v3703 = vadd.f32 0.0, %v3702
    %v3704 = vpop.f32.mrb[0].mxu0
    %3705 = vmatprep.mubr.f32.mxu0 0.0
    %3706 = vmatmul.mubr.f32.gmra.mrb[0].mxu0 %v2588
    %v3707 = vpop.f32.mrb[0].mxu0
    %v3708 = vadd.f32 0.0, %v3707
    %v3709 = vpop.f32.mrb[0].mxu0
    %3710 = vmatprep.mubr.f32.mxu0 0.0
    %3711 = vmatmul.mubr.f32.gmra.mrb[0].mxu0 %v3607
    %v3712 = vpop.f32.mrb[0].mxu0
    %v3713 = vadd.f32 0.0, %v3712
    %v3714 = vpop.f32.mrb[0].mxu0
    %3715 = vmatprep.mubr.f32.mxu0 0.0
    %3716 = vmatmul.mubr.f32.gmra.mrb[0].mxu0 %v2592
    %v3717 = vpop.f32.mrb[0].mxu0
    %v3718 = vadd.f32 0.0, %v3717
    %v3719 = vpop.f32.mrb[0].mxu0
    %3720 = vmatprep.mubr.f32.mxu0 0.0
    %3721 = vmatmul.mubr.f32.gmra.mrb[0].mxu0 %v2594
    %v3722 = vpop.f32.mrb[0].mxu0
    %v3723 = vadd.f32 0.0, %v3722
    %v3724 = vpop.f32.mrb[0].mxu0
    %3725 = vmatprep.mubr.f32.mxu0 0.0
    %3726 = vmatmul.mubr.f32.gmra.mrb[0].mxu0 %v2596
    %v3727 = vpop.f32.mrb[0].mxu0
    %v3728 = vadd.f32 0.0, %v3727
    %v3729 = vpop.f32.mrb[0].mxu0
    %3730 = vmatprep.mubr.f32.mxu0 0.0
    %3731 = vmatmul.mubr.f32.gmra.mrb[0].mxu0 %v2598
    %v3732 = vpop.f32.mrb[0].mxu0
    %v3733 = vadd.f32 0.0, %v3732
    %v3734 = vpop.f32.mrb[0].mxu0
    %3735 = vmatprep.mubr.f32.mxu0 0.0
    %3736 = vmatmul.mubr.f32.gmra.mrb[0].mxu0 %v2600
    %v3737 = vpop.f32.mrb[0].mxu0
    %v3738 = vadd.f32 0.0, %v3737
    %v3739 = vpop.f32.mrb[0].mxu0
    %3740 = vmatprep.mubr.f32.mxu0 0.0
    %3741 = vmatmul.mubr.f32.gmra.mrb[0].mxu0 %v2602
    %v3742 = vpop.f32.mrb[0].mxu0
    %v3743 = vadd.f32 0.0, %v3742
    %v3744 = vpop.f32.mrb[0].mxu0
    %3745 = vmatprep.mubr.f32.mxu0 0.0
    %3746 = vmatmul.mubr.f32.gmra.mrb[0].mxu0 %v2604
    %v3747 = vpop.f32.mrb[0].mxu0
    %v3748 = vadd.f32 0.0, %v3747
    %v3749 = vpop.f32.mrb[0].mxu0
    %3750 = vmatprep.mubr.f32.mxu0 0.0
    %3751 = vmatmul.mubr.f32.gmra.mrb[0].mxu0 %v3609
    %v3752 = vpop.f32.mrb[0].mxu0
    %v3753 = vadd.f32 0.0, %v3752
    %v3754 = vpop.f32.mrb[0].mxu0
    %3755 = vdwg.mxu0
    %v3756 = vadd.f32 %v3583, %v3678
    %v3757 = vadd.f32 %v3584, %v3683
    %v3758 = vadd.f32 %v3585, %v3688
    %v3759 = vadd.f32 %v3586, %v3693
    %v3760 = vadd.f32 %v3587, %v3698
    %v3761 = vadd.f32 %v3588, %v3703
    %v3762 = vadd.f32 %v3589, %v3708
    %v3763 = vadd.f32 %v3590, %v3713
    %v3764 = vadd.f32 %v3591, %v3718
    %v3765 = vadd.f32 %v3592, %v3723
    %v3766 = vadd.f32 %v3593, %v3728
    %v3767 = vadd.f32 %v3594, %v3733
    %v3768 = vadd.f32 %v3595, %v3738
    %v3769 = vadd.f32 %v3596, %v3743
    %v3770 = vadd.f32 %v3597, %v3748
    %v3771 = vadd.f32 %v3598, %v3753
    %v3772 = vrot.slane %v2052, 3
    %v3773 = vrot.slane %v2053, 3
    %v3774 = vsel %vm2767, %v3772, %v3773
    %v3775 = vrot.slane %v2076, 3
    %v3776 = vrot.slane %v2077, 3
    %v3777 = vsel %vm2767, %v3775, %v3776
    %s3778 = scalar_lea.vmem %s3, 64
    %v3779 = vld [vmem:[%s3778] sm:$0xff]
    %v3780 = vsel %vm2168, %v3774, 0
    %v3782 = vsel %vm2168, %v3777, 0
    %3784 = vmatprep.subr.mxu0 0.0
    %3785 = vmatpush1.msra.mxu0 %v3779
    %3786 = vmatprep.subr.mxu0 0.0
    %3787 = vmatpush1.msra.mxu0 0.0
    %3788 = vmatprep.subr.mxu0 0.0
    %3789 = vmatpush1.msra.mxu0 0.0
    %3790 = vmatprep.subr.mxu0 0.0
    %3791 = vmatpush1.msra.mxu0 0.0
    %3792 = vmatprep.subr.mxu0 0.0
    %3793 = vmatpush1.msra.mxu0 0.0
    %3794 = vmatprep.subr.mxu0 0.0
    %3795 = vmatpush1.msra.mxu0 0.0
    %3796 = vmatprep.subr.mxu0 0.0
    %3797 = vmatpush1.msra.mxu0 0.0
    %3798 = vmatprep.subr.mxu0 0.0
    %3799 = vmatpush1.msra.mxu0 0.0
    %3800 = vmatprep.subr.mxu0 0.0
    %3801 = vmatpush1.msra.mxu0 0.0
    %3802 = vmatprep.subr.mxu0 0.0
    %3803 = vmatpush1.msra.mxu0 0.0
    %3804 = vmatprep.subr.mxu0 0.0
    %3805 = vmatpush1.msra.mxu0 0.0
    %3806 = vmatprep.subr.mxu0 0.0
    %3807 = vmatpush1.msra.mxu0 0.0
    %3808 = vmatprep.subr.mxu0 0.0
    %3809 = vmatpush1.msra.mxu0 0.0
    %3810 = vmatprep.subr.mxu0 0.0
    %3811 = vmatpush1.msra.mxu0 0.0
    %3812 = vmatprep.subr.mxu0 0.0
    %3813 = vmatpush1.msra.mxu0 0.0
    %3814 = vmatprep.subr.mxu0 0.0
    %3815 = vmatpush1.msra.mxu0 0.0
    %3816 = vmatprep.subr.mxu0 0.0
    %3817 = vmatpush1.msra.mxu0 0.0
    %3818 = vmatprep.subr.mxu0 0.0
    %3819 = vmatpush1.msra.mxu0 0.0
    %3820 = vmatprep.subr.mxu0 0.0
    %3821 = vmatpush1.msra.mxu0 0.0
    %3822 = vmatprep.subr.mxu0 0.0
    %3823 = vmatpush1.msra.mxu0 0.0
    %3824 = vmatprep.subr.mxu0 0.0
    %3825 = vmatpush1.msra.mxu0 0.0
    %3826 = vmatprep.subr.mxu0 0.0
    %3827 = vmatpush1.msra.mxu0 0.0
    %3828 = vmatprep.subr.mxu0 0.0
    %3829 = vmatpush1.msra.mxu0 0.0
    %3830 = vmatprep.subr.mxu0 0.0
    %3831 = vmatpush1.msra.mxu0 0.0
    %3832 = vmatprep.subr.mxu0 0.0
    %3833 = vmatpush1.msra.mxu0 0.0
    %3834 = vmatprep.subr.mxu0 0.0
    %3835 = vmatpush1.msra.mxu0 0.0
    %3836 = vmatprep.subr.mxu0 0.0
    %3837 = vmatpush1.msra.mxu0 0.0
    %3838 = vmatprep.subr.mxu0 0.0
    %3839 = vmatpush1.msra.mxu0 0.0
    %3840 = vmatprep.subr.mxu0 0.0
    %3841 = vmatpush1.msra.mxu0 0.0
    %3842 = vmatprep.subr.mxu0 0.0
    %3843 = vmatpush1.msra.mxu0 0.0
    %3844 = vmatprep.subr.mxu0 0.0
    %3845 = vmatpush1.msra.mxu0 0.0
    %3846 = vmatprep.subr.mxu0 0.0
    %3847 = vmatpush1.msra.mxu0 0.0
    %3848 = vmatprep.mubr.f32.mxu0 0.0
    %3849 = vmatmul.mubr.f32.gmra.mrb[0].mxu0 %v2820
    %v3850 = vpop.f32.mrb[0].mxu0
    %v3851 = vadd.f32 0.0, %v3850
    %v3852 = vpop.f32.mrb[0].mxu0
    %3853 = vmatprep.mubr.f32.mxu0 0.0
    %3854 = vmatmul.mubr.f32.gmra.mrb[0].mxu0 %v2822
    %v3855 = vpop.f32.mrb[0].mxu0
    %v3856 = vadd.f32 0.0, %v3855
    %v3857 = vpop.f32.mrb[0].mxu0
    %3858 = vmatprep.mubr.f32.mxu0 0.0
    %3859 = vmatmul.mubr.f32.gmra.mrb[0].mxu0 %v2824
    %v3860 = vpop.f32.mrb[0].mxu0
    %v3861 = vadd.f32 0.0, %v3860
    %v3862 = vpop.f32.mrb[0].mxu0
    %3863 = vmatprep.mubr.f32.mxu0 0.0
    %3864 = vmatmul.mubr.f32.gmra.mrb[0].mxu0 %v2826
    %v3865 = vpop.f32.mrb[0].mxu0
    %v3866 = vadd.f32 0.0, %v3865
    %v3867 = vpop.f32.mrb[0].mxu0
    %3868 = vmatprep.mubr.f32.mxu0 0.0
    %3869 = vmatmul.mubr.f32.gmra.mrb[0].mxu0 %v2828
    %v3870 = vpop.f32.mrb[0].mxu0
    %v3871 = vadd.f32 0.0, %v3870
    %v3872 = vpop.f32.mrb[0].mxu0
    %3873 = vmatprep.mubr.f32.mxu0 0.0
    %3874 = vmatmul.mubr.f32.gmra.mrb[0].mxu0 %v2830
    %v3875 = vpop.f32.mrb[0].mxu0
    %v3876 = vadd.f32 0.0, %v3875
    %v3877 = vpop.f32.mrb[0].mxu0
    %3878 = vmatprep.mubr.f32.mxu0 0.0
    %3879 = vmatmul.mubr.f32.gmra.mrb[0].mxu0 %v2832
    %v3880 = vpop.f32.mrb[0].mxu0
    %v3881 = vadd.f32 0.0, %v3880
    %v3882 = vpop.f32.mrb[0].mxu0
    %3883 = vmatprep.mubr.f32.mxu0 0.0
    %3884 = vmatmul.mubr.f32.gmra.mrb[0].mxu0 %v3780
    %v3885 = vpop.f32.mrb[0].mxu0
    %v3886 = vadd.f32 0.0, %v3885
    %v3887 = vpop.f32.mrb[0].mxu0
    %3888 = vmatprep.mubr.f32.mxu0 0.0
    %3889 = vmatmul.mubr.f32.gmra.mrb[0].mxu0 %v2836
    %v3890 = vpop.f32.mrb[0].mxu0
    %v3891 = vadd.f32 0.0, %v3890
    %v3892 = vpop.f32.mrb[0].mxu0
    %3893 = vmatprep.mubr.f32.mxu0 0.0
    %3894 = vmatmul.mubr.f32.gmra.mrb[0].mxu0 %v2838
    %v3895 = vpop.f32.mrb[0].mxu0
    %v3896 = vadd.f32 0.0, %v3895
    %v3897 = vpop.f32.mrb[0].mxu0
    %3898 = vmatprep.mubr.f32.mxu0 0.0
    %3899 = vmatmul.mubr.f32.gmra.mrb[0].mxu0 %v2840
    %v3900 = vpop.f32.mrb[0].mxu0
    %v3901 = vadd.f32 0.0, %v3900
    %v3902 = vpop.f32.mrb[0].mxu0
    %3903 = vmatprep.mubr.f32.mxu0 0.0
    %3904 = vmatmul.mubr.f32.gmra.mrb[0].mxu0 %v2842
    %v3905 = vpop.f32.mrb[0].mxu0
    %v3906 = vadd.f32 0.0, %v3905
    %v3907 = vpop.f32.mrb[0].mxu0
    %3908 = vmatprep.mubr.f32.mxu0 0.0
    %3909 = vmatmul.mubr.f32.gmra.mrb[0].mxu0 %v2844
    %v3910 = vpop.f32.mrb[0].mxu0
    %v3911 = vadd.f32 0.0, %v3910
    %v3912 = vpop.f32.mrb[0].mxu0
    %3913 = vmatprep.mubr.f32.mxu0 0.0
    %3914 = vmatmul.mubr.f32.gmra.mrb[0].mxu0 %v2846
    %v3915 = vpop.f32.mrb[0].mxu0
    %v3916 = vadd.f32 0.0, %v3915
    %v3917 = vpop.f32.mrb[0].mxu0
    %3918 = vmatprep.mubr.f32.mxu0 0.0
    %3919 = vmatmul.mubr.f32.gmra.mrb[0].mxu0 %v2848
    %v3920 = vpop.f32.mrb[0].mxu0
    %v3921 = vadd.f32 0.0, %v3920
    %v3922 = vpop.f32.mrb[0].mxu0
    %3923 = vmatprep.mubr.f32.mxu0 0.0
    %3924 = vmatmul.mubr.f32.gmra.mrb[0].mxu0 %v3782
    %v3925 = vpop.f32.mrb[0].mxu0
    %v3926 = vadd.f32 0.0, %v3925
    %v3927 = vpop.f32.mrb[0].mxu0
    %3928 = vdwg.mxu0
    %v3929 = vadd.f32 %v3756, %v3851
    %v3930 = vadd.f32 %v3757, %v3856
    %v3931 = vadd.f32 %v3758, %v3861
    %v3932 = vadd.f32 %v3759, %v3866
    %v3933 = vadd.f32 %v3760, %v3871
    %v3934 = vadd.f32 %v3761, %v3876
    %v3935 = vadd.f32 %v3762, %v3881
    %v3936 = vadd.f32 %v3763, %v3886
    %v3937 = vadd.f32 %v3764, %v3891
    %v3938 = vadd.f32 %v3765, %v3896
    %v3939 = vadd.f32 %v3766, %v3901
    %v3940 = vadd.f32 %v3767, %v3906
    %v3941 = vadd.f32 %v3768, %v3911
    %v3942 = vadd.f32 %v3769, %v3916
    %v3943 = vadd.f32 %v3770, %v3921
    %v3944 = vadd.f32 %v3771, %v3926
    %v3945 = vrot.slane %v2052, 4
    %v3946 = vrot.slane %v2053, 4
    %v3947 = vsel %vm3011, %v3945, %v3946
    %v3948 = vrot.slane %v2076, 4
    %v3949 = vrot.slane %v2077, 4
    %v3950 = vsel %vm3011, %v3948, %v3949
    %s3951 = scalar_lea.vmem %s3, 72
    %v3952 = vld [vmem:[%s3951] sm:$0xff]
    %v3953 = vsel %vm2168, %v3947, 0
    %v3955 = vsel %vm2168, %v3950, 0
    %3957 = vmatprep.subr.mxu0 0.0
    %3958 = vmatpush1.msra.mxu0 %v3952
    %3959 = vmatprep.subr.mxu0 0.0
    %3960 = vmatpush1.msra.mxu0 0.0
    %3961 = vmatprep.subr.mxu0 0.0
    %3962 = vmatpush1.msra.mxu0 0.0
    %3963 = vmatprep.subr.mxu0 0.0
    %3964 = vmatpush1.msra.mxu0 0.0
    %3965 = vmatprep.subr.mxu0 0.0
    %3966 = vmatpush1.msra.mxu0 0.0
    %3967 = vmatprep.subr.mxu0 0.0
    %3968 = vmatpush1.msra.mxu0 0.0
    %3969 = vmatprep.subr.mxu0 0.0
    %3970 = vmatpush1.msra.mxu0 0.0
    %3971 = vmatprep.subr.mxu0 0.0
    %3972 = vmatpush1.msra.mxu0 0.0
    %3973 = vmatprep.subr.mxu0 0.0
    %3974 = vmatpush1.msra.mxu0 0.0
    %3975 = vmatprep.subr.mxu0 0.0
    %3976 = vmatpush1.msra.mxu0 0.0
    %3977 = vmatprep.subr.mxu0 0.0
    %3978 = vmatpush1.msra.mxu0 0.0
    %3979 = vmatprep.subr.mxu0 0.0
    %3980 = vmatpush1.msra.mxu0 0.0
    %3981 = vmatprep.subr.mxu0 0.0
    %3982 = vmatpush1.msra.mxu0 0.0
    %3983 = vmatprep.subr.mxu0 0.0
    %3984 = vmatpush1.msra.mxu0 0.0
    %3985 = vmatprep.subr.mxu0 0.0
    %3986 = vmatpush1.msra.mxu0 0.0
    %3987 = vmatprep.subr.mxu0 0.0
    %3988 = vmatpush1.msra.mxu0 0.0
    %3989 = vmatprep.subr.mxu0 0.0
    %3990 = vmatpush1.msra.mxu0 0.0
    %3991 = vmatprep.subr.mxu0 0.0
    %3992 = vmatpush1.msra.mxu0 0.0
    %3993 = vmatprep.subr.mxu0 0.0
    %3994 = vmatpush1.msra.mxu0 0.0
    %3995 = vmatprep.subr.mxu0 0.0
    %3996 = vmatpush1.msra.mxu0 0.0
    %3997 = vmatprep.subr.mxu0 0.0
    %3998 = vmatpush1.msra.mxu0 0.0
    %3999 = vmatprep.subr.mxu0 0.0
    %4000 = vmatpush1.msra.mxu0 0.0
    %4001 = vmatprep.subr.mxu0 0.0
    %4002 = vmatpush1.msra.mxu0 0.0
    %4003 = vmatprep.subr.mxu0 0.0
    %4004 = vmatpush1.msra.mxu0 0.0
    %4005 = vmatprep.subr.mxu0 0.0
    %4006 = vmatpush1.msra.mxu0 0.0
    %4007 = vmatprep.subr.mxu0 0.0
    %4008 = vmatpush1.msra.mxu0 0.0
    %4009 = vmatprep.subr.mxu0 0.0
    %4010 = vmatpush1.msra.mxu0 0.0
    %4011 = vmatprep.subr.mxu0 0.0
    %4012 = vmatpush1.msra.mxu0 0.0
    %4013 = vmatprep.subr.mxu0 0.0
    %4014 = vmatpush1.msra.mxu0 0.0
    %4015 = vmatprep.subr.mxu0 0.0
    %4016 = vmatpush1.msra.mxu0 0.0
    %4017 = vmatprep.subr.mxu0 0.0
    %4018 = vmatpush1.msra.mxu0 0.0
    %4019 = vmatprep.subr.mxu0 0.0
    %4020 = vmatpush1.msra.mxu0 0.0
    %4021 = vmatprep.mubr.f32.mxu0 0.0
    %4022 = vmatmul.mubr.f32.gmra.mrb[0].mxu0 %v3064
    %v4023 = vpop.f32.mrb[0].mxu0
    %v4024 = vadd.f32 0.0, %v4023
    %v4025 = vpop.f32.mrb[0].mxu0
    %4026 = vmatprep.mubr.f32.mxu0 0.0
    %4027 = vmatmul.mubr.f32.gmra.mrb[0].mxu0 %v3066
    %v4028 = vpop.f32.mrb[0].mxu0
    %v4029 = vadd.f32 0.0, %v4028
    %v4030 = vpop.f32.mrb[0].mxu0
    %4031 = vmatprep.mubr.f32.mxu0 0.0
    %4032 = vmatmul.mubr.f32.gmra.mrb[0].mxu0 %v3068
    %v4033 = vpop.f32.mrb[0].mxu0
    %v4034 = vadd.f32 0.0, %v4033
    %v4035 = vpop.f32.mrb[0].mxu0
    %4036 = vmatprep.mubr.f32.mxu0 0.0
    %4037 = vmatmul.mubr.f32.gmra.mrb[0].mxu0 %v3070
    %v4038 = vpop.f32.mrb[0].mxu0
    %v4039 = vadd.f32 0.0, %v4038
    %v4040 = vpop.f32.mrb[0].mxu0
    %4041 = vmatprep.mubr.f32.mxu0 0.0
    %4042 = vmatmul.mubr.f32.gmra.mrb[0].mxu0 %v3072
    %v4043 = vpop.f32.mrb[0].mxu0
    %v4044 = vadd.f32 0.0, %v4043
    %v4045 = vpop.f32.mrb[0].mxu0
    %4046 = vmatprep.mubr.f32.mxu0 0.0
    %4047 = vmatmul.mubr.f32.gmra.mrb[0].mxu0 %v3074
    %v4048 = vpop.f32.mrb[0].mxu0
    %v4049 = vadd.f32 0.0, %v4048
    %v4050 = vpop.f32.mrb[0].mxu0
    %4051 = vmatprep.mubr.f32.mxu0 0.0
    %4052 = vmatmul.mubr.f32.gmra.mrb[0].mxu0 %v3076
    %v4053 = vpop.f32.mrb[0].mxu0
    %v4054 = vadd.f32 0.0, %v4053
    %v4055 = vpop.f32.mrb[0].mxu0
    %4056 = vmatprep.mubr.f32.mxu0 0.0
    %4057 = vmatmul.mubr.f32.gmra.mrb[0].mxu0 %v3953
    %v4058 = vpop.f32.mrb[0].mxu0
    %v4059 = vadd.f32 0.0, %v4058
    %v4060 = vpop.f32.mrb[0].mxu0
    %4061 = vmatprep.mubr.f32.mxu0 0.0
    %4062 = vmatmul.mubr.f32.gmra.mrb[0].mxu0 %v3080
    %v4063 = vpop.f32.mrb[0].mxu0
    %v4064 = vadd.f32 0.0, %v4063
    %v4065 = vpop.f32.mrb[0].mxu0
    %4066 = vmatprep.mubr.f32.mxu0 0.0
    %4067 = vmatmul.mubr.f32.gmra.mrb[0].mxu0 %v3082
    %v4068 = vpop.f32.mrb[0].mxu0
    %v4069 = vadd.f32 0.0, %v4068
    %v4070 = vpop.f32.mrb[0].mxu0
    %4071 = vmatprep.mubr.f32.mxu0 0.0
    %4072 = vmatmul.mubr.f32.gmra.mrb[0].mxu0 %v3084
    %v4073 = vpop.f32.mrb[0].mxu0
    %v4074 = vadd.f32 0.0, %v4073
    %v4075 = vpop.f32.mrb[0].mxu0
    %4076 = vmatprep.mubr.f32.mxu0 0.0
    %4077 = vmatmul.mubr.f32.gmra.mrb[0].mxu0 %v3086
    %v4078 = vpop.f32.mrb[0].mxu0
    %v4079 = vadd.f32 0.0, %v4078
    %v4080 = vpop.f32.mrb[0].mxu0
    %4081 = vmatprep.mubr.f32.mxu0 0.0
    %4082 = vmatmul.mubr.f32.gmra.mrb[0].mxu0 %v3088
    %v4083 = vpop.f32.mrb[0].mxu0
    %v4084 = vadd.f32 0.0, %v4083
    %v4085 = vpop.f32.mrb[0].mxu0
    %4086 = vmatprep.mubr.f32.mxu0 0.0
    %4087 = vmatmul.mubr.f32.gmra.mrb[0].mxu0 %v3090
    %v4088 = vpop.f32.mrb[0].mxu0
    %v4089 = vadd.f32 0.0, %v4088
    %v4090 = vpop.f32.mrb[0].mxu0
    %4091 = vmatprep.mubr.f32.mxu0 0.0
    %4092 = vmatmul.mubr.f32.gmra.mrb[0].mxu0 %v3092
    %v4093 = vpop.f32.mrb[0].mxu0
    %v4094 = vadd.f32 0.0, %v4093
    %v4095 = vpop.f32.mrb[0].mxu0
    %4096 = vmatprep.mubr.f32.mxu0 0.0
    %4097 = vmatmul.mubr.f32.gmra.mrb[0].mxu0 %v3955
    %v4098 = vpop.f32.mrb[0].mxu0
    %v4099 = vadd.f32 0.0, %v4098
    %v4100 = vpop.f32.mrb[0].mxu0
    %4101 = vdwg.mxu0
    %v4102 = vadd.f32 %v3929, %v4024
    %v4103 = vadd.f32 %v3930, %v4029
    %v4104 = vadd.f32 %v3931, %v4034
    %v4105 = vadd.f32 %v3932, %v4039
    %v4106 = vadd.f32 %v3933, %v4044
    %v4107 = vadd.f32 %v3934, %v4049
    %v4108 = vadd.f32 %v3935, %v4054
    %v4109 = vadd.f32 %v3936, %v4059
    %v4110 = vadd.f32 %v3937, %v4064
    %v4111 = vadd.f32 %v3938, %v4069
    %v4112 = vadd.f32 %v3939, %v4074
    %v4113 = vadd.f32 %v3940, %v4079
    %v4114 = vadd.f32 %v3941, %v4084
    %v4115 = vadd.f32 %v3942, %v4089
    %v4116 = vadd.f32 %v3943, %v4094
    %v4117 = vadd.f32 %v3944, %v4099
    %s4118 = scalar_lea.vmem %s3, 80
    %v4119 = vld [vmem:[%s4118] sm:$0xff]
    %v4121 = vsel %vm2168, %v2054, 0
    %v4124 = vsel %vm2168, %v2078, 0
    %4126 = vmatprep.subr.mxu0 0.0
    %4127 = vmatpush1.msra.mxu0 %v4119
    %4128 = vmatprep.subr.mxu0 0.0
    %4129 = vmatpush1.msra.mxu0 0.0
    %4130 = vmatprep.subr.mxu0 0.0
    %4131 = vmatpush1.msra.mxu0 0.0
    %4132 = vmatprep.subr.mxu0 0.0
    %4133 = vmatpush1.msra.mxu0 0.0
    %4134 = vmatprep.subr.mxu0 0.0
    %4135 = vmatpush1.msra.mxu0 0.0
    %4136 = vmatprep.subr.mxu0 0.0
    %4137 = vmatpush1.msra.mxu0 0.0
    %4138 = vmatprep.subr.mxu0 0.0
    %4139 = vmatpush1.msra.mxu0 0.0
    %4140 = vmatprep.subr.mxu0 0.0
    %4141 = vmatpush1.msra.mxu0 0.0
    %4142 = vmatprep.subr.mxu0 0.0
    %4143 = vmatpush1.msra.mxu0 0.0
    %4144 = vmatprep.subr.mxu0 0.0
    %4145 = vmatpush1.msra.mxu0 0.0
    %4146 = vmatprep.subr.mxu0 0.0
    %4147 = vmatpush1.msra.mxu0 0.0
    %4148 = vmatprep.subr.mxu0 0.0
    %4149 = vmatpush1.msra.mxu0 0.0
    %4150 = vmatprep.subr.mxu0 0.0
    %4151 = vmatpush1.msra.mxu0 0.0
    %4152 = vmatprep.subr.mxu0 0.0
    %4153 = vmatpush1.msra.mxu0 0.0
    %4154 = vmatprep.subr.mxu0 0.0
    %4155 = vmatpush1.msra.mxu0 0.0
    %4156 = vmatprep.subr.mxu0 0.0
    %4157 = vmatpush1.msra.mxu0 0.0
    %4158 = vmatprep.subr.mxu0 0.0
    %4159 = vmatpush1.msra.mxu0 0.0
    %4160 = vmatprep.subr.mxu0 0.0
    %4161 = vmatpush1.msra.mxu0 0.0
    %4162 = vmatprep.subr.mxu0 0.0
    %4163 = vmatpush1.msra.mxu0 0.0
    %4164 = vmatprep.subr.mxu0 0.0
    %4165 = vmatpush1.msra.mxu0 0.0
    %4166 = vmatprep.subr.mxu0 0.0
    %4167 = vmatpush1.msra.mxu0 0.0
    %4168 = vmatprep.subr.mxu0 0.0
    %4169 = vmatpush1.msra.mxu0 0.0
    %4170 = vmatprep.subr.mxu0 0.0
    %4171 = vmatpush1.msra.mxu0 0.0
    %4172 = vmatprep.subr.mxu0 0.0
    %4173 = vmatpush1.msra.mxu0 0.0
    %4174 = vmatprep.subr.mxu0 0.0
    %4175 = vmatpush1.msra.mxu0 0.0
    %4176 = vmatprep.subr.mxu0 0.0
    %4177 = vmatpush1.msra.mxu0 0.0
    %4178 = vmatprep.subr.mxu0 0.0
    %4179 = vmatpush1.msra.mxu0 0.0
    %4180 = vmatprep.subr.mxu0 0.0
    %4181 = vmatpush1.msra.mxu0 0.0
    %4182 = vmatprep.subr.mxu0 0.0
    %4183 = vmatpush1.msra.mxu0 0.0
    %4184 = vmatprep.subr.mxu0 0.0
    %4185 = vmatpush1.msra.mxu0 0.0
    %4186 = vmatprep.subr.mxu0 0.0
    %4187 = vmatpush1.msra.mxu0 0.0
    %4188 = vmatprep.subr.mxu0 0.0
    %4189 = vmatpush1.msra.mxu0 0.0
    %4190 = vmatprep.mubr.f32.mxu0 0.0
    %4191 = vmatmul.mubr.f32.gmra.mrb[0].mxu0 %v2350
    %v4192 = vpop.f32.mrb[0].mxu0
    %v4193 = vadd.f32 0.0, %v4192
    %v4194 = vpop.f32.mrb[0].mxu0
    %4195 = vmatprep.mubr.f32.mxu0 0.0
    %4196 = vmatmul.mubr.f32.gmra.mrb[0].mxu0 %v2352
    %v4197 = vpop.f32.mrb[0].mxu0
    %v4198 = vadd.f32 0.0, %v4197
    %v4199 = vpop.f32.mrb[0].mxu0
    %4200 = vmatprep.mubr.f32.mxu0 0.0
    %4201 = vmatmul.mubr.f32.gmra.mrb[0].mxu0 %v2354
    %v4202 = vpop.f32.mrb[0].mxu0
    %v4203 = vadd.f32 0.0, %v4202
    %v4204 = vpop.f32.mrb[0].mxu0
    %4205 = vmatprep.mubr.f32.mxu0 0.0
    %4206 = vmatmul.mubr.f32.gmra.mrb[0].mxu0 %v2356
    %v4207 = vpop.f32.mrb[0].mxu0
    %v4208 = vadd.f32 0.0, %v4207
    %v4209 = vpop.f32.mrb[0].mxu0
    %4210 = vmatprep.mubr.f32.mxu0 0.0
    %4211 = vmatmul.mubr.f32.gmra.mrb[0].mxu0 %v2358
    %v4212 = vpop.f32.mrb[0].mxu0
    %v4213 = vadd.f32 0.0, %v4212
    %v4214 = vpop.f32.mrb[0].mxu0
    %4215 = vmatprep.mubr.f32.mxu0 0.0
    %4216 = vmatmul.mubr.f32.gmra.mrb[0].mxu0 %v2360
    %v4217 = vpop.f32.mrb[0].mxu0
    %v4218 = vadd.f32 0.0, %v4217
    %v4219 = vpop.f32.mrb[0].mxu0
    %4220 = vmatprep.mubr.f32.mxu0 0.0
    %4221 = vmatmul.mubr.f32.gmra.mrb[0].mxu0 %v3258
    %v4222 = vpop.f32.mrb[0].mxu0
    %v4223 = vadd.f32 0.0, %v4222
    %v4224 = vpop.f32.mrb[0].mxu0
    %4225 = vmatprep.mubr.f32.mxu0 0.0
    %4226 = vmatmul.mubr.f32.gmra.mrb[0].mxu0 %v4121
    %v4227 = vpop.f32.mrb[0].mxu0
    %v4228 = vadd.f32 0.0, %v4227
    %v4229 = vpop.f32.mrb[0].mxu0
    %4230 = vmatprep.mubr.f32.mxu0 0.0
    %4231 = vmatmul.mubr.f32.gmra.mrb[0].mxu0 %v2366
    %v4232 = vpop.f32.mrb[0].mxu0
    %v4233 = vadd.f32 0.0, %v4232
    %v4234 = vpop.f32.mrb[0].mxu0
    %4235 = vmatprep.mubr.f32.mxu0 0.0
    %4236 = vmatmul.mubr.f32.gmra.mrb[0].mxu0 %v2368
    %v4237 = vpop.f32.mrb[0].mxu0
    %v4238 = vadd.f32 0.0, %v4237
    %v4239 = vpop.f32.mrb[0].mxu0
    %4240 = vmatprep.mubr.f32.mxu0 0.0
    %4241 = vmatmul.mubr.f32.gmra.mrb[0].mxu0 %v2370
    %v4242 = vpop.f32.mrb[0].mxu0
    %v4243 = vadd.f32 0.0, %v4242
    %v4244 = vpop.f32.mrb[0].mxu0
    %4245 = vmatprep.mubr.f32.mxu0 0.0
    %4246 = vmatmul.mubr.f32.gmra.mrb[0].mxu0 %v2372
    %v4247 = vpop.f32.mrb[0].mxu0
    %v4248 = vadd.f32 0.0, %v4247
    %v4249 = vpop.f32.mrb[0].mxu0
    %4250 = vmatprep.mubr.f32.mxu0 0.0
    %4251 = vmatmul.mubr.f32.gmra.mrb[0].mxu0 %v2374
    %v4252 = vpop.f32.mrb[0].mxu0
    %v4253 = vadd.f32 0.0, %v4252
    %v4254 = vpop.f32.mrb[0].mxu0
    %4255 = vmatprep.mubr.f32.mxu0 0.0
    %4256 = vmatmul.mubr.f32.gmra.mrb[0].mxu0 %v2376
    %v4257 = vpop.f32.mrb[0].mxu0
    %v4258 = vadd.f32 0.0, %v4257
    %v4259 = vpop.f32.mrb[0].mxu0
    %4260 = vmatprep.mubr.f32.mxu0 0.0
    %4261 = vmatmul.mubr.f32.gmra.mrb[0].mxu0 %v3261
    %v4262 = vpop.f32.mrb[0].mxu0
    %v4263 = vadd.f32 0.0, %v4262
    %v4264 = vpop.f32.mrb[0].mxu0
    %4265 = vmatprep.mubr.f32.mxu0 0.0
    %4266 = vmatmul.mubr.f32.gmra.mrb[0].mxu0 %v4124
    %v4267 = vpop.f32.mrb[0].mxu0
    %v4268 = vadd.f32 0.0, %v4267
    %v4269 = vpop.f32.mrb[0].mxu0
    %4270 = vdwg.mxu0
    %v4271 = vadd.f32 %v4102, %v4193
    %v4272 = vadd.f32 %v4103, %v4198
    %v4273 = vadd.f32 %v4104, %v4203
    %v4274 = vadd.f32 %v4105, %v4208
    %v4275 = vadd.f32 %v4106, %v4213
    %v4276 = vadd.f32 %v4107, %v4218
    %v4277 = vadd.f32 %v4108, %v4223
    %v4278 = vadd.f32 %v4109, %v4228
    %v4279 = vadd.f32 %v4110, %v4233
    %v4280 = vadd.f32 %v4111, %v4238
    %v4281 = vadd.f32 %v4112, %v4243
    %v4282 = vadd.f32 %v4113, %v4248
    %v4283 = vadd.f32 %v4114, %v4253
    %v4284 = vadd.f32 %v4115, %v4258
    %v4285 = vadd.f32 %v4116, %v4263
    %v4286 = vadd.f32 %v4117, %v4268
    %v4289 = vrot.slane %v2054, 1
    %v4290 = vrot.slane %v2055, 1
    %v4291 = vsel %vm2117, %v4289, %v4290
    %v4292 = vrot.slane %v2078, 1
    %v4293 = vrot.slane %v2079, 1
    %v4294 = vsel %vm2117, %v4292, %v4293
    %s4295 = scalar_lea.vmem %s3, 88
    %v4296 = vld [vmem:[%s4295] sm:$0xff]
    %v4297 = vsel %vm2168, %v4291, 0
    %v4299 = vsel %vm2168, %v4294, 0
    %4301 = vmatprep.subr.mxu0 0.0
    %4302 = vmatpush1.msra.mxu0 %v4296
    %4303 = vmatprep.subr.mxu0 0.0
    %4304 = vmatpush1.msra.mxu0 0.0
    %4305 = vmatprep.subr.mxu0 0.0
    %4306 = vmatpush1.msra.mxu0 0.0
    %4307 = vmatprep.subr.mxu0 0.0
    %4308 = vmatpush1.msra.mxu0 0.0
    %4309 = vmatprep.subr.mxu0 0.0
    %4310 = vmatpush1.msra.mxu0 0.0
    %4311 = vmatprep.subr.mxu0 0.0
    %4312 = vmatpush1.msra.mxu0 0.0
    %4313 = vmatprep.subr.mxu0 0.0
    %4314 = vmatpush1.msra.mxu0 0.0
    %4315 = vmatprep.subr.mxu0 0.0
    %4316 = vmatpush1.msra.mxu0 0.0
    %4317 = vmatprep.subr.mxu0 0.0
    %4318 = vmatpush1.msra.mxu0 0.0
    %4319 = vmatprep.subr.mxu0 0.0
    %4320 = vmatpush1.msra.mxu0 0.0
    %4321 = vmatprep.subr.mxu0 0.0
    %4322 = vmatpush1.msra.mxu0 0.0
    %4323 = vmatprep.subr.mxu0 0.0
    %4324 = vmatpush1.msra.mxu0 0.0
    %4325 = vmatprep.subr.mxu0 0.0
    %4326 = vmatpush1.msra.mxu0 0.0
    %4327 = vmatprep.subr.mxu0 0.0
    %4328 = vmatpush1.msra.mxu0 0.0
    %4329 = vmatprep.subr.mxu0 0.0
    %4330 = vmatpush1.msra.mxu0 0.0
    %4331 = vmatprep.subr.mxu0 0.0
    %4332 = vmatpush1.msra.mxu0 0.0
    %4333 = vmatprep.subr.mxu0 0.0
    %4334 = vmatpush1.msra.mxu0 0.0
    %4335 = vmatprep.subr.mxu0 0.0
    %4336 = vmatpush1.msra.mxu0 0.0
    %4337 = vmatprep.subr.mxu0 0.0
    %4338 = vmatpush1.msra.mxu0 0.0
    %4339 = vmatprep.subr.mxu0 0.0
    %4340 = vmatpush1.msra.mxu0 0.0
    %4341 = vmatprep.subr.mxu0 0.0
    %4342 = vmatpush1.msra.mxu0 0.0
    %4343 = vmatprep.subr.mxu0 0.0
    %4344 = vmatpush1.msra.mxu0 0.0
    %4345 = vmatprep.subr.mxu0 0.0
    %4346 = vmatpush1.msra.mxu0 0.0
    %4347 = vmatprep.subr.mxu0 0.0
    %4348 = vmatpush1.msra.mxu0 0.0
    %4349 = vmatprep.subr.mxu0 0.0
    %4350 = vmatpush1.msra.mxu0 0.0
    %4351 = vmatprep.subr.mxu0 0.0
    %4352 = vmatpush1.msra.mxu0 0.0
    %4353 = vmatprep.subr.mxu0 0.0
    %4354 = vmatpush1.msra.mxu0 0.0
    %4355 = vmatprep.subr.mxu0 0.0
    %4356 = vmatpush1.msra.mxu0 0.0
    %4357 = vmatprep.subr.mxu0 0.0
    %4358 = vmatpush1.msra.mxu0 0.0
    %4359 = vmatprep.subr.mxu0 0.0
    %4360 = vmatpush1.msra.mxu0 0.0
    %4361 = vmatprep.subr.mxu0 0.0
    %4362 = vmatpush1.msra.mxu0 0.0
    %4363 = vmatprep.subr.mxu0 0.0
    %4364 = vmatpush1.msra.mxu0 0.0
    %4365 = vmatprep.mubr.f32.mxu0 0.0
    %4366 = vmatmul.mubr.f32.gmra.mrb[0].mxu0 %v2173
    %v4367 = vpop.f32.mrb[0].mxu0
    %v4368 = vadd.f32 0.0, %v4367
    %v4369 = vpop.f32.mrb[0].mxu0
    %4370 = vmatprep.mubr.f32.mxu0 0.0
    %4371 = vmatmul.mubr.f32.gmra.mrb[0].mxu0 %v2175
    %v4372 = vpop.f32.mrb[0].mxu0
    %v4373 = vadd.f32 0.0, %v4372
    %v4374 = vpop.f32.mrb[0].mxu0
    %4375 = vmatprep.mubr.f32.mxu0 0.0
    %4376 = vmatmul.mubr.f32.gmra.mrb[0].mxu0 %v2177
    %v4377 = vpop.f32.mrb[0].mxu0
    %v4378 = vadd.f32 0.0, %v4377
    %v4379 = vpop.f32.mrb[0].mxu0
    %4380 = vmatprep.mubr.f32.mxu0 0.0
    %4381 = vmatmul.mubr.f32.gmra.mrb[0].mxu0 %v2179
    %v4382 = vpop.f32.mrb[0].mxu0
    %v4383 = vadd.f32 0.0, %v4382
    %v4384 = vpop.f32.mrb[0].mxu0
    %4385 = vmatprep.mubr.f32.mxu0 0.0
    %4386 = vmatmul.mubr.f32.gmra.mrb[0].mxu0 %v2181
    %v4387 = vpop.f32.mrb[0].mxu0
    %v4388 = vadd.f32 0.0, %v4387
    %v4389 = vpop.f32.mrb[0].mxu0
    %4390 = vmatprep.mubr.f32.mxu0 0.0
    %4391 = vmatmul.mubr.f32.gmra.mrb[0].mxu0 %v2183
    %v4392 = vpop.f32.mrb[0].mxu0
    %v4393 = vadd.f32 0.0, %v4392
    %v4394 = vpop.f32.mrb[0].mxu0
    %4395 = vmatprep.mubr.f32.mxu0 0.0
    %4396 = vmatmul.mubr.f32.gmra.mrb[0].mxu0 %v3434
    %v4397 = vpop.f32.mrb[0].mxu0
    %v4398 = vadd.f32 0.0, %v4397
    %v4399 = vpop.f32.mrb[0].mxu0
    %4400 = vmatprep.mubr.f32.mxu0 0.0
    %4401 = vmatmul.mubr.f32.gmra.mrb[0].mxu0 %v4297
    %v4402 = vpop.f32.mrb[0].mxu0
    %v4403 = vadd.f32 0.0, %v4402
    %v4404 = vpop.f32.mrb[0].mxu0
    %4405 = vmatprep.mubr.f32.mxu0 0.0
    %4406 = vmatmul.mubr.f32.gmra.mrb[0].mxu0 %v2189
    %v4407 = vpop.f32.mrb[0].mxu0
    %v4408 = vadd.f32 0.0, %v4407
    %v4409 = vpop.f32.mrb[0].mxu0
    %4410 = vmatprep.mubr.f32.mxu0 0.0
    %4411 = vmatmul.mubr.f32.gmra.mrb[0].mxu0 %v2191
    %v4412 = vpop.f32.mrb[0].mxu0
    %v4413 = vadd.f32 0.0, %v4412
    %v4414 = vpop.f32.mrb[0].mxu0
    %4415 = vmatprep.mubr.f32.mxu0 0.0
    %4416 = vmatmul.mubr.f32.gmra.mrb[0].mxu0 %v2193
    %v4417 = vpop.f32.mrb[0].mxu0
    %v4418 = vadd.f32 0.0, %v4417
    %v4419 = vpop.f32.mrb[0].mxu0
    %4420 = vmatprep.mubr.f32.mxu0 0.0
    %4421 = vmatmul.mubr.f32.gmra.mrb[0].mxu0 %v2195
    %v4422 = vpop.f32.mrb[0].mxu0
    %v4423 = vadd.f32 0.0, %v4422
    %v4424 = vpop.f32.mrb[0].mxu0
    %4425 = vmatprep.mubr.f32.mxu0 0.0
    %4426 = vmatmul.mubr.f32.gmra.mrb[0].mxu0 %v2197
    %v4427 = vpop.f32.mrb[0].mxu0
    %v4428 = vadd.f32 0.0, %v4427
    %v4429 = vpop.f32.mrb[0].mxu0
    %4430 = vmatprep.mubr.f32.mxu0 0.0
    %4431 = vmatmul.mubr.f32.gmra.mrb[0].mxu0 %v2199
    %v4432 = vpop.f32.mrb[0].mxu0
    %v4433 = vadd.f32 0.0, %v4432
    %v4434 = vpop.f32.mrb[0].mxu0
    %4435 = vmatprep.mubr.f32.mxu0 0.0
    %4436 = vmatmul.mubr.f32.gmra.mrb[0].mxu0 %v3436
    %v4437 = vpop.f32.mrb[0].mxu0
    %v4438 = vadd.f32 0.0, %v4437
    %v4439 = vpop.f32.mrb[0].mxu0
    %4440 = vmatprep.mubr.f32.mxu0 0.0
    %4441 = vmatmul.mubr.f32.gmra.mrb[0].mxu0 %v4299
    %v4442 = vpop.f32.mrb[0].mxu0
    %v4443 = vadd.f32 0.0, %v4442
    %v4444 = vpop.f32.mrb[0].mxu0
    %4445 = vdwg.mxu0
    %v4446 = vadd.f32 %v4271, %v4368
    %v4447 = vadd.f32 %v4272, %v4373
    %v4448 = vadd.f32 %v4273, %v4378
    %v4449 = vadd.f32 %v4274, %v4383
    %v4450 = vadd.f32 %v4275, %v4388
    %v4451 = vadd.f32 %v4276, %v4393
    %v4452 = vadd.f32 %v4277, %v4398
    %v4453 = vadd.f32 %v4278, %v4403
    %v4454 = vadd.f32 %v4279, %v4408
    %v4455 = vadd.f32 %v4280, %v4413
    %v4456 = vadd.f32 %v4281, %v4418
    %v4457 = vadd.f32 %v4282, %v4423
    %v4458 = vadd.f32 %v4283, %v4428
    %v4459 = vadd.f32 %v4284, %v4433
    %v4460 = vadd.f32 %v4285, %v4438
    %v4461 = vadd.f32 %v4286, %v4443
    %v4462 = vrot.slane %v2054, 2
    %v4463 = vrot.slane %v2055, 2
    %v4464 = vsel %vm2523, %v4462, %v4463
    %v4465 = vrot.slane %v2078, 2
    %v4466 = vrot.slane %v2079, 2
    %v4467 = vsel %vm2523, %v4465, %v4466
    %s4468 = scalar_lea.vmem %s3, 96
    %v4469 = vld [vmem:[%s4468] sm:$0xff]
    %v4470 = vsel %vm2168, %v4464, 0
    %v4472 = vsel %vm2168, %v4467, 0
    %4474 = vmatprep.subr.mxu0 0.0
    %4475 = vmatpush1.msra.mxu0 %v4469
    %4476 = vmatprep.subr.mxu0 0.0
    %4477 = vmatpush1.msra.mxu0 0.0
    %4478 = vmatprep.subr.mxu0 0.0
    %4479 = vmatpush1.msra.mxu0 0.0
    %4480 = vmatprep.subr.mxu0 0.0
    %4481 = vmatpush1.msra.mxu0 0.0
    %4482 = vmatprep.subr.mxu0 0.0
    %4483 = vmatpush1.msra.mxu0 0.0
    %4484 = vmatprep.subr.mxu0 0.0
    %4485 = vmatpush1.msra.mxu0 0.0
    %4486 = vmatprep.subr.mxu0 0.0
    %4487 = vmatpush1.msra.mxu0 0.0
    %4488 = vmatprep.subr.mxu0 0.0
    %4489 = vmatpush1.msra.mxu0 0.0
    %4490 = vmatprep.subr.mxu0 0.0
    %4491 = vmatpush1.msra.mxu0 0.0
    %4492 = vmatprep.subr.mxu0 0.0
    %4493 = vmatpush1.msra.mxu0 0.0
    %4494 = vmatprep.subr.mxu0 0.0
    %4495 = vmatpush1.msra.mxu0 0.0
    %4496 = vmatprep.subr.mxu0 0.0
    %4497 = vmatpush1.msra.mxu0 0.0
    %4498 = vmatprep.subr.mxu0 0.0
    %4499 = vmatpush1.msra.mxu0 0.0
    %4500 = vmatprep.subr.mxu0 0.0
    %4501 = vmatpush1.msra.mxu0 0.0
    %4502 = vmatprep.subr.mxu0 0.0
    %4503 = vmatpush1.msra.mxu0 0.0
    %4504 = vmatprep.subr.mxu0 0.0
    %4505 = vmatpush1.msra.mxu0 0.0
    %4506 = vmatprep.subr.mxu0 0.0
    %4507 = vmatpush1.msra.mxu0 0.0
    %4508 = vmatprep.subr.mxu0 0.0
    %4509 = vmatpush1.msra.mxu0 0.0
    %4510 = vmatprep.subr.mxu0 0.0
    %4511 = vmatpush1.msra.mxu0 0.0
    %4512 = vmatprep.subr.mxu0 0.0
    %4513 = vmatpush1.msra.mxu0 0.0
    %4514 = vmatprep.subr.mxu0 0.0
    %4515 = vmatpush1.msra.mxu0 0.0
    %4516 = vmatprep.subr.mxu0 0.0
    %4517 = vmatpush1.msra.mxu0 0.0
    %4518 = vmatprep.subr.mxu0 0.0
    %4519 = vmatpush1.msra.mxu0 0.0
    %4520 = vmatprep.subr.mxu0 0.0
    %4521 = vmatpush1.msra.mxu0 0.0
    %4522 = vmatprep.subr.mxu0 0.0
    %4523 = vmatpush1.msra.mxu0 0.0
    %4524 = vmatprep.subr.mxu0 0.0
    %4525 = vmatpush1.msra.mxu0 0.0
    %4526 = vmatprep.subr.mxu0 0.0
    %4527 = vmatpush1.msra.mxu0 0.0
    %4528 = vmatprep.subr.mxu0 0.0
    %4529 = vmatpush1.msra.mxu0 0.0
    %4530 = vmatprep.subr.mxu0 0.0
    %4531 = vmatpush1.msra.mxu0 0.0
    %4532 = vmatprep.subr.mxu0 0.0
    %4533 = vmatpush1.msra.mxu0 0.0
    %4534 = vmatprep.subr.mxu0 0.0
    %4535 = vmatpush1.msra.mxu0 0.0
    %4536 = vmatprep.subr.mxu0 0.0
    %4537 = vmatpush1.msra.mxu0 0.0
    %4538 = vmatprep.mubr.f32.mxu0 0.0
    %4539 = vmatmul.mubr.f32.gmra.mrb[0].mxu0 %v2578
    %v4540 = vpop.f32.mrb[0].mxu0
    %v4541 = vadd.f32 0.0, %v4540
    %v4542 = vpop.f32.mrb[0].mxu0
    %4543 = vmatprep.mubr.f32.mxu0 0.0
    %4544 = vmatmul.mubr.f32.gmra.mrb[0].mxu0 %v2580
    %v4545 = vpop.f32.mrb[0].mxu0
    %v4546 = vadd.f32 0.0, %v4545
    %v4547 = vpop.f32.mrb[0].mxu0
    %4548 = vmatprep.mubr.f32.mxu0 0.0
    %4549 = vmatmul.mubr.f32.gmra.mrb[0].mxu0 %v2582
    %v4550 = vpop.f32.mrb[0].mxu0
    %v4551 = vadd.f32 0.0, %v4550
    %v4552 = vpop.f32.mrb[0].mxu0
    %4553 = vmatprep.mubr.f32.mxu0 0.0
    %4554 = vmatmul.mubr.f32.gmra.mrb[0].mxu0 %v2584
    %v4555 = vpop.f32.mrb[0].mxu0
    %v4556 = vadd.f32 0.0, %v4555
    %v4557 = vpop.f32.mrb[0].mxu0
    %4558 = vmatprep.mubr.f32.mxu0 0.0
    %4559 = vmatmul.mubr.f32.gmra.mrb[0].mxu0 %v2586
    %v4560 = vpop.f32.mrb[0].mxu0
    %v4561 = vadd.f32 0.0, %v4560
    %v4562 = vpop.f32.mrb[0].mxu0
    %4563 = vmatprep.mubr.f32.mxu0 0.0
    %4564 = vmatmul.mubr.f32.gmra.mrb[0].mxu0 %v2588
    %v4565 = vpop.f32.mrb[0].mxu0
    %v4566 = vadd.f32 0.0, %v4565
    %v4567 = vpop.f32.mrb[0].mxu0
    %4568 = vmatprep.mubr.f32.mxu0 0.0
    %4569 = vmatmul.mubr.f32.gmra.mrb[0].mxu0 %v3607
    %v4570 = vpop.f32.mrb[0].mxu0
    %v4571 = vadd.f32 0.0, %v4570
    %v4572 = vpop.f32.mrb[0].mxu0
    %4573 = vmatprep.mubr.f32.mxu0 0.0
    %4574 = vmatmul.mubr.f32.gmra.mrb[0].mxu0 %v4470
    %v4575 = vpop.f32.mrb[0].mxu0
    %v4576 = vadd.f32 0.0, %v4575
    %v4577 = vpop.f32.mrb[0].mxu0
    %4578 = vmatprep.mubr.f32.mxu0 0.0
    %4579 = vmatmul.mubr.f32.gmra.mrb[0].mxu0 %v2594
    %v4580 = vpop.f32.mrb[0].mxu0
    %v4581 = vadd.f32 0.0, %v4580
    %v4582 = vpop.f32.mrb[0].mxu0
    %4583 = vmatprep.mubr.f32.mxu0 0.0
    %4584 = vmatmul.mubr.f32.gmra.mrb[0].mxu0 %v2596
    %v4585 = vpop.f32.mrb[0].mxu0
    %v4586 = vadd.f32 0.0, %v4585
    %v4587 = vpop.f32.mrb[0].mxu0
    %4588 = vmatprep.mubr.f32.mxu0 0.0
    %4589 = vmatmul.mubr.f32.gmra.mrb[0].mxu0 %v2598
    %v4590 = vpop.f32.mrb[0].mxu0
    %v4591 = vadd.f32 0.0, %v4590
    %v4592 = vpop.f32.mrb[0].mxu0
    %4593 = vmatprep.mubr.f32.mxu0 0.0
    %4594 = vmatmul.mubr.f32.gmra.mrb[0].mxu0 %v2600
    %v4595 = vpop.f32.mrb[0].mxu0
    %v4596 = vadd.f32 0.0, %v4595
    %v4597 = vpop.f32.mrb[0].mxu0
    %4598 = vmatprep.mubr.f32.mxu0 0.0
    %4599 = vmatmul.mubr.f32.gmra.mrb[0].mxu0 %v2602
    %v4600 = vpop.f32.mrb[0].mxu0
    %v4601 = vadd.f32 0.0, %v4600
    %v4602 = vpop.f32.mrb[0].mxu0
    %4603 = vmatprep.mubr.f32.mxu0 0.0
    %4604 = vmatmul.mubr.f32.gmra.mrb[0].mxu0 %v2604
    %v4605 = vpop.f32.mrb[0].mxu0
    %v4606 = vadd.f32 0.0, %v4605
    %v4607 = vpop.f32.mrb[0].mxu0
    %4608 = vmatprep.mubr.f32.mxu0 0.0
    %4609 = vmatmul.mubr.f32.gmra.mrb[0].mxu0 %v3609
    %v4610 = vpop.f32.mrb[0].mxu0
    %v4611 = vadd.f32 0.0, %v4610
    %v4612 = vpop.f32.mrb[0].mxu0
    %4613 = vmatprep.mubr.f32.mxu0 0.0
    %4614 = vmatmul.mubr.f32.gmra.mrb[0].mxu0 %v4472
    %v4615 = vpop.f32.mrb[0].mxu0
    %v4616 = vadd.f32 0.0, %v4615
    %v4617 = vpop.f32.mrb[0].mxu0
    %4618 = vdwg.mxu0
    %v4619 = vadd.f32 %v4446, %v4541
    %v4620 = vadd.f32 %v4447, %v4546
    %v4621 = vadd.f32 %v4448, %v4551
    %v4622 = vadd.f32 %v4449, %v4556
    %v4623 = vadd.f32 %v4450, %v4561
    %v4624 = vadd.f32 %v4451, %v4566
    %v4625 = vadd.f32 %v4452, %v4571
    %v4626 = vadd.f32 %v4453, %v4576
    %v4627 = vadd.f32 %v4454, %v4581
    %v4628 = vadd.f32 %v4455, %v4586
    %v4629 = vadd.f32 %v4456, %v4591
    %v4630 = vadd.f32 %v4457, %v4596
    %v4631 = vadd.f32 %v4458, %v4601
    %v4632 = vadd.f32 %v4459, %v4606
    %v4633 = vadd.f32 %v4460, %v4611
    %v4634 = vadd.f32 %v4461, %v4616
    %v4635 = vrot.slane %v2054, 3
    %v4636 = vrot.slane %v2055, 3
    %v4637 = vsel %vm2767, %v4635, %v4636
    %v4638 = vrot.slane %v2078, 3
    %v4639 = vrot.slane %v2079, 3
    %v4640 = vsel %vm2767, %v4638, %v4639
    %s4641 = scalar_lea.vmem %s3, 104
    %v4642 = vld [vmem:[%s4641] sm:$0xff]
    %v4643 = vsel %vm2168, %v4637, 0
    %v4645 = vsel %vm2168, %v4640, 0
    %4647 = vmatprep.subr.mxu0 0.0
    %4648 = vmatpush1.msra.mxu0 %v4642
    %4649 = vmatprep.subr.mxu0 0.0
    %4650 = vmatpush1.msra.mxu0 0.0
    %4651 = vmatprep.subr.mxu0 0.0
    %4652 = vmatpush1.msra.mxu0 0.0
    %4653 = vmatprep.subr.mxu0 0.0
    %4654 = vmatpush1.msra.mxu0 0.0
    %4655 = vmatprep.subr.mxu0 0.0
    %4656 = vmatpush1.msra.mxu0 0.0
    %4657 = vmatprep.subr.mxu0 0.0
    %4658 = vmatpush1.msra.mxu0 0.0
    %4659 = vmatprep.subr.mxu0 0.0
    %4660 = vmatpush1.msra.mxu0 0.0
    %4661 = vmatprep.subr.mxu0 0.0
    %4662 = vmatpush1.msra.mxu0 0.0
    %4663 = vmatprep.subr.mxu0 0.0
    %4664 = vmatpush1.msra.mxu0 0.0
    %4665 = vmatprep.subr.mxu0 0.0
    %4666 = vmatpush1.msra.mxu0 0.0
    %4667 = vmatprep.subr.mxu0 0.0
    %4668 = vmatpush1.msra.mxu0 0.0
    %4669 = vmatprep.subr.mxu0 0.0
    %4670 = vmatpush1.msra.mxu0 0.0
    %4671 = vmatprep.subr.mxu0 0.0
    %4672 = vmatpush1.msra.mxu0 0.0
    %4673 = vmatprep.subr.mxu0 0.0
    %4674 = vmatpush1.msra.mxu0 0.0
    %4675 = vmatprep.subr.mxu0 0.0
    %4676 = vmatpush1.msra.mxu0 0.0
    %4677 = vmatprep.subr.mxu0 0.0
    %4678 = vmatpush1.msra.mxu0 0.0
    %4679 = vmatprep.subr.mxu0 0.0
    %4680 = vmatpush1.msra.mxu0 0.0
    %4681 = vmatprep.subr.mxu0 0.0
    %4682 = vmatpush1.msra.mxu0 0.0
    %4683 = vmatprep.subr.mxu0 0.0
    %4684 = vmatpush1.msra.mxu0 0.0
    %4685 = vmatprep.subr.mxu0 0.0
    %4686 = vmatpush1.msra.mxu0 0.0
    %4687 = vmatprep.subr.mxu0 0.0
    %4688 = vmatpush1.msra.mxu0 0.0
    %4689 = vmatprep.subr.mxu0 0.0
    %4690 = vmatpush1.msra.mxu0 0.0
    %4691 = vmatprep.subr.mxu0 0.0
    %4692 = vmatpush1.msra.mxu0 0.0
    %4693 = vmatprep.subr.mxu0 0.0
    %4694 = vmatpush1.msra.mxu0 0.0
    %4695 = vmatprep.subr.mxu0 0.0
    %4696 = vmatpush1.msra.mxu0 0.0
    %4697 = vmatprep.subr.mxu0 0.0
    %4698 = vmatpush1.msra.mxu0 0.0
    %4699 = vmatprep.subr.mxu0 0.0
    %4700 = vmatpush1.msra.mxu0 0.0
    %4701 = vmatprep.subr.mxu0 0.0
    %4702 = vmatpush1.msra.mxu0 0.0
    %4703 = vmatprep.subr.mxu0 0.0
    %4704 = vmatpush1.msra.mxu0 0.0
    %4705 = vmatprep.subr.mxu0 0.0
    %4706 = vmatpush1.msra.mxu0 0.0
    %4707 = vmatprep.subr.mxu0 0.0
    %4708 = vmatpush1.msra.mxu0 0.0
    %4709 = vmatprep.subr.mxu0 0.0
    %4710 = vmatpush1.msra.mxu0 0.0
    %4711 = vmatprep.mubr.f32.mxu0 0.0
    %4712 = vmatmul.mubr.f32.gmra.mrb[0].mxu0 %v2822
    %v4713 = vpop.f32.mrb[0].mxu0
    %v4714 = vadd.f32 0.0, %v4713
    %v4715 = vpop.f32.mrb[0].mxu0
    %4716 = vmatprep.mubr.f32.mxu0 0.0
    %4717 = vmatmul.mubr.f32.gmra.mrb[0].mxu0 %v2824
    %v4718 = vpop.f32.mrb[0].mxu0
    %v4719 = vadd.f32 0.0, %v4718
    %v4720 = vpop.f32.mrb[0].mxu0
    %4721 = vmatprep.mubr.f32.mxu0 0.0
    %4722 = vmatmul.mubr.f32.gmra.mrb[0].mxu0 %v2826
    %v4723 = vpop.f32.mrb[0].mxu0
    %v4724 = vadd.f32 0.0, %v4723
    %v4725 = vpop.f32.mrb[0].mxu0
    %4726 = vmatprep.mubr.f32.mxu0 0.0
    %4727 = vmatmul.mubr.f32.gmra.mrb[0].mxu0 %v2828
    %v4728 = vpop.f32.mrb[0].mxu0
    %v4729 = vadd.f32 0.0, %v4728
    %v4730 = vpop.f32.mrb[0].mxu0
    %4731 = vmatprep.mubr.f32.mxu0 0.0
    %4732 = vmatmul.mubr.f32.gmra.mrb[0].mxu0 %v2830
    %v4733 = vpop.f32.mrb[0].mxu0
    %v4734 = vadd.f32 0.0, %v4733
    %v4735 = vpop.f32.mrb[0].mxu0
    %4736 = vmatprep.mubr.f32.mxu0 0.0
    %4737 = vmatmul.mubr.f32.gmra.mrb[0].mxu0 %v2832
    %v4738 = vpop.f32.mrb[0].mxu0
    %v4739 = vadd.f32 0.0, %v4738
    %v4740 = vpop.f32.mrb[0].mxu0
    %4741 = vmatprep.mubr.f32.mxu0 0.0
    %4742 = vmatmul.mubr.f32.gmra.mrb[0].mxu0 %v3780
    %v4743 = vpop.f32.mrb[0].mxu0
    %v4744 = vadd.f32 0.0, %v4743
    %v4745 = vpop.f32.mrb[0].mxu0
    %4746 = vmatprep.mubr.f32.mxu0 0.0
    %4747 = vmatmul.mubr.f32.gmra.mrb[0].mxu0 %v4643
    %v4748 = vpop.f32.mrb[0].mxu0
    %v4749 = vadd.f32 0.0, %v4748
    %v4750 = vpop.f32.mrb[0].mxu0
    %4751 = vmatprep.mubr.f32.mxu0 0.0
    %4752 = vmatmul.mubr.f32.gmra.mrb[0].mxu0 %v2838
    %v4753 = vpop.f32.mrb[0].mxu0
    %v4754 = vadd.f32 0.0, %v4753
    %v4755 = vpop.f32.mrb[0].mxu0
    %4756 = vmatprep.mubr.f32.mxu0 0.0
    %4757 = vmatmul.mubr.f32.gmra.mrb[0].mxu0 %v2840
    %v4758 = vpop.f32.mrb[0].mxu0
    %v4759 = vadd.f32 0.0, %v4758
    %v4760 = vpop.f32.mrb[0].mxu0
    %4761 = vmatprep.mubr.f32.mxu0 0.0
    %4762 = vmatmul.mubr.f32.gmra.mrb[0].mxu0 %v2842
    %v4763 = vpop.f32.mrb[0].mxu0
    %v4764 = vadd.f32 0.0, %v4763
    %v4765 = vpop.f32.mrb[0].mxu0
    %4766 = vmatprep.mubr.f32.mxu0 0.0
    %4767 = vmatmul.mubr.f32.gmra.mrb[0].mxu0 %v2844
    %v4768 = vpop.f32.mrb[0].mxu0
    %v4769 = vadd.f32 0.0, %v4768
    %v4770 = vpop.f32.mrb[0].mxu0
    %4771 = vmatprep.mubr.f32.mxu0 0.0
    %4772 = vmatmul.mubr.f32.gmra.mrb[0].mxu0 %v2846
    %v4773 = vpop.f32.mrb[0].mxu0
    %v4774 = vadd.f32 0.0, %v4773
    %v4775 = vpop.f32.mrb[0].mxu0
    %4776 = vmatprep.mubr.f32.mxu0 0.0
    %4777 = vmatmul.mubr.f32.gmra.mrb[0].mxu0 %v2848
    %v4778 = vpop.f32.mrb[0].mxu0
    %v4779 = vadd.f32 0.0, %v4778
    %v4780 = vpop.f32.mrb[0].mxu0
    %4781 = vmatprep.mubr.f32.mxu0 0.0
    %4782 = vmatmul.mubr.f32.gmra.mrb[0].mxu0 %v3782
    %v4783 = vpop.f32.mrb[0].mxu0
    %v4784 = vadd.f32 0.0, %v4783
    %v4785 = vpop.f32.mrb[0].mxu0
    %4786 = vmatprep.mubr.f32.mxu0 0.0
    %4787 = vmatmul.mubr.f32.gmra.mrb[0].mxu0 %v4645
    %v4788 = vpop.f32.mrb[0].mxu0
    %v4789 = vadd.f32 0.0, %v4788
    %v4790 = vpop.f32.mrb[0].mxu0
    %4791 = vdwg.mxu0
    %v4792 = vadd.f32 %v4619, %v4714
    %v4793 = vadd.f32 %v4620, %v4719
    %v4794 = vadd.f32 %v4621, %v4724
    %v4795 = vadd.f32 %v4622, %v4729
    %v4796 = vadd.f32 %v4623, %v4734
    %v4797 = vadd.f32 %v4624, %v4739
    %v4798 = vadd.f32 %v4625, %v4744
    %v4799 = vadd.f32 %v4626, %v4749
    %v4800 = vadd.f32 %v4627, %v4754
    %v4801 = vadd.f32 %v4628, %v4759
    %v4802 = vadd.f32 %v4629, %v4764
    %v4803 = vadd.f32 %v4630, %v4769
    %v4804 = vadd.f32 %v4631, %v4774
    %v4805 = vadd.f32 %v4632, %v4779
    %v4806 = vadd.f32 %v4633, %v4784
    %v4807 = vadd.f32 %v4634, %v4789
    %v4808 = vrot.slane %v2054, 4
    %v4809 = vrot.slane %v2055, 4
    %v4810 = vsel %vm3011, %v4808, %v4809
    %v4811 = vrot.slane %v2078, 4
    %v4812 = vrot.slane %v2079, 4
    %v4813 = vsel %vm3011, %v4811, %v4812
    %s4814 = scalar_lea.vmem %s3, 112
    %v4815 = vld [vmem:[%s4814] sm:$0xff]
    %v4816 = vsel %vm2168, %v4810, 0
    %v4818 = vsel %vm2168, %v4813, 0
    %4820 = vmatprep.subr.mxu0 0.0
    %4821 = vmatpush1.msra.mxu0 %v4815
    %4822 = vmatprep.subr.mxu0 0.0
    %4823 = vmatpush1.msra.mxu0 0.0
    %4824 = vmatprep.subr.mxu0 0.0
    %4825 = vmatpush1.msra.mxu0 0.0
    %4826 = vmatprep.subr.mxu0 0.0
    %4827 = vmatpush1.msra.mxu0 0.0
    %4828 = vmatprep.subr.mxu0 0.0
    %4829 = vmatpush1.msra.mxu0 0.0
    %4830 = vmatprep.subr.mxu0 0.0
    %4831 = vmatpush1.msra.mxu0 0.0
    %4832 = vmatprep.subr.mxu0 0.0
    %4833 = vmatpush1.msra.mxu0 0.0
    %4834 = vmatprep.subr.mxu0 0.0
    %4835 = vmatpush1.msra.mxu0 0.0
    %4836 = vmatprep.subr.mxu0 0.0
    %4837 = vmatpush1.msra.mxu0 0.0
    %4838 = vmatprep.subr.mxu0 0.0
    %4839 = vmatpush1.msra.mxu0 0.0
    %4840 = vmatprep.subr.mxu0 0.0
    %4841 = vmatpush1.msra.mxu0 0.0
    %4842 = vmatprep.subr.mxu0 0.0
    %4843 = vmatpush1.msra.mxu0 0.0
    %4844 = vmatprep.subr.mxu0 0.0
    %4845 = vmatpush1.msra.mxu0 0.0
    %4846 = vmatprep.subr.mxu0 0.0
    %4847 = vmatpush1.msra.mxu0 0.0
    %4848 = vmatprep.subr.mxu0 0.0
    %4849 = vmatpush1.msra.mxu0 0.0
    %4850 = vmatprep.subr.mxu0 0.0
    %4851 = vmatpush1.msra.mxu0 0.0
    %4852 = vmatprep.subr.mxu0 0.0
    %4853 = vmatpush1.msra.mxu0 0.0
    %4854 = vmatprep.subr.mxu0 0.0
    %4855 = vmatpush1.msra.mxu0 0.0
    %4856 = vmatprep.subr.mxu0 0.0
    %4857 = vmatpush1.msra.mxu0 0.0
    %4858 = vmatprep.subr.mxu0 0.0
    %4859 = vmatpush1.msra.mxu0 0.0
    %4860 = vmatprep.subr.mxu0 0.0
    %4861 = vmatpush1.msra.mxu0 0.0
    %4862 = vmatprep.subr.mxu0 0.0
    %4863 = vmatpush1.msra.mxu0 0.0
    %4864 = vmatprep.subr.mxu0 0.0
    %4865 = vmatpush1.msra.mxu0 0.0
    %4866 = vmatprep.subr.mxu0 0.0
    %4867 = vmatpush1.msra.mxu0 0.0
    %4868 = vmatprep.subr.mxu0 0.0
    %4869 = vmatpush1.msra.mxu0 0.0
    %4870 = vmatprep.subr.mxu0 0.0
    %4871 = vmatpush1.msra.mxu0 0.0
    %4872 = vmatprep.subr.mxu0 0.0
    %4873 = vmatpush1.msra.mxu0 0.0
    %4874 = vmatprep.subr.mxu0 0.0
    %4875 = vmatpush1.msra.mxu0 0.0
    %4876 = vmatprep.subr.mxu0 0.0
    %4877 = vmatpush1.msra.mxu0 0.0
    %4878 = vmatprep.subr.mxu0 0.0
    %4879 = vmatpush1.msra.mxu0 0.0
    %4880 = vmatprep.subr.mxu0 0.0
    %4881 = vmatpush1.msra.mxu0 0.0
    %4882 = vmatprep.subr.mxu0 0.0
    %4883 = vmatpush1.msra.mxu0 0.0
    %4884 = vmatprep.mubr.f32.mxu0 0.0
    %4885 = vmatmul.mubr.f32.gmra.mrb[0].mxu0 %v3066
    %v4886 = vpop.f32.mrb[0].mxu0
    %v4887 = vadd.f32 0.0, %v4886
    %v4888 = vpop.f32.mrb[0].mxu0
    %4889 = vmatprep.mubr.f32.mxu0 0.0
    %4890 = vmatmul.mubr.f32.gmra.mrb[0].mxu0 %v3068
    %v4891 = vpop.f32.mrb[0].mxu0
    %v4892 = vadd.f32 0.0, %v4891
    %v4893 = vpop.f32.mrb[0].mxu0
    %4894 = vmatprep.mubr.f32.mxu0 0.0
    %4895 = vmatmul.mubr.f32.gmra.mrb[0].mxu0 %v3070
    %v4896 = vpop.f32.mrb[0].mxu0
    %v4897 = vadd.f32 0.0, %v4896
    %v4898 = vpop.f32.mrb[0].mxu0
    %4899 = vmatprep.mubr.f32.mxu0 0.0
    %4900 = vmatmul.mubr.f32.gmra.mrb[0].mxu0 %v3072
    %v4901 = vpop.f32.mrb[0].mxu0
    %v4902 = vadd.f32 0.0, %v4901
    %v4903 = vpop.f32.mrb[0].mxu0
    %4904 = vmatprep.mubr.f32.mxu0 0.0
    %4905 = vmatmul.mubr.f32.gmra.mrb[0].mxu0 %v3074
    %v4906 = vpop.f32.mrb[0].mxu0
    %v4907 = vadd.f32 0.0, %v4906
    %v4908 = vpop.f32.mrb[0].mxu0
    %4909 = vmatprep.mubr.f32.mxu0 0.0
    %4910 = vmatmul.mubr.f32.gmra.mrb[0].mxu0 %v3076
    %v4911 = vpop.f32.mrb[0].mxu0
    %v4912 = vadd.f32 0.0, %v4911
    %v4913 = vpop.f32.mrb[0].mxu0
    %4914 = vmatprep.mubr.f32.mxu0 0.0
    %4915 = vmatmul.mubr.f32.gmra.mrb[0].mxu0 %v3953
    %v4916 = vpop.f32.mrb[0].mxu0
    %v4917 = vadd.f32 0.0, %v4916
    %v4918 = vpop.f32.mrb[0].mxu0
    %4919 = vmatprep.mubr.f32.mxu0 0.0
    %4920 = vmatmul.mubr.f32.gmra.mrb[0].mxu0 %v4816
    %v4921 = vpop.f32.mrb[0].mxu0
    %v4922 = vadd.f32 0.0, %v4921
    %v4923 = vpop.f32.mrb[0].mxu0
    %4924 = vmatprep.mubr.f32.mxu0 0.0
    %4925 = vmatmul.mubr.f32.gmra.mrb[0].mxu0 %v3082
    %v4926 = vpop.f32.mrb[0].mxu0
    %v4927 = vadd.f32 0.0, %v4926
    %v4928 = vpop.f32.mrb[0].mxu0
    %4929 = vmatprep.mubr.f32.mxu0 0.0
    %4930 = vmatmul.mubr.f32.gmra.mrb[0].mxu0 %v3084
    %v4931 = vpop.f32.mrb[0].mxu0
    %v4932 = vadd.f32 0.0, %v4931
    %v4933 = vpop.f32.mrb[0].mxu0
    %4934 = vmatprep.mubr.f32.mxu0 0.0
    %4935 = vmatmul.mubr.f32.gmra.mrb[0].mxu0 %v3086
    %v4936 = vpop.f32.mrb[0].mxu0
    %v4937 = vadd.f32 0.0, %v4936
    %v4938 = vpop.f32.mrb[0].mxu0
    %4939 = vmatprep.mubr.f32.mxu0 0.0
    %4940 = vmatmul.mubr.f32.gmra.mrb[0].mxu0 %v3088
    %v4941 = vpop.f32.mrb[0].mxu0
    %v4942 = vadd.f32 0.0, %v4941
    %v4943 = vpop.f32.mrb[0].mxu0
    %4944 = vmatprep.mubr.f32.mxu0 0.0
    %4945 = vmatmul.mubr.f32.gmra.mrb[0].mxu0 %v3090
    %v4946 = vpop.f32.mrb[0].mxu0
    %v4947 = vadd.f32 0.0, %v4946
    %v4948 = vpop.f32.mrb[0].mxu0
    %4949 = vmatprep.mubr.f32.mxu0 0.0
    %4950 = vmatmul.mubr.f32.gmra.mrb[0].mxu0 %v3092
    %v4951 = vpop.f32.mrb[0].mxu0
    %v4952 = vadd.f32 0.0, %v4951
    %v4953 = vpop.f32.mrb[0].mxu0
    %4954 = vmatprep.mubr.f32.mxu0 0.0
    %4955 = vmatmul.mubr.f32.gmra.mrb[0].mxu0 %v3955
    %v4956 = vpop.f32.mrb[0].mxu0
    %v4957 = vadd.f32 0.0, %v4956
    %v4958 = vpop.f32.mrb[0].mxu0
    %4959 = vmatprep.mubr.f32.mxu0 0.0
    %4960 = vmatmul.mubr.f32.gmra.mrb[0].mxu0 %v4818
    %v4961 = vpop.f32.mrb[0].mxu0
    %v4962 = vadd.f32 0.0, %v4961
    %v4963 = vpop.f32.mrb[0].mxu0
    %4964 = vdwg.mxu0
    %v4965 = vadd.f32 %v4792, %v4887
    %v4966 = vadd.f32 %v4793, %v4892
    %v4967 = vadd.f32 %v4794, %v4897
    %v4968 = vadd.f32 %v4795, %v4902
    %v4969 = vadd.f32 %v4796, %v4907
    %v4970 = vadd.f32 %v4797, %v4912
    %v4971 = vadd.f32 %v4798, %v4917
    %v4972 = vadd.f32 %v4799, %v4922
    %v4973 = vadd.f32 %v4800, %v4927
    %v4974 = vadd.f32 %v4801, %v4932
    %v4975 = vadd.f32 %v4802, %v4937
    %v4976 = vadd.f32 %v4803, %v4942
    %v4977 = vadd.f32 %v4804, %v4947
    %v4978 = vadd.f32 %v4805, %v4952
    %v4979 = vadd.f32 %v4806, %v4957
    %v4980 = vadd.f32 %v4807, %v4962
    %s4981 = scalar_lea.vmem %s3, 120
    %v4982 = vld [vmem:[%s4981] sm:$0xff]
    %v4984 = vsel %vm2168, %v2056, 0
    %v4987 = vsel %vm2168, %v2080, 0
    %4989 = vmatprep.subr.mxu0 0.0
    %4990 = vmatpush1.msra.mxu0 %v4982
    %4991 = vmatprep.subr.mxu0 0.0
    %4992 = vmatpush1.msra.mxu0 0.0
    %4993 = vmatprep.subr.mxu0 0.0
    %4994 = vmatpush1.msra.mxu0 0.0
    %4995 = vmatprep.subr.mxu0 0.0
    %4996 = vmatpush1.msra.mxu0 0.0
    %4997 = vmatprep.subr.mxu0 0.0
    %4998 = vmatpush1.msra.mxu0 0.0
    %4999 = vmatprep.subr.mxu0 0.0
    %5000 = vmatpush1.msra.mxu0 0.0
    %5001 = vmatprep.subr.mxu0 0.0
    %5002 = vmatpush1.msra.mxu0 0.0
    %5003 = vmatprep.subr.mxu0 0.0
    %5004 = vmatpush1.msra.mxu0 0.0
    %5005 = vmatprep.subr.mxu0 0.0
    %5006 = vmatpush1.msra.mxu0 0.0
    %5007 = vmatprep.subr.mxu0 0.0
    %5008 = vmatpush1.msra.mxu0 0.0
    %5009 = vmatprep.subr.mxu0 0.0
    %5010 = vmatpush1.msra.mxu0 0.0
    %5011 = vmatprep.subr.mxu0 0.0
    %5012 = vmatpush1.msra.mxu0 0.0
    %5013 = vmatprep.subr.mxu0 0.0
    %5014 = vmatpush1.msra.mxu0 0.0
    %5015 = vmatprep.subr.mxu0 0.0
    %5016 = vmatpush1.msra.mxu0 0.0
    %5017 = vmatprep.subr.mxu0 0.0
    %5018 = vmatpush1.msra.mxu0 0.0
    %5019 = vmatprep.subr.mxu0 0.0
    %5020 = vmatpush1.msra.mxu0 0.0
    %5021 = vmatprep.subr.mxu0 0.0
    %5022 = vmatpush1.msra.mxu0 0.0
    %5023 = vmatprep.subr.mxu0 0.0
    %5024 = vmatpush1.msra.mxu0 0.0
    %5025 = vmatprep.subr.mxu0 0.0
    %5026 = vmatpush1.msra.mxu0 0.0
    %5027 = vmatprep.subr.mxu0 0.0
    %5028 = vmatpush1.msra.mxu0 0.0
    %5029 = vmatprep.subr.mxu0 0.0
    %5030 = vmatpush1.msra.mxu0 0.0
    %5031 = vmatprep.subr.mxu0 0.0
    %5032 = vmatpush1.msra.mxu0 0.0
    %5033 = vmatprep.subr.mxu0 0.0
    %5034 = vmatpush1.msra.mxu0 0.0
    %5035 = vmatprep.subr.mxu0 0.0
    %5036 = vmatpush1.msra.mxu0 0.0
    %5037 = vmatprep.subr.mxu0 0.0
    %5038 = vmatpush1.msra.mxu0 0.0
    %5039 = vmatprep.subr.mxu0 0.0
    %5040 = vmatpush1.msra.mxu0 0.0
    %5041 = vmatprep.subr.mxu0 0.0
    %5042 = vmatpush1.msra.mxu0 0.0
    %5043 = vmatprep.subr.mxu0 0.0
    %5044 = vmatpush1.msra.mxu0 0.0
    %5045 = vmatprep.subr.mxu0 0.0
    %5046 = vmatpush1.msra.mxu0 0.0
    %5047 = vmatprep.subr.mxu0 0.0
    %5048 = vmatpush1.msra.mxu0 0.0
    %5049 = vmatprep.subr.mxu0 0.0
    %5050 = vmatpush1.msra.mxu0 0.0
    %5051 = vmatprep.subr.mxu0 0.0
    %5052 = vmatpush1.msra.mxu0 0.0
    %5053 = vmatprep.mubr.f32.mxu0 0.0
    %5054 = vmatmul.mubr.f32.gmra.mrb[0].mxu0 %v2352
    %v5055 = vpop.f32.mrb[0].mxu0
    %v5056 = vadd.f32 0.0, %v5055
    %v5057 = vpop.f32.mrb[0].mxu0
    %5058 = vmatprep.mubr.f32.mxu0 0.0
    %5059 = vmatmul.mubr.f32.gmra.mrb[0].mxu0 %v2354
    %v5060 = vpop.f32.mrb[0].mxu0
    %v5061 = vadd.f32 0.0, %v5060
    %v5062 = vpop.f32.mrb[0].mxu0
    %5063 = vmatprep.mubr.f32.mxu0 0.0
    %5064 = vmatmul.mubr.f32.gmra.mrb[0].mxu0 %v2356
    %v5065 = vpop.f32.mrb[0].mxu0
    %v5066 = vadd.f32 0.0, %v5065
    %v5067 = vpop.f32.mrb[0].mxu0
    %5068 = vmatprep.mubr.f32.mxu0 0.0
    %5069 = vmatmul.mubr.f32.gmra.mrb[0].mxu0 %v2358
    %v5070 = vpop.f32.mrb[0].mxu0
    %v5071 = vadd.f32 0.0, %v5070
    %v5072 = vpop.f32.mrb[0].mxu0
    %5073 = vmatprep.mubr.f32.mxu0 0.0
    %5074 = vmatmul.mubr.f32.gmra.mrb[0].mxu0 %v2360
    %v5075 = vpop.f32.mrb[0].mxu0
    %v5076 = vadd.f32 0.0, %v5075
    %v5077 = vpop.f32.mrb[0].mxu0
    %5078 = vmatprep.mubr.f32.mxu0 0.0
    %5079 = vmatmul.mubr.f32.gmra.mrb[0].mxu0 %v3258
    %v5080 = vpop.f32.mrb[0].mxu0
    %v5081 = vadd.f32 0.0, %v5080
    %v5082 = vpop.f32.mrb[0].mxu0
    %5083 = vmatprep.mubr.f32.mxu0 0.0
    %5084 = vmatmul.mubr.f32.gmra.mrb[0].mxu0 %v4121
    %v5085 = vpop.f32.mrb[0].mxu0
    %v5086 = vadd.f32 0.0, %v5085
    %v5087 = vpop.f32.mrb[0].mxu0
    %5088 = vmatprep.mubr.f32.mxu0 0.0
    %5089 = vmatmul.mubr.f32.gmra.mrb[0].mxu0 %v4984
    %v5090 = vpop.f32.mrb[0].mxu0
    %v5091 = vadd.f32 0.0, %v5090
    %v5092 = vpop.f32.mrb[0].mxu0
    %5093 = vmatprep.mubr.f32.mxu0 0.0
    %5094 = vmatmul.mubr.f32.gmra.mrb[0].mxu0 %v2368
    %v5095 = vpop.f32.mrb[0].mxu0
    %v5096 = vadd.f32 0.0, %v5095
    %v5097 = vpop.f32.mrb[0].mxu0
    %5098 = vmatprep.mubr.f32.mxu0 0.0
    %5099 = vmatmul.mubr.f32.gmra.mrb[0].mxu0 %v2370
    %v5100 = vpop.f32.mrb[0].mxu0
    %v5101 = vadd.f32 0.0, %v5100
    %v5102 = vpop.f32.mrb[0].mxu0
    %5103 = vmatprep.mubr.f32.mxu0 0.0
    %5104 = vmatmul.mubr.f32.gmra.mrb[0].mxu0 %v2372
    %v5105 = vpop.f32.mrb[0].mxu0
    %v5106 = vadd.f32 0.0, %v5105
    %v5107 = vpop.f32.mrb[0].mxu0
    %5108 = vmatprep.mubr.f32.mxu0 0.0
    %5109 = vmatmul.mubr.f32.gmra.mrb[0].mxu0 %v2374
    %v5110 = vpop.f32.mrb[0].mxu0
    %v5111 = vadd.f32 0.0, %v5110
    %v5112 = vpop.f32.mrb[0].mxu0
    %5113 = vmatprep.mubr.f32.mxu0 0.0
    %5114 = vmatmul.mubr.f32.gmra.mrb[0].mxu0 %v2376
    %v5115 = vpop.f32.mrb[0].mxu0
    %v5116 = vadd.f32 0.0, %v5115
    %v5117 = vpop.f32.mrb[0].mxu0
    %5118 = vmatprep.mubr.f32.mxu0 0.0
    %5119 = vmatmul.mubr.f32.gmra.mrb[0].mxu0 %v3261
    %v5120 = vpop.f32.mrb[0].mxu0
    %v5121 = vadd.f32 0.0, %v5120
    %v5122 = vpop.f32.mrb[0].mxu0
    %5123 = vmatprep.mubr.f32.mxu0 0.0
    %5124 = vmatmul.mubr.f32.gmra.mrb[0].mxu0 %v4124
    %v5125 = vpop.f32.mrb[0].mxu0
    %v5126 = vadd.f32 0.0, %v5125
    %v5127 = vpop.f32.mrb[0].mxu0
    %5128 = vmatprep.mubr.f32.mxu0 0.0
    %5129 = vmatmul.mubr.f32.gmra.mrb[0].mxu0 %v4987
    %v5130 = vpop.f32.mrb[0].mxu0
    %v5131 = vadd.f32 0.0, %v5130
    %v5132 = vpop.f32.mrb[0].mxu0
    %5133 = vdwg.mxu0
    %v5134 = vadd.f32 %v4965, %v5056
    %v5135 = vadd.f32 %v4966, %v5061
    %v5136 = vadd.f32 %v4967, %v5066
    %v5137 = vadd.f32 %v4968, %v5071
    %v5138 = vadd.f32 %v4969, %v5076
    %v5139 = vadd.f32 %v4970, %v5081
    %v5140 = vadd.f32 %v4971, %v5086
    %v5141 = vadd.f32 %v4972, %v5091
    %v5142 = vadd.f32 %v4973, %v5096
    %v5143 = vadd.f32 %v4974, %v5101
    %v5144 = vadd.f32 %v4975, %v5106
    %v5145 = vadd.f32 %v4976, %v5111
    %v5146 = vadd.f32 %v4977, %v5116
    %v5147 = vadd.f32 %v4978, %v5121
    %v5148 = vadd.f32 %v4979, %v5126
    %v5149 = vadd.f32 %v4980, %v5131
    %v5152 = vrot.slane %v2056, 1
    %v5153 = vrot.slane %v2057, 1
    %v5154 = vsel %vm2117, %v5152, %v5153
    %v5155 = vrot.slane %v2080, 1
    %v5156 = vrot.slane %v2081, 1
    %v5157 = vsel %vm2117, %v5155, %v5156
    %s5158 = scalar_lea.vmem %s3, 128
    %v5159 = vld [vmem:[%s5158] sm:$0xff]
    %v5160 = vsel %vm2168, %v5154, 0
    %v5162 = vsel %vm2168, %v5157, 0
    %5164 = vmatprep.subr.mxu0 0.0
    %5165 = vmatpush1.msra.mxu0 %v5159
    %5166 = vmatprep.subr.mxu0 0.0
    %5167 = vmatpush1.msra.mxu0 0.0
    %5168 = vmatprep.subr.mxu0 0.0
    %5169 = vmatpush1.msra.mxu0 0.0
    %5170 = vmatprep.subr.mxu0 0.0
    %5171 = vmatpush1.msra.mxu0 0.0
    %5172 = vmatprep.subr.mxu0 0.0
    %5173 = vmatpush1.msra.mxu0 0.0
    %5174 = vmatprep.subr.mxu0 0.0
    %5175 = vmatpush1.msra.mxu0 0.0
    %5176 = vmatprep.subr.mxu0 0.0
    %5177 = vmatpush1.msra.mxu0 0.0
    %5178 = vmatprep.subr.mxu0 0.0
    %5179 = vmatpush1.msra.mxu0 0.0
    %5180 = vmatprep.subr.mxu0 0.0
    %5181 = vmatpush1.msra.mxu0 0.0
    %5182 = vmatprep.subr.mxu0 0.0
    %5183 = vmatpush1.msra.mxu0 0.0
    %5184 = vmatprep.subr.mxu0 0.0
    %5185 = vmatpush1.msra.mxu0 0.0
    %5186 = vmatprep.subr.mxu0 0.0
    %5187 = vmatpush1.msra.mxu0 0.0
    %5188 = vmatprep.subr.mxu0 0.0
    %5189 = vmatpush1.msra.mxu0 0.0
    %5190 = vmatprep.subr.mxu0 0.0
    %5191 = vmatpush1.msra.mxu0 0.0
    %5192 = vmatprep.subr.mxu0 0.0
    %5193 = vmatpush1.msra.mxu0 0.0
    %5194 = vmatprep.subr.mxu0 0.0
    %5195 = vmatpush1.msra.mxu0 0.0
    %5196 = vmatprep.subr.mxu0 0.0
    %5197 = vmatpush1.msra.mxu0 0.0
    %5198 = vmatprep.subr.mxu0 0.0
    %5199 = vmatpush1.msra.mxu0 0.0
    %5200 = vmatprep.subr.mxu0 0.0
    %5201 = vmatpush1.msra.mxu0 0.0
    %5202 = vmatprep.subr.mxu0 0.0
    %5203 = vmatpush1.msra.mxu0 0.0
    %5204 = vmatprep.subr.mxu0 0.0
    %5205 = vmatpush1.msra.mxu0 0.0
    %5206 = vmatprep.subr.mxu0 0.0
    %5207 = vmatpush1.msra.mxu0 0.0
    %5208 = vmatprep.subr.mxu0 0.0
    %5209 = vmatpush1.msra.mxu0 0.0
    %5210 = vmatprep.subr.mxu0 0.0
    %5211 = vmatpush1.msra.mxu0 0.0
    %5212 = vmatprep.subr.mxu0 0.0
    %5213 = vmatpush1.msra.mxu0 0.0
    %5214 = vmatprep.subr.mxu0 0.0
    %5215 = vmatpush1.msra.mxu0 0.0
    %5216 = vmatprep.subr.mxu0 0.0
    %5217 = vmatpush1.msra.mxu0 0.0
    %5218 = vmatprep.subr.mxu0 0.0
    %5219 = vmatpush1.msra.mxu0 0.0
    %5220 = vmatprep.subr.mxu0 0.0
    %5221 = vmatpush1.msra.mxu0 0.0
    %5222 = vmatprep.subr.mxu0 0.0
    %5223 = vmatpush1.msra.mxu0 0.0
    %5224 = vmatprep.subr.mxu0 0.0
    %5225 = vmatpush1.msra.mxu0 0.0
    %5226 = vmatprep.subr.mxu0 0.0
    %5227 = vmatpush1.msra.mxu0 0.0
    %5228 = vmatprep.mubr.f32.mxu0 0.0
    %5229 = vmatmul.mubr.f32.gmra.mrb[0].mxu0 %v2175
    %v5230 = vpop.f32.mrb[0].mxu0
    %v5231 = vadd.f32 0.0, %v5230
    %v5232 = vpop.f32.mrb[0].mxu0
    %5233 = vmatprep.mubr.f32.mxu0 0.0
    %5234 = vmatmul.mubr.f32.gmra.mrb[0].mxu0 %v2177
    %v5235 = vpop.f32.mrb[0].mxu0
    %v5236 = vadd.f32 0.0, %v5235
    %v5237 = vpop.f32.mrb[0].mxu0
    %5238 = vmatprep.mubr.f32.mxu0 0.0
    %5239 = vmatmul.mubr.f32.gmra.mrb[0].mxu0 %v2179
    %v5240 = vpop.f32.mrb[0].mxu0
    %v5241 = vadd.f32 0.0, %v5240
    %v5242 = vpop.f32.mrb[0].mxu0
    %5243 = vmatprep.mubr.f32.mxu0 0.0
    %5244 = vmatmul.mubr.f32.gmra.mrb[0].mxu0 %v2181
    %v5245 = vpop.f32.mrb[0].mxu0
    %v5246 = vadd.f32 0.0, %v5245
    %v5247 = vpop.f32.mrb[0].mxu0
    %5248 = vmatprep.mubr.f32.mxu0 0.0
    %5249 = vmatmul.mubr.f32.gmra.mrb[0].mxu0 %v2183
    %v5250 = vpop.f32.mrb[0].mxu0
    %v5251 = vadd.f32 0.0, %v5250
    %v5252 = vpop.f32.mrb[0].mxu0
    %5253 = vmatprep.mubr.f32.mxu0 0.0
    %5254 = vmatmul.mubr.f32.gmra.mrb[0].mxu0 %v3434
    %v5255 = vpop.f32.mrb[0].mxu0
    %v5256 = vadd.f32 0.0, %v5255
    %v5257 = vpop.f32.mrb[0].mxu0
    %5258 = vmatprep.mubr.f32.mxu0 0.0
    %5259 = vmatmul.mubr.f32.gmra.mrb[0].mxu0 %v4297
    %v5260 = vpop.f32.mrb[0].mxu0
    %v5261 = vadd.f32 0.0, %v5260
    %v5262 = vpop.f32.mrb[0].mxu0
    %5263 = vmatprep.mubr.f32.mxu0 0.0
    %5264 = vmatmul.mubr.f32.gmra.mrb[0].mxu0 %v5160
    %v5265 = vpop.f32.mrb[0].mxu0
    %v5266 = vadd.f32 0.0, %v5265
    %v5267 = vpop.f32.mrb[0].mxu0
    %5268 = vmatprep.mubr.f32.mxu0 0.0
    %5269 = vmatmul.mubr.f32.gmra.mrb[0].mxu0 %v2191
    %v5270 = vpop.f32.mrb[0].mxu0
    %v5271 = vadd.f32 0.0, %v5270
    %v5272 = vpop.f32.mrb[0].mxu0
    %5273 = vmatprep.mubr.f32.mxu0 0.0
    %5274 = vmatmul.mubr.f32.gmra.mrb[0].mxu0 %v2193
    %v5275 = vpop.f32.mrb[0].mxu0
    %v5276 = vadd.f32 0.0, %v5275
    %v5277 = vpop.f32.mrb[0].mxu0
    %5278 = vmatprep.mubr.f32.mxu0 0.0
    %5279 = vmatmul.mubr.f32.gmra.mrb[0].mxu0 %v2195
    %v5280 = vpop.f32.mrb[0].mxu0
    %v5281 = vadd.f32 0.0, %v5280
    %v5282 = vpop.f32.mrb[0].mxu0
    %5283 = vmatprep.mubr.f32.mxu0 0.0
    %5284 = vmatmul.mubr.f32.gmra.mrb[0].mxu0 %v2197
    %v5285 = vpop.f32.mrb[0].mxu0
    %v5286 = vadd.f32 0.0, %v5285
    %v5287 = vpop.f32.mrb[0].mxu0
    %5288 = vmatprep.mubr.f32.mxu0 0.0
    %5289 = vmatmul.mubr.f32.gmra.mrb[0].mxu0 %v2199
    %v5290 = vpop.f32.mrb[0].mxu0
    %v5291 = vadd.f32 0.0, %v5290
    %v5292 = vpop.f32.mrb[0].mxu0
    %5293 = vmatprep.mubr.f32.mxu0 0.0
    %5294 = vmatmul.mubr.f32.gmra.mrb[0].mxu0 %v3436
    %v5295 = vpop.f32.mrb[0].mxu0
    %v5296 = vadd.f32 0.0, %v5295
    %v5297 = vpop.f32.mrb[0].mxu0
    %5298 = vmatprep.mubr.f32.mxu0 0.0
    %5299 = vmatmul.mubr.f32.gmra.mrb[0].mxu0 %v4299
    %v5300 = vpop.f32.mrb[0].mxu0
    %v5301 = vadd.f32 0.0, %v5300
    %v5302 = vpop.f32.mrb[0].mxu0
    %5303 = vmatprep.mubr.f32.mxu0 0.0
    %5304 = vmatmul.mubr.f32.gmra.mrb[0].mxu0 %v5162
    %v5305 = vpop.f32.mrb[0].mxu0
    %v5306 = vadd.f32 0.0, %v5305
    %v5307 = vpop.f32.mrb[0].mxu0
    %5308 = vdwg.mxu0
    %v5309 = vadd.f32 %v5134, %v5231
    %v5310 = vadd.f32 %v5135, %v5236
    %v5311 = vadd.f32 %v5136, %v5241
    %v5312 = vadd.f32 %v5137, %v5246
    %v5313 = vadd.f32 %v5138, %v5251
    %v5314 = vadd.f32 %v5139, %v5256
    %v5315 = vadd.f32 %v5140, %v5261
    %v5316 = vadd.f32 %v5141, %v5266
    %v5317 = vadd.f32 %v5142, %v5271
    %v5318 = vadd.f32 %v5143, %v5276
    %v5319 = vadd.f32 %v5144, %v5281
    %v5320 = vadd.f32 %v5145, %v5286
    %v5321 = vadd.f32 %v5146, %v5291
    %v5322 = vadd.f32 %v5147, %v5296
    %v5323 = vadd.f32 %v5148, %v5301
    %v5324 = vadd.f32 %v5149, %v5306
    %v5325 = vrot.slane %v2056, 2
    %v5326 = vrot.slane %v2057, 2
    %v5327 = vsel %vm2523, %v5325, %v5326
    %v5328 = vrot.slane %v2080, 2
    %v5329 = vrot.slane %v2081, 2
    %v5330 = vsel %vm2523, %v5328, %v5329
    %s5331 = scalar_lea.vmem %s3, 136
    %v5332 = vld [vmem:[%s5331] sm:$0xff]
    %v5333 = vsel %vm2168, %v5327, 0
    %v5335 = vsel %vm2168, %v5330, 0
    %5337 = vmatprep.subr.mxu0 0.0
    %5338 = vmatpush1.msra.mxu0 %v5332
    %5339 = vmatprep.subr.mxu0 0.0
    %5340 = vmatpush1.msra.mxu0 0.0
    %5341 = vmatprep.subr.mxu0 0.0
    %5342 = vmatpush1.msra.mxu0 0.0
    %5343 = vmatprep.subr.mxu0 0.0
    %5344 = vmatpush1.msra.mxu0 0.0
    %5345 = vmatprep.subr.mxu0 0.0
    %5346 = vmatpush1.msra.mxu0 0.0
    %5347 = vmatprep.subr.mxu0 0.0
    %5348 = vmatpush1.msra.mxu0 0.0
    %5349 = vmatprep.subr.mxu0 0.0
    %5350 = vmatpush1.msra.mxu0 0.0
    %5351 = vmatprep.subr.mxu0 0.0
    %5352 = vmatpush1.msra.mxu0 0.0
    %5353 = vmatprep.subr.mxu0 0.0
    %5354 = vmatpush1.msra.mxu0 0.0
    %5355 = vmatprep.subr.mxu0 0.0
    %5356 = vmatpush1.msra.mxu0 0.0
    %5357 = vmatprep.subr.mxu0 0.0
    %5358 = vmatpush1.msra.mxu0 0.0
    %5359 = vmatprep.subr.mxu0 0.0
    %5360 = vmatpush1.msra.mxu0 0.0
    %5361 = vmatprep.subr.mxu0 0.0
    %5362 = vmatpush1.msra.mxu0 0.0
    %5363 = vmatprep.subr.mxu0 0.0
    %5364 = vmatpush1.msra.mxu0 0.0
    %5365 = vmatprep.subr.mxu0 0.0
    %5366 = vmatpush1.msra.mxu0 0.0
    %5367 = vmatprep.subr.mxu0 0.0
    %5368 = vmatpush1.msra.mxu0 0.0
    %5369 = vmatprep.subr.mxu0 0.0
    %5370 = vmatpush1.msra.mxu0 0.0
    %5371 = vmatprep.subr.mxu0 0.0
    %5372 = vmatpush1.msra.mxu0 0.0
    %5373 = vmatprep.subr.mxu0 0.0
    %5374 = vmatpush1.msra.mxu0 0.0
    %5375 = vmatprep.subr.mxu0 0.0
    %5376 = vmatpush1.msra.mxu0 0.0
    %5377 = vmatprep.subr.mxu0 0.0
    %5378 = vmatpush1.msra.mxu0 0.0
    %5379 = vmatprep.subr.mxu0 0.0
    %5380 = vmatpush1.msra.mxu0 0.0
    %5381 = vmatprep.subr.mxu0 0.0
    %5382 = vmatpush1.msra.mxu0 0.0
    %5383 = vmatprep.subr.mxu0 0.0
    %5384 = vmatpush1.msra.mxu0 0.0
    %5385 = vmatprep.subr.mxu0 0.0
    %5386 = vmatpush1.msra.mxu0 0.0
    %5387 = vmatprep.subr.mxu0 0.0
    %5388 = vmatpush1.msra.mxu0 0.0
    %5389 = vmatprep.subr.mxu0 0.0
    %5390 = vmatpush1.msra.mxu0 0.0
    %5391 = vmatprep.subr.mxu0 0.0
    %5392 = vmatpush1.msra.mxu0 0.0
    %5393 = vmatprep.subr.mxu0 0.0
    %5394 = vmatpush1.msra.mxu0 0.0
    %5395 = vmatprep.subr.mxu0 0.0
    %5396 = vmatpush1.msra.mxu0 0.0
    %5397 = vmatprep.subr.mxu0 0.0
    %5398 = vmatpush1.msra.mxu0 0.0
    %5399 = vmatprep.subr.mxu0 0.0
    %5400 = vmatpush1.msra.mxu0 0.0
    %5401 = vmatprep.mubr.f32.mxu0 0.0
    %5402 = vmatmul.mubr.f32.gmra.mrb[0].mxu0 %v2580
    %v5403 = vpop.f32.mrb[0].mxu0
    %v5404 = vadd.f32 0.0, %v5403
    %v5405 = vpop.f32.mrb[0].mxu0
    %5406 = vmatprep.mubr.f32.mxu0 0.0
    %5407 = vmatmul.mubr.f32.gmra.mrb[0].mxu0 %v2582
    %v5408 = vpop.f32.mrb[0].mxu0
    %v5409 = vadd.f32 0.0, %v5408
    %v5410 = vpop.f32.mrb[0].mxu0
    %5411 = vmatprep.mubr.f32.mxu0 0.0
    %5412 = vmatmul.mubr.f32.gmra.mrb[0].mxu0 %v2584
    %v5413 = vpop.f32.mrb[0].mxu0
    %v5414 = vadd.f32 0.0, %v5413
    %v5415 = vpop.f32.mrb[0].mxu0
    %5416 = vmatprep.mubr.f32.mxu0 0.0
    %5417 = vmatmul.mubr.f32.gmra.mrb[0].mxu0 %v2586
    %v5418 = vpop.f32.mrb[0].mxu0
    %v5419 = vadd.f32 0.0, %v5418
    %v5420 = vpop.f32.mrb[0].mxu0
    %5421 = vmatprep.mubr.f32.mxu0 0.0
    %5422 = vmatmul.mubr.f32.gmra.mrb[0].mxu0 %v2588
    %v5423 = vpop.f32.mrb[0].mxu0
    %v5424 = vadd.f32 0.0, %v5423
    %v5425 = vpop.f32.mrb[0].mxu0
    %5426 = vmatprep.mubr.f32.mxu0 0.0
    %5427 = vmatmul.mubr.f32.gmra.mrb[0].mxu0 %v3607
    %v5428 = vpop.f32.mrb[0].mxu0
    %v5429 = vadd.f32 0.0, %v5428
    %v5430 = vpop.f32.mrb[0].mxu0
    %5431 = vmatprep.mubr.f32.mxu0 0.0
    %5432 = vmatmul.mubr.f32.gmra.mrb[0].mxu0 %v4470
    %v5433 = vpop.f32.mrb[0].mxu0
    %v5434 = vadd.f32 0.0, %v5433
    %v5435 = vpop.f32.mrb[0].mxu0
    %5436 = vmatprep.mubr.f32.mxu0 0.0
    %5437 = vmatmul.mubr.f32.gmra.mrb[0].mxu0 %v5333
    %v5438 = vpop.f32.mrb[0].mxu0
    %v5439 = vadd.f32 0.0, %v5438
    %v5440 = vpop.f32.mrb[0].mxu0
    %5441 = vmatprep.mubr.f32.mxu0 0.0
    %5442 = vmatmul.mubr.f32.gmra.mrb[0].mxu0 %v2596
    %v5443 = vpop.f32.mrb[0].mxu0
    %v5444 = vadd.f32 0.0, %v5443
    %v5445 = vpop.f32.mrb[0].mxu0
    %5446 = vmatprep.mubr.f32.mxu0 0.0
    %5447 = vmatmul.mubr.f32.gmra.mrb[0].mxu0 %v2598
    %v5448 = vpop.f32.mrb[0].mxu0
    %v5449 = vadd.f32 0.0, %v5448
    %v5450 = vpop.f32.mrb[0].mxu0
    %5451 = vmatprep.mubr.f32.mxu0 0.0
    %5452 = vmatmul.mubr.f32.gmra.mrb[0].mxu0 %v2600
    %v5453 = vpop.f32.mrb[0].mxu0
    %v5454 = vadd.f32 0.0, %v5453
    %v5455 = vpop.f32.mrb[0].mxu0
    %5456 = vmatprep.mubr.f32.mxu0 0.0
    %5457 = vmatmul.mubr.f32.gmra.mrb[0].mxu0 %v2602
    %v5458 = vpop.f32.mrb[0].mxu0
    %v5459 = vadd.f32 0.0, %v5458
    %v5460 = vpop.f32.mrb[0].mxu0
    %5461 = vmatprep.mubr.f32.mxu0 0.0
    %5462 = vmatmul.mubr.f32.gmra.mrb[0].mxu0 %v2604
    %v5463 = vpop.f32.mrb[0].mxu0
    %v5464 = vadd.f32 0.0, %v5463
    %v5465 = vpop.f32.mrb[0].mxu0
    %5466 = vmatprep.mubr.f32.mxu0 0.0
    %5467 = vmatmul.mubr.f32.gmra.mrb[0].mxu0 %v3609
    %v5468 = vpop.f32.mrb[0].mxu0
    %v5469 = vadd.f32 0.0, %v5468
    %v5470 = vpop.f32.mrb[0].mxu0
    %5471 = vmatprep.mubr.f32.mxu0 0.0
    %5472 = vmatmul.mubr.f32.gmra.mrb[0].mxu0 %v4472
    %v5473 = vpop.f32.mrb[0].mxu0
    %v5474 = vadd.f32 0.0, %v5473
    %v5475 = vpop.f32.mrb[0].mxu0
    %5476 = vmatprep.mubr.f32.mxu0 0.0
    %5477 = vmatmul.mubr.f32.gmra.mrb[0].mxu0 %v5335
    %v5478 = vpop.f32.mrb[0].mxu0
    %v5479 = vadd.f32 0.0, %v5478
    %v5480 = vpop.f32.mrb[0].mxu0
    %5481 = vdwg.mxu0
    %v5482 = vadd.f32 %v5309, %v5404
    %v5483 = vadd.f32 %v5310, %v5409
    %v5484 = vadd.f32 %v5311, %v5414
    %v5485 = vadd.f32 %v5312, %v5419
    %v5486 = vadd.f32 %v5313, %v5424
    %v5487 = vadd.f32 %v5314, %v5429
    %v5488 = vadd.f32 %v5315, %v5434
    %v5489 = vadd.f32 %v5316, %v5439
    %v5490 = vadd.f32 %v5317, %v5444
    %v5491 = vadd.f32 %v5318, %v5449
    %v5492 = vadd.f32 %v5319, %v5454
    %v5493 = vadd.f32 %v5320, %v5459
    %v5494 = vadd.f32 %v5321, %v5464
    %v5495 = vadd.f32 %v5322, %v5469
    %v5496 = vadd.f32 %v5323, %v5474
    %v5497 = vadd.f32 %v5324, %v5479
    %v5498 = vrot.slane %v2056, 3
    %v5499 = vrot.slane %v2057, 3
    %v5500 = vsel %vm2767, %v5498, %v5499
    %v5501 = vrot.slane %v2080, 3
    %v5502 = vrot.slane %v2081, 3
    %v5503 = vsel %vm2767, %v5501, %v5502
    %s5504 = scalar_lea.vmem %s3, 144
    %v5505 = vld [vmem:[%s5504] sm:$0xff]
    %v5506 = vsel %vm2168, %v5500, 0
    %v5508 = vsel %vm2168, %v5503, 0
    %5510 = vmatprep.subr.mxu0 0.0
    %5511 = vmatpush1.msra.mxu0 %v5505
    %5512 = vmatprep.subr.mxu0 0.0
    %5513 = vmatpush1.msra.mxu0 0.0
    %5514 = vmatprep.subr.mxu0 0.0
    %5515 = vmatpush1.msra.mxu0 0.0
    %5516 = vmatprep.subr.mxu0 0.0
    %5517 = vmatpush1.msra.mxu0 0.0
    %5518 = vmatprep.subr.mxu0 0.0
    %5519 = vmatpush1.msra.mxu0 0.0
    %5520 = vmatprep.subr.mxu0 0.0
    %5521 = vmatpush1.msra.mxu0 0.0
    %5522 = vmatprep.subr.mxu0 0.0
    %5523 = vmatpush1.msra.mxu0 0.0
    %5524 = vmatprep.subr.mxu0 0.0
    %5525 = vmatpush1.msra.mxu0 0.0
    %5526 = vmatprep.subr.mxu0 0.0
    %5527 = vmatpush1.msra.mxu0 0.0
    %5528 = vmatprep.subr.mxu0 0.0
    %5529 = vmatpush1.msra.mxu0 0.0
    %5530 = vmatprep.subr.mxu0 0.0
    %5531 = vmatpush1.msra.mxu0 0.0
    %5532 = vmatprep.subr.mxu0 0.0
    %5533 = vmatpush1.msra.mxu0 0.0
    %5534 = vmatprep.subr.mxu0 0.0
    %5535 = vmatpush1.msra.mxu0 0.0
    %5536 = vmatprep.subr.mxu0 0.0
    %5537 = vmatpush1.msra.mxu0 0.0
    %5538 = vmatprep.subr.mxu0 0.0
    %5539 = vmatpush1.msra.mxu0 0.0
    %5540 = vmatprep.subr.mxu0 0.0
    %5541 = vmatpush1.msra.mxu0 0.0
    %5542 = vmatprep.subr.mxu0 0.0
    %5543 = vmatpush1.msra.mxu0 0.0
    %5544 = vmatprep.subr.mxu0 0.0
    %5545 = vmatpush1.msra.mxu0 0.0
    %5546 = vmatprep.subr.mxu0 0.0
    %5547 = vmatpush1.msra.mxu0 0.0
    %5548 = vmatprep.subr.mxu0 0.0
    %5549 = vmatpush1.msra.mxu0 0.0
    %5550 = vmatprep.subr.mxu0 0.0
    %5551 = vmatpush1.msra.mxu0 0.0
    %5552 = vmatprep.subr.mxu0 0.0
    %5553 = vmatpush1.msra.mxu0 0.0
    %5554 = vmatprep.subr.mxu0 0.0
    %5555 = vmatpush1.msra.mxu0 0.0
    %5556 = vmatprep.subr.mxu0 0.0
    %5557 = vmatpush1.msra.mxu0 0.0
    %5558 = vmatprep.subr.mxu0 0.0
    %5559 = vmatpush1.msra.mxu0 0.0
    %5560 = vmatprep.subr.mxu0 0.0
    %5561 = vmatpush1.msra.mxu0 0.0
    %5562 = vmatprep.subr.mxu0 0.0
    %5563 = vmatpush1.msra.mxu0 0.0
    %5564 = vmatprep.subr.mxu0 0.0
    %5565 = vmatpush1.msra.mxu0 0.0
    %5566 = vmatprep.subr.mxu0 0.0
    %5567 = vmatpush1.msra.mxu0 0.0
    %5568 = vmatprep.subr.mxu0 0.0
    %5569 = vmatpush1.msra.mxu0 0.0
    %5570 = vmatprep.subr.mxu0 0.0
    %5571 = vmatpush1.msra.mxu0 0.0
    %5572 = vmatprep.subr.mxu0 0.0
    %5573 = vmatpush1.msra.mxu0 0.0
    %5574 = vmatprep.mubr.f32.mxu0 0.0
    %5575 = vmatmul.mubr.f32.gmra.mrb[0].mxu0 %v2824
    %v5576 = vpop.f32.mrb[0].mxu0
    %v5577 = vadd.f32 0.0, %v5576
    %v5578 = vpop.f32.mrb[0].mxu0
    %5579 = vmatprep.mubr.f32.mxu0 0.0
    %5580 = vmatmul.mubr.f32.gmra.mrb[0].mxu0 %v2826
    %v5581 = vpop.f32.mrb[0].mxu0
    %v5582 = vadd.f32 0.0, %v5581
    %v5583 = vpop.f32.mrb[0].mxu0
    %5584 = vmatprep.mubr.f32.mxu0 0.0
    %5585 = vmatmul.mubr.f32.gmra.mrb[0].mxu0 %v2828
    %v5586 = vpop.f32.mrb[0].mxu0
    %v5587 = vadd.f32 0.0, %v5586
    %v5588 = vpop.f32.mrb[0].mxu0
    %5589 = vmatprep.mubr.f32.mxu0 0.0
    %5590 = vmatmul.mubr.f32.gmra.mrb[0].mxu0 %v2830
    %v5591 = vpop.f32.mrb[0].mxu0
    %v5592 = vadd.f32 0.0, %v5591
    %v5593 = vpop.f32.mrb[0].mxu0
    %5594 = vmatprep.mubr.f32.mxu0 0.0
    %5595 = vmatmul.mubr.f32.gmra.mrb[0].mxu0 %v2832
    %v5596 = vpop.f32.mrb[0].mxu0
    %v5597 = vadd.f32 0.0, %v5596
    %v5598 = vpop.f32.mrb[0].mxu0
    %5599 = vmatprep.mubr.f32.mxu0 0.0
    %5600 = vmatmul.mubr.f32.gmra.mrb[0].mxu0 %v3780
    %v5601 = vpop.f32.mrb[0].mxu0
    %v5602 = vadd.f32 0.0, %v5601
    %v5603 = vpop.f32.mrb[0].mxu0
    %5604 = vmatprep.mubr.f32.mxu0 0.0
    %5605 = vmatmul.mubr.f32.gmra.mrb[0].mxu0 %v4643
    %v5606 = vpop.f32.mrb[0].mxu0
    %v5607 = vadd.f32 0.0, %v5606
    %v5608 = vpop.f32.mrb[0].mxu0
    %5609 = vmatprep.mubr.f32.mxu0 0.0
    %5610 = vmatmul.mubr.f32.gmra.mrb[0].mxu0 %v5506
    %v5611 = vpop.f32.mrb[0].mxu0
    %v5612 = vadd.f32 0.0, %v5611
    %v5613 = vpop.f32.mrb[0].mxu0
    %5614 = vmatprep.mubr.f32.mxu0 0.0
    %5615 = vmatmul.mubr.f32.gmra.mrb[0].mxu0 %v2840
    %v5616 = vpop.f32.mrb[0].mxu0
    %v5617 = vadd.f32 0.0, %v5616
    %v5618 = vpop.f32.mrb[0].mxu0
    %5619 = vmatprep.mubr.f32.mxu0 0.0
    %5620 = vmatmul.mubr.f32.gmra.mrb[0].mxu0 %v2842
    %v5621 = vpop.f32.mrb[0].mxu0
    %v5622 = vadd.f32 0.0, %v5621
    %v5623 = vpop.f32.mrb[0].mxu0
    %5624 = vmatprep.mubr.f32.mxu0 0.0
    %5625 = vmatmul.mubr.f32.gmra.mrb[0].mxu0 %v2844
    %v5626 = vpop.f32.mrb[0].mxu0
    %v5627 = vadd.f32 0.0, %v5626
    %v5628 = vpop.f32.mrb[0].mxu0
    %5629 = vmatprep.mubr.f32.mxu0 0.0
    %5630 = vmatmul.mubr.f32.gmra.mrb[0].mxu0 %v2846
    %v5631 = vpop.f32.mrb[0].mxu0
    %v5632 = vadd.f32 0.0, %v5631
    %v5633 = vpop.f32.mrb[0].mxu0
    %5634 = vmatprep.mubr.f32.mxu0 0.0
    %5635 = vmatmul.mubr.f32.gmra.mrb[0].mxu0 %v2848
    %v5636 = vpop.f32.mrb[0].mxu0
    %v5637 = vadd.f32 0.0, %v5636
    %v5638 = vpop.f32.mrb[0].mxu0
    %5639 = vmatprep.mubr.f32.mxu0 0.0
    %5640 = vmatmul.mubr.f32.gmra.mrb[0].mxu0 %v3782
    %v5641 = vpop.f32.mrb[0].mxu0
    %v5642 = vadd.f32 0.0, %v5641
    %v5643 = vpop.f32.mrb[0].mxu0
    %5644 = vmatprep.mubr.f32.mxu0 0.0
    %5645 = vmatmul.mubr.f32.gmra.mrb[0].mxu0 %v4645
    %v5646 = vpop.f32.mrb[0].mxu0
    %v5647 = vadd.f32 0.0, %v5646
    %v5648 = vpop.f32.mrb[0].mxu0
    %5649 = vmatprep.mubr.f32.mxu0 0.0
    %5650 = vmatmul.mubr.f32.gmra.mrb[0].mxu0 %v5508
    %v5651 = vpop.f32.mrb[0].mxu0
    %v5652 = vadd.f32 0.0, %v5651
    %v5653 = vpop.f32.mrb[0].mxu0
    %5654 = vdwg.mxu0
    %v5655 = vadd.f32 %v5482, %v5577
    %v5656 = vadd.f32 %v5483, %v5582
    %v5657 = vadd.f32 %v5484, %v5587
    %v5658 = vadd.f32 %v5485, %v5592
    %v5659 = vadd.f32 %v5486, %v5597
    %v5660 = vadd.f32 %v5487, %v5602
    %v5661 = vadd.f32 %v5488, %v5607
    %v5662 = vadd.f32 %v5489, %v5612
    %v5663 = vadd.f32 %v5490, %v5617
    %v5664 = vadd.f32 %v5491, %v5622
    %v5665 = vadd.f32 %v5492, %v5627
    %v5666 = vadd.f32 %v5493, %v5632
    %v5667 = vadd.f32 %v5494, %v5637
    %v5668 = vadd.f32 %v5495, %v5642
    %v5669 = vadd.f32 %v5496, %v5647
    %v5670 = vadd.f32 %v5497, %v5652
    %v5671 = vrot.slane %v2056, 4
    %v5672 = vrot.slane %v2057, 4
    %v5673 = vsel %vm3011, %v5671, %v5672
    %v5674 = vrot.slane %v2080, 4
    %v5675 = vrot.slane %v2081, 4
    %v5676 = vsel %vm3011, %v5674, %v5675
    %s5677 = scalar_lea.vmem %s3, 152
    %v5678 = vld [vmem:[%s5677] sm:$0xff]
    %v5679 = vsel %vm2168, %v5673, 0
    %v5681 = vsel %vm2168, %v5676, 0
    %5683 = vmatprep.subr.mxu0 0.0
    %5684 = vmatpush1.msra.mxu0 %v5678
    %5685 = vmatprep.subr.mxu0 0.0
    %5686 = vmatpush1.msra.mxu0 0.0
    %5687 = vmatprep.subr.mxu0 0.0
    %5688 = vmatpush1.msra.mxu0 0.0
    %5689 = vmatprep.subr.mxu0 0.0
    %5690 = vmatpush1.msra.mxu0 0.0
    %5691 = vmatprep.subr.mxu0 0.0
    %5692 = vmatpush1.msra.mxu0 0.0
    %5693 = vmatprep.subr.mxu0 0.0
    %5694 = vmatpush1.msra.mxu0 0.0
    %5695 = vmatprep.subr.mxu0 0.0
    %5696 = vmatpush1.msra.mxu0 0.0
    %5697 = vmatprep.subr.mxu0 0.0
    %5698 = vmatpush1.msra.mxu0 0.0
    %5699 = vmatprep.subr.mxu0 0.0
    %5700 = vmatpush1.msra.mxu0 0.0
    %5701 = vmatprep.subr.mxu0 0.0
    %5702 = vmatpush1.msra.mxu0 0.0
    %5703 = vmatprep.subr.mxu0 0.0
    %5704 = vmatpush1.msra.mxu0 0.0
    %5705 = vmatprep.subr.mxu0 0.0
    %5706 = vmatpush1.msra.mxu0 0.0
    %5707 = vmatprep.subr.mxu0 0.0
    %5708 = vmatpush1.msra.mxu0 0.0
    %5709 = vmatprep.subr.mxu0 0.0
    %5710 = vmatpush1.msra.mxu0 0.0
    %5711 = vmatprep.subr.mxu0 0.0
    %5712 = vmatpush1.msra.mxu0 0.0
    %5713 = vmatprep.subr.mxu0 0.0
    %5714 = vmatpush1.msra.mxu0 0.0
    %5715 = vmatprep.subr.mxu0 0.0
    %5716 = vmatpush1.msra.mxu0 0.0
    %5717 = vmatprep.subr.mxu0 0.0
    %5718 = vmatpush1.msra.mxu0 0.0
    %5719 = vmatprep.subr.mxu0 0.0
    %5720 = vmatpush1.msra.mxu0 0.0
    %5721 = vmatprep.subr.mxu0 0.0
    %5722 = vmatpush1.msra.mxu0 0.0
    %5723 = vmatprep.subr.mxu0 0.0
    %5724 = vmatpush1.msra.mxu0 0.0
    %5725 = vmatprep.subr.mxu0 0.0
    %5726 = vmatpush1.msra.mxu0 0.0
    %5727 = vmatprep.subr.mxu0 0.0
    %5728 = vmatpush1.msra.mxu0 0.0
    %5729 = vmatprep.subr.mxu0 0.0
    %5730 = vmatpush1.msra.mxu0 0.0
    %5731 = vmatprep.subr.mxu0 0.0
    %5732 = vmatpush1.msra.mxu0 0.0
    %5733 = vmatprep.subr.mxu0 0.0
    %5734 = vmatpush1.msra.mxu0 0.0
    %5735 = vmatprep.subr.mxu0 0.0
    %5736 = vmatpush1.msra.mxu0 0.0
    %5737 = vmatprep.subr.mxu0 0.0
    %5738 = vmatpush1.msra.mxu0 0.0
    %5739 = vmatprep.subr.mxu0 0.0
    %5740 = vmatpush1.msra.mxu0 0.0
    %5741 = vmatprep.subr.mxu0 0.0
    %5742 = vmatpush1.msra.mxu0 0.0
    %5743 = vmatprep.subr.mxu0 0.0
    %5744 = vmatpush1.msra.mxu0 0.0
    %5745 = vmatprep.subr.mxu0 0.0
    %5746 = vmatpush1.msra.mxu0 0.0
    %5747 = vmatprep.mubr.f32.mxu0 0.0
    %5748 = vmatmul.mubr.f32.gmra.mrb[0].mxu0 %v3068
    %v5749 = vpop.f32.mrb[0].mxu0
    %v5750 = vadd.f32 0.0, %v5749
    %v5751 = vpop.f32.mrb[0].mxu0
    %5752 = vmatprep.mubr.f32.mxu0 0.0
    %5753 = vmatmul.mubr.f32.gmra.mrb[0].mxu0 %v3070
    %v5754 = vpop.f32.mrb[0].mxu0
    %v5755 = vadd.f32 0.0, %v5754
    %v5756 = vpop.f32.mrb[0].mxu0
    %5757 = vmatprep.mubr.f32.mxu0 0.0
    %5758 = vmatmul.mubr.f32.gmra.mrb[0].mxu0 %v3072
    %v5759 = vpop.f32.mrb[0].mxu0
    %v5760 = vadd.f32 0.0, %v5759
    %v5761 = vpop.f32.mrb[0].mxu0
    %5762 = vmatprep.mubr.f32.mxu0 0.0
    %5763 = vmatmul.mubr.f32.gmra.mrb[0].mxu0 %v3074
    %v5764 = vpop.f32.mrb[0].mxu0
    %v5765 = vadd.f32 0.0, %v5764
    %v5766 = vpop.f32.mrb[0].mxu0
    %5767 = vmatprep.mubr.f32.mxu0 0.0
    %5768 = vmatmul.mubr.f32.gmra.mrb[0].mxu0 %v3076
    %v5769 = vpop.f32.mrb[0].mxu0
    %v5770 = vadd.f32 0.0, %v5769
    %v5771 = vpop.f32.mrb[0].mxu0
    %5772 = vmatprep.mubr.f32.mxu0 0.0
    %5773 = vmatmul.mubr.f32.gmra.mrb[0].mxu0 %v3953
    %v5774 = vpop.f32.mrb[0].mxu0
    %v5775 = vadd.f32 0.0, %v5774
    %v5776 = vpop.f32.mrb[0].mxu0
    %5777 = vmatprep.mubr.f32.mxu0 0.0
    %5778 = vmatmul.mubr.f32.gmra.mrb[0].mxu0 %v4816
    %v5779 = vpop.f32.mrb[0].mxu0
    %v5780 = vadd.f32 0.0, %v5779
    %v5781 = vpop.f32.mrb[0].mxu0
    %5782 = vmatprep.mubr.f32.mxu0 0.0
    %5783 = vmatmul.mubr.f32.gmra.mrb[0].mxu0 %v5679
    %v5784 = vpop.f32.mrb[0].mxu0
    %v5785 = vadd.f32 0.0, %v5784
    %v5786 = vpop.f32.mrb[0].mxu0
    %5787 = vmatprep.mubr.f32.mxu0 0.0
    %5788 = vmatmul.mubr.f32.gmra.mrb[0].mxu0 %v3084
    %v5789 = vpop.f32.mrb[0].mxu0
    %v5790 = vadd.f32 0.0, %v5789
    %v5791 = vpop.f32.mrb[0].mxu0
    %5792 = vmatprep.mubr.f32.mxu0 0.0
    %5793 = vmatmul.mubr.f32.gmra.mrb[0].mxu0 %v3086
    %v5794 = vpop.f32.mrb[0].mxu0
    %v5795 = vadd.f32 0.0, %v5794
    %v5796 = vpop.f32.mrb[0].mxu0
    %5797 = vmatprep.mubr.f32.mxu0 0.0
    %5798 = vmatmul.mubr.f32.gmra.mrb[0].mxu0 %v3088
    %v5799 = vpop.f32.mrb[0].mxu0
    %v5800 = vadd.f32 0.0, %v5799
    %v5801 = vpop.f32.mrb[0].mxu0
    %5802 = vmatprep.mubr.f32.mxu0 0.0
    %5803 = vmatmul.mubr.f32.gmra.mrb[0].mxu0 %v3090
    %v5804 = vpop.f32.mrb[0].mxu0
    %v5805 = vadd.f32 0.0, %v5804
    %v5806 = vpop.f32.mrb[0].mxu0
    %5807 = vmatprep.mubr.f32.mxu0 0.0
    %5808 = vmatmul.mubr.f32.gmra.mrb[0].mxu0 %v3092
    %v5809 = vpop.f32.mrb[0].mxu0
    %v5810 = vadd.f32 0.0, %v5809
    %v5811 = vpop.f32.mrb[0].mxu0
    %5812 = vmatprep.mubr.f32.mxu0 0.0
    %5813 = vmatmul.mubr.f32.gmra.mrb[0].mxu0 %v3955
    %v5814 = vpop.f32.mrb[0].mxu0
    %v5815 = vadd.f32 0.0, %v5814
    %v5816 = vpop.f32.mrb[0].mxu0
    %5817 = vmatprep.mubr.f32.mxu0 0.0
    %5818 = vmatmul.mubr.f32.gmra.mrb[0].mxu0 %v4818
    %v5819 = vpop.f32.mrb[0].mxu0
    %v5820 = vadd.f32 0.0, %v5819
    %v5821 = vpop.f32.mrb[0].mxu0
    %5822 = vmatprep.mubr.f32.mxu0 0.0
    %5823 = vmatmul.mubr.f32.gmra.mrb[0].mxu0 %v5681
    %v5824 = vpop.f32.mrb[0].mxu0
    %v5825 = vadd.f32 0.0, %v5824
    %v5826 = vpop.f32.mrb[0].mxu0
    %5827 = vdwg.mxu0
    %v5828 = vadd.f32 %v5655, %v5750
    %v5829 = vadd.f32 %v5656, %v5755
    %v5830 = vadd.f32 %v5657, %v5760
    %v5831 = vadd.f32 %v5658, %v5765
    %v5832 = vadd.f32 %v5659, %v5770
    %v5833 = vadd.f32 %v5660, %v5775
    %v5834 = vadd.f32 %v5661, %v5780
    %v5835 = vadd.f32 %v5662, %v5785
    %v5836 = vadd.f32 %v5663, %v5790
    %v5837 = vadd.f32 %v5664, %v5795
    %v5838 = vadd.f32 %v5665, %v5800
    %v5839 = vadd.f32 %v5666, %v5805
    %v5840 = vadd.f32 %v5667, %v5810
    %v5841 = vadd.f32 %v5668, %v5815
    %v5842 = vadd.f32 %v5669, %v5820
    %v5843 = vadd.f32 %v5670, %v5825
    %s5844 = scalar_lea.vmem %s3, 160
    %v5845 = vld [vmem:[%s5844] sm:$0xff]
    %v5847 = vsel %vm2168, %v2058, 0
    %v5850 = vsel %vm2168, %v2082, 0
    %5852 = vmatprep.subr.mxu0 0.0
    %5853 = vmatpush1.msra.mxu0 %v5845
    %5854 = vmatprep.subr.mxu0 0.0
    %5855 = vmatpush1.msra.mxu0 0.0
    %5856 = vmatprep.subr.mxu0 0.0
    %5857 = vmatpush1.msra.mxu0 0.0
    %5858 = vmatprep.subr.mxu0 0.0
    %5859 = vmatpush1.msra.mxu0 0.0
    %5860 = vmatprep.subr.mxu0 0.0
    %5861 = vmatpush1.msra.mxu0 0.0
    %5862 = vmatprep.subr.mxu0 0.0
    %5863 = vmatpush1.msra.mxu0 0.0
    %5864 = vmatprep.subr.mxu0 0.0
    %5865 = vmatpush1.msra.mxu0 0.0
    %5866 = vmatprep.subr.mxu0 0.0
    %5867 = vmatpush1.msra.mxu0 0.0
    %5868 = vmatprep.subr.mxu0 0.0
    %5869 = vmatpush1.msra.mxu0 0.0
    %5870 = vmatprep.subr.mxu0 0.0
    %5871 = vmatpush1.msra.mxu0 0.0
    %5872 = vmatprep.subr.mxu0 0.0
    %5873 = vmatpush1.msra.mxu0 0.0
    %5874 = vmatprep.subr.mxu0 0.0
    %5875 = vmatpush1.msra.mxu0 0.0
    %5876 = vmatprep.subr.mxu0 0.0
    %5877 = vmatpush1.msra.mxu0 0.0
    %5878 = vmatprep.subr.mxu0 0.0
    %5879 = vmatpush1.msra.mxu0 0.0
    %5880 = vmatprep.subr.mxu0 0.0
    %5881 = vmatpush1.msra.mxu0 0.0
    %5882 = vmatprep.subr.mxu0 0.0
    %5883 = vmatpush1.msra.mxu0 0.0
    %5884 = vmatprep.subr.mxu0 0.0
    %5885 = vmatpush1.msra.mxu0 0.0
    %5886 = vmatprep.subr.mxu0 0.0
    %5887 = vmatpush1.msra.mxu0 0.0
    %5888 = vmatprep.subr.mxu0 0.0
    %5889 = vmatpush1.msra.mxu0 0.0
    %5890 = vmatprep.subr.mxu0 0.0
    %5891 = vmatpush1.msra.mxu0 0.0
    %5892 = vmatprep.subr.mxu0 0.0
    %5893 = vmatpush1.msra.mxu0 0.0
    %5894 = vmatprep.subr.mxu0 0.0
    %5895 = vmatpush1.msra.mxu0 0.0
    %5896 = vmatprep.subr.mxu0 0.0
    %5897 = vmatpush1.msra.mxu0 0.0
    %5898 = vmatprep.subr.mxu0 0.0
    %5899 = vmatpush1.msra.mxu0 0.0
    %5900 = vmatprep.subr.mxu0 0.0
    %5901 = vmatpush1.msra.mxu0 0.0
    %5902 = vmatprep.subr.mxu0 0.0
    %5903 = vmatpush1.msra.mxu0 0.0
    %5904 = vmatprep.subr.mxu0 0.0
    %5905 = vmatpush1.msra.mxu0 0.0
    %5906 = vmatprep.subr.mxu0 0.0
    %5907 = vmatpush1.msra.mxu0 0.0
    %5908 = vmatprep.subr.mxu0 0.0
    %5909 = vmatpush1.msra.mxu0 0.0
    %5910 = vmatprep.subr.mxu0 0.0
    %5911 = vmatpush1.msra.mxu0 0.0
    %5912 = vmatprep.subr.mxu0 0.0
    %5913 = vmatpush1.msra.mxu0 0.0
    %5914 = vmatprep.subr.mxu0 0.0
    %5915 = vmatpush1.msra.mxu0 0.0
    %5916 = vmatprep.mubr.f32.mxu0 0.0
    %5917 = vmatmul.mubr.f32.gmra.mrb[0].mxu0 %v2354
    %v5918 = vpop.f32.mrb[0].mxu0
    %v5919 = vadd.f32 0.0, %v5918
    %v5920 = vpop.f32.mrb[0].mxu0
    %5921 = vmatprep.mubr.f32.mxu0 0.0
    %5922 = vmatmul.mubr.f32.gmra.mrb[0].mxu0 %v2356
    %v5923 = vpop.f32.mrb[0].mxu0
    %v5924 = vadd.f32 0.0, %v5923
    %v5925 = vpop.f32.mrb[0].mxu0
    %5926 = vmatprep.mubr.f32.mxu0 0.0
    %5927 = vmatmul.mubr.f32.gmra.mrb[0].mxu0 %v2358
    %v5928 = vpop.f32.mrb[0].mxu0
    %v5929 = vadd.f32 0.0, %v5928
    %v5930 = vpop.f32.mrb[0].mxu0
    %5931 = vmatprep.mubr.f32.mxu0 0.0
    %5932 = vmatmul.mubr.f32.gmra.mrb[0].mxu0 %v2360
    %v5933 = vpop.f32.mrb[0].mxu0
    %v5934 = vadd.f32 0.0, %v5933
    %v5935 = vpop.f32.mrb[0].mxu0
    %5936 = vmatprep.mubr.f32.mxu0 0.0
    %5937 = vmatmul.mubr.f32.gmra.mrb[0].mxu0 %v3258
    %v5938 = vpop.f32.mrb[0].mxu0
    %v5939 = vadd.f32 0.0, %v5938
    %v5940 = vpop.f32.mrb[0].mxu0
    %5941 = vmatprep.mubr.f32.mxu0 0.0
    %5942 = vmatmul.mubr.f32.gmra.mrb[0].mxu0 %v4121
    %v5943 = vpop.f32.mrb[0].mxu0
    %v5944 = vadd.f32 0.0, %v5943
    %v5945 = vpop.f32.mrb[0].mxu0
    %5946 = vmatprep.mubr.f32.mxu0 0.0
    %5947 = vmatmul.mubr.f32.gmra.mrb[0].mxu0 %v4984
    %v5948 = vpop.f32.mrb[0].mxu0
    %v5949 = vadd.f32 0.0, %v5948
    %v5950 = vpop.f32.mrb[0].mxu0
    %5951 = vmatprep.mubr.f32.mxu0 0.0
    %5952 = vmatmul.mubr.f32.gmra.mrb[0].mxu0 %v5847
    %v5953 = vpop.f32.mrb[0].mxu0
    %v5954 = vadd.f32 0.0, %v5953
    %v5955 = vpop.f32.mrb[0].mxu0
    %5956 = vmatprep.mubr.f32.mxu0 0.0
    %5957 = vmatmul.mubr.f32.gmra.mrb[0].mxu0 %v2370
    %v5958 = vpop.f32.mrb[0].mxu0
    %v5959 = vadd.f32 0.0, %v5958
    %v5960 = vpop.f32.mrb[0].mxu0
    %5961 = vmatprep.mubr.f32.mxu0 0.0
    %5962 = vmatmul.mubr.f32.gmra.mrb[0].mxu0 %v2372
    %v5963 = vpop.f32.mrb[0].mxu0
    %v5964 = vadd.f32 0.0, %v5963
    %v5965 = vpop.f32.mrb[0].mxu0
    %5966 = vmatprep.mubr.f32.mxu0 0.0
    %5967 = vmatmul.mubr.f32.gmra.mrb[0].mxu0 %v2374
    %v5968 = vpop.f32.mrb[0].mxu0
    %v5969 = vadd.f32 0.0, %v5968
    %v5970 = vpop.f32.mrb[0].mxu0
    %5971 = vmatprep.mubr.f32.mxu0 0.0
    %5972 = vmatmul.mubr.f32.gmra.mrb[0].mxu0 %v2376
    %v5973 = vpop.f32.mrb[0].mxu0
    %v5974 = vadd.f32 0.0, %v5973
    %v5975 = vpop.f32.mrb[0].mxu0
    %5976 = vmatprep.mubr.f32.mxu0 0.0
    %5977 = vmatmul.mubr.f32.gmra.mrb[0].mxu0 %v3261
    %v5978 = vpop.f32.mrb[0].mxu0
    %v5979 = vadd.f32 0.0, %v5978
    %v5980 = vpop.f32.mrb[0].mxu0
    %5981 = vmatprep.mubr.f32.mxu0 0.0
    %5982 = vmatmul.mubr.f32.gmra.mrb[0].mxu0 %v4124
    %v5983 = vpop.f32.mrb[0].mxu0
    %v5984 = vadd.f32 0.0, %v5983
    %v5985 = vpop.f32.mrb[0].mxu0
    %5986 = vmatprep.mubr.f32.mxu0 0.0
    %5987 = vmatmul.mubr.f32.gmra.mrb[0].mxu0 %v4987
    %v5988 = vpop.f32.mrb[0].mxu0
    %v5989 = vadd.f32 0.0, %v5988
    %v5990 = vpop.f32.mrb[0].mxu0
    %5991 = vmatprep.mubr.f32.mxu0 0.0
    %5992 = vmatmul.mubr.f32.gmra.mrb[0].mxu0 %v5850
    %v5993 = vpop.f32.mrb[0].mxu0
    %v5994 = vadd.f32 0.0, %v5993
    %v5995 = vpop.f32.mrb[0].mxu0
    %5996 = vdwg.mxu0
    %v5997 = vadd.f32 %v5828, %v5919
    %v5998 = vadd.f32 %v5829, %v5924
    %v5999 = vadd.f32 %v5830, %v5929
    %v6000 = vadd.f32 %v5831, %v5934
    %v6001 = vadd.f32 %v5832, %v5939
    %v6002 = vadd.f32 %v5833, %v5944
    %v6003 = vadd.f32 %v5834, %v5949
    %v6004 = vadd.f32 %v5835, %v5954
    %v6005 = vadd.f32 %v5836, %v5959
    %v6006 = vadd.f32 %v5837, %v5964
    %v6007 = vadd.f32 %v5838, %v5969
    %v6008 = vadd.f32 %v5839, %v5974
    %v6009 = vadd.f32 %v5840, %v5979
    %v6010 = vadd.f32 %v5841, %v5984
    %v6011 = vadd.f32 %v5842, %v5989
    %v6012 = vadd.f32 %v5843, %v5994
    %v6015 = vrot.slane %v2058, 1
    %v6016 = vrot.slane %v2059, 1
    %v6017 = vsel %vm2117, %v6015, %v6016
    %v6018 = vrot.slane %v2082, 1
    %v6019 = vrot.slane %v2083, 1
    %v6020 = vsel %vm2117, %v6018, %v6019
    %s6021 = scalar_lea.vmem %s3, 168
    %v6022 = vld [vmem:[%s6021] sm:$0xff]
    %v6023 = vsel %vm2168, %v6017, 0
    %v6025 = vsel %vm2168, %v6020, 0
    %6027 = vmatprep.subr.mxu0 0.0
    %6028 = vmatpush1.msra.mxu0 %v6022
    %6029 = vmatprep.subr.mxu0 0.0
    %6030 = vmatpush1.msra.mxu0 0.0
    %6031 = vmatprep.subr.mxu0 0.0
    %6032 = vmatpush1.msra.mxu0 0.0
    %6033 = vmatprep.subr.mxu0 0.0
    %6034 = vmatpush1.msra.mxu0 0.0
    %6035 = vmatprep.subr.mxu0 0.0
    %6036 = vmatpush1.msra.mxu0 0.0
    %6037 = vmatprep.subr.mxu0 0.0
    %6038 = vmatpush1.msra.mxu0 0.0
    %6039 = vmatprep.subr.mxu0 0.0
    %6040 = vmatpush1.msra.mxu0 0.0
    %6041 = vmatprep.subr.mxu0 0.0
    %6042 = vmatpush1.msra.mxu0 0.0
    %6043 = vmatprep.subr.mxu0 0.0
    %6044 = vmatpush1.msra.mxu0 0.0
    %6045 = vmatprep.subr.mxu0 0.0
    %6046 = vmatpush1.msra.mxu0 0.0
    %6047 = vmatprep.subr.mxu0 0.0
    %6048 = vmatpush1.msra.mxu0 0.0
    %6049 = vmatprep.subr.mxu0 0.0
    %6050 = vmatpush1.msra.mxu0 0.0
    %6051 = vmatprep.subr.mxu0 0.0
    %6052 = vmatpush1.msra.mxu0 0.0
    %6053 = vmatprep.subr.mxu0 0.0
    %6054 = vmatpush1.msra.mxu0 0.0
    %6055 = vmatprep.subr.mxu0 0.0
    %6056 = vmatpush1.msra.mxu0 0.0
    %6057 = vmatprep.subr.mxu0 0.0
    %6058 = vmatpush1.msra.mxu0 0.0
    %6059 = vmatprep.subr.mxu0 0.0
    %6060 = vmatpush1.msra.mxu0 0.0
    %6061 = vmatprep.subr.mxu0 0.0
    %6062 = vmatpush1.msra.mxu0 0.0
    %6063 = vmatprep.subr.mxu0 0.0
    %6064 = vmatpush1.msra.mxu0 0.0
    %6065 = vmatprep.subr.mxu0 0.0
    %6066 = vmatpush1.msra.mxu0 0.0
    %6067 = vmatprep.subr.mxu0 0.0
    %6068 = vmatpush1.msra.mxu0 0.0
    %6069 = vmatprep.subr.mxu0 0.0
    %6070 = vmatpush1.msra.mxu0 0.0
    %6071 = vmatprep.subr.mxu0 0.0
    %6072 = vmatpush1.msra.mxu0 0.0
    %6073 = vmatprep.subr.mxu0 0.0
    %6074 = vmatpush1.msra.mxu0 0.0
    %6075 = vmatprep.subr.mxu0 0.0
    %6076 = vmatpush1.msra.mxu0 0.0
    %6077 = vmatprep.subr.mxu0 0.0
    %6078 = vmatpush1.msra.mxu0 0.0
    %6079 = vmatprep.subr.mxu0 0.0
    %6080 = vmatpush1.msra.mxu0 0.0
    %6081 = vmatprep.subr.mxu0 0.0
    %6082 = vmatpush1.msra.mxu0 0.0
    %6083 = vmatprep.subr.mxu0 0.0
    %6084 = vmatpush1.msra.mxu0 0.0
    %6085 = vmatprep.subr.mxu0 0.0
    %6086 = vmatpush1.msra.mxu0 0.0
    %6087 = vmatprep.subr.mxu0 0.0
    %6088 = vmatpush1.msra.mxu0 0.0
    %6089 = vmatprep.subr.mxu0 0.0
    %6090 = vmatpush1.msra.mxu0 0.0
    %6091 = vmatprep.mubr.f32.mxu0 0.0
    %6092 = vmatmul.mubr.f32.gmra.mrb[0].mxu0 %v2177
    %v6093 = vpop.f32.mrb[0].mxu0
    %v6094 = vadd.f32 0.0, %v6093
    %v6095 = vpop.f32.mrb[0].mxu0
    %6096 = vmatprep.mubr.f32.mxu0 0.0
    %6097 = vmatmul.mubr.f32.gmra.mrb[0].mxu0 %v2179
    %v6098 = vpop.f32.mrb[0].mxu0
    %v6099 = vadd.f32 0.0, %v6098
    %v6100 = vpop.f32.mrb[0].mxu0
    %6101 = vmatprep.mubr.f32.mxu0 0.0
    %6102 = vmatmul.mubr.f32.gmra.mrb[0].mxu0 %v2181
    %v6103 = vpop.f32.mrb[0].mxu0
    %v6104 = vadd.f32 0.0, %v6103
    %v6105 = vpop.f32.mrb[0].mxu0
    %6106 = vmatprep.mubr.f32.mxu0 0.0
    %6107 = vmatmul.mubr.f32.gmra.mrb[0].mxu0 %v2183
    %v6108 = vpop.f32.mrb[0].mxu0
    %v6109 = vadd.f32 0.0, %v6108
    %v6110 = vpop.f32.mrb[0].mxu0
    %6111 = vmatprep.mubr.f32.mxu0 0.0
    %6112 = vmatmul.mubr.f32.gmra.mrb[0].mxu0 %v3434
    %v6113 = vpop.f32.mrb[0].mxu0
    %v6114 = vadd.f32 0.0, %v6113
    %v6115 = vpop.f32.mrb[0].mxu0
    %6116 = vmatprep.mubr.f32.mxu0 0.0
    %6117 = vmatmul.mubr.f32.gmra.mrb[0].mxu0 %v4297
    %v6118 = vpop.f32.mrb[0].mxu0
    %v6119 = vadd.f32 0.0, %v6118
    %v6120 = vpop.f32.mrb[0].mxu0
    %6121 = vmatprep.mubr.f32.mxu0 0.0
    %6122 = vmatmul.mubr.f32.gmra.mrb[0].mxu0 %v5160
    %v6123 = vpop.f32.mrb[0].mxu0
    %v6124 = vadd.f32 0.0, %v6123
    %v6125 = vpop.f32.mrb[0].mxu0
    %6126 = vmatprep.mubr.f32.mxu0 0.0
    %6127 = vmatmul.mubr.f32.gmra.mrb[0].mxu0 %v6023
    %v6128 = vpop.f32.mrb[0].mxu0
    %v6129 = vadd.f32 0.0, %v6128
    %v6130 = vpop.f32.mrb[0].mxu0
    %6131 = vmatprep.mubr.f32.mxu0 0.0
    %6132 = vmatmul.mubr.f32.gmra.mrb[0].mxu0 %v2193
    %v6133 = vpop.f32.mrb[0].mxu0
    %v6134 = vadd.f32 0.0, %v6133
    %v6135 = vpop.f32.mrb[0].mxu0
    %6136 = vmatprep.mubr.f32.mxu0 0.0
    %6137 = vmatmul.mubr.f32.gmra.mrb[0].mxu0 %v2195
    %v6138 = vpop.f32.mrb[0].mxu0
    %v6139 = vadd.f32 0.0, %v6138
    %v6140 = vpop.f32.mrb[0].mxu0
    %6141 = vmatprep.mubr.f32.mxu0 0.0
    %6142 = vmatmul.mubr.f32.gmra.mrb[0].mxu0 %v2197
    %v6143 = vpop.f32.mrb[0].mxu0
    %v6144 = vadd.f32 0.0, %v6143
    %v6145 = vpop.f32.mrb[0].mxu0
    %6146 = vmatprep.mubr.f32.mxu0 0.0
    %6147 = vmatmul.mubr.f32.gmra.mrb[0].mxu0 %v2199
    %v6148 = vpop.f32.mrb[0].mxu0
    %v6149 = vadd.f32 0.0, %v6148
    %v6150 = vpop.f32.mrb[0].mxu0
    %6151 = vmatprep.mubr.f32.mxu0 0.0
    %6152 = vmatmul.mubr.f32.gmra.mrb[0].mxu0 %v3436
    %v6153 = vpop.f32.mrb[0].mxu0
    %v6154 = vadd.f32 0.0, %v6153
    %v6155 = vpop.f32.mrb[0].mxu0
    %6156 = vmatprep.mubr.f32.mxu0 0.0
    %6157 = vmatmul.mubr.f32.gmra.mrb[0].mxu0 %v4299
    %v6158 = vpop.f32.mrb[0].mxu0
    %v6159 = vadd.f32 0.0, %v6158
    %v6160 = vpop.f32.mrb[0].mxu0
    %6161 = vmatprep.mubr.f32.mxu0 0.0
    %6162 = vmatmul.mubr.f32.gmra.mrb[0].mxu0 %v5162
    %v6163 = vpop.f32.mrb[0].mxu0
    %v6164 = vadd.f32 0.0, %v6163
    %v6165 = vpop.f32.mrb[0].mxu0
    %6166 = vmatprep.mubr.f32.mxu0 0.0
    %6167 = vmatmul.mubr.f32.gmra.mrb[0].mxu0 %v6025
    %v6168 = vpop.f32.mrb[0].mxu0
    %v6169 = vadd.f32 0.0, %v6168
    %v6170 = vpop.f32.mrb[0].mxu0
    %6171 = vdwg.mxu0
    %v6172 = vadd.f32 %v5997, %v6094
    %v6173 = vadd.f32 %v5998, %v6099
    %v6174 = vadd.f32 %v5999, %v6104
    %v6175 = vadd.f32 %v6000, %v6109
    %v6176 = vadd.f32 %v6001, %v6114
    %v6177 = vadd.f32 %v6002, %v6119
    %v6178 = vadd.f32 %v6003, %v6124
    %v6179 = vadd.f32 %v6004, %v6129
    %v6180 = vadd.f32 %v6005, %v6134
    %v6181 = vadd.f32 %v6006, %v6139
    %v6182 = vadd.f32 %v6007, %v6144
    %v6183 = vadd.f32 %v6008, %v6149
    %v6184 = vadd.f32 %v6009, %v6154
    %v6185 = vadd.f32 %v6010, %v6159
    %v6186 = vadd.f32 %v6011, %v6164
    %v6187 = vadd.f32 %v6012, %v6169
    %v6188 = vrot.slane %v2058, 2
    %v6189 = vrot.slane %v2059, 2
    %v6190 = vsel %vm2523, %v6188, %v6189
    %v6191 = vrot.slane %v2082, 2
    %v6192 = vrot.slane %v2083, 2
    %v6193 = vsel %vm2523, %v6191, %v6192
    %s6194 = scalar_lea.vmem %s3, 176
    %v6195 = vld [vmem:[%s6194] sm:$0xff]
    %v6196 = vsel %vm2168, %v6190, 0
    %v6198 = vsel %vm2168, %v6193, 0
    %6200 = vmatprep.subr.mxu0 0.0
    %6201 = vmatpush1.msra.mxu0 %v6195
    %6202 = vmatprep.subr.mxu0 0.0
    %6203 = vmatpush1.msra.mxu0 0.0
    %6204 = vmatprep.subr.mxu0 0.0
    %6205 = vmatpush1.msra.mxu0 0.0
    %6206 = vmatprep.subr.mxu0 0.0
    %6207 = vmatpush1.msra.mxu0 0.0
    %6208 = vmatprep.subr.mxu0 0.0
    %6209 = vmatpush1.msra.mxu0 0.0
    %6210 = vmatprep.subr.mxu0 0.0
    %6211 = vmatpush1.msra.mxu0 0.0
    %6212 = vmatprep.subr.mxu0 0.0
    %6213 = vmatpush1.msra.mxu0 0.0
    %6214 = vmatprep.subr.mxu0 0.0
    %6215 = vmatpush1.msra.mxu0 0.0
    %6216 = vmatprep.subr.mxu0 0.0
    %6217 = vmatpush1.msra.mxu0 0.0
    %6218 = vmatprep.subr.mxu0 0.0
    %6219 = vmatpush1.msra.mxu0 0.0
    %6220 = vmatprep.subr.mxu0 0.0
    %6221 = vmatpush1.msra.mxu0 0.0
    %6222 = vmatprep.subr.mxu0 0.0
    %6223 = vmatpush1.msra.mxu0 0.0
    %6224 = vmatprep.subr.mxu0 0.0
    %6225 = vmatpush1.msra.mxu0 0.0
    %6226 = vmatprep.subr.mxu0 0.0
    %6227 = vmatpush1.msra.mxu0 0.0
    %6228 = vmatprep.subr.mxu0 0.0
    %6229 = vmatpush1.msra.mxu0 0.0
    %6230 = vmatprep.subr.mxu0 0.0
    %6231 = vmatpush1.msra.mxu0 0.0
    %6232 = vmatprep.subr.mxu0 0.0
    %6233 = vmatpush1.msra.mxu0 0.0
    %6234 = vmatprep.subr.mxu0 0.0
    %6235 = vmatpush1.msra.mxu0 0.0
    %6236 = vmatprep.subr.mxu0 0.0
    %6237 = vmatpush1.msra.mxu0 0.0
    %6238 = vmatprep.subr.mxu0 0.0
    %6239 = vmatpush1.msra.mxu0 0.0
    %6240 = vmatprep.subr.mxu0 0.0
    %6241 = vmatpush1.msra.mxu0 0.0
    %6242 = vmatprep.subr.mxu0 0.0
    %6243 = vmatpush1.msra.mxu0 0.0
    %6244 = vmatprep.subr.mxu0 0.0
    %6245 = vmatpush1.msra.mxu0 0.0
    %6246 = vmatprep.subr.mxu0 0.0
    %6247 = vmatpush1.msra.mxu0 0.0
    %6248 = vmatprep.subr.mxu0 0.0
    %6249 = vmatpush1.msra.mxu0 0.0
    %6250 = vmatprep.subr.mxu0 0.0
    %6251 = vmatpush1.msra.mxu0 0.0
    %6252 = vmatprep.subr.mxu0 0.0
    %6253 = vmatpush1.msra.mxu0 0.0
    %6254 = vmatprep.subr.mxu0 0.0
    %6255 = vmatpush1.msra.mxu0 0.0
    %6256 = vmatprep.subr.mxu0 0.0
    %6257 = vmatpush1.msra.mxu0 0.0
    %6258 = vmatprep.subr.mxu0 0.0
    %6259 = vmatpush1.msra.mxu0 0.0
    %6260 = vmatprep.subr.mxu0 0.0
    %6261 = vmatpush1.msra.mxu0 0.0
    %6262 = vmatprep.subr.mxu0 0.0
    %6263 = vmatpush1.msra.mxu0 0.0
    %6264 = vmatprep.mubr.f32.mxu0 0.0
    %6265 = vmatmul.mubr.f32.gmra.mrb[0].mxu0 %v2582
    %v6266 = vpop.f32.mrb[0].mxu0
    %v6267 = vadd.f32 0.0, %v6266
    %v6268 = vpop.f32.mrb[0].mxu0
    %6269 = vmatprep.mubr.f32.mxu0 0.0
    %6270 = vmatmul.mubr.f32.gmra.mrb[0].mxu0 %v2584
    %v6271 = vpop.f32.mrb[0].mxu0
    %v6272 = vadd.f32 0.0, %v6271
    %v6273 = vpop.f32.mrb[0].mxu0
    %6274 = vmatprep.mubr.f32.mxu0 0.0
    %6275 = vmatmul.mubr.f32.gmra.mrb[0].mxu0 %v2586
    %v6276 = vpop.f32.mrb[0].mxu0
    %v6277 = vadd.f32 0.0, %v6276
    %v6278 = vpop.f32.mrb[0].mxu0
    %6279 = vmatprep.mubr.f32.mxu0 0.0
    %6280 = vmatmul.mubr.f32.gmra.mrb[0].mxu0 %v2588
    %v6281 = vpop.f32.mrb[0].mxu0
    %v6282 = vadd.f32 0.0, %v6281
    %v6283 = vpop.f32.mrb[0].mxu0
    %6284 = vmatprep.mubr.f32.mxu0 0.0
    %6285 = vmatmul.mubr.f32.gmra.mrb[0].mxu0 %v3607
    %v6286 = vpop.f32.mrb[0].mxu0
    %v6287 = vadd.f32 0.0, %v6286
    %v6288 = vpop.f32.mrb[0].mxu0
    %6289 = vmatprep.mubr.f32.mxu0 0.0
    %6290 = vmatmul.mubr.f32.gmra.mrb[0].mxu0 %v4470
    %v6291 = vpop.f32.mrb[0].mxu0
    %v6292 = vadd.f32 0.0, %v6291
    %v6293 = vpop.f32.mrb[0].mxu0
    %6294 = vmatprep.mubr.f32.mxu0 0.0
    %6295 = vmatmul.mubr.f32.gmra.mrb[0].mxu0 %v5333
    %v6296 = vpop.f32.mrb[0].mxu0
    %v6297 = vadd.f32 0.0, %v6296
    %v6298 = vpop.f32.mrb[0].mxu0
    %6299 = vmatprep.mubr.f32.mxu0 0.0
    %6300 = vmatmul.mubr.f32.gmra.mrb[0].mxu0 %v6196
    %v6301 = vpop.f32.mrb[0].mxu0
    %v6302 = vadd.f32 0.0, %v6301
    %v6303 = vpop.f32.mrb[0].mxu0
    %6304 = vmatprep.mubr.f32.mxu0 0.0
    %6305 = vmatmul.mubr.f32.gmra.mrb[0].mxu0 %v2598
    %v6306 = vpop.f32.mrb[0].mxu0
    %v6307 = vadd.f32 0.0, %v6306
    %v6308 = vpop.f32.mrb[0].mxu0
    %6309 = vmatprep.mubr.f32.mxu0 0.0
    %6310 = vmatmul.mubr.f32.gmra.mrb[0].mxu0 %v2600
    %v6311 = vpop.f32.mrb[0].mxu0
    %v6312 = vadd.f32 0.0, %v6311
    %v6313 = vpop.f32.mrb[0].mxu0
    %6314 = vmatprep.mubr.f32.mxu0 0.0
    %6315 = vmatmul.mubr.f32.gmra.mrb[0].mxu0 %v2602
    %v6316 = vpop.f32.mrb[0].mxu0
    %v6317 = vadd.f32 0.0, %v6316
    %v6318 = vpop.f32.mrb[0].mxu0
    %6319 = vmatprep.mubr.f32.mxu0 0.0
    %6320 = vmatmul.mubr.f32.gmra.mrb[0].mxu0 %v2604
    %v6321 = vpop.f32.mrb[0].mxu0
    %v6322 = vadd.f32 0.0, %v6321
    %v6323 = vpop.f32.mrb[0].mxu0
    %6324 = vmatprep.mubr.f32.mxu0 0.0
    %6325 = vmatmul.mubr.f32.gmra.mrb[0].mxu0 %v3609
    %v6326 = vpop.f32.mrb[0].mxu0
    %v6327 = vadd.f32 0.0, %v6326
    %v6328 = vpop.f32.mrb[0].mxu0
    %6329 = vmatprep.mubr.f32.mxu0 0.0
    %6330 = vmatmul.mubr.f32.gmra.mrb[0].mxu0 %v4472
    %v6331 = vpop.f32.mrb[0].mxu0
    %v6332 = vadd.f32 0.0, %v6331
    %v6333 = vpop.f32.mrb[0].mxu0
    %6334 = vmatprep.mubr.f32.mxu0 0.0
    %6335 = vmatmul.mubr.f32.gmra.mrb[0].mxu0 %v5335
    %v6336 = vpop.f32.mrb[0].mxu0
    %v6337 = vadd.f32 0.0, %v6336
    %v6338 = vpop.f32.mrb[0].mxu0
    %6339 = vmatprep.mubr.f32.mxu0 0.0
    %6340 = vmatmul.mubr.f32.gmra.mrb[0].mxu0 %v6198
    %v6341 = vpop.f32.mrb[0].mxu0
    %v6342 = vadd.f32 0.0, %v6341
    %v6343 = vpop.f32.mrb[0].mxu0
    %6344 = vdwg.mxu0
    %v6345 = vadd.f32 %v6172, %v6267
    %v6346 = vadd.f32 %v6173, %v6272
    %v6347 = vadd.f32 %v6174, %v6277
    %v6348 = vadd.f32 %v6175, %v6282
    %v6349 = vadd.f32 %v6176, %v6287
    %v6350 = vadd.f32 %v6177, %v6292
    %v6351 = vadd.f32 %v6178, %v6297
    %v6352 = vadd.f32 %v6179, %v6302
    %v6353 = vadd.f32 %v6180, %v6307
    %v6354 = vadd.f32 %v6181, %v6312
    %v6355 = vadd.f32 %v6182, %v6317
    %v6356 = vadd.f32 %v6183, %v6322
    %v6357 = vadd.f32 %v6184, %v6327
    %v6358 = vadd.f32 %v6185, %v6332
    %v6359 = vadd.f32 %v6186, %v6337
    %v6360 = vadd.f32 %v6187, %v6342
    %v6361 = vrot.slane %v2058, 3
    %v6362 = vrot.slane %v2059, 3
    %v6363 = vsel %vm2767, %v6361, %v6362
    %v6364 = vrot.slane %v2082, 3
    %v6365 = vrot.slane %v2083, 3
    %v6366 = vsel %vm2767, %v6364, %v6365
    %s6367 = scalar_lea.vmem %s3, 184
    %v6368 = vld [vmem:[%s6367] sm:$0xff]
    %v6369 = vsel %vm2168, %v6363, 0
    %v6371 = vsel %vm2168, %v6366, 0
    %6373 = vmatprep.subr.mxu0 0.0
    %6374 = vmatpush1.msra.mxu0 %v6368
    %6375 = vmatprep.subr.mxu0 0.0
    %6376 = vmatpush1.msra.mxu0 0.0
    %6377 = vmatprep.subr.mxu0 0.0
    %6378 = vmatpush1.msra.mxu0 0.0
    %6379 = vmatprep.subr.mxu0 0.0
    %6380 = vmatpush1.msra.mxu0 0.0
    %6381 = vmatprep.subr.mxu0 0.0
    %6382 = vmatpush1.msra.mxu0 0.0
    %6383 = vmatprep.subr.mxu0 0.0
    %6384 = vmatpush1.msra.mxu0 0.0
    %6385 = vmatprep.subr.mxu0 0.0
    %6386 = vmatpush1.msra.mxu0 0.0
    %6387 = vmatprep.subr.mxu0 0.0
    %6388 = vmatpush1.msra.mxu0 0.0
    %6389 = vmatprep.subr.mxu0 0.0
    %6390 = vmatpush1.msra.mxu0 0.0
    %6391 = vmatprep.subr.mxu0 0.0
    %6392 = vmatpush1.msra.mxu0 0.0
    %6393 = vmatprep.subr.mxu0 0.0
    %6394 = vmatpush1.msra.mxu0 0.0
    %6395 = vmatprep.subr.mxu0 0.0
    %6396 = vmatpush1.msra.mxu0 0.0
    %6397 = vmatprep.subr.mxu0 0.0
    %6398 = vmatpush1.msra.mxu0 0.0
    %6399 = vmatprep.subr.mxu0 0.0
    %6400 = vmatpush1.msra.mxu0 0.0
    %6401 = vmatprep.subr.mxu0 0.0
    %6402 = vmatpush1.msra.mxu0 0.0
    %6403 = vmatprep.subr.mxu0 0.0
    %6404 = vmatpush1.msra.mxu0 0.0
    %6405 = vmatprep.subr.mxu0 0.0
    %6406 = vmatpush1.msra.mxu0 0.0
    %6407 = vmatprep.subr.mxu0 0.0
    %6408 = vmatpush1.msra.mxu0 0.0
    %6409 = vmatprep.subr.mxu0 0.0
    %6410 = vmatpush1.msra.mxu0 0.0
    %6411 = vmatprep.subr.mxu0 0.0
    %6412 = vmatpush1.msra.mxu0 0.0
    %6413 = vmatprep.subr.mxu0 0.0
    %6414 = vmatpush1.msra.mxu0 0.0
    %6415 = vmatprep.subr.mxu0 0.0
    %6416 = vmatpush1.msra.mxu0 0.0
    %6417 = vmatprep.subr.mxu0 0.0
    %6418 = vmatpush1.msra.mxu0 0.0
    %6419 = vmatprep.subr.mxu0 0.0
    %6420 = vmatpush1.msra.mxu0 0.0
    %6421 = vmatprep.subr.mxu0 0.0
    %6422 = vmatpush1.msra.mxu0 0.0
    %6423 = vmatprep.subr.mxu0 0.0
    %6424 = vmatpush1.msra.mxu0 0.0
    %6425 = vmatprep.subr.mxu0 0.0
    %6426 = vmatpush1.msra.mxu0 0.0
    %6427 = vmatprep.subr.mxu0 0.0
    %6428 = vmatpush1.msra.mxu0 0.0
    %6429 = vmatprep.subr.mxu0 0.0
    %6430 = vmatpush1.msra.mxu0 0.0
    %6431 = vmatprep.subr.mxu0 0.0
    %6432 = vmatpush1.msra.mxu0 0.0
    %6433 = vmatprep.subr.mxu0 0.0
    %6434 = vmatpush1.msra.mxu0 0.0
    %6435 = vmatprep.subr.mxu0 0.0
    %6436 = vmatpush1.msra.mxu0 0.0
    %6437 = vmatprep.mubr.f32.mxu0 0.0
    %6438 = vmatmul.mubr.f32.gmra.mrb[0].mxu0 %v2826
    %v6439 = vpop.f32.mrb[0].mxu0
    %v6440 = vadd.f32 0.0, %v6439
    %v6441 = vpop.f32.mrb[0].mxu0
    %6442 = vmatprep.mubr.f32.mxu0 0.0
    %6443 = vmatmul.mubr.f32.gmra.mrb[0].mxu0 %v2828
    %v6444 = vpop.f32.mrb[0].mxu0
    %v6445 = vadd.f32 0.0, %v6444
    %v6446 = vpop.f32.mrb[0].mxu0
    %6447 = vmatprep.mubr.f32.mxu0 0.0
    %6448 = vmatmul.mubr.f32.gmra.mrb[0].mxu0 %v2830
    %v6449 = vpop.f32.mrb[0].mxu0
    %v6450 = vadd.f32 0.0, %v6449
    %v6451 = vpop.f32.mrb[0].mxu0
    %6452 = vmatprep.mubr.f32.mxu0 0.0
    %6453 = vmatmul.mubr.f32.gmra.mrb[0].mxu0 %v2832
    %v6454 = vpop.f32.mrb[0].mxu0
    %v6455 = vadd.f32 0.0, %v6454
    %v6456 = vpop.f32.mrb[0].mxu0
    %6457 = vmatprep.mubr.f32.mxu0 0.0
    %6458 = vmatmul.mubr.f32.gmra.mrb[0].mxu0 %v3780
    %v6459 = vpop.f32.mrb[0].mxu0
    %v6460 = vadd.f32 0.0, %v6459
    %v6461 = vpop.f32.mrb[0].mxu0
    %6462 = vmatprep.mubr.f32.mxu0 0.0
    %6463 = vmatmul.mubr.f32.gmra.mrb[0].mxu0 %v4643
    %v6464 = vpop.f32.mrb[0].mxu0
    %v6465 = vadd.f32 0.0, %v6464
    %v6466 = vpop.f32.mrb[0].mxu0
    %6467 = vmatprep.mubr.f32.mxu0 0.0
    %6468 = vmatmul.mubr.f32.gmra.mrb[0].mxu0 %v5506
    %v6469 = vpop.f32.mrb[0].mxu0
    %v6470 = vadd.f32 0.0, %v6469
    %v6471 = vpop.f32.mrb[0].mxu0
    %6472 = vmatprep.mubr.f32.mxu0 0.0
    %6473 = vmatmul.mubr.f32.gmra.mrb[0].mxu0 %v6369
    %v6474 = vpop.f32.mrb[0].mxu0
    %v6475 = vadd.f32 0.0, %v6474
    %v6476 = vpop.f32.mrb[0].mxu0
    %6477 = vmatprep.mubr.f32.mxu0 0.0
    %6478 = vmatmul.mubr.f32.gmra.mrb[0].mxu0 %v2842
    %v6479 = vpop.f32.mrb[0].mxu0
    %v6480 = vadd.f32 0.0, %v6479
    %v6481 = vpop.f32.mrb[0].mxu0
    %6482 = vmatprep.mubr.f32.mxu0 0.0
    %6483 = vmatmul.mubr.f32.gmra.mrb[0].mxu0 %v2844
    %v6484 = vpop.f32.mrb[0].mxu0
    %v6485 = vadd.f32 0.0, %v6484
    %v6486 = vpop.f32.mrb[0].mxu0
    %6487 = vmatprep.mubr.f32.mxu0 0.0
    %6488 = vmatmul.mubr.f32.gmra.mrb[0].mxu0 %v2846
    %v6489 = vpop.f32.mrb[0].mxu0
    %v6490 = vadd.f32 0.0, %v6489
    %v6491 = vpop.f32.mrb[0].mxu0
    %6492 = vmatprep.mubr.f32.mxu0 0.0
    %6493 = vmatmul.mubr.f32.gmra.mrb[0].mxu0 %v2848
    %v6494 = vpop.f32.mrb[0].mxu0
    %v6495 = vadd.f32 0.0, %v6494
    %v6496 = vpop.f32.mrb[0].mxu0
    %6497 = vmatprep.mubr.f32.mxu0 0.0
    %6498 = vmatmul.mubr.f32.gmra.mrb[0].mxu0 %v3782
    %v6499 = vpop.f32.mrb[0].mxu0
    %v6500 = vadd.f32 0.0, %v6499
    %v6501 = vpop.f32.mrb[0].mxu0
    %6502 = vmatprep.mubr.f32.mxu0 0.0
    %6503 = vmatmul.mubr.f32.gmra.mrb[0].mxu0 %v4645
    %v6504 = vpop.f32.mrb[0].mxu0
    %v6505 = vadd.f32 0.0, %v6504
    %v6506 = vpop.f32.mrb[0].mxu0
    %6507 = vmatprep.mubr.f32.mxu0 0.0
    %6508 = vmatmul.mubr.f32.gmra.mrb[0].mxu0 %v5508
    %v6509 = vpop.f32.mrb[0].mxu0
    %v6510 = vadd.f32 0.0, %v6509
    %v6511 = vpop.f32.mrb[0].mxu0
    %6512 = vmatprep.mubr.f32.mxu0 0.0
    %6513 = vmatmul.mubr.f32.gmra.mrb[0].mxu0 %v6371
    %v6514 = vpop.f32.mrb[0].mxu0
    %v6515 = vadd.f32 0.0, %v6514
    %v6516 = vpop.f32.mrb[0].mxu0
    %6517 = vdwg.mxu0
    %v6518 = vadd.f32 %v6345, %v6440
    %v6519 = vadd.f32 %v6346, %v6445
    %v6520 = vadd.f32 %v6347, %v6450
    %v6521 = vadd.f32 %v6348, %v6455
    %v6522 = vadd.f32 %v6349, %v6460
    %v6523 = vadd.f32 %v6350, %v6465
    %v6524 = vadd.f32 %v6351, %v6470
    %v6525 = vadd.f32 %v6352, %v6475
    %v6526 = vadd.f32 %v6353, %v6480
    %v6527 = vadd.f32 %v6354, %v6485
    %v6528 = vadd.f32 %v6355, %v6490
    %v6529 = vadd.f32 %v6356, %v6495
    %v6530 = vadd.f32 %v6357, %v6500
    %v6531 = vadd.f32 %v6358, %v6505
    %v6532 = vadd.f32 %v6359, %v6510
    %v6533 = vadd.f32 %v6360, %v6515
    %v6534 = vrot.slane %v2058, 4
    %v6535 = vrot.slane %v2059, 4
    %v6536 = vsel %vm3011, %v6534, %v6535
    %v6537 = vrot.slane %v2082, 4
    %v6538 = vrot.slane %v2083, 4
    %v6539 = vsel %vm3011, %v6537, %v6538
    %s6540 = scalar_lea.vmem %s3, 192
    %v6541 = vld [vmem:[%s6540] sm:$0xff]
    %v6542 = vsel %vm2168, %v6536, 0
    %v6544 = vsel %vm2168, %v6539, 0
    %6546 = vmatprep.subr.mxu0 0.0
    %6547 = vmatpush1.msra.mxu0 %v6541
    %6548 = vmatprep.subr.mxu0 0.0
    %6549 = vmatpush1.msra.mxu0 0.0
    %6550 = vmatprep.subr.mxu0 0.0
    %6551 = vmatpush1.msra.mxu0 0.0
    %6552 = vmatprep.subr.mxu0 0.0
    %6553 = vmatpush1.msra.mxu0 0.0
    %6554 = vmatprep.subr.mxu0 0.0
    %6555 = vmatpush1.msra.mxu0 0.0
    %6556 = vmatprep.subr.mxu0 0.0
    %6557 = vmatpush1.msra.mxu0 0.0
    %6558 = vmatprep.subr.mxu0 0.0
    %6559 = vmatpush1.msra.mxu0 0.0
    %6560 = vmatprep.subr.mxu0 0.0
    %6561 = vmatpush1.msra.mxu0 0.0
    %6562 = vmatprep.subr.mxu0 0.0
    %6563 = vmatpush1.msra.mxu0 0.0
    %6564 = vmatprep.subr.mxu0 0.0
    %6565 = vmatpush1.msra.mxu0 0.0
    %6566 = vmatprep.subr.mxu0 0.0
    %6567 = vmatpush1.msra.mxu0 0.0
    %6568 = vmatprep.subr.mxu0 0.0
    %6569 = vmatpush1.msra.mxu0 0.0
    %6570 = vmatprep.subr.mxu0 0.0
    %6571 = vmatpush1.msra.mxu0 0.0
    %6572 = vmatprep.subr.mxu0 0.0
    %6573 = vmatpush1.msra.mxu0 0.0
    %6574 = vmatprep.subr.mxu0 0.0
    %6575 = vmatpush1.msra.mxu0 0.0
    %6576 = vmatprep.subr.mxu0 0.0
    %6577 = vmatpush1.msra.mxu0 0.0
    %6578 = vmatprep.subr.mxu0 0.0
    %6579 = vmatpush1.msra.mxu0 0.0
    %6580 = vmatprep.subr.mxu0 0.0
    %6581 = vmatpush1.msra.mxu0 0.0
    %6582 = vmatprep.subr.mxu0 0.0
    %6583 = vmatpush1.msra.mxu0 0.0
    %6584 = vmatprep.subr.mxu0 0.0
    %6585 = vmatpush1.msra.mxu0 0.0
    %6586 = vmatprep.subr.mxu0 0.0
    %6587 = vmatpush1.msra.mxu0 0.0
    %6588 = vmatprep.subr.mxu0 0.0
    %6589 = vmatpush1.msra.mxu0 0.0
    %6590 = vmatprep.subr.mxu0 0.0
    %6591 = vmatpush1.msra.mxu0 0.0
    %6592 = vmatprep.subr.mxu0 0.0
    %6593 = vmatpush1.msra.mxu0 0.0
    %6594 = vmatprep.subr.mxu0 0.0
    %6595 = vmatpush1.msra.mxu0 0.0
    %6596 = vmatprep.subr.mxu0 0.0
    %6597 = vmatpush1.msra.mxu0 0.0
    %6598 = vmatprep.subr.mxu0 0.0
    %6599 = vmatpush1.msra.mxu0 0.0
    %6600 = vmatprep.subr.mxu0 0.0
    %6601 = vmatpush1.msra.mxu0 0.0
    %6602 = vmatprep.subr.mxu0 0.0
    %6603 = vmatpush1.msra.mxu0 0.0
    %6604 = vmatprep.subr.mxu0 0.0
    %6605 = vmatpush1.msra.mxu0 0.0
    %6606 = vmatprep.subr.mxu0 0.0
    %6607 = vmatpush1.msra.mxu0 0.0
    %6608 = vmatprep.subr.mxu0 0.0
    %6609 = vmatpush1.msra.mxu0 0.0
    %6610 = vmatprep.mubr.f32.mxu0 0.0
    %6611 = vmatmul.mubr.f32.gmra.mrb[0].mxu0 %v3070
    %v6612 = vpop.f32.mrb[0].mxu0
    %v6613 = vadd.f32 0.0, %v6612
    %v6614 = vpop.f32.mrb[0].mxu0
    %6615 = vmatprep.mubr.f32.mxu0 0.0
    %6616 = vmatmul.mubr.f32.gmra.mrb[0].mxu0 %v3072
    %v6617 = vpop.f32.mrb[0].mxu0
    %v6618 = vadd.f32 0.0, %v6617
    %v6619 = vpop.f32.mrb[0].mxu0
    %6620 = vmatprep.mubr.f32.mxu0 0.0
    %6621 = vmatmul.mubr.f32.gmra.mrb[0].mxu0 %v3074
    %v6622 = vpop.f32.mrb[0].mxu0
    %v6623 = vadd.f32 0.0, %v6622
    %v6624 = vpop.f32.mrb[0].mxu0
    %6625 = vmatprep.mubr.f32.mxu0 0.0
    %6626 = vmatmul.mubr.f32.gmra.mrb[0].mxu0 %v3076
    %v6627 = vpop.f32.mrb[0].mxu0
    %v6628 = vadd.f32 0.0, %v6627
    %v6629 = vpop.f32.mrb[0].mxu0
    %6630 = vmatprep.mubr.f32.mxu0 0.0
    %6631 = vmatmul.mubr.f32.gmra.mrb[0].mxu0 %v3953
    %v6632 = vpop.f32.mrb[0].mxu0
    %v6633 = vadd.f32 0.0, %v6632
    %v6634 = vpop.f32.mrb[0].mxu0
    %6635 = vmatprep.mubr.f32.mxu0 0.0
    %6636 = vmatmul.mubr.f32.gmra.mrb[0].mxu0 %v4816
    %v6637 = vpop.f32.mrb[0].mxu0
    %v6638 = vadd.f32 0.0, %v6637
    %v6639 = vpop.f32.mrb[0].mxu0
    %6640 = vmatprep.mubr.f32.mxu0 0.0
    %6641 = vmatmul.mubr.f32.gmra.mrb[0].mxu0 %v5679
    %v6642 = vpop.f32.mrb[0].mxu0
    %v6643 = vadd.f32 0.0, %v6642
    %v6644 = vpop.f32.mrb[0].mxu0
    %6645 = vmatprep.mubr.f32.mxu0 0.0
    %6646 = vmatmul.mubr.f32.gmra.mrb[0].mxu0 %v6542
    %v6647 = vpop.f32.mrb[0].mxu0
    %v6648 = vadd.f32 0.0, %v6647
    %v6649 = vpop.f32.mrb[0].mxu0
    %6650 = vmatprep.mubr.f32.mxu0 0.0
    %6651 = vmatmul.mubr.f32.gmra.mrb[0].mxu0 %v3086
    %v6652 = vpop.f32.mrb[0].mxu0
    %v6653 = vadd.f32 0.0, %v6652
    %v6654 = vpop.f32.mrb[0].mxu0
    %6655 = vmatprep.mubr.f32.mxu0 0.0
    %6656 = vmatmul.mubr.f32.gmra.mrb[0].mxu0 %v3088
    %v6657 = vpop.f32.mrb[0].mxu0
    %v6658 = vadd.f32 0.0, %v6657
    %v6659 = vpop.f32.mrb[0].mxu0
    %6660 = vmatprep.mubr.f32.mxu0 0.0
    %6661 = vmatmul.mubr.f32.gmra.mrb[0].mxu0 %v3090
    %v6662 = vpop.f32.mrb[0].mxu0
    %v6663 = vadd.f32 0.0, %v6662
    %v6664 = vpop.f32.mrb[0].mxu0
    %6665 = vmatprep.mubr.f32.mxu0 0.0
    %6666 = vmatmul.mubr.f32.gmra.mrb[0].mxu0 %v3092
    %v6667 = vpop.f32.mrb[0].mxu0
    %v6668 = vadd.f32 0.0, %v6667
    %v6669 = vpop.f32.mrb[0].mxu0
    %6670 = vmatprep.mubr.f32.mxu0 0.0
    %6671 = vmatmul.mubr.f32.gmra.mrb[0].mxu0 %v3955
    %v6672 = vpop.f32.mrb[0].mxu0
    %v6673 = vadd.f32 0.0, %v6672
    %v6674 = vpop.f32.mrb[0].mxu0
    %6675 = vmatprep.mubr.f32.mxu0 0.0
    %6676 = vmatmul.mubr.f32.gmra.mrb[0].mxu0 %v4818
    %v6677 = vpop.f32.mrb[0].mxu0
    %v6678 = vadd.f32 0.0, %v6677
    %v6679 = vpop.f32.mrb[0].mxu0
    %6680 = vmatprep.mubr.f32.mxu0 0.0
    %6681 = vmatmul.mubr.f32.gmra.mrb[0].mxu0 %v5681
    %v6682 = vpop.f32.mrb[0].mxu0
    %v6683 = vadd.f32 0.0, %v6682
    %v6684 = vpop.f32.mrb[0].mxu0
    %6685 = vmatprep.mubr.f32.mxu0 0.0
    %6686 = vmatmul.mubr.f32.gmra.mrb[0].mxu0 %v6544
    %v6687 = vpop.f32.mrb[0].mxu0
    %v6688 = vadd.f32 0.0, %v6687
    %v6689 = vpop.f32.mrb[0].mxu0
    %6690 = vdwg.mxu0
    %v6691 = vadd.f32 %v6518, %v6613
    %v6692 = vadd.f32 %v6519, %v6618
    %v6693 = vadd.f32 %v6520, %v6623
    %v6694 = vadd.f32 %v6521, %v6628
    %v6695 = vadd.f32 %v6522, %v6633
    %v6696 = vadd.f32 %v6523, %v6638
    %v6697 = vadd.f32 %v6524, %v6643
    %v6698 = vadd.f32 %v6525, %v6648
    %v6699 = vadd.f32 %v6526, %v6653
    %v6700 = vadd.f32 %v6527, %v6658
    %v6701 = vadd.f32 %v6528, %v6663
    %v6702 = vadd.f32 %v6529, %v6668
    %v6703 = vadd.f32 %v6530, %v6673
    %v6704 = vadd.f32 %v6531, %v6678
    %v6705 = vadd.f32 %v6532, %v6683
    %v6706 = vadd.f32 %v6533, %v6688
    %v6709 = vrot.slane %v6691, 1
    %v6710 = vrot.slane %v6699, 1
    %v6713 = vmax.f32 %v6691, %v6709
    %v6714 = vmax.f32 %v6699, %v6710
    %v6717 = vrot.slane %v6692, 1
    %v6718 = vrot.slane %v6700, 1
    %v6721 = vmax.f32 %v6692, %v6717
    %v6722 = vmax.f32 %v6700, %v6718
    %v6723 = vmax.f32 %v6713, %v6721
    %v6724 = vmax.f32 %v6714, %v6722
    %v6725 = vld [vmem:[%s4] sm:$0x1]
    %v6727 = vlaneseq
    %v6728 = vshrl.u32 %v6727, 7
    %v6729 = vsub.s32 0, %v6728
    %v6730 = vrot.slane %v6725, %v6729
    %v6732 = vadd.f32 %v6723, %v6730
    %v6733 = vadd.f32 %v6724, %v6730
    %v6734 = vmax.f32 %v6732, 0.0
    %v6735 = vmax.f32 %v6733, 0.0
    %v6736 = vld [vmem:[%s5] sm:$0xff]
    %v6737 = vld [vmem:[%s5 + $0x8] sm:$0xff]
    %s6738 = scalar_lea.vmem %s5, 16
    %v6739 = vld [vmem:[%s6738] sm:$0xff]
    %v6740 = vld [vmem:[%s6738 + $0x8] sm:$0xff]
    %v6743 = vrot.slane %v6734, 2
    %v6744 = vrot.slane %v6735, 1
    %vm6745 = vcmask 1041409
    %v6746 = vsel %vm6745, %v6744, %v6743
    %vm6747 = vcmask 130048
    %v6748 = vsel %vm6747, %v6746, 0
    %6750 = vmatprep.subr.mxu0 0.0
    %6751 = vmatpush1.msra.mxu0 %v6739
    %6752 = vmatprep.subr.mxu0 0.0
    %6753 = vmatpush1.msra.mxu0 %v6740
    %6754 = vmatprep.subr.mxu0 0.0
    %6755 = vmatpush1.msra.mxu0 0.0
    %6756 = vmatprep.subr.mxu0 0.0
    %6757 = vmatpush1.msra.mxu0 0.0
    %6758 = vmatprep.subr.mxu0 0.0
    %6759 = vmatpush1.msra.mxu0 0.0
    %6760 = vmatprep.subr.mxu0 0.0
    %6761 = vmatpush1.msra.mxu0 0.0
    %6762 = vmatprep.subr.mxu0 0.0
    %6763 = vmatpush1.msra.mxu0 0.0
    %6764 = vmatprep.subr.mxu0 0.0
    %6765 = vmatpush1.msra.mxu0 0.0
    %6766 = vmatprep.subr.mxu0 0.0
    %6767 = vmatpush1.msra.mxu0 0.0
    %6768 = vmatprep.subr.mxu0 0.0
    %6769 = vmatpush1.msra.mxu0 0.0
    %6770 = vmatprep.subr.mxu0 0.0
    %6771 = vmatpush1.msra.mxu0 0.0
    %6772 = vmatprep.subr.mxu0 0.0
    %6773 = vmatpush1.msra.mxu0 0.0
    %6774 = vmatprep.subr.mxu0 0.0
    %6775 = vmatpush1.msra.mxu0 0.0
    %6776 = vmatprep.subr.mxu0 0.0
    %6777 = vmatpush1.msra.mxu0 0.0
    %6778 = vmatprep.subr.mxu0 0.0
    %6779 = vmatpush1.msra.mxu0 0.0
    %6780 = vmatprep.subr.mxu0 0.0
    %6781 = vmatpush1.msra.mxu0 0.0
    %6782 = vmatprep.subr.mxu0 0.0
    %6783 = vmatpush1.msra.mxu0 0.0
    %6784 = vmatprep.subr.mxu0 0.0
    %6785 = vmatpush1.msra.mxu0 0.0
    %6786 = vmatprep.subr.mxu0 0.0
    %6787 = vmatpush1.msra.mxu0 0.0
    %6788 = vmatprep.subr.mxu0 0.0
    %6789 = vmatpush1.msra.mxu0 0.0
    %6790 = vmatprep.subr.mxu0 0.0
    %6791 = vmatpush1.msra.mxu0 0.0
    %6792 = vmatprep.subr.mxu0 0.0
    %6793 = vmatpush1.msra.mxu0 0.0
    %6794 = vmatprep.subr.mxu0 0.0
    %6795 = vmatpush1.msra.mxu0 0.0
    %6796 = vmatprep.subr.mxu0 0.0
    %6797 = vmatpush1.msra.mxu0 0.0
    %6798 = vmatprep.subr.mxu0 0.0
    %6799 = vmatpush1.msra.mxu0 0.0
    %6800 = vmatprep.subr.mxu0 0.0
    %6801 = vmatpush1.msra.mxu0 0.0
    %6802 = vmatprep.subr.mxu0 0.0
    %6803 = vmatpush1.msra.mxu0 0.0
    %6804 = vmatprep.subr.mxu0 0.0
    %6805 = vmatpush1.msra.mxu0 0.0
    %6806 = vmatprep.subr.mxu0 0.0
    %6807 = vmatpush1.msra.mxu0 0.0
    %6808 = vmatprep.subr.mxu0 0.0
    %6809 = vmatpush1.msra.mxu0 0.0
    %6810 = vmatprep.subr.mxu0 0.0
    %6811 = vmatpush1.msra.mxu0 0.0
    %6812 = vmatprep.subr.mxu0 0.0
    %6813 = vmatpush1.msra.mxu0 0.0
    %6814 = vmatprep.mubr.f32.mxu0 0.0
    %6815 = vmatmul.mubr.f32.gmra.mrb[0].mxu0 %v6748
    %v6816 = vpop.f32.mrb[0].mxu0
    %v6817 = vadd.f32 0.0, %v6816
    %v6818 = vpop.f32.mrb[0].mxu0
    %6819 = vdwg.mxu0
    %v6820 = vrot.slane %v6735, 7
    %v6821 = vsel %vm6745, %v6820, %v6734
    %v6822 = vsel %vm6747, %v6821, 0
    %6824 = vmatprep.subr.mxu0 0.0
    %6825 = vmatpush1.msra.mxu0 %v6736
    %6826 = vmatprep.subr.mxu0 0.0
    %6827 = vmatpush1.msra.mxu0 %v6737
    %6828 = vmatprep.subr.mxu0 0.0
    %6829 = vmatpush1.msra.mxu0 0.0
    %6830 = vmatprep.subr.mxu0 0.0
    %6831 = vmatpush1.msra.mxu0 0.0
    %6832 = vmatprep.subr.mxu0 0.0
    %6833 = vmatpush1.msra.mxu0 0.0
    %6834 = vmatprep.subr.mxu0 0.0
    %6835 = vmatpush1.msra.mxu0 0.0
    %6836 = vmatprep.subr.mxu0 0.0
    %6837 = vmatpush1.msra.mxu0 0.0
    %6838 = vmatprep.subr.mxu0 0.0
    %6839 = vmatpush1.msra.mxu0 0.0
    %6840 = vmatprep.subr.mxu0 0.0
    %6841 = vmatpush1.msra.mxu0 0.0
    %6842 = vmatprep.subr.mxu0 0.0
    %6843 = vmatpush1.msra.mxu0 0.0
    %6844 = vmatprep.subr.mxu0 0.0
    %6845 = vmatpush1.msra.mxu0 0.0
    %6846 = vmatprep.subr.mxu0 0.0
    %6847 = vmatpush1.msra.mxu0 0.0
    %6848 = vmatprep.subr.mxu0 0.0
    %6849 = vmatpush1.msra.mxu0 0.0
    %6850 = vmatprep.subr.mxu0 0.0
    %6851 = vmatpush1.msra.mxu0 0.0
    %6852 = vmatprep.subr.mxu0 0.0
    %6853 = vmatpush1.msra.mxu0 0.0
    %6854 = vmatprep.subr.mxu0 0.0
    %6855 = vmatpush1.msra.mxu0 0.0
    %6856 = vmatprep.subr.mxu0 0.0
    %6857 = vmatpush1.msra.mxu0 0.0
    %6858 = vmatprep.subr.mxu0 0.0
    %6859 = vmatpush1.msra.mxu0 0.0
    %6860 = vmatprep.subr.mxu0 0.0
    %6861 = vmatpush1.msra.mxu0 0.0
    %6862 = vmatprep.subr.mxu0 0.0
    %6863 = vmatpush1.msra.mxu0 0.0
    %6864 = vmatprep.subr.mxu0 0.0
    %6865 = vmatpush1.msra.mxu0 0.0
    %6866 = vmatprep.subr.mxu0 0.0
    %6867 = vmatpush1.msra.mxu0 0.0
    %6868 = vmatprep.subr.mxu0 0.0
    %6869 = vmatpush1.msra.mxu0 0.0
    %6870 = vmatprep.subr.mxu0 0.0
    %6871 = vmatpush1.msra.mxu0 0.0
    %6872 = vmatprep.subr.mxu0 0.0
    %6873 = vmatpush1.msra.mxu0 0.0
    %6874 = vmatprep.subr.mxu0 0.0
    %6875 = vmatpush1.msra.mxu0 0.0
    %6876 = vmatprep.subr.mxu0 0.0
    %6877 = vmatpush1.msra.mxu0 0.0
    %6878 = vmatprep.subr.mxu0 0.0
    %6879 = vmatpush1.msra.mxu0 0.0
    %6880 = vmatprep.subr.mxu0 0.0
    %6881 = vmatpush1.msra.mxu0 0.0
    %6882 = vmatprep.subr.mxu0 0.0
    %6883 = vmatpush1.msra.mxu0 0.0
    %6884 = vmatprep.subr.mxu0 0.0
    %6885 = vmatpush1.msra.mxu0 0.0
    %6886 = vmatprep.subr.mxu0 0.0
    %6887 = vmatpush1.msra.mxu0 0.0
    %6888 = vmatprep.mubr.f32.mxu0 0.0
    %6889 = vmatmul.mubr.f32.gmra.mrb[0].mxu0 %v6822
    %v6890 = vpop.f32.mrb[0].mxu0
    %v6891 = vadd.f32 %v6817, %v6890
    %v6892 = vpop.f32.mrb[0].mxu0
    %6893 = vdwg.mxu0
    %s6894 = scalar_lea.vmem %s5, 32
    %v6895 = vld [vmem:[%s6894] sm:$0xff]
    %v6896 = vld [vmem:[%s6894 + $0x8] sm:$0xff]
    %v6897 = vrot.slane %v6734, 4
    %v6898 = vrot.slane %v6735, 3
    %v6899 = vsel %vm6745, %v6898, %v6897
    %v6900 = vsel %vm6747, %v6899, 0
    %6902 = vmatprep.subr.mxu0 0.0
    %6903 = vmatpush1.msra.mxu0 %v6895
    %6904 = vmatprep.subr.mxu0 0.0
    %6905 = vmatpush1.msra.mxu0 %v6896
    %6906 = vmatprep.subr.mxu0 0.0
    %6907 = vmatpush1.msra.mxu0 0.0
    %6908 = vmatprep.subr.mxu0 0.0
    %6909 = vmatpush1.msra.mxu0 0.0
    %6910 = vmatprep.subr.mxu0 0.0
    %6911 = vmatpush1.msra.mxu0 0.0
    %6912 = vmatprep.subr.mxu0 0.0
    %6913 = vmatpush1.msra.mxu0 0.0
    %6914 = vmatprep.subr.mxu0 0.0
    %6915 = vmatpush1.msra.mxu0 0.0
    %6916 = vmatprep.subr.mxu0 0.0
    %6917 = vmatpush1.msra.mxu0 0.0
    %6918 = vmatprep.subr.mxu0 0.0
    %6919 = vmatpush1.msra.mxu0 0.0
    %6920 = vmatprep.subr.mxu0 0.0
    %6921 = vmatpush1.msra.mxu0 0.0
    %6922 = vmatprep.subr.mxu0 0.0
    %6923 = vmatpush1.msra.mxu0 0.0
    %6924 = vmatprep.subr.mxu0 0.0
    %6925 = vmatpush1.msra.mxu0 0.0
    %6926 = vmatprep.subr.mxu0 0.0
    %6927 = vmatpush1.msra.mxu0 0.0
    %6928 = vmatprep.subr.mxu0 0.0
    %6929 = vmatpush1.msra.mxu0 0.0
    %6930 = vmatprep.subr.mxu0 0.0
    %6931 = vmatpush1.msra.mxu0 0.0
    %6932 = vmatprep.subr.mxu0 0.0
    %6933 = vmatpush1.msra.mxu0 0.0
    %6934 = vmatprep.subr.mxu0 0.0
    %6935 = vmatpush1.msra.mxu0 0.0
    %6936 = vmatprep.subr.mxu0 0.0
    %6937 = vmatpush1.msra.mxu0 0.0
    %6938 = vmatprep.subr.mxu0 0.0
    %6939 = vmatpush1.msra.mxu0 0.0
    %6940 = vmatprep.subr.mxu0 0.0
    %6941 = vmatpush1.msra.mxu0 0.0
    %6942 = vmatprep.subr.mxu0 0.0
    %6943 = vmatpush1.msra.mxu0 0.0
    %6944 = vmatprep.subr.mxu0 0.0
    %6945 = vmatpush1.msra.mxu0 0.0
    %6946 = vmatprep.subr.mxu0 0.0
    %6947 = vmatpush1.msra.mxu0 0.0
    %6948 = vmatprep.subr.mxu0 0.0
    %6949 = vmatpush1.msra.mxu0 0.0
    %6950 = vmatprep.subr.mxu0 0.0
    %6951 = vmatpush1.msra.mxu0 0.0
    %6952 = vmatprep.subr.mxu0 0.0
    %6953 = vmatpush1.msra.mxu0 0.0
    %6954 = vmatprep.subr.mxu0 0.0
    %6955 = vmatpush1.msra.mxu0 0.0
    %6956 = vmatprep.subr.mxu0 0.0
    %6957 = vmatpush1.msra.mxu0 0.0
    %6958 = vmatprep.subr.mxu0 0.0
    %6959 = vmatpush1.msra.mxu0 0.0
    %6960 = vmatprep.subr.mxu0 0.0
    %6961 = vmatpush1.msra.mxu0 0.0
    %6962 = vmatprep.subr.mxu0 0.0
    %6963 = vmatpush1.msra.mxu0 0.0
    %6964 = vmatprep.subr.mxu0 0.0
    %6965 = vmatpush1.msra.mxu0 0.0
    %6966 = vmatprep.mubr.f32.mxu0 0.0
    %6967 = vmatmul.mubr.f32.gmra.mrb[0].mxu0 %v6900
    %v6968 = vpop.f32.mrb[0].mxu0
    %v6969 = vadd.f32 0.0, %v6968
    %v6970 = vpop.f32.mrb[0].mxu0
    %6971 = vdwg.mxu0
    %v6972 = vadd.f32 %v6891, %v6969
    %s6973 = scalar_lea.vmem %s5, 48
    %v6974 = vld [vmem:[%s6973] sm:$0xff]
    %v6975 = vld [vmem:[%s6973 + $0x8] sm:$0xff]
    %v6976 = vrot.slane %v6734, 6
    %v6977 = vrot.slane %v6735, 5
    %v6978 = vsel %vm6745, %v6977, %v6976
    %v6979 = vsel %vm6747, %v6978, 0
    %6981 = vmatprep.subr.mxu0 0.0
    %6982 = vmatpush1.msra.mxu0 %v6974
    %6983 = vmatprep.subr.mxu0 0.0
    %6984 = vmatpush1.msra.mxu0 %v6975
    %6985 = vmatprep.subr.mxu0 0.0
    %6986 = vmatpush1.msra.mxu0 0.0
    %6987 = vmatprep.subr.mxu0 0.0
    %6988 = vmatpush1.msra.mxu0 0.0
    %6989 = vmatprep.subr.mxu0 0.0
    %6990 = vmatpush1.msra.mxu0 0.0
    %6991 = vmatprep.subr.mxu0 0.0
    %6992 = vmatpush1.msra.mxu0 0.0
    %6993 = vmatprep.subr.mxu0 0.0
    %6994 = vmatpush1.msra.mxu0 0.0
    %6995 = vmatprep.subr.mxu0 0.0
    %6996 = vmatpush1.msra.mxu0 0.0
    %6997 = vmatprep.subr.mxu0 0.0
    %6998 = vmatpush1.msra.mxu0 0.0
    %6999 = vmatprep.subr.mxu0 0.0
    %7000 = vmatpush1.msra.mxu0 0.0
    %7001 = vmatprep.subr.mxu0 0.0
    %7002 = vmatpush1.msra.mxu0 0.0
    %7003 = vmatprep.subr.mxu0 0.0
    %7004 = vmatpush1.msra.mxu0 0.0
    %7005 = vmatprep.subr.mxu0 0.0
    %7006 = vmatpush1.msra.mxu0 0.0
    %7007 = vmatprep.subr.mxu0 0.0
    %7008 = vmatpush1.msra.mxu0 0.0
    %7009 = vmatprep.subr.mxu0 0.0
    %7010 = vmatpush1.msra.mxu0 0.0
    %7011 = vmatprep.subr.mxu0 0.0
    %7012 = vmatpush1.msra.mxu0 0.0
    %7013 = vmatprep.subr.mxu0 0.0
    %7014 = vmatpush1.msra.mxu0 0.0
    %7015 = vmatprep.subr.mxu0 0.0
    %7016 = vmatpush1.msra.mxu0 0.0
    %7017 = vmatprep.subr.mxu0 0.0
    %7018 = vmatpush1.msra.mxu0 0.0
    %7019 = vmatprep.subr.mxu0 0.0
    %7020 = vmatpush1.msra.mxu0 0.0
    %7021 = vmatprep.subr.mxu0 0.0
    %7022 = vmatpush1.msra.mxu0 0.0
    %7023 = vmatprep.subr.mxu0 0.0
    %7024 = vmatpush1.msra.mxu0 0.0
    %7025 = vmatprep.subr.mxu0 0.0
    %7026 = vmatpush1.msra.mxu0 0.0
    %7027 = vmatprep.subr.mxu0 0.0
    %7028 = vmatpush1.msra.mxu0 0.0
    %7029 = vmatprep.subr.mxu0 0.0
    %7030 = vmatpush1.msra.mxu0 0.0
    %7031 = vmatprep.subr.mxu0 0.0
    %7032 = vmatpush1.msra.mxu0 0.0
    %7033 = vmatprep.subr.mxu0 0.0
    %7034 = vmatpush1.msra.mxu0 0.0
    %7035 = vmatprep.subr.mxu0 0.0
    %7036 = vmatpush1.msra.mxu0 0.0
    %7037 = vmatprep.subr.mxu0 0.0
    %7038 = vmatpush1.msra.mxu0 0.0
    %7039 = vmatprep.subr.mxu0 0.0
    %7040 = vmatpush1.msra.mxu0 0.0
    %7041 = vmatprep.subr.mxu0 0.0
    %7042 = vmatpush1.msra.mxu0 0.0
    %7043 = vmatprep.subr.mxu0 0.0
    %7044 = vmatpush1.msra.mxu0 0.0
    %7045 = vmatprep.mubr.f32.mxu0 0.0
    %7046 = vmatmul.mubr.f32.gmra.mrb[0].mxu0 %v6979
    %v7047 = vpop.f32.mrb[0].mxu0
    %v7048 = vadd.f32 0.0, %v7047
    %v7049 = vpop.f32.mrb[0].mxu0
    %7050 = vdwg.mxu0
    %v7051 = vadd.f32 %v6972, %v7048
    %v7054 = vrot.slane %v6693, 1
    %v7055 = vrot.slane %v6701, 1
    %v7058 = vmax.f32 %v6693, %v7054
    %v7059 = vmax.f32 %v6701, %v7055
    %v7062 = vrot.slane %v6694, 1
    %v7063 = vrot.slane %v6702, 1
    %v7066 = vmax.f32 %v6694, %v7062
    %v7067 = vmax.f32 %v6702, %v7063
    %v7068 = vmax.f32 %v7058, %v7066
    %v7069 = vmax.f32 %v7059, %v7067
    %v7070 = vadd.f32 %v7068, %v6730
    %v7071 = vadd.f32 %v7069, %v6730
    %v7072 = vmax.f32 %v7070, 0.0
    %v7073 = vmax.f32 %v7071, 0.0
    %s7074 = scalar_lea.vmem %s5, 64
    %v7075 = vld [vmem:[%s7074] sm:$0xff]
    %v7076 = vld [vmem:[%s7074 + $0x8] sm:$0xff]
    %v7079 = vrot.slane %v7073, 7
    %v7080 = vsel %vm6745, %v7079, %v7072
    %v7081 = vsel %vm6747, %v7080, 0
    %7083 = vmatprep.subr.mxu0 0.0
    %7084 = vmatpush1.msra.mxu0 %v7075
    %7085 = vmatprep.subr.mxu0 0.0
    %7086 = vmatpush1.msra.mxu0 %v7076
    %7087 = vmatprep.subr.mxu0 0.0
    %7088 = vmatpush1.msra.mxu0 0.0
    %7089 = vmatprep.subr.mxu0 0.0
    %7090 = vmatpush1.msra.mxu0 0.0
    %7091 = vmatprep.subr.mxu0 0.0
    %7092 = vmatpush1.msra.mxu0 0.0
    %7093 = vmatprep.subr.mxu0 0.0
    %7094 = vmatpush1.msra.mxu0 0.0
    %7095 = vmatprep.subr.mxu0 0.0
    %7096 = vmatpush1.msra.mxu0 0.0
    %7097 = vmatprep.subr.mxu0 0.0
    %7098 = vmatpush1.msra.mxu0 0.0
    %7099 = vmatprep.subr.mxu0 0.0
    %7100 = vmatpush1.msra.mxu0 0.0
    %7101 = vmatprep.subr.mxu0 0.0
    %7102 = vmatpush1.msra.mxu0 0.0
    %7103 = vmatprep.subr.mxu0 0.0
    %7104 = vmatpush1.msra.mxu0 0.0
    %7105 = vmatprep.subr.mxu0 0.0
    %7106 = vmatpush1.msra.mxu0 0.0
    %7107 = vmatprep.subr.mxu0 0.0
    %7108 = vmatpush1.msra.mxu0 0.0
    %7109 = vmatprep.subr.mxu0 0.0
    %7110 = vmatpush1.msra.mxu0 0.0
    %7111 = vmatprep.subr.mxu0 0.0
    %7112 = vmatpush1.msra.mxu0 0.0
    %7113 = vmatprep.subr.mxu0 0.0
    %7114 = vmatpush1.msra.mxu0 0.0
    %7115 = vmatprep.subr.mxu0 0.0
    %7116 = vmatpush1.msra.mxu0 0.0
    %7117 = vmatprep.subr.mxu0 0.0
    %7118 = vmatpush1.msra.mxu0 0.0
    %7119 = vmatprep.subr.mxu0 0.0
    %7120 = vmatpush1.msra.mxu0 0.0
    %7121 = vmatprep.subr.mxu0 0.0
    %7122 = vmatpush1.msra.mxu0 0.0
    %7123 = vmatprep.subr.mxu0 0.0
    %7124 = vmatpush1.msra.mxu0 0.0
    %7125 = vmatprep.subr.mxu0 0.0
    %7126 = vmatpush1.msra.mxu0 0.0
    %7127 = vmatprep.subr.mxu0 0.0
    %7128 = vmatpush1.msra.mxu0 0.0
    %7129 = vmatprep.subr.mxu0 0.0
    %7130 = vmatpush1.msra.mxu0 0.0
    %7131 = vmatprep.subr.mxu0 0.0
    %7132 = vmatpush1.msra.mxu0 0.0
    %7133 = vmatprep.subr.mxu0 0.0
    %7134 = vmatpush1.msra.mxu0 0.0
    %7135 = vmatprep.subr.mxu0 0.0
    %7136 = vmatpush1.msra.mxu0 0.0
    %7137 = vmatprep.subr.mxu0 0.0
    %7138 = vmatpush1.msra.mxu0 0.0
    %7139 = vmatprep.subr.mxu0 0.0
    %7140 = vmatpush1.msra.mxu0 0.0
    %7141 = vmatprep.subr.mxu0 0.0
    %7142 = vmatpush1.msra.mxu0 0.0
    %7143 = vmatprep.subr.mxu0 0.0
    %7144 = vmatpush1.msra.mxu0 0.0
    %7145 = vmatprep.subr.mxu0 0.0
    %7146 = vmatpush1.msra.mxu0 0.0
    %7147 = vmatprep.mubr.f32.mxu0 0.0
    %7148 = vmatmul.mubr.f32.gmra.mrb[0].mxu0 %v7081
    %v7149 = vpop.f32.mrb[0].mxu0
    %v7150 = vadd.f32 0.0, %v7149
    %v7151 = vpop.f32.mrb[0].mxu0
    %7152 = vdwg.mxu0
    %v7153 = vadd.f32 %v7051, %v7150
    %s7154 = scalar_lea.vmem %s5, 80
    %v7155 = vld [vmem:[%s7154] sm:$0xff]
    %v7156 = vld [vmem:[%s7154 + $0x8] sm:$0xff]
    %v7157 = vrot.slane %v7072, 2
    %v7158 = vrot.slane %v7073, 1
    %v7159 = vsel %vm6745, %v7158, %v7157
    %v7160 = vsel %vm6747, %v7159, 0
    %7162 = vmatprep.subr.mxu0 0.0
    %7163 = vmatpush1.msra.mxu0 %v7155
    %7164 = vmatprep.subr.mxu0 0.0
    %7165 = vmatpush1.msra.mxu0 %v7156
    %7166 = vmatprep.subr.mxu0 0.0
    %7167 = vmatpush1.msra.mxu0 0.0
    %7168 = vmatprep.subr.mxu0 0.0
    %7169 = vmatpush1.msra.mxu0 0.0
    %7170 = vmatprep.subr.mxu0 0.0
    %7171 = vmatpush1.msra.mxu0 0.0
    %7172 = vmatprep.subr.mxu0 0.0
    %7173 = vmatpush1.msra.mxu0 0.0
    %7174 = vmatprep.subr.mxu0 0.0
    %7175 = vmatpush1.msra.mxu0 0.0
    %7176 = vmatprep.subr.mxu0 0.0
    %7177 = vmatpush1.msra.mxu0 0.0
    %7178 = vmatprep.subr.mxu0 0.0
    %7179 = vmatpush1.msra.mxu0 0.0
    %7180 = vmatprep.subr.mxu0 0.0
    %7181 = vmatpush1.msra.mxu0 0.0
    %7182 = vmatprep.subr.mxu0 0.0
    %7183 = vmatpush1.msra.mxu0 0.0
    %7184 = vmatprep.subr.mxu0 0.0
    %7185 = vmatpush1.msra.mxu0 0.0
    %7186 = vmatprep.subr.mxu0 0.0
    %7187 = vmatpush1.msra.mxu0 0.0
    %7188 = vmatprep.subr.mxu0 0.0
    %7189 = vmatpush1.msra.mxu0 0.0
    %7190 = vmatprep.subr.mxu0 0.0
    %7191 = vmatpush1.msra.mxu0 0.0
    %7192 = vmatprep.subr.mxu0 0.0
    %7193 = vmatpush1.msra.mxu0 0.0
    %7194 = vmatprep.subr.mxu0 0.0
    %7195 = vmatpush1.msra.mxu0 0.0
    %7196 = vmatprep.subr.mxu0 0.0
    %7197 = vmatpush1.msra.mxu0 0.0
    %7198 = vmatprep.subr.mxu0 0.0
    %7199 = vmatpush1.msra.mxu0 0.0
    %7200 = vmatprep.subr.mxu0 0.0
    %7201 = vmatpush1.msra.mxu0 0.0
    %7202 = vmatprep.subr.mxu0 0.0
    %7203 = vmatpush1.msra.mxu0 0.0
    %7204 = vmatprep.subr.mxu0 0.0
    %7205 = vmatpush1.msra.mxu0 0.0
    %7206 = vmatprep.subr.mxu0 0.0
    %7207 = vmatpush1.msra.mxu0 0.0
    %7208 = vmatprep.subr.mxu0 0.0
    %7209 = vmatpush1.msra.mxu0 0.0
    %7210 = vmatprep.subr.mxu0 0.0
    %7211 = vmatpush1.msra.mxu0 0.0
    %7212 = vmatprep.subr.mxu0 0.0
    %7213 = vmatpush1.msra.mxu0 0.0
    %7214 = vmatprep.subr.mxu0 0.0
    %7215 = vmatpush1.msra.mxu0 0.0
    %7216 = vmatprep.subr.mxu0 0.0
    %7217 = vmatpush1.msra.mxu0 0.0
    %7218 = vmatprep.subr.mxu0 0.0
    %7219 = vmatpush1.msra.mxu0 0.0
    %7220 = vmatprep.subr.mxu0 0.0
    %7221 = vmatpush1.msra.mxu0 0.0
    %7222 = vmatprep.subr.mxu0 0.0
    %7223 = vmatpush1.msra.mxu0 0.0
    %7224 = vmatprep.subr.mxu0 0.0
    %7225 = vmatpush1.msra.mxu0 0.0
    %7226 = vmatprep.mubr.f32.mxu0 0.0
    %7227 = vmatmul.mubr.f32.gmra.mrb[0].mxu0 %v7160
    %v7228 = vpop.f32.mrb[0].mxu0
    %v7229 = vadd.f32 0.0, %v7228
    %v7230 = vpop.f32.mrb[0].mxu0
    %7231 = vdwg.mxu0
    %v7232 = vadd.f32 %v7153, %v7229
    %s7233 = scalar_lea.vmem %s5, 96
    %v7234 = vld [vmem:[%s7233] sm:$0xff]
    %v7235 = vld [vmem:[%s7233 + $0x8] sm:$0xff]
    %v7236 = vrot.slane %v7072, 4
    %v7237 = vrot.slane %v7073, 3
    %v7238 = vsel %vm6745, %v7237, %v7236
    %v7239 = vsel %vm6747, %v7238, 0
    %7241 = vmatprep.subr.mxu0 0.0
    %7242 = vmatpush1.msra.mxu0 %v7234
    %7243 = vmatprep.subr.mxu0 0.0
    %7244 = vmatpush1.msra.mxu0 %v7235
    %7245 = vmatprep.subr.mxu0 0.0
    %7246 = vmatpush1.msra.mxu0 0.0
    %7247 = vmatprep.subr.mxu0 0.0
    %7248 = vmatpush1.msra.mxu0 0.0
    %7249 = vmatprep.subr.mxu0 0.0
    %7250 = vmatpush1.msra.mxu0 0.0
    %7251 = vmatprep.subr.mxu0 0.0
    %7252 = vmatpush1.msra.mxu0 0.0
    %7253 = vmatprep.subr.mxu0 0.0
    %7254 = vmatpush1.msra.mxu0 0.0
    %7255 = vmatprep.subr.mxu0 0.0
    %7256 = vmatpush1.msra.mxu0 0.0
    %7257 = vmatprep.subr.mxu0 0.0
    %7258 = vmatpush1.msra.mxu0 0.0
    %7259 = vmatprep.subr.mxu0 0.0
    %7260 = vmatpush1.msra.mxu0 0.0
    %7261 = vmatprep.subr.mxu0 0.0
    %7262 = vmatpush1.msra.mxu0 0.0
    %7263 = vmatprep.subr.mxu0 0.0
    %7264 = vmatpush1.msra.mxu0 0.0
    %7265 = vmatprep.subr.mxu0 0.0
    %7266 = vmatpush1.msra.mxu0 0.0
    %7267 = vmatprep.subr.mxu0 0.0
    %7268 = vmatpush1.msra.mxu0 0.0
    %7269 = vmatprep.subr.mxu0 0.0
    %7270 = vmatpush1.msra.mxu0 0.0
    %7271 = vmatprep.subr.mxu0 0.0
    %7272 = vmatpush1.msra.mxu0 0.0
    %7273 = vmatprep.subr.mxu0 0.0
    %7274 = vmatpush1.msra.mxu0 0.0
    %7275 = vmatprep.subr.mxu0 0.0
    %7276 = vmatpush1.msra.mxu0 0.0
    %7277 = vmatprep.subr.mxu0 0.0
    %7278 = vmatpush1.msra.mxu0 0.0
    %7279 = vmatprep.subr.mxu0 0.0
    %7280 = vmatpush1.msra.mxu0 0.0
    %7281 = vmatprep.subr.mxu0 0.0
    %7282 = vmatpush1.msra.mxu0 0.0
    %7283 = vmatprep.subr.mxu0 0.0
    %7284 = vmatpush1.msra.mxu0 0.0
    %7285 = vmatprep.subr.mxu0 0.0
    %7286 = vmatpush1.msra.mxu0 0.0
    %7287 = vmatprep.subr.mxu0 0.0
    %7288 = vmatpush1.msra.mxu0 0.0
    %7289 = vmatprep.subr.mxu0 0.0
    %7290 = vmatpush1.msra.mxu0 0.0
    %7291 = vmatprep.subr.mxu0 0.0
    %7292 = vmatpush1.msra.mxu0 0.0
    %7293 = vmatprep.subr.mxu0 0.0
    %7294 = vmatpush1.msra.mxu0 0.0
    %7295 = vmatprep.subr.mxu0 0.0
    %7296 = vmatpush1.msra.mxu0 0.0
    %7297 = vmatprep.subr.mxu0 0.0
    %7298 = vmatpush1.msra.mxu0 0.0
    %7299 = vmatprep.subr.mxu0 0.0
    %7300 = vmatpush1.msra.mxu0 0.0
    %7301 = vmatprep.subr.mxu0 0.0
    %7302 = vmatpush1.msra.mxu0 0.0
    %7303 = vmatprep.subr.mxu0 0.0
    %7304 = vmatpush1.msra.mxu0 0.0
    %7305 = vmatprep.mubr.f32.mxu0 0.0
    %7306 = vmatmul.mubr.f32.gmra.mrb[0].mxu0 %v7239
    %v7307 = vpop.f32.mrb[0].mxu0
    %v7308 = vadd.f32 0.0, %v7307
    %v7309 = vpop.f32.mrb[0].mxu0
    %7310 = vdwg.mxu0
    %v7311 = vadd.f32 %v7232, %v7308
    %s7312 = scalar_lea.vmem %s5, 112
    %v7313 = vld [vmem:[%s7312] sm:$0xff]
    %v7314 = vld [vmem:[%s7312 + $0x8] sm:$0xff]
    %v7315 = vrot.slane %v7072, 6
    %v7316 = vrot.slane %v7073, 5
    %v7317 = vsel %vm6745, %v7316, %v7315
    %v7318 = vsel %vm6747, %v7317, 0
    %7320 = vmatprep.subr.mxu0 0.0
    %7321 = vmatpush1.msra.mxu0 %v7313
    %7322 = vmatprep.subr.mxu0 0.0
    %7323 = vmatpush1.msra.mxu0 %v7314
    %7324 = vmatprep.subr.mxu0 0.0
    %7325 = vmatpush1.msra.mxu0 0.0
    %7326 = vmatprep.subr.mxu0 0.0
    %7327 = vmatpush1.msra.mxu0 0.0
    %7328 = vmatprep.subr.mxu0 0.0
    %7329 = vmatpush1.msra.mxu0 0.0
    %7330 = vmatprep.subr.mxu0 0.0
    %7331 = vmatpush1.msra.mxu0 0.0
    %7332 = vmatprep.subr.mxu0 0.0
    %7333 = vmatpush1.msra.mxu0 0.0
    %7334 = vmatprep.subr.mxu0 0.0
    %7335 = vmatpush1.msra.mxu0 0.0
    %7336 = vmatprep.subr.mxu0 0.0
    %7337 = vmatpush1.msra.mxu0 0.0
    %7338 = vmatprep.subr.mxu0 0.0
    %7339 = vmatpush1.msra.mxu0 0.0
    %7340 = vmatprep.subr.mxu0 0.0
    %7341 = vmatpush1.msra.mxu0 0.0
    %7342 = vmatprep.subr.mxu0 0.0
    %7343 = vmatpush1.msra.mxu0 0.0
    %7344 = vmatprep.subr.mxu0 0.0
    %7345 = vmatpush1.msra.mxu0 0.0
    %7346 = vmatprep.subr.mxu0 0.0
    %7347 = vmatpush1.msra.mxu0 0.0
    %7348 = vmatprep.subr.mxu0 0.0
    %7349 = vmatpush1.msra.mxu0 0.0
    %7350 = vmatprep.subr.mxu0 0.0
    %7351 = vmatpush1.msra.mxu0 0.0
    %7352 = vmatprep.subr.mxu0 0.0
    %7353 = vmatpush1.msra.mxu0 0.0
    %7354 = vmatprep.subr.mxu0 0.0
    %7355 = vmatpush1.msra.mxu0 0.0
    %7356 = vmatprep.subr.mxu0 0.0
    %7357 = vmatpush1.msra.mxu0 0.0
    %7358 = vmatprep.subr.mxu0 0.0
    %7359 = vmatpush1.msra.mxu0 0.0
    %7360 = vmatprep.subr.mxu0 0.0
    %7361 = vmatpush1.msra.mxu0 0.0
    %7362 = vmatprep.subr.mxu0 0.0
    %7363 = vmatpush1.msra.mxu0 0.0
    %7364 = vmatprep.subr.mxu0 0.0
    %7365 = vmatpush1.msra.mxu0 0.0
    %7366 = vmatprep.subr.mxu0 0.0
    %7367 = vmatpush1.msra.mxu0 0.0
    %7368 = vmatprep.subr.mxu0 0.0
    %7369 = vmatpush1.msra.mxu0 0.0
    %7370 = vmatprep.subr.mxu0 0.0
    %7371 = vmatpush1.msra.mxu0 0.0
    %7372 = vmatprep.subr.mxu0 0.0
    %7373 = vmatpush1.msra.mxu0 0.0
    %7374 = vmatprep.subr.mxu0 0.0
    %7375 = vmatpush1.msra.mxu0 0.0
    %7376 = vmatprep.subr.mxu0 0.0
    %7377 = vmatpush1.msra.mxu0 0.0
    %7378 = vmatprep.subr.mxu0 0.0
    %7379 = vmatpush1.msra.mxu0 0.0
    %7380 = vmatprep.subr.mxu0 0.0
    %7381 = vmatpush1.msra.mxu0 0.0
    %7382 = vmatprep.subr.mxu0 0.0
    %7383 = vmatpush1.msra.mxu0 0.0
    %7384 = vmatprep.mubr.f32.mxu0 0.0
    %7385 = vmatmul.mubr.f32.gmra.mrb[0].mxu0 %v7318
    %v7386 = vpop.f32.mrb[0].mxu0
    %v7387 = vadd.f32 0.0, %v7386
    %v7388 = vpop.f32.mrb[0].mxu0
    %7389 = vdwg.mxu0
    %v7390 = vadd.f32 %v7311, %v7387
    %v7393 = vrot.slane %v6695, 1
    %v7394 = vrot.slane %v6703, 1
    %v7397 = vmax.f32 %v6695, %v7393
    %v7398 = vmax.f32 %v6703, %v7394
    %v7401 = vrot.slane %v6696, 1
    %v7402 = vrot.slane %v6704, 1
    %v7405 = vmax.f32 %v6696, %v7401
    %v7406 = vmax.f32 %v6704, %v7402
    %v7407 = vmax.f32 %v7397, %v7405
    %v7408 = vmax.f32 %v7398, %v7406
    %v7409 = vadd.f32 %v7407, %v6730
    %v7410 = vadd.f32 %v7408, %v6730
    %v7411 = vmax.f32 %v7409, 0.0
    %v7412 = vmax.f32 %v7410, 0.0
    %s7413 = scalar_lea.vmem %s5, 128
    %v7414 = vld [vmem:[%s7413] sm:$0xff]
    %v7415 = vld [vmem:[%s7413 + $0x8] sm:$0xff]
    %v7418 = vrot.slane %v7412, 7
    %v7419 = vsel %vm6745, %v7418, %v7411
    %v7420 = vsel %vm6747, %v7419, 0
    %7422 = vmatprep.subr.mxu0 0.0
    %7423 = vmatpush1.msra.mxu0 %v7414
    %7424 = vmatprep.subr.mxu0 0.0
    %7425 = vmatpush1.msra.mxu0 %v7415
    %7426 = vmatprep.subr.mxu0 0.0
    %7427 = vmatpush1.msra.mxu0 0.0
    %7428 = vmatprep.subr.mxu0 0.0
    %7429 = vmatpush1.msra.mxu0 0.0
    %7430 = vmatprep.subr.mxu0 0.0
    %7431 = vmatpush1.msra.mxu0 0.0
    %7432 = vmatprep.subr.mxu0 0.0
    %7433 = vmatpush1.msra.mxu0 0.0
    %7434 = vmatprep.subr.mxu0 0.0
    %7435 = vmatpush1.msra.mxu0 0.0
    %7436 = vmatprep.subr.mxu0 0.0
    %7437 = vmatpush1.msra.mxu0 0.0
    %7438 = vmatprep.subr.mxu0 0.0
    %7439 = vmatpush1.msra.mxu0 0.0
    %7440 = vmatprep.subr.mxu0 0.0
    %7441 = vmatpush1.msra.mxu0 0.0
    %7442 = vmatprep.subr.mxu0 0.0
    %7443 = vmatpush1.msra.mxu0 0.0
    %7444 = vmatprep.subr.mxu0 0.0
    %7445 = vmatpush1.msra.mxu0 0.0
    %7446 = vmatprep.subr.mxu0 0.0
    %7447 = vmatpush1.msra.mxu0 0.0
    %7448 = vmatprep.subr.mxu0 0.0
    %7449 = vmatpush1.msra.mxu0 0.0
    %7450 = vmatprep.subr.mxu0 0.0
    %7451 = vmatpush1.msra.mxu0 0.0
    %7452 = vmatprep.subr.mxu0 0.0
    %7453 = vmatpush1.msra.mxu0 0.0
    %7454 = vmatprep.subr.mxu0 0.0
    %7455 = vmatpush1.msra.mxu0 0.0
    %7456 = vmatprep.subr.mxu0 0.0
    %7457 = vmatpush1.msra.mxu0 0.0
    %7458 = vmatprep.subr.mxu0 0.0
    %7459 = vmatpush1.msra.mxu0 0.0
    %7460 = vmatprep.subr.mxu0 0.0
    %7461 = vmatpush1.msra.mxu0 0.0
    %7462 = vmatprep.subr.mxu0 0.0
    %7463 = vmatpush1.msra.mxu0 0.0
    %7464 = vmatprep.subr.mxu0 0.0
    %7465 = vmatpush1.msra.mxu0 0.0
    %7466 = vmatprep.subr.mxu0 0.0
    %7467 = vmatpush1.msra.mxu0 0.0
    %7468 = vmatprep.subr.mxu0 0.0
    %7469 = vmatpush1.msra.mxu0 0.0
    %7470 = vmatprep.subr.mxu0 0.0
    %7471 = vmatpush1.msra.mxu0 0.0
    %7472 = vmatprep.subr.mxu0 0.0
    %7473 = vmatpush1.msra.mxu0 0.0
    %7474 = vmatprep.subr.mxu0 0.0
    %7475 = vmatpush1.msra.mxu0 0.0
    %7476 = vmatprep.subr.mxu0 0.0
    %7477 = vmatpush1.msra.mxu0 0.0
    %7478 = vmatprep.subr.mxu0 0.0
    %7479 = vmatpush1.msra.mxu0 0.0
    %7480 = vmatprep.subr.mxu0 0.0
    %7481 = vmatpush1.msra.mxu0 0.0
    %7482 = vmatprep.subr.mxu0 0.0
    %7483 = vmatpush1.msra.mxu0 0.0
    %7484 = vmatprep.subr.mxu0 0.0
    %7485 = vmatpush1.msra.mxu0 0.0
    %7486 = vmatprep.mubr.f32.mxu0 0.0
    %7487 = vmatmul.mubr.f32.gmra.mrb[0].mxu0 %v7420
    %v7488 = vpop.f32.mrb[0].mxu0
    %v7489 = vadd.f32 0.0, %v7488
    %v7490 = vpop.f32.mrb[0].mxu0
    %7491 = vdwg.mxu0
    %v7492 = vadd.f32 %v7390, %v7489
    %s7493 = scalar_lea.vmem %s5, 144
    %v7494 = vld [vmem:[%s7493] sm:$0xff]
    %v7495 = vld [vmem:[%s7493 + $0x8] sm:$0xff]
    %v7496 = vrot.slane %v7411, 2
    %v7497 = vrot.slane %v7412, 1
    %v7498 = vsel %vm6745, %v7497, %v7496
    %v7499 = vsel %vm6747, %v7498, 0
    %7501 = vmatprep.subr.mxu0 0.0
    %7502 = vmatpush1.msra.mxu0 %v7494
    %7503 = vmatprep.subr.mxu0 0.0
    %7504 = vmatpush1.msra.mxu0 %v7495
    %7505 = vmatprep.subr.mxu0 0.0
    %7506 = vmatpush1.msra.mxu0 0.0
    %7507 = vmatprep.subr.mxu0 0.0
    %7508 = vmatpush1.msra.mxu0 0.0
    %7509 = vmatprep.subr.mxu0 0.0
    %7510 = vmatpush1.msra.mxu0 0.0
    %7511 = vmatprep.subr.mxu0 0.0
    %7512 = vmatpush1.msra.mxu0 0.0
    %7513 = vmatprep.subr.mxu0 0.0
    %7514 = vmatpush1.msra.mxu0 0.0
    %7515 = vmatprep.subr.mxu0 0.0
    %7516 = vmatpush1.msra.mxu0 0.0
    %7517 = vmatprep.subr.mxu0 0.0
    %7518 = vmatpush1.msra.mxu0 0.0
    %7519 = vmatprep.subr.mxu0 0.0
    %7520 = vmatpush1.msra.mxu0 0.0
    %7521 = vmatprep.subr.mxu0 0.0
    %7522 = vmatpush1.msra.mxu0 0.0
    %7523 = vmatprep.subr.mxu0 0.0
    %7524 = vmatpush1.msra.mxu0 0.0
    %7525 = vmatprep.subr.mxu0 0.0
    %7526 = vmatpush1.msra.mxu0 0.0
    %7527 = vmatprep.subr.mxu0 0.0
    %7528 = vmatpush1.msra.mxu0 0.0
    %7529 = vmatprep.subr.mxu0 0.0
    %7530 = vmatpush1.msra.mxu0 0.0
    %7531 = vmatprep.subr.mxu0 0.0
    %7532 = vmatpush1.msra.mxu0 0.0
    %7533 = vmatprep.subr.mxu0 0.0
    %7534 = vmatpush1.msra.mxu0 0.0
    %7535 = vmatprep.subr.mxu0 0.0
    %7536 = vmatpush1.msra.mxu0 0.0
    %7537 = vmatprep.subr.mxu0 0.0
    %7538 = vmatpush1.msra.mxu0 0.0
    %7539 = vmatprep.subr.mxu0 0.0
    %7540 = vmatpush1.msra.mxu0 0.0
    %7541 = vmatprep.subr.mxu0 0.0
    %7542 = vmatpush1.msra.mxu0 0.0
    %7543 = vmatprep.subr.mxu0 0.0
    %7544 = vmatpush1.msra.mxu0 0.0
    %7545 = vmatprep.subr.mxu0 0.0
    %7546 = vmatpush1.msra.mxu0 0.0
    %7547 = vmatprep.subr.mxu0 0.0
    %7548 = vmatpush1.msra.mxu0 0.0
    %7549 = vmatprep.subr.mxu0 0.0
    %7550 = vmatpush1.msra.mxu0 0.0
    %7551 = vmatprep.subr.mxu0 0.0
    %7552 = vmatpush1.msra.mxu0 0.0
    %7553 = vmatprep.subr.mxu0 0.0
    %7554 = vmatpush1.msra.mxu0 0.0
    %7555 = vmatprep.subr.mxu0 0.0
    %7556 = vmatpush1.msra.mxu0 0.0
    %7557 = vmatprep.subr.mxu0 0.0
    %7558 = vmatpush1.msra.mxu0 0.0
    %7559 = vmatprep.subr.mxu0 0.0
    %7560 = vmatpush1.msra.mxu0 0.0
    %7561 = vmatprep.subr.mxu0 0.0
    %7562 = vmatpush1.msra.mxu0 0.0
    %7563 = vmatprep.subr.mxu0 0.0
    %7564 = vmatpush1.msra.mxu0 0.0
    %7565 = vmatprep.mubr.f32.mxu0 0.0
    %7566 = vmatmul.mubr.f32.gmra.mrb[0].mxu0 %v7499
    %v7567 = vpop.f32.mrb[0].mxu0
    %v7568 = vadd.f32 0.0, %v7567
    %v7569 = vpop.f32.mrb[0].mxu0
    %7570 = vdwg.mxu0
    %v7571 = vadd.f32 %v7492, %v7568
    %s7572 = scalar_lea.vmem %s5, 160
    %v7573 = vld [vmem:[%s7572] sm:$0xff]
    %v7574 = vld [vmem:[%s7572 + $0x8] sm:$0xff]
    %v7575 = vrot.slane %v7411, 4
    %v7576 = vrot.slane %v7412, 3
    %v7577 = vsel %vm6745, %v7576, %v7575
    %v7578 = vsel %vm6747, %v7577, 0
    %7580 = vmatprep.subr.mxu0 0.0
    %7581 = vmatpush1.msra.mxu0 %v7573
    %7582 = vmatprep.subr.mxu0 0.0
    %7583 = vmatpush1.msra.mxu0 %v7574
    %7584 = vmatprep.subr.mxu0 0.0
    %7585 = vmatpush1.msra.mxu0 0.0
    %7586 = vmatprep.subr.mxu0 0.0
    %7587 = vmatpush1.msra.mxu0 0.0
    %7588 = vmatprep.subr.mxu0 0.0
    %7589 = vmatpush1.msra.mxu0 0.0
    %7590 = vmatprep.subr.mxu0 0.0
    %7591 = vmatpush1.msra.mxu0 0.0
    %7592 = vmatprep.subr.mxu0 0.0
    %7593 = vmatpush1.msra.mxu0 0.0
    %7594 = vmatprep.subr.mxu0 0.0
    %7595 = vmatpush1.msra.mxu0 0.0
    %7596 = vmatprep.subr.mxu0 0.0
    %7597 = vmatpush1.msra.mxu0 0.0
    %7598 = vmatprep.subr.mxu0 0.0
    %7599 = vmatpush1.msra.mxu0 0.0
    %7600 = vmatprep.subr.mxu0 0.0
    %7601 = vmatpush1.msra.mxu0 0.0
    %7602 = vmatprep.subr.mxu0 0.0
    %7603 = vmatpush1.msra.mxu0 0.0
    %7604 = vmatprep.subr.mxu0 0.0
    %7605 = vmatpush1.msra.mxu0 0.0
    %7606 = vmatprep.subr.mxu0 0.0
    %7607 = vmatpush1.msra.mxu0 0.0
    %7608 = vmatprep.subr.mxu0 0.0
    %7609 = vmatpush1.msra.mxu0 0.0
    %7610 = vmatprep.subr.mxu0 0.0
    %7611 = vmatpush1.msra.mxu0 0.0
    %7612 = vmatprep.subr.mxu0 0.0
    %7613 = vmatpush1.msra.mxu0 0.0
    %7614 = vmatprep.subr.mxu0 0.0
    %7615 = vmatpush1.msra.mxu0 0.0
    %7616 = vmatprep.subr.mxu0 0.0
    %7617 = vmatpush1.msra.mxu0 0.0
    %7618 = vmatprep.subr.mxu0 0.0
    %7619 = vmatpush1.msra.mxu0 0.0
    %7620 = vmatprep.subr.mxu0 0.0
    %7621 = vmatpush1.msra.mxu0 0.0
    %7622 = vmatprep.subr.mxu0 0.0
    %7623 = vmatpush1.msra.mxu0 0.0
    %7624 = vmatprep.subr.mxu0 0.0
    %7625 = vmatpush1.msra.mxu0 0.0
    %7626 = vmatprep.subr.mxu0 0.0
    %7627 = vmatpush1.msra.mxu0 0.0
    %7628 = vmatprep.subr.mxu0 0.0
    %7629 = vmatpush1.msra.mxu0 0.0
    %7630 = vmatprep.subr.mxu0 0.0
    %7631 = vmatpush1.msra.mxu0 0.0
    %7632 = vmatprep.subr.mxu0 0.0
    %7633 = vmatpush1.msra.mxu0 0.0
    %7634 = vmatprep.subr.mxu0 0.0
    %7635 = vmatpush1.msra.mxu0 0.0
    %7636 = vmatprep.subr.mxu0 0.0
    %7637 = vmatpush1.msra.mxu0 0.0
    %7638 = vmatprep.subr.mxu0 0.0
    %7639 = vmatpush1.msra.mxu0 0.0
    %7640 = vmatprep.subr.mxu0 0.0
    %7641 = vmatpush1.msra.mxu0 0.0
    %7642 = vmatprep.subr.mxu0 0.0
    %7643 = vmatpush1.msra.mxu0 0.0
    %7644 = vmatprep.mubr.f32.mxu0 0.0
    %7645 = vmatmul.mubr.f32.gmra.mrb[0].mxu0 %v7578
    %v7646 = vpop.f32.mrb[0].mxu0
    %v7647 = vadd.f32 0.0, %v7646
    %v7648 = vpop.f32.mrb[0].mxu0
    %7649 = vdwg.mxu0
    %v7650 = vadd.f32 %v7571, %v7647
    %s7651 = scalar_lea.vmem %s5, 176
    %v7652 = vld [vmem:[%s7651] sm:$0xff]
    %v7653 = vld [vmem:[%s7651 + $0x8] sm:$0xff]
    %v7654 = vrot.slane %v7411, 6
    %v7655 = vrot.slane %v7412, 5
    %v7656 = vsel %vm6745, %v7655, %v7654
    %v7657 = vsel %vm6747, %v7656, 0
    %7659 = vmatprep.subr.mxu0 0.0
    %7660 = vmatpush1.msra.mxu0 %v7652
    %7661 = vmatprep.subr.mxu0 0.0
    %7662 = vmatpush1.msra.mxu0 %v7653
    %7663 = vmatprep.subr.mxu0 0.0
    %7664 = vmatpush1.msra.mxu0 0.0
    %7665 = vmatprep.subr.mxu0 0.0
    %7666 = vmatpush1.msra.mxu0 0.0
    %7667 = vmatprep.subr.mxu0 0.0
    %7668 = vmatpush1.msra.mxu0 0.0
    %7669 = vmatprep.subr.mxu0 0.0
    %7670 = vmatpush1.msra.mxu0 0.0
    %7671 = vmatprep.subr.mxu0 0.0
    %7672 = vmatpush1.msra.mxu0 0.0
    %7673 = vmatprep.subr.mxu0 0.0
    %7674 = vmatpush1.msra.mxu0 0.0
    %7675 = vmatprep.subr.mxu0 0.0
    %7676 = vmatpush1.msra.mxu0 0.0
    %7677 = vmatprep.subr.mxu0 0.0
    %7678 = vmatpush1.msra.mxu0 0.0
    %7679 = vmatprep.subr.mxu0 0.0
    %7680 = vmatpush1.msra.mxu0 0.0
    %7681 = vmatprep.subr.mxu0 0.0
    %7682 = vmatpush1.msra.mxu0 0.0
    %7683 = vmatprep.subr.mxu0 0.0
    %7684 = vmatpush1.msra.mxu0 0.0
    %7685 = vmatprep.subr.mxu0 0.0
    %7686 = vmatpush1.msra.mxu0 0.0
    %7687 = vmatprep.subr.mxu0 0.0
    %7688 = vmatpush1.msra.mxu0 0.0
    %7689 = vmatprep.subr.mxu0 0.0
    %7690 = vmatpush1.msra.mxu0 0.0
    %7691 = vmatprep.subr.mxu0 0.0
    %7692 = vmatpush1.msra.mxu0 0.0
    %7693 = vmatprep.subr.mxu0 0.0
    %7694 = vmatpush1.msra.mxu0 0.0
    %7695 = vmatprep.subr.mxu0 0.0
    %7696 = vmatpush1.msra.mxu0 0.0
    %7697 = vmatprep.subr.mxu0 0.0
    %7698 = vmatpush1.msra.mxu0 0.0
    %7699 = vmatprep.subr.mxu0 0.0
    %7700 = vmatpush1.msra.mxu0 0.0
    %7701 = vmatprep.subr.mxu0 0.0
    %7702 = vmatpush1.msra.mxu0 0.0
    %7703 = vmatprep.subr.mxu0 0.0
    %7704 = vmatpush1.msra.mxu0 0.0
    %7705 = vmatprep.subr.mxu0 0.0
    %7706 = vmatpush1.msra.mxu0 0.0
    %7707 = vmatprep.subr.mxu0 0.0
    %7708 = vmatpush1.msra.mxu0 0.0
    %7709 = vmatprep.subr.mxu0 0.0
    %7710 = vmatpush1.msra.mxu0 0.0
    %7711 = vmatprep.subr.mxu0 0.0
    %7712 = vmatpush1.msra.mxu0 0.0
    %7713 = vmatprep.subr.mxu0 0.0
    %7714 = vmatpush1.msra.mxu0 0.0
    %7715 = vmatprep.subr.mxu0 0.0
    %7716 = vmatpush1.msra.mxu0 0.0
    %7717 = vmatprep.subr.mxu0 0.0
    %7718 = vmatpush1.msra.mxu0 0.0
    %7719 = vmatprep.subr.mxu0 0.0
    %7720 = vmatpush1.msra.mxu0 0.0
    %7721 = vmatprep.subr.mxu0 0.0
    %7722 = vmatpush1.msra.mxu0 0.0
    %7723 = vmatprep.mubr.f32.mxu0 0.0
    %7724 = vmatmul.mubr.f32.gmra.mrb[0].mxu0 %v7657
    %v7725 = vpop.f32.mrb[0].mxu0
    %v7726 = vadd.f32 0.0, %v7725
    %v7727 = vpop.f32.mrb[0].mxu0
    %7728 = vdwg.mxu0
    %v7729 = vadd.f32 %v7650, %v7726
    %v7732 = vrot.slane %v6697, 1
    %v7733 = vrot.slane %v6705, 1
    %v7736 = vmax.f32 %v6697, %v7732
    %v7737 = vmax.f32 %v6705, %v7733
    %v7740 = vrot.slane %v6698, 1
    %v7741 = vrot.slane %v6706, 1
    %v7744 = vmax.f32 %v6698, %v7740
    %v7745 = vmax.f32 %v6706, %v7741
    %v7746 = vmax.f32 %v7736, %v7744
    %v7747 = vmax.f32 %v7737, %v7745
    %v7748 = vadd.f32 %v7746, %v6730
    %v7749 = vadd.f32 %v7747, %v6730
    %v7750 = vmax.f32 %v7748, 0.0
    %v7751 = vmax.f32 %v7749, 0.0
    %s7752 = scalar_lea.vmem %s5, 192
    %v7753 = vld [vmem:[%s7752] sm:$0xff]
    %v7754 = vld [vmem:[%s7752 + $0x8] sm:$0xff]
    %v7757 = vrot.slane %v7751, 7
    %v7758 = vsel %vm6745, %v7757, %v7750
    %v7759 = vsel %vm6747, %v7758, 0
    %7761 = vmatprep.subr.mxu0 0.0
    %7762 = vmatpush1.msra.mxu0 %v7753
    %7763 = vmatprep.subr.mxu0 0.0
    %7764 = vmatpush1.msra.mxu0 %v7754
    %7765 = vmatprep.subr.mxu0 0.0
    %7766 = vmatpush1.msra.mxu0 0.0
    %7767 = vmatprep.subr.mxu0 0.0
    %7768 = vmatpush1.msra.mxu0 0.0
    %7769 = vmatprep.subr.mxu0 0.0
    %7770 = vmatpush1.msra.mxu0 0.0
    %7771 = vmatprep.subr.mxu0 0.0
    %7772 = vmatpush1.msra.mxu0 0.0
    %7773 = vmatprep.subr.mxu0 0.0
    %7774 = vmatpush1.msra.mxu0 0.0
    %7775 = vmatprep.subr.mxu0 0.0
    %7776 = vmatpush1.msra.mxu0 0.0
    %7777 = vmatprep.subr.mxu0 0.0
    %7778 = vmatpush1.msra.mxu0 0.0
    %7779 = vmatprep.subr.mxu0 0.0
    %7780 = vmatpush1.msra.mxu0 0.0
    %7781 = vmatprep.subr.mxu0 0.0
    %7782 = vmatpush1.msra.mxu0 0.0
    %7783 = vmatprep.subr.mxu0 0.0
    %7784 = vmatpush1.msra.mxu0 0.0
    %7785 = vmatprep.subr.mxu0 0.0
    %7786 = vmatpush1.msra.mxu0 0.0
    %7787 = vmatprep.subr.mxu0 0.0
    %7788 = vmatpush1.msra.mxu0 0.0
    %7789 = vmatprep.subr.mxu0 0.0
    %7790 = vmatpush1.msra.mxu0 0.0
    %7791 = vmatprep.subr.mxu0 0.0
    %7792 = vmatpush1.msra.mxu0 0.0
    %7793 = vmatprep.subr.mxu0 0.0
    %7794 = vmatpush1.msra.mxu0 0.0
    %7795 = vmatprep.subr.mxu0 0.0
    %7796 = vmatpush1.msra.mxu0 0.0
    %7797 = vmatprep.subr.mxu0 0.0
    %7798 = vmatpush1.msra.mxu0 0.0
    %7799 = vmatprep.subr.mxu0 0.0
    %7800 = vmatpush1.msra.mxu0 0.0
    %7801 = vmatprep.subr.mxu0 0.0
    %7802 = vmatpush1.msra.mxu0 0.0
    %7803 = vmatprep.subr.mxu0 0.0
    %7804 = vmatpush1.msra.mxu0 0.0
    %7805 = vmatprep.subr.mxu0 0.0
    %7806 = vmatpush1.msra.mxu0 0.0
    %7807 = vmatprep.subr.mxu0 0.0
    %7808 = vmatpush1.msra.mxu0 0.0
    %7809 = vmatprep.subr.mxu0 0.0
    %7810 = vmatpush1.msra.mxu0 0.0
    %7811 = vmatprep.subr.mxu0 0.0
    %7812 = vmatpush1.msra.mxu0 0.0
    %7813 = vmatprep.subr.mxu0 0.0
    %7814 = vmatpush1.msra.mxu0 0.0
    %7815 = vmatprep.subr.mxu0 0.0
    %7816 = vmatpush1.msra.mxu0 0.0
    %7817 = vmatprep.subr.mxu0 0.0
    %7818 = vmatpush1.msra.mxu0 0.0
    %7819 = vmatprep.subr.mxu0 0.0
    %7820 = vmatpush1.msra.mxu0 0.0
    %7821 = vmatprep.subr.mxu0 0.0
    %7822 = vmatpush1.msra.mxu0 0.0
    %7823 = vmatprep.subr.mxu0 0.0
    %7824 = vmatpush1.msra.mxu0 0.0
    %7825 = vmatprep.mubr.f32.mxu0 0.0
    %7826 = vmatmul.mubr.f32.gmra.mrb[0].mxu0 %v7759
    %v7827 = vpop.f32.mrb[0].mxu0
    %v7828 = vadd.f32 0.0, %v7827
    %v7829 = vpop.f32.mrb[0].mxu0
    %7830 = vdwg.mxu0
    %v7831 = vadd.f32 %v7729, %v7828
    %s7832 = scalar_lea.vmem %s5, 208
    %v7833 = vld [vmem:[%s7832] sm:$0xff]
    %v7834 = vld [vmem:[%s7832 + $0x8] sm:$0xff]
    %v7835 = vrot.slane %v7750, 2
    %v7836 = vrot.slane %v7751, 1
    %v7837 = vsel %vm6745, %v7836, %v7835
    %v7838 = vsel %vm6747, %v7837, 0
    %7840 = vmatprep.subr.mxu0 0.0
    %7841 = vmatpush1.msra.mxu0 %v7833
    %7842 = vmatprep.subr.mxu0 0.0
    %7843 = vmatpush1.msra.mxu0 %v7834
    %7844 = vmatprep.subr.mxu0 0.0
    %7845 = vmatpush1.msra.mxu0 0.0
    %7846 = vmatprep.subr.mxu0 0.0
    %7847 = vmatpush1.msra.mxu0 0.0
    %7848 = vmatprep.subr.mxu0 0.0
    %7849 = vmatpush1.msra.mxu0 0.0
    %7850 = vmatprep.subr.mxu0 0.0
    %7851 = vmatpush1.msra.mxu0 0.0
    %7852 = vmatprep.subr.mxu0 0.0
    %7853 = vmatpush1.msra.mxu0 0.0
    %7854 = vmatprep.subr.mxu0 0.0
    %7855 = vmatpush1.msra.mxu0 0.0
    %7856 = vmatprep.subr.mxu0 0.0
    %7857 = vmatpush1.msra.mxu0 0.0
    %7858 = vmatprep.subr.mxu0 0.0
    %7859 = vmatpush1.msra.mxu0 0.0
    %7860 = vmatprep.subr.mxu0 0.0
    %7861 = vmatpush1.msra.mxu0 0.0
    %7862 = vmatprep.subr.mxu0 0.0
    %7863 = vmatpush1.msra.mxu0 0.0
    %7864 = vmatprep.subr.mxu0 0.0
    %7865 = vmatpush1.msra.mxu0 0.0
    %7866 = vmatprep.subr.mxu0 0.0
    %7867 = vmatpush1.msra.mxu0 0.0
    %7868 = vmatprep.subr.mxu0 0.0
    %7869 = vmatpush1.msra.mxu0 0.0
    %7870 = vmatprep.subr.mxu0 0.0
    %7871 = vmatpush1.msra.mxu0 0.0
    %7872 = vmatprep.subr.mxu0 0.0
    %7873 = vmatpush1.msra.mxu0 0.0
    %7874 = vmatprep.subr.mxu0 0.0
    %7875 = vmatpush1.msra.mxu0 0.0
    %7876 = vmatprep.subr.mxu0 0.0
    %7877 = vmatpush1.msra.mxu0 0.0
    %7878 = vmatprep.subr.mxu0 0.0
    %7879 = vmatpush1.msra.mxu0 0.0
    %7880 = vmatprep.subr.mxu0 0.0
    %7881 = vmatpush1.msra.mxu0 0.0
    %7882 = vmatprep.subr.mxu0 0.0
    %7883 = vmatpush1.msra.mxu0 0.0
    %7884 = vmatprep.subr.mxu0 0.0
    %7885 = vmatpush1.msra.mxu0 0.0
    %7886 = vmatprep.subr.mxu0 0.0
    %7887 = vmatpush1.msra.mxu0 0.0
    %7888 = vmatprep.subr.mxu0 0.0
    %7889 = vmatpush1.msra.mxu0 0.0
    %7890 = vmatprep.subr.mxu0 0.0
    %7891 = vmatpush1.msra.mxu0 0.0
    %7892 = vmatprep.subr.mxu0 0.0
    %7893 = vmatpush1.msra.mxu0 0.0
    %7894 = vmatprep.subr.mxu0 0.0
    %7895 = vmatpush1.msra.mxu0 0.0
    %7896 = vmatprep.subr.mxu0 0.0
    %7897 = vmatpush1.msra.mxu0 0.0
    %7898 = vmatprep.subr.mxu0 0.0
    %7899 = vmatpush1.msra.mxu0 0.0
    %7900 = vmatprep.subr.mxu0 0.0
    %7901 = vmatpush1.msra.mxu0 0.0
    %7902 = vmatprep.subr.mxu0 0.0
    %7903 = vmatpush1.msra.mxu0 0.0
    %7904 = vmatprep.mubr.f32.mxu0 0.0
    %7905 = vmatmul.mubr.f32.gmra.mrb[0].mxu0 %v7838
    %v7906 = vpop.f32.mrb[0].mxu0
    %v7907 = vadd.f32 0.0, %v7906
    %v7908 = vpop.f32.mrb[0].mxu0
    %7909 = vdwg.mxu0
    %v7910 = vadd.f32 %v7831, %v7907
    %s7911 = scalar_lea.vmem %s5, 224
    %v7912 = vld [vmem:[%s7911] sm:$0xff]
    %v7913 = vld [vmem:[%s7911 + $0x8] sm:$0xff]
    %v7914 = vrot.slane %v7750, 4
    %v7915 = vrot.slane %v7751, 3
    %v7916 = vsel %vm6745, %v7915, %v7914
    %v7917 = vsel %vm6747, %v7916, 0
    %7919 = vmatprep.subr.mxu0 0.0
    %7920 = vmatpush1.msra.mxu0 %v7912
    %7921 = vmatprep.subr.mxu0 0.0
    %7922 = vmatpush1.msra.mxu0 %v7913
    %7923 = vmatprep.subr.mxu0 0.0
    %7924 = vmatpush1.msra.mxu0 0.0
    %7925 = vmatprep.subr.mxu0 0.0
    %7926 = vmatpush1.msra.mxu0 0.0
    %7927 = vmatprep.subr.mxu0 0.0
    %7928 = vmatpush1.msra.mxu0 0.0
    %7929 = vmatprep.subr.mxu0 0.0
    %7930 = vmatpush1.msra.mxu0 0.0
    %7931 = vmatprep.subr.mxu0 0.0
    %7932 = vmatpush1.msra.mxu0 0.0
    %7933 = vmatprep.subr.mxu0 0.0
    %7934 = vmatpush1.msra.mxu0 0.0
    %7935 = vmatprep.subr.mxu0 0.0
    %7936 = vmatpush1.msra.mxu0 0.0
    %7937 = vmatprep.subr.mxu0 0.0
    %7938 = vmatpush1.msra.mxu0 0.0
    %7939 = vmatprep.subr.mxu0 0.0
    %7940 = vmatpush1.msra.mxu0 0.0
    %7941 = vmatprep.subr.mxu0 0.0
    %7942 = vmatpush1.msra.mxu0 0.0
    %7943 = vmatprep.subr.mxu0 0.0
    %7944 = vmatpush1.msra.mxu0 0.0
    %7945 = vmatprep.subr.mxu0 0.0
    %7946 = vmatpush1.msra.mxu0 0.0
    %7947 = vmatprep.subr.mxu0 0.0
    %7948 = vmatpush1.msra.mxu0 0.0
    %7949 = vmatprep.subr.mxu0 0.0
    %7950 = vmatpush1.msra.mxu0 0.0
    %7951 = vmatprep.subr.mxu0 0.0
    %7952 = vmatpush1.msra.mxu0 0.0
    %7953 = vmatprep.subr.mxu0 0.0
    %7954 = vmatpush1.msra.mxu0 0.0
    %7955 = vmatprep.subr.mxu0 0.0
    %7956 = vmatpush1.msra.mxu0 0.0
    %7957 = vmatprep.subr.mxu0 0.0
    %7958 = vmatpush1.msra.mxu0 0.0
    %7959 = vmatprep.subr.mxu0 0.0
    %7960 = vmatpush1.msra.mxu0 0.0
    %7961 = vmatprep.subr.mxu0 0.0
    %7962 = vmatpush1.msra.mxu0 0.0
    %7963 = vmatprep.subr.mxu0 0.0
    %7964 = vmatpush1.msra.mxu0 0.0
    %7965 = vmatprep.subr.mxu0 0.0
    %7966 = vmatpush1.msra.mxu0 0.0
    %7967 = vmatprep.subr.mxu0 0.0
    %7968 = vmatpush1.msra.mxu0 0.0
    %7969 = vmatprep.subr.mxu0 0.0
    %7970 = vmatpush1.msra.mxu0 0.0
    %7971 = vmatprep.subr.mxu0 0.0
    %7972 = vmatpush1.msra.mxu0 0.0
    %7973 = vmatprep.subr.mxu0 0.0
    %7974 = vmatpush1.msra.mxu0 0.0
    %7975 = vmatprep.subr.mxu0 0.0
    %7976 = vmatpush1.msra.mxu0 0.0
    %7977 = vmatprep.subr.mxu0 0.0
    %7978 = vmatpush1.msra.mxu0 0.0
    %7979 = vmatprep.subr.mxu0 0.0
    %7980 = vmatpush1.msra.mxu0 0.0
    %7981 = vmatprep.subr.mxu0 0.0
    %7982 = vmatpush1.msra.mxu0 0.0
    %7983 = vmatprep.mubr.f32.mxu0 0.0
    %7984 = vmatmul.mubr.f32.gmra.mrb[0].mxu0 %v7917
    %v7985 = vpop.f32.mrb[0].mxu0
    %v7986 = vadd.f32 0.0, %v7985
    %v7987 = vpop.f32.mrb[0].mxu0
    %7988 = vdwg.mxu0
    %v7989 = vadd.f32 %v7910, %v7986
    %s7990 = scalar_lea.vmem %s5, 240
    %v7991 = vld [vmem:[%s7990] sm:$0xff]
    %v7992 = vld [vmem:[%s7990 + $0x8] sm:$0xff]
    %v7993 = vrot.slane %v7750, 6
    %v7994 = vrot.slane %v7751, 5
    %v7995 = vsel %vm6745, %v7994, %v7993
    %v7996 = vsel %vm6747, %v7995, 0
    %7998 = vmatprep.subr.mxu0 0.0
    %7999 = vmatpush1.msra.mxu0 %v7991
    %8000 = vmatprep.subr.mxu0 0.0
    %8001 = vmatpush1.msra.mxu0 %v7992
    %8002 = vmatprep.subr.mxu0 0.0
    %8003 = vmatpush1.msra.mxu0 0.0
    %8004 = vmatprep.subr.mxu0 0.0
    %8005 = vmatpush1.msra.mxu0 0.0
    %8006 = vmatprep.subr.mxu0 0.0
    %8007 = vmatpush1.msra.mxu0 0.0
    %8008 = vmatprep.subr.mxu0 0.0
    %8009 = vmatpush1.msra.mxu0 0.0
    %8010 = vmatprep.subr.mxu0 0.0
    %8011 = vmatpush1.msra.mxu0 0.0
    %8012 = vmatprep.subr.mxu0 0.0
    %8013 = vmatpush1.msra.mxu0 0.0
    %8014 = vmatprep.subr.mxu0 0.0
    %8015 = vmatpush1.msra.mxu0 0.0
    %8016 = vmatprep.subr.mxu0 0.0
    %8017 = vmatpush1.msra.mxu0 0.0
    %8018 = vmatprep.subr.mxu0 0.0
    %8019 = vmatpush1.msra.mxu0 0.0
    %8020 = vmatprep.subr.mxu0 0.0
    %8021 = vmatpush1.msra.mxu0 0.0
    %8022 = vmatprep.subr.mxu0 0.0
    %8023 = vmatpush1.msra.mxu0 0.0
    %8024 = vmatprep.subr.mxu0 0.0
    %8025 = vmatpush1.msra.mxu0 0.0
    %8026 = vmatprep.subr.mxu0 0.0
    %8027 = vmatpush1.msra.mxu0 0.0
    %8028 = vmatprep.subr.mxu0 0.0
    %8029 = vmatpush1.msra.mxu0 0.0
    %8030 = vmatprep.subr.mxu0 0.0
    %8031 = vmatpush1.msra.mxu0 0.0
    %8032 = vmatprep.subr.mxu0 0.0
    %8033 = vmatpush1.msra.mxu0 0.0
    %8034 = vmatprep.subr.mxu0 0.0
    %8035 = vmatpush1.msra.mxu0 0.0
    %8036 = vmatprep.subr.mxu0 0.0
    %8037 = vmatpush1.msra.mxu0 0.0
    %8038 = vmatprep.subr.mxu0 0.0
    %8039 = vmatpush1.msra.mxu0 0.0
    %8040 = vmatprep.subr.mxu0 0.0
    %8041 = vmatpush1.msra.mxu0 0.0
    %8042 = vmatprep.subr.mxu0 0.0
    %8043 = vmatpush1.msra.mxu0 0.0
    %8044 = vmatprep.subr.mxu0 0.0
    %8045 = vmatpush1.msra.mxu0 0.0
    %8046 = vmatprep.subr.mxu0 0.0
    %8047 = vmatpush1.msra.mxu0 0.0
    %8048 = vmatprep.subr.mxu0 0.0
    %8049 = vmatpush1.msra.mxu0 0.0
    %8050 = vmatprep.subr.mxu0 0.0
    %8051 = vmatpush1.msra.mxu0 0.0
    %8052 = vmatprep.subr.mxu0 0.0
    %8053 = vmatpush1.msra.mxu0 0.0
    %8054 = vmatprep.subr.mxu0 0.0
    %8055 = vmatpush1.msra.mxu0 0.0
    %8056 = vmatprep.subr.mxu0 0.0
    %8057 = vmatpush1.msra.mxu0 0.0
    %8058 = vmatprep.subr.mxu0 0.0
    %8059 = vmatpush1.msra.mxu0 0.0
    %8060 = vmatprep.subr.mxu0 0.0
    %8061 = vmatpush1.msra.mxu0 0.0
    %8062 = vmatprep.mubr.f32.mxu0 0.0
    %8063 = vmatmul.mubr.f32.gmra.mrb[0].mxu0 %v7996
    %v8064 = vpop.f32.mrb[0].mxu0
    %v8065 = vadd.f32 0.0, %v8064
    %v8066 = vpop.f32.mrb[0].mxu0
    %8067 = vdwg.mxu0
    %v8068 = vadd.f32 %v7989, %v8065
    %v8069 = vld [vmem:[%s6] sm:$0x1]
    %v8071 = vlaneseq
    %v8072 = vshrl.u32 %v8071, 7
    %v8073 = vsub.s32 0, %v8072
    %v8074 = vrot.slane %v8069, %v8073
    %v8076 = vadd.f32 %v8068, %v8074
    %v8077 = vmax.f32 %v8076, 0.0
    %v8078 = vld [vmem:[%s7] sm:$0xff]
    %v8079 = vld [vmem:[%s7 + $0x8] sm:$0xff]
    %v8080 = vld [vmem:[%s7 + $0x10] sm:$0xff]
    %v8081 = vld [vmem:[%s7 + $0x18] sm:$0xff]
    %v8082 = vld [vmem:[%s7 + $0x20] sm:$0xff]
    %v8083 = vld [vmem:[%s7 + $0x28] sm:$0xff]
    %v8084 = vld [vmem:[%s7 + $0x30] sm:$0xff]
    %v8085 = vld [vmem:[%s7 + $0x38] sm:$0xff]
    %v8086 = vld [vmem:[%s7 + $0x40] sm:$0xff]
    %v8087 = vld [vmem:[%s7 + $0x48] sm:$0xff]
    %v8088 = vld [vmem:[%s7 + $0x50] sm:$0xff]
    %v8089 = vld [vmem:[%s7 + $0x58] sm:$0xff]
    %v8090 = vld [vmem:[%s7 + $0x60] sm:$0xff]
    %v8091 = vld [vmem:[%s7 + $0x68] sm:$0xff]
    %v8092 = vld [vmem:[%s7 + $0x70] sm:$0xff]
    %v8093 = vld [vmem:[%s7 + $0x78] sm:$0xff]
    %v8094 = vld [vmem:[%s8] sm:$0x1]
    %v8096 = vlaneseq
    %v8097 = vshrl.u32 %v8096, 7
    %v8098 = vsub.s32 0, %v8097
    %v8099 = vrot.slane %v8094, %v8098
    %8101 = vmatprep.subr.mxu0 0.0
    %8102 = vmatpush1.msra.mxu0 %v8078
    %8103 = vmatprep.subr.mxu0 0.0
    %8104 = vmatpush1.msra.mxu0 %v8079
    %8105 = vmatprep.subr.mxu0 0.0
    %8106 = vmatpush1.msra.mxu0 %v8080
    %8107 = vmatprep.subr.mxu0 0.0
    %8108 = vmatpush1.msra.mxu0 %v8081
    %8109 = vmatprep.subr.mxu0 0.0
    %8110 = vmatpush1.msra.mxu0 %v8082
    %8111 = vmatprep.subr.mxu0 0.0
    %8112 = vmatpush1.msra.mxu0 %v8083
    %8113 = vmatprep.subr.mxu0 0.0
    %8114 = vmatpush1.msra.mxu0 %v8084
    %8115 = vmatprep.subr.mxu0 0.0
    %8116 = vmatpush1.msra.mxu0 %v8085
    %8117 = vmatprep.subr.mxu0 0.0
    %8118 = vmatpush1.msra.mxu0 %v8086
    %8119 = vmatprep.subr.mxu0 0.0
    %8120 = vmatpush1.msra.mxu0 %v8087
    %8121 = vmatprep.subr.mxu0 0.0
    %8122 = vmatpush1.msra.mxu0 %v8088
    %8123 = vmatprep.subr.mxu0 0.0
    %8124 = vmatpush1.msra.mxu0 %v8089
    %8125 = vmatprep.subr.mxu0 0.0
    %8126 = vmatpush1.msra.mxu0 %v8090
    %8127 = vmatprep.subr.mxu0 0.0
    %8128 = vmatpush1.msra.mxu0 %v8091
    %8129 = vmatprep.subr.mxu0 0.0
    %8130 = vmatpush1.msra.mxu0 %v8092
    %8131 = vmatprep.subr.mxu0 0.0
    %8132 = vmatpush1.msra.mxu0 %v8093
    %8133 = vmatprep.subr.mxu0 0.0
    %8134 = vmatpush1.msra.mxu0 0.0
    %8135 = vmatprep.subr.mxu0 0.0
    %8136 = vmatpush1.msra.mxu0 0.0
    %8137 = vmatprep.subr.mxu0 0.0
    %8138 = vmatpush1.msra.mxu0 0.0
    %8139 = vmatprep.subr.mxu0 0.0
    %8140 = vmatpush1.msra.mxu0 0.0
    %8141 = vmatprep.subr.mxu0 0.0
    %8142 = vmatpush1.msra.mxu0 0.0
    %8143 = vmatprep.subr.mxu0 0.0
    %8144 = vmatpush1.msra.mxu0 0.0
    %8145 = vmatprep.subr.mxu0 0.0
    %8146 = vmatpush1.msra.mxu0 0.0
    %8147 = vmatprep.subr.mxu0 0.0
    %8148 = vmatpush1.msra.mxu0 0.0
    %8149 = vmatprep.subr.mxu0 0.0
    %8150 = vmatpush1.msra.mxu0 0.0
    %8151 = vmatprep.subr.mxu0 0.0
    %8152 = vmatpush1.msra.mxu0 0.0
    %8153 = vmatprep.subr.mxu0 0.0
    %8154 = vmatpush1.msra.mxu0 0.0
    %8155 = vmatprep.subr.mxu0 0.0
    %8156 = vmatpush1.msra.mxu0 0.0
    %8157 = vmatprep.subr.mxu0 0.0
    %8158 = vmatpush1.msra.mxu0 0.0
    %8159 = vmatprep.subr.mxu0 0.0
    %8160 = vmatpush1.msra.mxu0 0.0
    %8161 = vmatprep.subr.mxu0 0.0
    %8162 = vmatpush1.msra.mxu0 0.0
    %8163 = vmatprep.subr.mxu0 0.0
    %8164 = vmatpush1.msra.mxu0 0.0
    %8165 = vmatprep.mubr.f32.mxu0 0.0
    %8166 = vmatmul.mubr.f32.gmra.mrb[0].mxu0 %v8077
    %v8167 = vpop.f32.mrb[0].mxu0
    %v8168 = vadd.f32 %v8099, %v8167
    %v8169 = vpop.f32.mrb[0].mxu0
    %8170 = vdwg.mxu0
    %v8171 = vmax.f32 %v8168, 0.0
    %v8172 = vld [vmem:[%s9] sm:$0xff]
    %v8173 = vld [vmem:[%s9 + $0x8] sm:$0xff]
    %v8174 = vld [vmem:[%s9 + $0x10] sm:$0xff]
    %v8175 = vld [vmem:[%s9 + $0x18] sm:$0xff]
    %v8176 = vld [vmem:[%s9 + $0x20] sm:$0xff]
    %v8177 = vld [vmem:[%s9 + $0x28] sm:$0xff]
    %v8178 = vld [vmem:[%s9 + $0x30] sm:$0xff]
    %v8179 = vld [vmem:[%s9 + $0x38] sm:$0xff]
    %v8180 = vld [vmem:[%s9 + $0x40] sm:$0xff]
    %v8181 = vld [vmem:[%s9 + $0x48] sm:$0xff]
    %v8182 = vld [vmem:[%s9 + $0x50] sm:$0xff]
    %v8183 = vld [vmem:[%s9 + $0x58] sm:$0xff]
    %v8184 = vld [vmem:[%s9 + $0x60] sm:$0xff]
    %v8185 = vld [vmem:[%s9 + $0x68] sm:$0xff]
    %v8186 = vld [vmem:[%s9 + $0x70] sm:$0xff]
    %v8187 = vld [vmem:[%s9 + $0x78] sm:$0xff]
    %v8188 = vld [vmem:[%s10] sm:$0x1]
    %v8190 = vlaneseq
    %v8191 = vshrl.u32 %v8190, 7
    %v8192 = vsub.s32 0, %v8191
    %v8193 = vrot.slane %v8188, %v8192
    %8195 = vmatprep.subr.mxu0 0.0
    %8196 = vmatpush1.msra.mxu0 %v8172
    %8197 = vmatprep.subr.mxu0 0.0
    %8198 = vmatpush1.msra.mxu0 %v8173
    %8199 = vmatprep.subr.mxu0 0.0
    %8200 = vmatpush1.msra.mxu0 %v8174
    %8201 = vmatprep.subr.mxu0 0.0
    %8202 = vmatpush1.msra.mxu0 %v8175
    %8203 = vmatprep.subr.mxu0 0.0
    %8204 = vmatpush1.msra.mxu0 %v8176
    %8205 = vmatprep.subr.mxu0 0.0
    %8206 = vmatpush1.msra.mxu0 %v8177
    %8207 = vmatprep.subr.mxu0 0.0
    %8208 = vmatpush1.msra.mxu0 %v8178
    %8209 = vmatprep.subr.mxu0 0.0
    %8210 = vmatpush1.msra.mxu0 %v8179
    %8211 = vmatprep.subr.mxu0 0.0
    %8212 = vmatpush1.msra.mxu0 %v8180
    %8213 = vmatprep.subr.mxu0 0.0
    %8214 = vmatpush1.msra.mxu0 %v8181
    %8215 = vmatprep.subr.mxu0 0.0
    %8216 = vmatpush1.msra.mxu0 %v8182
    %8217 = vmatprep.subr.mxu0 0.0
    %8218 = vmatpush1.msra.mxu0 %v8183
    %8219 = vmatprep.subr.mxu0 0.0
    %8220 = vmatpush1.msra.mxu0 %v8184
    %8221 = vmatprep.subr.mxu0 0.0
    %8222 = vmatpush1.msra.mxu0 %v8185
    %8223 = vmatprep.subr.mxu0 0.0
    %8224 = vmatpush1.msra.mxu0 %v8186
    %8225 = vmatprep.subr.mxu0 0.0
    %8226 = vmatpush1.msra.mxu0 %v8187
    %8227 = vmatprep.subr.mxu0 0.0
    %8228 = vmatpush1.msra.mxu0 0.0
    %8229 = vmatprep.subr.mxu0 0.0
    %8230 = vmatpush1.msra.mxu0 0.0
    %8231 = vmatprep.subr.mxu0 0.0
    %8232 = vmatpush1.msra.mxu0 0.0
    %8233 = vmatprep.subr.mxu0 0.0
    %8234 = vmatpush1.msra.mxu0 0.0
    %8235 = vmatprep.subr.mxu0 0.0
    %8236 = vmatpush1.msra.mxu0 0.0
    %8237 = vmatprep.subr.mxu0 0.0
    %8238 = vmatpush1.msra.mxu0 0.0
    %8239 = vmatprep.subr.mxu0 0.0
    %8240 = vmatpush1.msra.mxu0 0.0
    %8241 = vmatprep.subr.mxu0 0.0
    %8242 = vmatpush1.msra.mxu0 0.0
    %8243 = vmatprep.subr.mxu0 0.0
    %8244 = vmatpush1.msra.mxu0 0.0
    %8245 = vmatprep.subr.mxu0 0.0
    %8246 = vmatpush1.msra.mxu0 0.0
    %8247 = vmatprep.subr.mxu0 0.0
    %8248 = vmatpush1.msra.mxu0 0.0
    %8249 = vmatprep.subr.mxu0 0.0
    %8250 = vmatpush1.msra.mxu0 0.0
    %8251 = vmatprep.subr.mxu0 0.0
    %8252 = vmatpush1.msra.mxu0 0.0
    %8253 = vmatprep.subr.mxu0 0.0
    %8254 = vmatpush1.msra.mxu0 0.0
    %8255 = vmatprep.subr.mxu0 0.0
    %8256 = vmatpush1.msra.mxu0 0.0
    %8257 = vmatprep.subr.mxu0 0.0
    %8258 = vmatpush1.msra.mxu0 0.0
    %8259 = vmatprep.mubr.f32.mxu0 0.0
    %8260 = vmatmul.mubr.f32.gmra.mrb[0].mxu0 %v8171
    %v8261 = vpop.f32.mrb[0].mxu0
    %v8262 = vadd.f32 %v8193, %v8261
    %v8263 = vpop.f32.mrb[0].mxu0
    %8264 = vdwg.mxu0
    %8265 = vst [vmem:[#allocation2] sm:$0x3] %v8262
    // Predicated region
    $region46: #{net_forward.1} parent=1 // pred_check
      _
    $region47: #{net_forward.1} parent=1 // pred_check_branch
      %8267 = sbr.rel (0) target = $region49
    $region48: #{net_forward.1} parent=1 // pred_region
      %s8269 = ssub.s32 32, 32
      %8270 = vsyncadd [#allocation3], %s8269
      %s8272 = sshll.u32 [#allocation2], 4
      %s8273 = int_to_ptr.vmem [resolvable:$true] %s8272
      %8275 = dma.vmem_to_hbm [thread:$0]  %s8273, 32, %s11, [#allocation3]
    $region49: #{net_forward.1} parent=1 // pred_fallthru
      _
    // Predicated region
    $region50: #{net_forward.1} parent=1 // pred_check
      _
    $region51: #{net_forward.1} parent=1 // pred_check_branch
      %8277 = sbr.rel (0) target = $region53
    $region52: #{net_forward.1} parent=1 // pred_region
      %8278 = dma.done [#allocation3], 32
    $region53: #{net_forward.1} parent=1 // pred_fallthru
      _
    %8279 = vsyncpa [#allocation3], 1

</llo_original>
